<compile_context>
chip_gen: v7x
topology: tpu7x:2x2x1
jax: 0.10.0
libtpu: 0.0.40
codegen_flags: <defaults>
</compile_context>

<pallas_src>
import functools

import numpy as np
import jax
import jax.numpy as jnp
from jax import lax
from jax.experimental import pallas as pl
from jax.experimental.pallas import tpu as pltpu

# ----------------------------- config (small, synthetic) -----------------------------
LATENT_DIM = 8          # config.latent_dim
DIM = 64                # config.latent_dim_diffusion
LATENT_SIZE = (4, 4)    # config.latent_size  -> SEQ = 16
SEQ = LATENT_SIZE[0] * LATENT_SIZE[1]
N_CLUSTERS = 4          # config.n_clusters
N_HEADS = 2             # config.n_heads_dit
N_BLOCKS = 2            # config.n_blocks_dit
MLP_RATIO = 4
HEAD_DIM = DIM // N_HEADS
HIDDEN = DIM * MLP_RATIO
NOISE_STEPS = 16        # config.noise_steps (only used by training/sampling utils)
BETA_START, BETA_END = 1e-4, 2e-2
OUT_PAD = 128           # lane-dense padded output width (sliced to LATENT_DIM outside)


# ----------------------------- in-kernel helpers -----------------------------
def _layernorm(v, eps=1e-6):
    mu = jnp.mean(v, axis=-1, keepdims=True)
    var = jnp.mean((v - mu) ** 2, axis=-1, keepdims=True)
    return (v - mu) * lax.rsqrt(var + eps)


def _gelu_tanh(v):
    c0 = jnp.float32(0.7978845608028654)  # sqrt(2/pi)
    return 0.5 * v * (1.0 + jnp.tanh(c0 * (v + 0.044715 * v * v * v)))


def _silu(v):
    return v * (1.0 / (1.0 + jnp.exp(-v)))


# ----------------------------- fused forward kernel -----------------------------
def _build_kernel(with_condition: bool):
    def kernel(zq_ref, c_ref, tenc_ref, cos_ref, sin_ref, mask_ref,
               exw_ref, exb_ref, exwr_ref, exbr_ref,
               ecw_ref, ecb_ref,
               adaw_ref, adab_ref,
               qw_ref, qb_ref, kw_ref, kb_ref, vw_ref, vb_ref,
               pw_ref, pb_ref,
               f1w_ref, f1b_ref, f2w_ref, f2b_ref,
               fadaw_ref, fadab_ref, finw_ref, finb_ref,
               o_ref):
        f32 = jnp.float32

        # ---- emb_x + rotary (pair-swap folded into permuted weights) ----
        zq = zq_ref[...]                                          # (BS, LD)
        x = jnp.dot(zq, exw_ref[...], preferred_element_type=f32) + exb_ref[...]
        xp = jnp.dot(zq, exwr_ref[...], preferred_element_type=f32) + exbr_ref[...]
        x = x * cos_ref[...] + xp * sin_ref[...]                  # (BS, D)

        # ---- condition embedding + SiLU (rows already broadcast over sequence) ----
        if with_condition:
            cond = (jnp.dot(c_ref[...], ecw_ref[...], preferred_element_type=f32)
                    + ecb_ref[...] + tenc_ref[...])
        else:
            cond = tenc_ref[...]
        ca = _silu(cond)                                          # (BS, D)

        mask = mask_ref[...]                                      # (BS, BS) block-diag 0/1
        scale = f32(HEAD_DIM ** -0.5)

        # ---- DiT blocks (static Python loop; weights indexed on leading dim) ----
        for blk in range(N_BLOCKS):
            mods = []
            for kk in range(6):
                idx = blk * 6 + kk
                mods.append(jnp.dot(ca, adaw_ref[idx], preferred_element_type=f32)
                            + adab_ref[idx])
            shift_msa, scale_msa, gate_msa, shift_mlp, scale_mlp, gate_mlp = mods

            # attention branch
            xn = _layernorm(x) * (1.0 + scale_msa) + shift_msa
            head_sum = None
            for h in range(N_HEADS):
                hidx = blk * N_HEADS + h
                qh = jnp.dot(xn, qw_ref[hidx], preferred_element_type=f32) + qb_ref[hidx]
                kh = jnp.dot(xn, kw_ref[hidx], preferred_element_type=f32) + kb_ref[hidx]
                vh = jnp.dot(xn, vw_ref[hidx], preferred_element_type=f32) + vb_ref[hidx]
                s = lax.dot_general(qh * scale, kh, (((1,), (1,)), ((), ())),
                                    preferred_element_type=f32)   # (BS, BS)
                p = jnp.exp(s - jnp.max(s, axis=-1, keepdims=True)) * mask
                p = p * pl.reciprocal(jnp.sum(p, axis=-1, keepdims=True), approx=True)
                oh = jnp.dot(p, vh, preferred_element_type=f32)   # (BS, HD)
                contrib = jnp.dot(oh, pw_ref[hidx], preferred_element_type=f32)  # (BS, D)
                head_sum = contrib if head_sum is None else head_sum + contrib
            x = x + gate_msa * (head_sum + pb_ref[blk])

            # MLP branch
            xn = _layernorm(x) * (1.0 + scale_mlp) + shift_mlp
            h1 = jnp.dot(xn, f1w_ref[blk], preferred_element_type=f32) + f1b_ref[blk]
            h1 = _gelu_tanh(h1)
            h2 = jnp.dot(h1, f2w_ref[blk], preferred_element_type=f32) + f2b_ref[blk]
            x = x + gate_mlp * h2

        # ---- final layer (adaLN + projection into lane-dense padded output) ----
        shift = jnp.dot(ca, fadaw_ref[0], preferred_element_type=f32) + fadab_ref[0]
        scl = jnp.dot(ca, fadaw_ref[1], preferred_element_type=f32) + fadab_ref[1]
        xn = _layernorm(x) * (1.0 + scl) + shift
        o_ref[...] = jnp.dot(xn, finw_ref[...], preferred_element_type=f32) + finb_ref[...]

    return kernel


# ----------------------------- JAX glue -----------------------------
def pos_encoding(t):
    # t: (B, 1) float -> (B, DIM).  Matches DiffusionModel.pos_encoding.
    inv_freq = 1.0 / (10000.0 ** (jnp.arange(0, DIM, 2, dtype=jnp.float32) / DIM))
    t_rep = jnp.tile(t, (1, DIM // 2))
    return jnp.concatenate([jnp.sin(t_rep * inv_freq), jnp.cos(t_rep * inv_freq)], axis=-1)


def apply_rotary(x):
    # lucidrains-style interleaved rotary (used by the pure-JAX reference).
    b, s, d = x.shape
    inv_freq = 1.0 / (10000.0 ** (jnp.arange(0, d, 2, dtype=jnp.float32) / d))
    pos = jnp.arange(s, dtype=jnp.float32)
    freqs = jnp.repeat(pos[:, None] * inv_freq[None, :], 2, axis=-1)
    cos = jnp.cos(freqs)[None]
    sin = jnp.sin(freqs)[None]
    xr = x.reshape(b, s, d // 2, 2)
    rot = jnp.stack([-xr[..., 1], xr[..., 0]], axis=-1).reshape(b, s, d)
    return x * cos + rot * sin


def _rotary_tables_np(s, d):
    # trace-time numpy constants for the fused kernel
    inv_freq = 1.0 / (10000.0 ** (np.arange(0, d, 2, dtype=np.float64) / d))
    freqs = np.arange(s, dtype=np.float64)[:, None] * inv_freq[None, :]
    freqs = np.repeat(freqs, 2, axis=-1)
    return np.cos(freqs).astype(np.float32), np.sin(freqs).astype(np.float32)


def init_params(key):
    def lin(k, fan_in, fan_out, scale=0.02):
        kw, kb = jax.random.split(k)
        w = scale * jax.random.normal(kw, (fan_in, fan_out), jnp.float32)
        bias = scale * jax.random.normal(kb, (1, fan_out), jnp.float32)
        return w, bias

    keys = jax.random.split(key, 4 + N_BLOCKS)
    p = {}
    p["emb_x_w"], p["emb_x_b"] = lin(keys[0], LATENT_DIM, DIM)
    p["emb_c_w"], p["emb_c_b"] = lin(keys[1], N_CLUSTERS, DIM)
    p["fin_ada_w"], p["fin_ada_b"] = lin(keys[2], DIM, 2 * DIM)
    p["fin_w"], p["fin_b"] = lin(keys[3], DIM, LATENT_DIM)
    p["blocks"] = []
    for i in range(N_BLOCKS):
        bkeys = jax.random.split(keys[4 + i], 5)
        blk = {}
        blk["ada_w"], blk["ada_b"] = lin(bkeys[0], DIM, 6 * DIM)
        blk["qkv_w"], blk["qkv_b"] = lin(bkeys[1], DIM, 3 * DIM)
        blk["proj_w"], blk["proj_b"] = lin(bkeys[2], DIM, DIM)
        blk["fc1_w"], blk["fc1_b"] = lin(bkeys[3], DIM, HIDDEN)
        blk["fc2_w"], blk["fc2_b"] = lin(bkeys[4], HIDDEN, DIM)
        p["blocks"].append(blk)
    return p


def pack_params(p):
    """Trace-time repack: pre-split / permute / pad / stack weights for the kernel."""
    d = DIM

    def rot_cols(w):
        # permute + negate columns so (zq @ Wp + bp) == interleaved_pair_swap(zq @ W + b)
        wr = w.reshape(w.shape[0], d // 2, 2)
        return jnp.stack([-wr[..., 1], wr[..., 0]], axis=-1).reshape(w.shape)

    def stack(name):
        return jnp.stack([blk[name] for blk in p["blocks"]], axis=0)

    packed = {
        "emb_x_w": p["emb_x_w"], "emb_x_b": p["emb_x_b"],
        "emb_x_wr": rot_cols(p["emb_x_w"]), "emb_x_br": rot_cols(p["emb_x_b"]),
        "emb_c_w": p["emb_c_w"], "emb_c_b": p["emb_c_b"],
    }

    ada_w = stack("ada_w")                                     # (NB, D, 6D)
    packed["ada_w"] = (ada_w.reshape(N_BLOCKS, d, 6, d)
                       .transpose(0, 2, 1, 3).reshape(N_BLOCKS * 6, d, d))
    ada_b = stack("ada_b")                                     # (NB, 1, 6D)
    packed["ada_b"] = (ada_b.reshape(N_BLOCKS, 1, 6, d)
                       .transpose(0, 2, 1, 3).reshape(N_BLOCKS * 6, 1, d))

    qkv_w = stack("qkv_w").reshape(N_BLOCKS, d, 3, N_HEADS, HEAD_DIM)
    qkv_b = stack("qkv_b").reshape(N_BLOCKS, 1, 3, N_HEADS, HEAD_DIM)
    for i, nm in enumerate(("q", "k", "v")):
        packed[nm + "_w"] = (qkv_w[:, :, i].transpose(0, 2, 1, 3)
                             .reshape(N_BLOCKS * N_HEADS, d, HEAD_DIM))
        packed[nm + "_b"] = (qkv_b[:, :, i].transpose(0, 2, 1, 3)
                             .reshape(N_BLOCKS * N_HEADS, 1, HEAD_DIM))

    packed["proj_w"] = stack("proj_w").reshape(N_BLOCKS * N_HEADS, HEAD_DIM, d)
    packed["proj_b"] = stack("proj_b")                          # (NB, 1, D)
    packed["fc1_w"] = stack("fc1_w"); packed["fc1_b"] = stack("fc1_b")
    packed["fc2_w"] = stack("fc2_w"); packed["fc2_b"] = stack("fc2_b")

    packed["fin_ada_w"] = p["fin_ada_w"].reshape(d, 2, d).transpose(1, 0, 2)  # (2, D, D)
    packed["fin_ada_b"] = p["fin_ada_b"].reshape(1, 2, d).transpose(1, 0, 2)  # (2, 1, D)
    packed["fin_w"] = jnp.pad(p["fin_w"], ((0, 0), (0, OUT_PAD - LATENT_DIM)))
    packed["fin_b"] = jnp.pad(p["fin_b"], ((0, 0), (0, OUT_PAD - LATENT_DIM)))
    return packed


def diffusion_schedules():
    # DiffusionModule buffers (not used by forward, kept for fidelity).
    beta = jnp.linspace(BETA_START, BETA_END, NOISE_STEPS)
    alpha = 1.0 - beta
    alpha_hat = jnp.cumprod(alpha)
    gammas = []
    for t in range(NOISE_STEPS):
        ah_inv = jnp.cumprod(jnp.flip(alpha[:t]))
        gammas.append(jnp.sum(jnp.sqrt(ah_inv)))
    gammas = jnp.stack(gammas)
    gamma_hat = gammas / gammas[-1]
    return beta, alpha, alpha_hat, gamma_hat


def diffusion_forward(packed, zq, t, c, with_condition=True):
    """DiffusionModel.forward — single fused Pallas kernel."""
    b, s, ld = zq.shape
    bs = b * s
    zq_bs = zq.reshape(bs, ld)

    # timestep positional encoding (tiny runtime sin/cos) broadcast over sequence
    t_enc = pos_encoding(t.astype(jnp.float32)[:, None])      # (B, DIM)
    tenc_bs = jnp.repeat(t_enc, s, axis=0)                    # (BS, DIM)
    c_bs = jnp.repeat(c, s, axis=0)                           # (BS, N_CLUSTERS)

    # trace-time constants: rotary tables + block-diagonal attention mask
    cos_t, sin_t = _rotary_tables_np(s, DIM)
    cos_bs = jnp.asarray(np.tile(cos_t, (b, 1)))
    sin_bs = jnp.asarray(np.tile(sin_t, (b, 1)))
    mask = jnp.asarray(np.kron(np.eye(b, dtype=np.float32),
                               np.ones((s, s), dtype=np.float32)))

    args = (zq_bs, c_bs, tenc_bs, cos_bs, sin_bs, mask,
            packed["emb_x_w"], packed["emb_x_b"], packed["emb_x_wr"], packed["emb_x_br"],
            packed["emb_c_w"], packed["emb_c_b"],
            packed["ada_w"], packed["ada_b"],
            packed["q_w"], packed["q_b"], packed["k_w"], packed["k_b"],
            packed["v_w"], packed["v_b"],
            packed["proj_w"], packed["proj_b"],
            packed["fc1_w"], packed["fc1_b"], packed["fc2_w"], packed["fc2_b"],
            packed["fin_ada_w"], packed["fin_ada_b"], packed["fin_w"], packed["fin_b"])

    vmem = pl.BlockSpec(memory_space=pltpu.MemorySpace.VMEM)
    out = pl.pallas_call(
        _build_kernel(with_condition),
        out_shape=jax.ShapeDtypeStruct((bs, OUT_PAD), jnp.float32),
        in_specs=[vmem] * len(args),
        out_specs=vmem,
    )(*args)
    return out[:, :LATENT_DIM].reshape(b, s, LATENT_DIM)


# ----------------------------- pure-JAX reference for validation ---------------------
def _ref_forward(params, zq, t, c, with_condition=True):
    b, s, _ = zq.shape
    x = zq @ params["emb_x_w"] + params["emb_x_b"]
    x = apply_rotary(x)
    t_enc = pos_encoding(t.astype(jnp.float32)[:, None])
    cond = (c @ params["emb_c_w"] + params["emb_c_b"]) + t_enc if with_condition else t_enc
    ca = jax.nn.silu(cond)

    def ln(v):
        mu = v.mean(-1, keepdims=True)
        var = ((v - mu) ** 2).mean(-1, keepdims=True)
        return (v - mu) / jnp.sqrt(var + 1e-6)

    for blk in params["blocks"]:
        mod = ca @ blk["ada_w"] + blk["ada_b"]
        sm, scm, gm, sp, scp, gp = jnp.split(mod, 6, axis=-1)
        xn = ln(x) * (1 + scm[:, None]) + sm[:, None]
        qkv = xn @ blk["qkv_w"] + blk["qkv_b"]
        q, k, v = jnp.split(qkv, 3, axis=-1)
        q = q.reshape(b, s, N_HEADS, HEAD_DIM).transpose(0, 2, 1, 3) * (HEAD_DIM ** -0.5)
        k = k.reshape(b, s, N_HEADS, HEAD_DIM).transpose(0, 2, 1, 3)
        v = v.reshape(b, s, N_HEADS, HEAD_DIM).transpose(0, 2, 1, 3)
        a = jax.nn.softmax(q @ k.transpose(0, 1, 3, 2), axis=-1)
        o = (a @ v).transpose(0, 2, 1, 3).reshape(b, s, DIM)
        x = x + gm[:, None] * (o @ blk["proj_w"] + blk["proj_b"])
        xn = ln(x) * (1 + scp[:, None]) + sp[:, None]
        h = jax.nn.gelu(xn @ blk["fc1_w"] + blk["fc1_b"], approximate=True)
        x = x + gp[:, None] * (h @ blk["fc2_w"] + blk["fc2_b"])
    mod = ca @ params["fin_ada_w"] + params["fin_ada_b"]
    sh, sc = jnp.split(mod, 2, axis=-1)
    xn = ln(x) * (1 + sc[:, None]) + sh[:, None]
    return xn @ params["fin_w"] + params["fin_b"]


# ----------------------------- main -----------------------------
if __name__ == "__main__":
    key = jax.random.PRNGKey(0)
    k_x, k_t, k_c = jax.random.split(key, 3)

    B = 2
    zq = jax.random.normal(k_x, (B, SEQ, LATENT_DIM), jnp.float32)
    t = jax.random.randint(k_t, (B,), 1, NOISE_STEPS)
    c = jax.nn.softmax(jax.random.normal(k_c, (B, N_CLUSTERS), jnp.float32), axis=-1)

    params = init_params(jax.random.PRNGKey(1))
    packed = pack_params(params)
    _ = diffusion_schedules()  # buffers kept for fidelity; unused by forward

    fwd = jax.jit(functools.partial(diffusion_forward, with_condition=True))
    out = jax.block_until_ready(fwd(packed, zq, t, c))

    ref = _ref_forward(params, zq, t, c, with_condition=True)
    assert out.shape == (B, SEQ, LATENT_DIM)
    err = float(jnp.max(jnp.abs(out - ref)))
    assert jnp.allclose(out, ref, atol=2e-3, rtol=2e-3), err

    print("KERNEL_OK")
</pallas_src>

<mosaic_0001>
module attributes {stable_mosaic.version = 11 : i64} {
  func.func @kernel(%arg0: memref<32x8xf32, #tpu.memory_space<vmem>>, %arg1: memref<32x4xf32, #tpu.memory_space<vmem>>, %arg2: memref<32x64xf32, #tpu.memory_space<vmem>>, %arg3: memref<32x64xf32, #tpu.memory_space<vmem>>, %arg4: memref<32x64xf32, #tpu.memory_space<vmem>>, %arg5: memref<32x32xf32, #tpu.memory_space<vmem>>, %arg6: memref<8x64xf32, #tpu.memory_space<vmem>>, %arg7: memref<1x64xf32, #tpu.memory_space<vmem>>, %arg8: memref<8x64xf32, #tpu.memory_space<vmem>>, %arg9: memref<1x64xf32, #tpu.memory_space<vmem>>, %arg10: memref<4x64xf32, #tpu.memory_space<vmem>>, %arg11: memref<1x64xf32, #tpu.memory_space<vmem>>, %arg12: memref<12x64x64xf32, #tpu.memory_space<vmem>>, %arg13: memref<12x1x64xf32, #tpu.memory_space<vmem>>, %arg14: memref<4x64x32xf32, #tpu.memory_space<vmem>>, %arg15: memref<4x1x32xf32, #tpu.memory_space<vmem>>, %arg16: memref<4x64x32xf32, #tpu.memory_space<vmem>>, %arg17: memref<4x1x32xf32, #tpu.memory_space<vmem>>, %arg18: memref<4x64x32xf32, #tpu.memory_space<vmem>>, %arg19: memref<4x1x32xf32, #tpu.memory_space<vmem>>, %arg20: memref<4x32x64xf32, #tpu.memory_space<vmem>>, %arg21: memref<2x1x64xf32, #tpu.memory_space<vmem>>, %arg22: memref<2x64x256xf32, #tpu.memory_space<vmem>>, %arg23: memref<2x1x256xf32, #tpu.memory_space<vmem>>, %arg24: memref<2x256x64xf32, #tpu.memory_space<vmem>>, %arg25: memref<2x1x64xf32, #tpu.memory_space<vmem>>, %arg26: memref<2x64x64xf32, #tpu.memory_space<vmem>>, %arg27: memref<2x1x64xf32, #tpu.memory_space<vmem>>, %arg28: memref<64x128xf32, #tpu.memory_space<vmem>>, %arg29: memref<1x128xf32, #tpu.memory_space<vmem>>, %arg30: memref<32x128xf32, #tpu.memory_space<vmem>>) attributes {dimension_semantics = [], scalar_prefetch = 0 : i64, scratch_operands = 0 : i64, tpu.core_type = #tpu.core_type<tc>} {
    %c0 = arith.constant 0 : index
    %c0_0 = arith.constant 0 : index
    %0 = vector.load %arg0[%c0, %c0_0] : memref<32x8xf32, #tpu.memory_space<vmem>>, vector<32x8xf32>
    %c0_1 = arith.constant 0 : index
    %c0_2 = arith.constant 0 : index
    %1 = vector.load %arg6[%c0_1, %c0_2] : memref<8x64xf32, #tpu.memory_space<vmem>>, vector<8x64xf32>
    %cst = arith.constant dense<0.000000e+00> : vector<32x64xf32>
    %2 = tpu.matmul %0, %1, %cst {dimension_numbers = #tpu.dot_dimension_numbers<[1], [0], [0], [1], [0, 0, 1, 1], [], []>} : vector<32x8xf32>, vector<8x64xf32>, vector<32x64xf32> -> vector<32x64xf32>
    %c0_3 = arith.constant 0 : index
    %c0_4 = arith.constant 0 : index
    %3 = vector.load %arg7[%c0_3, %c0_4] : memref<1x64xf32, #tpu.memory_space<vmem>>, vector<1x64xf32>
    %4 = vector.broadcast %3 : vector<1x64xf32> to vector<32x64xf32>
    %5 = arith.addf %2, %4 : vector<32x64xf32>
    %c0_5 = arith.constant 0 : index
    %c0_6 = arith.constant 0 : index
    %6 = vector.load %arg8[%c0_5, %c0_6] : memref<8x64xf32, #tpu.memory_space<vmem>>, vector<8x64xf32>
    %cst_7 = arith.constant dense<0.000000e+00> : vector<32x64xf32>
    %7 = tpu.matmul %0, %6, %cst_7 {dimension_numbers = #tpu.dot_dimension_numbers<[1], [0], [0], [1], [0, 0, 1, 1], [], []>} : vector<32x8xf32>, vector<8x64xf32>, vector<32x64xf32> -> vector<32x64xf32>
    %c0_8 = arith.constant 0 : index
    %c0_9 = arith.constant 0 : index
    %8 = vector.load %arg9[%c0_8, %c0_9] : memref<1x64xf32, #tpu.memory_space<vmem>>, vector<1x64xf32>
    %9 = vector.broadcast %8 : vector<1x64xf32> to vector<32x64xf32>
    %10 = arith.addf %7, %9 : vector<32x64xf32>
    %c0_10 = arith.constant 0 : index
    %c0_11 = arith.constant 0 : index
    %11 = vector.load %arg3[%c0_10, %c0_11] : memref<32x64xf32, #tpu.memory_space<vmem>>, vector<32x64xf32>
    %12 = arith.mulf %5, %11 : vector<32x64xf32>
    %c0_12 = arith.constant 0 : index
    %c0_13 = arith.constant 0 : index
    %13 = vector.load %arg4[%c0_12, %c0_13] : memref<32x64xf32, #tpu.memory_space<vmem>>, vector<32x64xf32>
    %14 = arith.mulf %10, %13 : vector<32x64xf32>
    %15 = arith.addf %12, %14 : vector<32x64xf32>
    %c0_14 = arith.constant 0 : index
    %c0_15 = arith.constant 0 : index
    %16 = vector.load %arg1[%c0_14, %c0_15] : memref<32x4xf32, #tpu.memory_space<vmem>>, vector<32x4xf32>
    %c0_16 = arith.constant 0 : index
    %c0_17 = arith.constant 0 : index
    %17 = vector.load %arg10[%c0_16, %c0_17] : memref<4x64xf32, #tpu.memory_space<vmem>>, vector<4x64xf32>
    %cst_18 = arith.constant dense<0.000000e+00> : vector<32x64xf32>
    %18 = tpu.matmul %16, %17, %cst_18 {dimension_numbers = #tpu.dot_dimension_numbers<[1], [0], [0], [1], [0, 0, 1, 1], [], []>} : vector<32x4xf32>, vector<4x64xf32>, vector<32x64xf32> -> vector<32x64xf32>
    %c0_19 = arith.constant 0 : index
    %c0_20 = arith.constant 0 : index
    %19 = vector.load %arg11[%c0_19, %c0_20] : memref<1x64xf32, #tpu.memory_space<vmem>>, vector<1x64xf32>
    %20 = vector.broadcast %19 : vector<1x64xf32> to vector<32x64xf32>
    %21 = arith.addf %18, %20 : vector<32x64xf32>
    %c0_21 = arith.constant 0 : index
    %c0_22 = arith.constant 0 : index
    %22 = vector.load %arg2[%c0_21, %c0_22] : memref<32x64xf32, #tpu.memory_space<vmem>>, vector<32x64xf32>
    %23 = arith.addf %21, %22 : vector<32x64xf32>
    %cst_23 = arith.constant 0.000000e+00 : f32
    %24 = vector.broadcast %cst_23 : f32 to vector<32x64xf32>
    %25 = arith.subf %24, %23 : vector<32x64xf32>
    %26 = math.exp %25 : vector<32x64xf32>
    %cst_24 = arith.constant 1.000000e+00 : f32
    %27 = vector.broadcast %cst_24 : f32 to vector<32x64xf32>
    %28 = arith.addf %27, %26 : vector<32x64xf32>
    %cst_25 = arith.constant 1.000000e+00 : f32
    %29 = vector.broadcast %cst_25 : f32 to vector<32x64xf32>
    %30 = arith.divf %29, %28 : vector<32x64xf32>
    %31 = arith.mulf %23, %30 : vector<32x64xf32>
    %c0_26 = arith.constant 0 : index
    %c0_27 = arith.constant 0 : index
    %32 = vector.load %arg5[%c0_26, %c0_27] : memref<32x32xf32, #tpu.memory_space<vmem>>, vector<32x32xf32>
    %c0_28 = arith.constant 0 : index
    %c0_29 = arith.constant 0 : index
    %c0_30 = arith.constant 0 : index
    %33 = vector.load %arg12[%c0_28, %c0_29, %c0_30] : memref<12x64x64xf32, #tpu.memory_space<vmem>>, vector<1x64x64xf32>
    %34 = vector.shape_cast %33 : vector<1x64x64xf32> to vector<64x64xf32>
    %cst_31 = arith.constant dense<0.000000e+00> : vector<32x64xf32>
    %35 = tpu.matmul %31, %34, %cst_31 {dimension_numbers = #tpu.dot_dimension_numbers<[1], [0], [0], [1], [0, 0, 1, 1], [], []>} : vector<32x64xf32>, vector<64x64xf32>, vector<32x64xf32> -> vector<32x64xf32>
    %c0_32 = arith.constant 0 : index
    %c0_33 = arith.constant 0 : index
    %c0_34 = arith.constant 0 : index
    %36 = vector.load %arg13[%c0_32, %c0_33, %c0_34] : memref<12x1x64xf32, #tpu.memory_space<vmem>>, vector<1x1x64xf32>
    %37 = vector.shape_cast %36 : vector<1x1x64xf32> to vector<1x64xf32>
    %38 = vector.broadcast %37 : vector<1x64xf32> to vector<32x64xf32>
    %39 = arith.addf %35, %38 : vector<32x64xf32>
    %c1 = arith.constant 1 : index
    %c0_35 = arith.constant 0 : index
    %c0_36 = arith.constant 0 : index
    %40 = vector.load %arg12[%c1, %c0_35, %c0_36] : memref<12x64x64xf32, #tpu.memory_space<vmem>>, vector<1x64x64xf32>
    %41 = vector.shape_cast %40 : vector<1x64x64xf32> to vector<64x64xf32>
    %cst_37 = arith.constant dense<0.000000e+00> : vector<32x64xf32>
    %42 = tpu.matmul %31, %41, %cst_37 {dimension_numbers = #tpu.dot_dimension_numbers<[1], [0], [0], [1], [0, 0, 1, 1], [], []>} : vector<32x64xf32>, vector<64x64xf32>, vector<32x64xf32> -> vector<32x64xf32>
    %c1_38 = arith.constant 1 : index
    %c0_39 = arith.constant 0 : index
    %c0_40 = arith.constant 0 : index
    %43 = vector.load %arg13[%c1_38, %c0_39, %c0_40] : memref<12x1x64xf32, #tpu.memory_space<vmem>>, vector<1x1x64xf32>
    %44 = vector.shape_cast %43 : vector<1x1x64xf32> to vector<1x64xf32>
    %45 = vector.broadcast %44 : vector<1x64xf32> to vector<32x64xf32>
    %46 = arith.addf %42, %45 : vector<32x64xf32>
    %c2 = arith.constant 2 : index
    %c0_41 = arith.constant 0 : index
    %c0_42 = arith.constant 0 : index
    %47 = vector.load %arg12[%c2, %c0_41, %c0_42] : memref<12x64x64xf32, #tpu.memory_space<vmem>>, vector<1x64x64xf32>
    %48 = vector.shape_cast %47 : vector<1x64x64xf32> to vector<64x64xf32>
    %cst_43 = arith.constant dense<0.000000e+00> : vector<32x64xf32>
    %49 = tpu.matmul %31, %48, %cst_43 {dimension_numbers = #tpu.dot_dimension_numbers<[1], [0], [0], [1], [0, 0, 1, 1], [], []>} : vector<32x64xf32>, vector<64x64xf32>, vector<32x64xf32> -> vector<32x64xf32>
    %c2_44 = arith.constant 2 : index
    %c0_45 = arith.constant 0 : index
    %c0_46 = arith.constant 0 : index
    %50 = vector.load %arg13[%c2_44, %c0_45, %c0_46] : memref<12x1x64xf32, #tpu.memory_space<vmem>>, vector<1x1x64xf32>
    %51 = vector.shape_cast %50 : vector<1x1x64xf32> to vector<1x64xf32>
    %52 = vector.broadcast %51 : vector<1x64xf32> to vector<32x64xf32>
    %53 = arith.addf %49, %52 : vector<32x64xf32>
    %c3 = arith.constant 3 : index
    %c0_47 = arith.constant 0 : index
    %c0_48 = arith.constant 0 : index
    %54 = vector.load %arg12[%c3, %c0_47, %c0_48] : memref<12x64x64xf32, #tpu.memory_space<vmem>>, vector<1x64x64xf32>
    %55 = vector.shape_cast %54 : vector<1x64x64xf32> to vector<64x64xf32>
    %cst_49 = arith.constant dense<0.000000e+00> : vector<32x64xf32>
    %56 = tpu.matmul %31, %55, %cst_49 {dimension_numbers = #tpu.dot_dimension_numbers<[1], [0], [0], [1], [0, 0, 1, 1], [], []>} : vector<32x64xf32>, vector<64x64xf32>, vector<32x64xf32> -> vector<32x64xf32>
    %c3_50 = arith.constant 3 : index
    %c0_51 = arith.constant 0 : index
    %c0_52 = arith.constant 0 : index
    %57 = vector.load %arg13[%c3_50, %c0_51, %c0_52] : memref<12x1x64xf32, #tpu.memory_space<vmem>>, vector<1x1x64xf32>
    %58 = vector.shape_cast %57 : vector<1x1x64xf32> to vector<1x64xf32>
    %59 = vector.broadcast %58 : vector<1x64xf32> to vector<32x64xf32>
    %60 = arith.addf %56, %59 : vector<32x64xf32>
    %c4 = arith.constant 4 : index
    %c0_53 = arith.constant 0 : index
    %c0_54 = arith.constant 0 : index
    %61 = vector.load %arg12[%c4, %c0_53, %c0_54] : memref<12x64x64xf32, #tpu.memory_space<vmem>>, vector<1x64x64xf32>
    %62 = vector.shape_cast %61 : vector<1x64x64xf32> to vector<64x64xf32>
    %cst_55 = arith.constant dense<0.000000e+00> : vector<32x64xf32>
    %63 = tpu.matmul %31, %62, %cst_55 {dimension_numbers = #tpu.dot_dimension_numbers<[1], [0], [0], [1], [0, 0, 1, 1], [], []>} : vector<32x64xf32>, vector<64x64xf32>, vector<32x64xf32> -> vector<32x64xf32>
    %c4_56 = arith.constant 4 : index
    %c0_57 = arith.constant 0 : index
    %c0_58 = arith.constant 0 : index
    %64 = vector.load %arg13[%c4_56, %c0_57, %c0_58] : memref<12x1x64xf32, #tpu.memory_space<vmem>>, vector<1x1x64xf32>
    %65 = vector.shape_cast %64 : vector<1x1x64xf32> to vector<1x64xf32>
    %66 = vector.broadcast %65 : vector<1x64xf32> to vector<32x64xf32>
    %67 = arith.addf %63, %66 : vector<32x64xf32>
    %c5 = arith.constant 5 : index
    %c0_59 = arith.constant 0 : index
    %c0_60 = arith.constant 0 : index
    %68 = vector.load %arg12[%c5, %c0_59, %c0_60] : memref<12x64x64xf32, #tpu.memory_space<vmem>>, vector<1x64x64xf32>
    %69 = vector.shape_cast %68 : vector<1x64x64xf32> to vector<64x64xf32>
    %cst_61 = arith.constant dense<0.000000e+00> : vector<32x64xf32>
    %70 = tpu.matmul %31, %69, %cst_61 {dimension_numbers = #tpu.dot_dimension_numbers<[1], [0], [0], [1], [0, 0, 1, 1], [], []>} : vector<32x64xf32>, vector<64x64xf32>, vector<32x64xf32> -> vector<32x64xf32>
    %c5_62 = arith.constant 5 : index
    %c0_63 = arith.constant 0 : index
    %c0_64 = arith.constant 0 : index
    %71 = vector.load %arg13[%c5_62, %c0_63, %c0_64] : memref<12x1x64xf32, #tpu.memory_space<vmem>>, vector<1x1x64xf32>
    %72 = vector.shape_cast %71 : vector<1x1x64xf32> to vector<1x64xf32>
    %73 = vector.broadcast %72 : vector<1x64xf32> to vector<32x64xf32>
    %74 = arith.addf %70, %73 : vector<32x64xf32>
    %cst_65 = arith.constant dense<0.000000e+00> : vector<32xf32>
    %75 = vector.multi_reduction <add>, %15, %cst_65 [1] : vector<32x64xf32> to vector<32xf32>
    %76 = vector.shape_cast %75 : vector<32xf32> to vector<32x1xf32>
    %cst_66 = arith.constant 6.400000e+01 : f32
    %77 = vector.broadcast %cst_66 : f32 to vector<32x1xf32>
    %78 = arith.divf %76, %77 : vector<32x1xf32>
    %79 = vector.broadcast %78 : vector<32x1xf32> to vector<32x64xf32>
    %80 = arith.subf %15, %79 : vector<32x64xf32>
    %81 = arith.mulf %80, %80 : vector<32x64xf32>
    %cst_67 = arith.constant dense<0.000000e+00> : vector<32xf32>
    %82 = vector.multi_reduction <add>, %81, %cst_67 [1] : vector<32x64xf32> to vector<32xf32>
    %83 = vector.shape_cast %82 : vector<32xf32> to vector<32x1xf32>
    %cst_68 = arith.constant 6.400000e+01 : f32
    %84 = vector.broadcast %cst_68 : f32 to vector<32x1xf32>
    %85 = arith.divf %83, %84 : vector<32x1xf32>
    %86 = vector.broadcast %78 : vector<32x1xf32> to vector<32x64xf32>
    %87 = arith.subf %15, %86 : vector<32x64xf32>
    %cst_69 = arith.constant 9.99999997E-7 : f32
    %88 = vector.broadcast %cst_69 : f32 to vector<32x1xf32>
    %89 = arith.addf %85, %88 : vector<32x1xf32>
    %90 = math.rsqrt %89 : vector<32x1xf32>
    %91 = vector.broadcast %90 : vector<32x1xf32> to vector<32x64xf32>
    %92 = arith.mulf %87, %91 : vector<32x64xf32>
    %cst_70 = arith.constant 1.000000e+00 : f32
    %93 = vector.broadcast %cst_70 : f32 to vector<32x64xf32>
    %94 = arith.addf %93, %46 : vector<32x64xf32>
    %95 = arith.mulf %92, %94 : vector<32x64xf32>
    %96 = arith.addf %95, %39 : vector<32x64xf32>
    %c0_71 = arith.constant 0 : index
    %c0_72 = arith.constant 0 : index
    %c0_73 = arith.constant 0 : index
    %97 = vector.load %arg14[%c0_71, %c0_72, %c0_73] : memref<4x64x32xf32, #tpu.memory_space<vmem>>, vector<1x64x32xf32>
    %98 = vector.shape_cast %97 : vector<1x64x32xf32> to vector<64x32xf32>
    %cst_74 = arith.constant dense<0.000000e+00> : vector<32x32xf32>
    %99 = tpu.matmul %96, %98, %cst_74 {dimension_numbers = #tpu.dot_dimension_numbers<[1], [0], [0], [1], [0, 0, 1, 1], [], []>} : vector<32x64xf32>, vector<64x32xf32>, vector<32x32xf32> -> vector<32x32xf32>
    %c0_75 = arith.constant 0 : index
    %c0_76 = arith.constant 0 : index
    %c0_77 = arith.constant 0 : index
    %100 = vector.load %arg15[%c0_75, %c0_76, %c0_77] : memref<4x1x32xf32, #tpu.memory_space<vmem>>, vector<1x1x32xf32>
    %101 = vector.shape_cast %100 : vector<1x1x32xf32> to vector<1x32xf32>
    %102 = vector.broadcast %101 : vector<1x32xf32> to vector<32x32xf32>
    %103 = arith.addf %99, %102 : vector<32x32xf32>
    %c0_78 = arith.constant 0 : index
    %c0_79 = arith.constant 0 : index
    %c0_80 = arith.constant 0 : index
    %104 = vector.load %arg16[%c0_78, %c0_79, %c0_80] : memref<4x64x32xf32, #tpu.memory_space<vmem>>, vector<1x64x32xf32>
    %105 = vector.shape_cast %104 : vector<1x64x32xf32> to vector<64x32xf32>
    %cst_81 = arith.constant dense<0.000000e+00> : vector<32x32xf32>
    %106 = tpu.matmul %96, %105, %cst_81 {dimension_numbers = #tpu.dot_dimension_numbers<[1], [0], [0], [1], [0, 0, 1, 1], [], []>} : vector<32x64xf32>, vector<64x32xf32>, vector<32x32xf32> -> vector<32x32xf32>
    %c0_82 = arith.constant 0 : index
    %c0_83 = arith.constant 0 : index
    %c0_84 = arith.constant 0 : index
    %107 = vector.load %arg17[%c0_82, %c0_83, %c0_84] : memref<4x1x32xf32, #tpu.memory_space<vmem>>, vector<1x1x32xf32>
    %108 = vector.shape_cast %107 : vector<1x1x32xf32> to vector<1x32xf32>
    %109 = vector.broadcast %108 : vector<1x32xf32> to vector<32x32xf32>
    %110 = arith.addf %106, %109 : vector<32x32xf32>
    %c0_85 = arith.constant 0 : index
    %c0_86 = arith.constant 0 : index
    %c0_87 = arith.constant 0 : index
    %111 = vector.load %arg18[%c0_85, %c0_86, %c0_87] : memref<4x64x32xf32, #tpu.memory_space<vmem>>, vector<1x64x32xf32>
    %112 = vector.shape_cast %111 : vector<1x64x32xf32> to vector<64x32xf32>
    %cst_88 = arith.constant dense<0.000000e+00> : vector<32x32xf32>
    %113 = tpu.matmul %96, %112, %cst_88 {dimension_numbers = #tpu.dot_dimension_numbers<[1], [0], [0], [1], [0, 0, 1, 1], [], []>} : vector<32x64xf32>, vector<64x32xf32>, vector<32x32xf32> -> vector<32x32xf32>
    %c0_89 = arith.constant 0 : index
    %c0_90 = arith.constant 0 : index
    %c0_91 = arith.constant 0 : index
    %114 = vector.load %arg19[%c0_89, %c0_90, %c0_91] : memref<4x1x32xf32, #tpu.memory_space<vmem>>, vector<1x1x32xf32>
    %115 = vector.shape_cast %114 : vector<1x1x32xf32> to vector<1x32xf32>
    %116 = vector.broadcast %115 : vector<1x32xf32> to vector<32x32xf32>
    %117 = arith.addf %113, %116 : vector<32x32xf32>
    %cst_92 = arith.constant 0.176776692 : f32
    %118 = vector.broadcast %cst_92 : f32 to vector<32x32xf32>
    %119 = arith.mulf %103, %118 : vector<32x32xf32>
    %cst_93 = arith.constant dense<0.000000e+00> : vector<32x32xf32>
    %120 = tpu.matmul %119, %110, %cst_93 {dimension_numbers = #tpu.dot_dimension_numbers<[1], [1], [0], [0], [0, 0, 1, 0], [], []>} : vector<32x32xf32>, vector<32x32xf32>, vector<32x32xf32> -> vector<32x32xf32>
    %cst_94 = arith.constant dense<0xFF800000> : vector<32xf32>
    %121 = vector.multi_reduction <maximumf>, %120, %cst_94 [1] : vector<32x32xf32> to vector<32xf32>
    %122 = vector.shape_cast %121 : vector<32xf32> to vector<32x1xf32>
    %123 = vector.broadcast %122 : vector<32x1xf32> to vector<32x32xf32>
    %124 = arith.subf %120, %123 : vector<32x32xf32>
    %125 = math.exp %124 : vector<32x32xf32>
    %126 = arith.mulf %125, %32 : vector<32x32xf32>
    %cst_95 = arith.constant dense<0.000000e+00> : vector<32xf32>
    %127 = vector.multi_reduction <add>, %126, %cst_95 [1] : vector<32x32xf32> to vector<32xf32>
    %128 = vector.shape_cast %127 : vector<32xf32> to vector<32x1xf32>
    %129 = tpu.reciprocal %128 {approx = true} : vector<32x1xf32> -> vector<32x1xf32>
    %130 = vector.broadcast %129 : vector<32x1xf32> to vector<32x32xf32>
    %131 = arith.mulf %126, %130 : vector<32x32xf32>
    %cst_96 = arith.constant dense<0.000000e+00> : vector<32x32xf32>
    %132 = tpu.matmul %131, %117, %cst_96 {dimension_numbers = #tpu.dot_dimension_numbers<[1], [0], [0], [1], [0, 0, 1, 1], [], []>} : vector<32x32xf32>, vector<32x32xf32>, vector<32x32xf32> -> vector<32x32xf32>
    %c0_97 = arith.constant 0 : index
    %c0_98 = arith.constant 0 : index
    %c0_99 = arith.constant 0 : index
    %133 = vector.load %arg20[%c0_97, %c0_98, %c0_99] : memref<4x32x64xf32, #tpu.memory_space<vmem>>, vector<1x32x64xf32>
    %134 = vector.shape_cast %133 : vector<1x32x64xf32> to vector<32x64xf32>
    %cst_100 = arith.constant dense<0.000000e+00> : vector<32x64xf32>
    %135 = tpu.matmul %132, %134, %cst_100 {dimension_numbers = #tpu.dot_dimension_numbers<[1], [0], [0], [1], [0, 0, 1, 1], [], []>} : vector<32x32xf32>, vector<32x64xf32>, vector<32x64xf32> -> vector<32x64xf32>
    %c1_101 = arith.constant 1 : index
    %c0_102 = arith.constant 0 : index
    %c0_103 = arith.constant 0 : index
    %136 = vector.load %arg14[%c1_101, %c0_102, %c0_103] : memref<4x64x32xf32, #tpu.memory_space<vmem>>, vector<1x64x32xf32>
    %137 = vector.shape_cast %136 : vector<1x64x32xf32> to vector<64x32xf32>
    %cst_104 = arith.constant dense<0.000000e+00> : vector<32x32xf32>
    %138 = tpu.matmul %96, %137, %cst_104 {dimension_numbers = #tpu.dot_dimension_numbers<[1], [0], [0], [1], [0, 0, 1, 1], [], []>} : vector<32x64xf32>, vector<64x32xf32>, vector<32x32xf32> -> vector<32x32xf32>
    %c1_105 = arith.constant 1 : index
    %c0_106 = arith.constant 0 : index
    %c0_107 = arith.constant 0 : index
    %139 = vector.load %arg15[%c1_105, %c0_106, %c0_107] : memref<4x1x32xf32, #tpu.memory_space<vmem>>, vector<1x1x32xf32>
    %140 = vector.shape_cast %139 : vector<1x1x32xf32> to vector<1x32xf32>
    %141 = vector.broadcast %140 : vector<1x32xf32> to vector<32x32xf32>
    %142 = arith.addf %138, %141 : vector<32x32xf32>
    %c1_108 = arith.constant 1 : index
    %c0_109 = arith.constant 0 : index
    %c0_110 = arith.constant 0 : index
    %143 = vector.load %arg16[%c1_108, %c0_109, %c0_110] : memref<4x64x32xf32, #tpu.memory_space<vmem>>, vector<1x64x32xf32>
    %144 = vector.shape_cast %143 : vector<1x64x32xf32> to vector<64x32xf32>
    %cst_111 = arith.constant dense<0.000000e+00> : vector<32x32xf32>
    %145 = tpu.matmul %96, %144, %cst_111 {dimension_numbers = #tpu.dot_dimension_numbers<[1], [0], [0], [1], [0, 0, 1, 1], [], []>} : vector<32x64xf32>, vector<64x32xf32>, vector<32x32xf32> -> vector<32x32xf32>
    %c1_112 = arith.constant 1 : index
    %c0_113 = arith.constant 0 : index
    %c0_114 = arith.constant 0 : index
    %146 = vector.load %arg17[%c1_112, %c0_113, %c0_114] : memref<4x1x32xf32, #tpu.memory_space<vmem>>, vector<1x1x32xf32>
    %147 = vector.shape_cast %146 : vector<1x1x32xf32> to vector<1x32xf32>
    %148 = vector.broadcast %147 : vector<1x32xf32> to vector<32x32xf32>
    %149 = arith.addf %145, %148 : vector<32x32xf32>
    %c1_115 = arith.constant 1 : index
    %c0_116 = arith.constant 0 : index
    %c0_117 = arith.constant 0 : index
    %150 = vector.load %arg18[%c1_115, %c0_116, %c0_117] : memref<4x64x32xf32, #tpu.memory_space<vmem>>, vector<1x64x32xf32>
    %151 = vector.shape_cast %150 : vector<1x64x32xf32> to vector<64x32xf32>
    %cst_118 = arith.constant dense<0.000000e+00> : vector<32x32xf32>
    %152 = tpu.matmul %96, %151, %cst_118 {dimension_numbers = #tpu.dot_dimension_numbers<[1], [0], [0], [1], [0, 0, 1, 1], [], []>} : vector<32x64xf32>, vector<64x32xf32>, vector<32x32xf32> -> vector<32x32xf32>
    %c1_119 = arith.constant 1 : index
    %c0_120 = arith.constant 0 : index
    %c0_121 = arith.constant 0 : index
    %153 = vector.load %arg19[%c1_119, %c0_120, %c0_121] : memref<4x1x32xf32, #tpu.memory_space<vmem>>, vector<1x1x32xf32>
    %154 = vector.shape_cast %153 : vector<1x1x32xf32> to vector<1x32xf32>
    %155 = vector.broadcast %154 : vector<1x32xf32> to vector<32x32xf32>
    %156 = arith.addf %152, %155 : vector<32x32xf32>
    %cst_122 = arith.constant 0.176776692 : f32
    %157 = vector.broadcast %cst_122 : f32 to vector<32x32xf32>
    %158 = arith.mulf %142, %157 : vector<32x32xf32>
    %cst_123 = arith.constant dense<0.000000e+00> : vector<32x32xf32>
    %159 = tpu.matmul %158, %149, %cst_123 {dimension_numbers = #tpu.dot_dimension_numbers<[1], [1], [0], [0], [0, 0, 1, 0], [], []>} : vector<32x32xf32>, vector<32x32xf32>, vector<32x32xf32> -> vector<32x32xf32>
    %cst_124 = arith.constant dense<0xFF800000> : vector<32xf32>
    %160 = vector.multi_reduction <maximumf>, %159, %cst_124 [1] : vector<32x32xf32> to vector<32xf32>
    %161 = vector.shape_cast %160 : vector<32xf32> to vector<32x1xf32>
    %162 = vector.broadcast %161 : vector<32x1xf32> to vector<32x32xf32>
    %163 = arith.subf %159, %162 : vector<32x32xf32>
    %164 = math.exp %163 : vector<32x32xf32>
    %165 = arith.mulf %164, %32 : vector<32x32xf32>
    %cst_125 = arith.constant dense<0.000000e+00> : vector<32xf32>
    %166 = vector.multi_reduction <add>, %165, %cst_125 [1] : vector<32x32xf32> to vector<32xf32>
    %167 = vector.shape_cast %166 : vector<32xf32> to vector<32x1xf32>
    %168 = tpu.reciprocal %167 {approx = true} : vector<32x1xf32> -> vector<32x1xf32>
    %169 = vector.broadcast %168 : vector<32x1xf32> to vector<32x32xf32>
    %170 = arith.mulf %165, %169 : vector<32x32xf32>
    %cst_126 = arith.constant dense<0.000000e+00> : vector<32x32xf32>
    %171 = tpu.matmul %170, %156, %cst_126 {dimension_numbers = #tpu.dot_dimension_numbers<[1], [0], [0], [1], [0, 0, 1, 1], [], []>} : vector<32x32xf32>, vector<32x32xf32>, vector<32x32xf32> -> vector<32x32xf32>
    %c1_127 = arith.constant 1 : index
    %c0_128 = arith.constant 0 : index
    %c0_129 = arith.constant 0 : index
    %172 = vector.load %arg20[%c1_127, %c0_128, %c0_129] : memref<4x32x64xf32, #tpu.memory_space<vmem>>, vector<1x32x64xf32>
    %173 = vector.shape_cast %172 : vector<1x32x64xf32> to vector<32x64xf32>
    %cst_130 = arith.constant dense<0.000000e+00> : vector<32x64xf32>
    %174 = tpu.matmul %171, %173, %cst_130 {dimension_numbers = #tpu.dot_dimension_numbers<[1], [0], [0], [1], [0, 0, 1, 1], [], []>} : vector<32x32xf32>, vector<32x64xf32>, vector<32x64xf32> -> vector<32x64xf32>
    %175 = arith.addf %135, %174 : vector<32x64xf32>
    %c0_131 = arith.constant 0 : index
    %c0_132 = arith.constant 0 : index
    %c0_133 = arith.constant 0 : index
    %176 = vector.load %arg21[%c0_131, %c0_132, %c0_133] : memref<2x1x64xf32, #tpu.memory_space<vmem>>, vector<1x1x64xf32>
    %177 = vector.shape_cast %176 : vector<1x1x64xf32> to vector<1x64xf32>
    %178 = vector.broadcast %177 : vector<1x64xf32> to vector<32x64xf32>
    %179 = arith.addf %175, %178 : vector<32x64xf32>
    %180 = arith.mulf %53, %179 : vector<32x64xf32>
    %181 = arith.addf %15, %180 : vector<32x64xf32>
    %cst_134 = arith.constant dense<0.000000e+00> : vector<32xf32>
    %182 = vector.multi_reduction <add>, %181, %cst_134 [1] : vector<32x64xf32> to vector<32xf32>
    %183 = vector.shape_cast %182 : vector<32xf32> to vector<32x1xf32>
    %cst_135 = arith.constant 6.400000e+01 : f32
    %184 = vector.broadcast %cst_135 : f32 to vector<32x1xf32>
    %185 = arith.divf %183, %184 : vector<32x1xf32>
    %186 = vector.broadcast %185 : vector<32x1xf32> to vector<32x64xf32>
    %187 = arith.subf %181, %186 : vector<32x64xf32>
    %188 = arith.mulf %187, %187 : vector<32x64xf32>
    %cst_136 = arith.constant dense<0.000000e+00> : vector<32xf32>
    %189 = vector.multi_reduction <add>, %188, %cst_136 [1] : vector<32x64xf32> to vector<32xf32>
    %190 = vector.shape_cast %189 : vector<32xf32> to vector<32x1xf32>
    %cst_137 = arith.constant 6.400000e+01 : f32
    %191 = vector.broadcast %cst_137 : f32 to vector<32x1xf32>
    %192 = arith.divf %190, %191 : vector<32x1xf32>
    %193 = vector.broadcast %185 : vector<32x1xf32> to vector<32x64xf32>
    %194 = arith.subf %181, %193 : vector<32x64xf32>
    %cst_138 = arith.constant 9.99999997E-7 : f32
    %195 = vector.broadcast %cst_138 : f32 to vector<32x1xf32>
    %196 = arith.addf %192, %195 : vector<32x1xf32>
    %197 = math.rsqrt %196 : vector<32x1xf32>
    %198 = vector.broadcast %197 : vector<32x1xf32> to vector<32x64xf32>
    %199 = arith.mulf %194, %198 : vector<32x64xf32>
    %cst_139 = arith.constant 1.000000e+00 : f32
    %200 = vector.broadcast %cst_139 : f32 to vector<32x64xf32>
    %201 = arith.addf %200, %67 : vector<32x64xf32>
    %202 = arith.mulf %199, %201 : vector<32x64xf32>
    %203 = arith.addf %202, %60 : vector<32x64xf32>
    %c0_140 = arith.constant 0 : index
    %c0_141 = arith.constant 0 : index
    %c0_142 = arith.constant 0 : index
    %204 = vector.load %arg22[%c0_140, %c0_141, %c0_142] : memref<2x64x256xf32, #tpu.memory_space<vmem>>, vector<1x64x256xf32>
    %205 = vector.shape_cast %204 : vector<1x64x256xf32> to vector<64x256xf32>
    %cst_143 = arith.constant dense<0.000000e+00> : vector<32x256xf32>
    %206 = tpu.matmul %203, %205, %cst_143 {dimension_numbers = #tpu.dot_dimension_numbers<[1], [0], [0], [1], [0, 0, 1, 1], [], []>} : vector<32x64xf32>, vector<64x256xf32>, vector<32x256xf32> -> vector<32x256xf32>
    %c0_144 = arith.constant 0 : index
    %c0_145 = arith.constant 0 : index
    %c0_146 = arith.constant 0 : index
    %207 = vector.load %arg23[%c0_144, %c0_145, %c0_146] : memref<2x1x256xf32, #tpu.memory_space<vmem>>, vector<1x1x256xf32>
    %208 = vector.shape_cast %207 : vector<1x1x256xf32> to vector<1x256xf32>
    %209 = vector.broadcast %208 : vector<1x256xf32> to vector<32x256xf32>
    %210 = arith.addf %206, %209 : vector<32x256xf32>
    %cst_147 = arith.constant 5.000000e-01 : f32
    %211 = vector.broadcast %cst_147 : f32 to vector<32x256xf32>
    %212 = arith.mulf %211, %210 : vector<32x256xf32>
    %cst_148 = arith.constant 4.471500e-02 : f32
    %213 = vector.broadcast %cst_148 : f32 to vector<32x256xf32>
    %214 = arith.mulf %213, %210 : vector<32x256xf32>
    %215 = arith.mulf %214, %210 : vector<32x256xf32>
    %216 = arith.mulf %215, %210 : vector<32x256xf32>
    %217 = arith.addf %210, %216 : vector<32x256xf32>
    %cst_149 = arith.constant 0.797884583 : f32
    %218 = vector.broadcast %cst_149 : f32 to vector<32x256xf32>
    %219 = arith.mulf %218, %217 : vector<32x256xf32>
    %220 = math.tanh %219 : vector<32x256xf32>
    %cst_150 = arith.constant 1.000000e+00 : f32
    %221 = vector.broadcast %cst_150 : f32 to vector<32x256xf32>
    %222 = arith.addf %221, %220 : vector<32x256xf32>
    %223 = arith.mulf %212, %222 : vector<32x256xf32>
    %c0_151 = arith.constant 0 : index
    %c0_152 = arith.constant 0 : index
    %c0_153 = arith.constant 0 : index
    %224 = vector.load %arg24[%c0_151, %c0_152, %c0_153] : memref<2x256x64xf32, #tpu.memory_space<vmem>>, vector<1x256x64xf32>
    %225 = vector.shape_cast %224 : vector<1x256x64xf32> to vector<256x64xf32>
    %cst_154 = arith.constant dense<0.000000e+00> : vector<32x64xf32>
    %226 = tpu.matmul %223, %225, %cst_154 {dimension_numbers = #tpu.dot_dimension_numbers<[1], [0], [0], [1], [0, 0, 1, 1], [], []>} : vector<32x256xf32>, vector<256x64xf32>, vector<32x64xf32> -> vector<32x64xf32>
    %c0_155 = arith.constant 0 : index
    %c0_156 = arith.constant 0 : index
    %c0_157 = arith.constant 0 : index
    %227 = vector.load %arg25[%c0_155, %c0_156, %c0_157] : memref<2x1x64xf32, #tpu.memory_space<vmem>>, vector<1x1x64xf32>
    %228 = vector.shape_cast %227 : vector<1x1x64xf32> to vector<1x64xf32>
    %229 = vector.broadcast %228 : vector<1x64xf32> to vector<32x64xf32>
    %230 = arith.addf %226, %229 : vector<32x64xf32>
    %231 = arith.mulf %74, %230 : vector<32x64xf32>
    %232 = arith.addf %181, %231 : vector<32x64xf32>
    %c6 = arith.constant 6 : index
    %c0_158 = arith.constant 0 : index
    %c0_159 = arith.constant 0 : index
    %233 = vector.load %arg12[%c6, %c0_158, %c0_159] : memref<12x64x64xf32, #tpu.memory_space<vmem>>, vector<1x64x64xf32>
    %234 = vector.shape_cast %233 : vector<1x64x64xf32> to vector<64x64xf32>
    %cst_160 = arith.constant dense<0.000000e+00> : vector<32x64xf32>
    %235 = tpu.matmul %31, %234, %cst_160 {dimension_numbers = #tpu.dot_dimension_numbers<[1], [0], [0], [1], [0, 0, 1, 1], [], []>} : vector<32x64xf32>, vector<64x64xf32>, vector<32x64xf32> -> vector<32x64xf32>
    %c6_161 = arith.constant 6 : index
    %c0_162 = arith.constant 0 : index
    %c0_163 = arith.constant 0 : index
    %236 = vector.load %arg13[%c6_161, %c0_162, %c0_163] : memref<12x1x64xf32, #tpu.memory_space<vmem>>, vector<1x1x64xf32>
    %237 = vector.shape_cast %236 : vector<1x1x64xf32> to vector<1x64xf32>
    %238 = vector.broadcast %237 : vector<1x64xf32> to vector<32x64xf32>
    %239 = arith.addf %235, %238 : vector<32x64xf32>
    %c7 = arith.constant 7 : index
    %c0_164 = arith.constant 0 : index
    %c0_165 = arith.constant 0 : index
    %240 = vector.load %arg12[%c7, %c0_164, %c0_165] : memref<12x64x64xf32, #tpu.memory_space<vmem>>, vector<1x64x64xf32>
    %241 = vector.shape_cast %240 : vector<1x64x64xf32> to vector<64x64xf32>
    %cst_166 = arith.constant dense<0.000000e+00> : vector<32x64xf32>
    %242 = tpu.matmul %31, %241, %cst_166 {dimension_numbers = #tpu.dot_dimension_numbers<[1], [0], [0], [1], [0, 0, 1, 1], [], []>} : vector<32x64xf32>, vector<64x64xf32>, vector<32x64xf32> -> vector<32x64xf32>
    %c7_167 = arith.constant 7 : index
    %c0_168 = arith.constant 0 : index
    %c0_169 = arith.constant 0 : index
    %243 = vector.load %arg13[%c7_167, %c0_168, %c0_169] : memref<12x1x64xf32, #tpu.memory_space<vmem>>, vector<1x1x64xf32>
    %244 = vector.shape_cast %243 : vector<1x1x64xf32> to vector<1x64xf32>
    %245 = vector.broadcast %244 : vector<1x64xf32> to vector<32x64xf32>
    %246 = arith.addf %242, %245 : vector<32x64xf32>
    %c8 = arith.constant 8 : index
    %c0_170 = arith.constant 0 : index
    %c0_171 = arith.constant 0 : index
    %247 = vector.load %arg12[%c8, %c0_170, %c0_171] : memref<12x64x64xf32, #tpu.memory_space<vmem>>, vector<1x64x64xf32>
    %248 = vector.shape_cast %247 : vector<1x64x64xf32> to vector<64x64xf32>
    %cst_172 = arith.constant dense<0.000000e+00> : vector<32x64xf32>
    %249 = tpu.matmul %31, %248, %cst_172 {dimension_numbers = #tpu.dot_dimension_numbers<[1], [0], [0], [1], [0, 0, 1, 1], [], []>} : vector<32x64xf32>, vector<64x64xf32>, vector<32x64xf32> -> vector<32x64xf32>
    %c8_173 = arith.constant 8 : index
    %c0_174 = arith.constant 0 : index
    %c0_175 = arith.constant 0 : index
    %250 = vector.load %arg13[%c8_173, %c0_174, %c0_175] : memref<12x1x64xf32, #tpu.memory_space<vmem>>, vector<1x1x64xf32>
    %251 = vector.shape_cast %250 : vector<1x1x64xf32> to vector<1x64xf32>
    %252 = vector.broadcast %251 : vector<1x64xf32> to vector<32x64xf32>
    %253 = arith.addf %249, %252 : vector<32x64xf32>
    %c9 = arith.constant 9 : index
    %c0_176 = arith.constant 0 : index
    %c0_177 = arith.constant 0 : index
    %254 = vector.load %arg12[%c9, %c0_176, %c0_177] : memref<12x64x64xf32, #tpu.memory_space<vmem>>, vector<1x64x64xf32>
    %255 = vector.shape_cast %254 : vector<1x64x64xf32> to vector<64x64xf32>
    %cst_178 = arith.constant dense<0.000000e+00> : vector<32x64xf32>
    %256 = tpu.matmul %31, %255, %cst_178 {dimension_numbers = #tpu.dot_dimension_numbers<[1], [0], [0], [1], [0, 0, 1, 1], [], []>} : vector<32x64xf32>, vector<64x64xf32>, vector<32x64xf32> -> vector<32x64xf32>
    %c9_179 = arith.constant 9 : index
    %c0_180 = arith.constant 0 : index
    %c0_181 = arith.constant 0 : index
    %257 = vector.load %arg13[%c9_179, %c0_180, %c0_181] : memref<12x1x64xf32, #tpu.memory_space<vmem>>, vector<1x1x64xf32>
    %258 = vector.shape_cast %257 : vector<1x1x64xf32> to vector<1x64xf32>
    %259 = vector.broadcast %258 : vector<1x64xf32> to vector<32x64xf32>
    %260 = arith.addf %256, %259 : vector<32x64xf32>
    %c10 = arith.constant 10 : index
    %c0_182 = arith.constant 0 : index
    %c0_183 = arith.constant 0 : index
    %261 = vector.load %arg12[%c10, %c0_182, %c0_183] : memref<12x64x64xf32, #tpu.memory_space<vmem>>, vector<1x64x64xf32>
    %262 = vector.shape_cast %261 : vector<1x64x64xf32> to vector<64x64xf32>
    %cst_184 = arith.constant dense<0.000000e+00> : vector<32x64xf32>
    %263 = tpu.matmul %31, %262, %cst_184 {dimension_numbers = #tpu.dot_dimension_numbers<[1], [0], [0], [1], [0, 0, 1, 1], [], []>} : vector<32x64xf32>, vector<64x64xf32>, vector<32x64xf32> -> vector<32x64xf32>
    %c10_185 = arith.constant 10 : index
    %c0_186 = arith.constant 0 : index
    %c0_187 = arith.constant 0 : index
    %264 = vector.load %arg13[%c10_185, %c0_186, %c0_187] : memref<12x1x64xf32, #tpu.memory_space<vmem>>, vector<1x1x64xf32>
    %265 = vector.shape_cast %264 : vector<1x1x64xf32> to vector<1x64xf32>
    %266 = vector.broadcast %265 : vector<1x64xf32> to vector<32x64xf32>
    %267 = arith.addf %263, %266 : vector<32x64xf32>
    %c11 = arith.constant 11 : index
    %c0_188 = arith.constant 0 : index
    %c0_189 = arith.constant 0 : index
    %268 = vector.load %arg12[%c11, %c0_188, %c0_189] : memref<12x64x64xf32, #tpu.memory_space<vmem>>, vector<1x64x64xf32>
    %269 = vector.shape_cast %268 : vector<1x64x64xf32> to vector<64x64xf32>
    %cst_190 = arith.constant dense<0.000000e+00> : vector<32x64xf32>
    %270 = tpu.matmul %31, %269, %cst_190 {dimension_numbers = #tpu.dot_dimension_numbers<[1], [0], [0], [1], [0, 0, 1, 1], [], []>} : vector<32x64xf32>, vector<64x64xf32>, vector<32x64xf32> -> vector<32x64xf32>
    %c11_191 = arith.constant 11 : index
    %c0_192 = arith.constant 0 : index
    %c0_193 = arith.constant 0 : index
    %271 = vector.load %arg13[%c11_191, %c0_192, %c0_193] : memref<12x1x64xf32, #tpu.memory_space<vmem>>, vector<1x1x64xf32>
    %272 = vector.shape_cast %271 : vector<1x1x64xf32> to vector<1x64xf32>
    %273 = vector.broadcast %272 : vector<1x64xf32> to vector<32x64xf32>
    %274 = arith.addf %270, %273 : vector<32x64xf32>
    %cst_194 = arith.constant dense<0.000000e+00> : vector<32xf32>
    %275 = vector.multi_reduction <add>, %232, %cst_194 [1] : vector<32x64xf32> to vector<32xf32>
    %276 = vector.shape_cast %275 : vector<32xf32> to vector<32x1xf32>
    %cst_195 = arith.constant 6.400000e+01 : f32
    %277 = vector.broadcast %cst_195 : f32 to vector<32x1xf32>
    %278 = arith.divf %276, %277 : vector<32x1xf32>
    %279 = vector.broadcast %278 : vector<32x1xf32> to vector<32x64xf32>
    %280 = arith.subf %232, %279 : vector<32x64xf32>
    %281 = arith.mulf %280, %280 : vector<32x64xf32>
    %cst_196 = arith.constant dense<0.000000e+00> : vector<32xf32>
    %282 = vector.multi_reduction <add>, %281, %cst_196 [1] : vector<32x64xf32> to vector<32xf32>
    %283 = vector.shape_cast %282 : vector<32xf32> to vector<32x1xf32>
    %cst_197 = arith.constant 6.400000e+01 : f32
    %284 = vector.broadcast %cst_197 : f32 to vector<32x1xf32>
    %285 = arith.divf %283, %284 : vector<32x1xf32>
    %286 = vector.broadcast %278 : vector<32x1xf32> to vector<32x64xf32>
    %287 = arith.subf %232, %286 : vector<32x64xf32>
    %cst_198 = arith.constant 9.99999997E-7 : f32
    %288 = vector.broadcast %cst_198 : f32 to vector<32x1xf32>
    %289 = arith.addf %285, %288 : vector<32x1xf32>
    %290 = math.rsqrt %289 : vector<32x1xf32>
    %291 = vector.broadcast %290 : vector<32x1xf32> to vector<32x64xf32>
    %292 = arith.mulf %287, %291 : vector<32x64xf32>
    %cst_199 = arith.constant 1.000000e+00 : f32
    %293 = vector.broadcast %cst_199 : f32 to vector<32x64xf32>
    %294 = arith.addf %293, %246 : vector<32x64xf32>
    %295 = arith.mulf %292, %294 : vector<32x64xf32>
    %296 = arith.addf %295, %239 : vector<32x64xf32>
    %c2_200 = arith.constant 2 : index
    %c0_201 = arith.constant 0 : index
    %c0_202 = arith.constant 0 : index
    %297 = vector.load %arg14[%c2_200, %c0_201, %c0_202] : memref<4x64x32xf32, #tpu.memory_space<vmem>>, vector<1x64x32xf32>
    %298 = vector.shape_cast %297 : vector<1x64x32xf32> to vector<64x32xf32>
    %cst_203 = arith.constant dense<0.000000e+00> : vector<32x32xf32>
    %299 = tpu.matmul %296, %298, %cst_203 {dimension_numbers = #tpu.dot_dimension_numbers<[1], [0], [0], [1], [0, 0, 1, 1], [], []>} : vector<32x64xf32>, vector<64x32xf32>, vector<32x32xf32> -> vector<32x32xf32>
    %c2_204 = arith.constant 2 : index
    %c0_205 = arith.constant 0 : index
    %c0_206 = arith.constant 0 : index
    %300 = vector.load %arg15[%c2_204, %c0_205, %c0_206] : memref<4x1x32xf32, #tpu.memory_space<vmem>>, vector<1x1x32xf32>
    %301 = vector.shape_cast %300 : vector<1x1x32xf32> to vector<1x32xf32>
    %302 = vector.broadcast %301 : vector<1x32xf32> to vector<32x32xf32>
    %303 = arith.addf %299, %302 : vector<32x32xf32>
    %c2_207 = arith.constant 2 : index
    %c0_208 = arith.constant 0 : index
    %c0_209 = arith.constant 0 : index
    %304 = vector.load %arg16[%c2_207, %c0_208, %c0_209] : memref<4x64x32xf32, #tpu.memory_space<vmem>>, vector<1x64x32xf32>
    %305 = vector.shape_cast %304 : vector<1x64x32xf32> to vector<64x32xf32>
    %cst_210 = arith.constant dense<0.000000e+00> : vector<32x32xf32>
    %306 = tpu.matmul %296, %305, %cst_210 {dimension_numbers = #tpu.dot_dimension_numbers<[1], [0], [0], [1], [0, 0, 1, 1], [], []>} : vector<32x64xf32>, vector<64x32xf32>, vector<32x32xf32> -> vector<32x32xf32>
    %c2_211 = arith.constant 2 : index
    %c0_212 = arith.constant 0 : index
    %c0_213 = arith.constant 0 : index
    %307 = vector.load %arg17[%c2_211, %c0_212, %c0_213] : memref<4x1x32xf32, #tpu.memory_space<vmem>>, vector<1x1x32xf32>
    %308 = vector.shape_cast %307 : vector<1x1x32xf32> to vector<1x32xf32>
    %309 = vector.broadcast %308 : vector<1x32xf32> to vector<32x32xf32>
    %310 = arith.addf %306, %309 : vector<32x32xf32>
    %c2_214 = arith.constant 2 : index
    %c0_215 = arith.constant 0 : index
    %c0_216 = arith.constant 0 : index
    %311 = vector.load %arg18[%c2_214, %c0_215, %c0_216] : memref<4x64x32xf32, #tpu.memory_space<vmem>>, vector<1x64x32xf32>
    %312 = vector.shape_cast %311 : vector<1x64x32xf32> to vector<64x32xf32>
    %cst_217 = arith.constant dense<0.000000e+00> : vector<32x32xf32>
    %313 = tpu.matmul %296, %312, %cst_217 {dimension_numbers = #tpu.dot_dimension_numbers<[1], [0], [0], [1], [0, 0, 1, 1], [], []>} : vector<32x64xf32>, vector<64x32xf32>, vector<32x32xf32> -> vector<32x32xf32>
    %c2_218 = arith.constant 2 : index
    %c0_219 = arith.constant 0 : index
    %c0_220 = arith.constant 0 : index
    %314 = vector.load %arg19[%c2_218, %c0_219, %c0_220] : memref<4x1x32xf32, #tpu.memory_space<vmem>>, vector<1x1x32xf32>
    %315 = vector.shape_cast %314 : vector<1x1x32xf32> to vector<1x32xf32>
    %316 = vector.broadcast %315 : vector<1x32xf32> to vector<32x32xf32>
    %317 = arith.addf %313, %316 : vector<32x32xf32>
    %cst_221 = arith.constant 0.176776692 : f32
    %318 = vector.broadcast %cst_221 : f32 to vector<32x32xf32>
    %319 = arith.mulf %303, %318 : vector<32x32xf32>
    %cst_222 = arith.constant dense<0.000000e+00> : vector<32x32xf32>
    %320 = tpu.matmul %319, %310, %cst_222 {dimension_numbers = #tpu.dot_dimension_numbers<[1], [1], [0], [0], [0, 0, 1, 0], [], []>} : vector<32x32xf32>, vector<32x32xf32>, vector<32x32xf32> -> vector<32x32xf32>
    %cst_223 = arith.constant dense<0xFF800000> : vector<32xf32>
    %321 = vector.multi_reduction <maximumf>, %320, %cst_223 [1] : vector<32x32xf32> to vector<32xf32>
    %322 = vector.shape_cast %321 : vector<32xf32> to vector<32x1xf32>
    %323 = vector.broadcast %322 : vector<32x1xf32> to vector<32x32xf32>
    %324 = arith.subf %320, %323 : vector<32x32xf32>
    %325 = math.exp %324 : vector<32x32xf32>
    %326 = arith.mulf %325, %32 : vector<32x32xf32>
    %cst_224 = arith.constant dense<0.000000e+00> : vector<32xf32>
    %327 = vector.multi_reduction <add>, %326, %cst_224 [1] : vector<32x32xf32> to vector<32xf32>
    %328 = vector.shape_cast %327 : vector<32xf32> to vector<32x1xf32>
    %329 = tpu.reciprocal %328 {approx = true} : vector<32x1xf32> -> vector<32x1xf32>
    %330 = vector.broadcast %329 : vector<32x1xf32> to vector<32x32xf32>
    %331 = arith.mulf %326, %330 : vector<32x32xf32>
    %cst_225 = arith.constant dense<0.000000e+00> : vector<32x32xf32>
    %332 = tpu.matmul %331, %317, %cst_225 {dimension_numbers = #tpu.dot_dimension_numbers<[1], [0], [0], [1], [0, 0, 1, 1], [], []>} : vector<32x32xf32>, vector<32x32xf32>, vector<32x32xf32> -> vector<32x32xf32>
    %c2_226 = arith.constant 2 : index
    %c0_227 = arith.constant 0 : index
    %c0_228 = arith.constant 0 : index
    %333 = vector.load %arg20[%c2_226, %c0_227, %c0_228] : memref<4x32x64xf32, #tpu.memory_space<vmem>>, vector<1x32x64xf32>
    %334 = vector.shape_cast %333 : vector<1x32x64xf32> to vector<32x64xf32>
    %cst_229 = arith.constant dense<0.000000e+00> : vector<32x64xf32>
    %335 = tpu.matmul %332, %334, %cst_229 {dimension_numbers = #tpu.dot_dimension_numbers<[1], [0], [0], [1], [0, 0, 1, 1], [], []>} : vector<32x32xf32>, vector<32x64xf32>, vector<32x64xf32> -> vector<32x64xf32>
    %c3_230 = arith.constant 3 : index
    %c0_231 = arith.constant 0 : index
    %c0_232 = arith.constant 0 : index
    %336 = vector.load %arg14[%c3_230, %c0_231, %c0_232] : memref<4x64x32xf32, #tpu.memory_space<vmem>>, vector<1x64x32xf32>
    %337 = vector.shape_cast %336 : vector<1x64x32xf32> to vector<64x32xf32>
    %cst_233 = arith.constant dense<0.000000e+00> : vector<32x32xf32>
    %338 = tpu.matmul %296, %337, %cst_233 {dimension_numbers = #tpu.dot_dimension_numbers<[1], [0], [0], [1], [0, 0, 1, 1], [], []>} : vector<32x64xf32>, vector<64x32xf32>, vector<32x32xf32> -> vector<32x32xf32>
    %c3_234 = arith.constant 3 : index
    %c0_235 = arith.constant 0 : index
    %c0_236 = arith.constant 0 : index
    %339 = vector.load %arg15[%c3_234, %c0_235, %c0_236] : memref<4x1x32xf32, #tpu.memory_space<vmem>>, vector<1x1x32xf32>
    %340 = vector.shape_cast %339 : vector<1x1x32xf32> to vector<1x32xf32>
    %341 = vector.broadcast %340 : vector<1x32xf32> to vector<32x32xf32>
    %342 = arith.addf %338, %341 : vector<32x32xf32>
    %c3_237 = arith.constant 3 : index
    %c0_238 = arith.constant 0 : index
    %c0_239 = arith.constant 0 : index
    %343 = vector.load %arg16[%c3_237, %c0_238, %c0_239] : memref<4x64x32xf32, #tpu.memory_space<vmem>>, vector<1x64x32xf32>
    %344 = vector.shape_cast %343 : vector<1x64x32xf32> to vector<64x32xf32>
    %cst_240 = arith.constant dense<0.000000e+00> : vector<32x32xf32>
    %345 = tpu.matmul %296, %344, %cst_240 {dimension_numbers = #tpu.dot_dimension_numbers<[1], [0], [0], [1], [0, 0, 1, 1], [], []>} : vector<32x64xf32>, vector<64x32xf32>, vector<32x32xf32> -> vector<32x32xf32>
    %c3_241 = arith.constant 3 : index
    %c0_242 = arith.constant 0 : index
    %c0_243 = arith.constant 0 : index
    %346 = vector.load %arg17[%c3_241, %c0_242, %c0_243] : memref<4x1x32xf32, #tpu.memory_space<vmem>>, vector<1x1x32xf32>
    %347 = vector.shape_cast %346 : vector<1x1x32xf32> to vector<1x32xf32>
    %348 = vector.broadcast %347 : vector<1x32xf32> to vector<32x32xf32>
    %349 = arith.addf %345, %348 : vector<32x32xf32>
    %c3_244 = arith.constant 3 : index
    %c0_245 = arith.constant 0 : index
    %c0_246 = arith.constant 0 : index
    %350 = vector.load %arg18[%c3_244, %c0_245, %c0_246] : memref<4x64x32xf32, #tpu.memory_space<vmem>>, vector<1x64x32xf32>
    %351 = vector.shape_cast %350 : vector<1x64x32xf32> to vector<64x32xf32>
    %cst_247 = arith.constant dense<0.000000e+00> : vector<32x32xf32>
    %352 = tpu.matmul %296, %351, %cst_247 {dimension_numbers = #tpu.dot_dimension_numbers<[1], [0], [0], [1], [0, 0, 1, 1], [], []>} : vector<32x64xf32>, vector<64x32xf32>, vector<32x32xf32> -> vector<32x32xf32>
    %c3_248 = arith.constant 3 : index
    %c0_249 = arith.constant 0 : index
    %c0_250 = arith.constant 0 : index
    %353 = vector.load %arg19[%c3_248, %c0_249, %c0_250] : memref<4x1x32xf32, #tpu.memory_space<vmem>>, vector<1x1x32xf32>
    %354 = vector.shape_cast %353 : vector<1x1x32xf32> to vector<1x32xf32>
    %355 = vector.broadcast %354 : vector<1x32xf32> to vector<32x32xf32>
    %356 = arith.addf %352, %355 : vector<32x32xf32>
    %cst_251 = arith.constant 0.176776692 : f32
    %357 = vector.broadcast %cst_251 : f32 to vector<32x32xf32>
    %358 = arith.mulf %342, %357 : vector<32x32xf32>
    %cst_252 = arith.constant dense<0.000000e+00> : vector<32x32xf32>
    %359 = tpu.matmul %358, %349, %cst_252 {dimension_numbers = #tpu.dot_dimension_numbers<[1], [1], [0], [0], [0, 0, 1, 0], [], []>} : vector<32x32xf32>, vector<32x32xf32>, vector<32x32xf32> -> vector<32x32xf32>
    %cst_253 = arith.constant dense<0xFF800000> : vector<32xf32>
    %360 = vector.multi_reduction <maximumf>, %359, %cst_253 [1] : vector<32x32xf32> to vector<32xf32>
    %361 = vector.shape_cast %360 : vector<32xf32> to vector<32x1xf32>
    %362 = vector.broadcast %361 : vector<32x1xf32> to vector<32x32xf32>
    %363 = arith.subf %359, %362 : vector<32x32xf32>
    %364 = math.exp %363 : vector<32x32xf32>
    %365 = arith.mulf %364, %32 : vector<32x32xf32>
    %cst_254 = arith.constant dense<0.000000e+00> : vector<32xf32>
    %366 = vector.multi_reduction <add>, %365, %cst_254 [1] : vector<32x32xf32> to vector<32xf32>
    %367 = vector.shape_cast %366 : vector<32xf32> to vector<32x1xf32>
    %368 = tpu.reciprocal %367 {approx = true} : vector<32x1xf32> -> vector<32x1xf32>
    %369 = vector.broadcast %368 : vector<32x1xf32> to vector<32x32xf32>
    %370 = arith.mulf %365, %369 : vector<32x32xf32>
    %cst_255 = arith.constant dense<0.000000e+00> : vector<32x32xf32>
    %371 = tpu.matmul %370, %356, %cst_255 {dimension_numbers = #tpu.dot_dimension_numbers<[1], [0], [0], [1], [0, 0, 1, 1], [], []>} : vector<32x32xf32>, vector<32x32xf32>, vector<32x32xf32> -> vector<32x32xf32>
    %c3_256 = arith.constant 3 : index
    %c0_257 = arith.constant 0 : index
    %c0_258 = arith.constant 0 : index
    %372 = vector.load %arg20[%c3_256, %c0_257, %c0_258] : memref<4x32x64xf32, #tpu.memory_space<vmem>>, vector<1x32x64xf32>
    %373 = vector.shape_cast %372 : vector<1x32x64xf32> to vector<32x64xf32>
    %cst_259 = arith.constant dense<0.000000e+00> : vector<32x64xf32>
    %374 = tpu.matmul %371, %373, %cst_259 {dimension_numbers = #tpu.dot_dimension_numbers<[1], [0], [0], [1], [0, 0, 1, 1], [], []>} : vector<32x32xf32>, vector<32x64xf32>, vector<32x64xf32> -> vector<32x64xf32>
    %375 = arith.addf %335, %374 : vector<32x64xf32>
    %c1_260 = arith.constant 1 : index
    %c0_261 = arith.constant 0 : index
    %c0_262 = arith.constant 0 : index
    %376 = vector.load %arg21[%c1_260, %c0_261, %c0_262] : memref<2x1x64xf32, #tpu.memory_space<vmem>>, vector<1x1x64xf32>
    %377 = vector.shape_cast %376 : vector<1x1x64xf32> to vector<1x64xf32>
    %378 = vector.broadcast %377 : vector<1x64xf32> to vector<32x64xf32>
    %379 = arith.addf %375, %378 : vector<32x64xf32>
    %380 = arith.mulf %253, %379 : vector<32x64xf32>
    %381 = arith.addf %232, %380 : vector<32x64xf32>
    %cst_263 = arith.constant dense<0.000000e+00> : vector<32xf32>
    %382 = vector.multi_reduction <add>, %381, %cst_263 [1] : vector<32x64xf32> to vector<32xf32>
    %383 = vector.shape_cast %382 : vector<32xf32> to vector<32x1xf32>
    %cst_264 = arith.constant 6.400000e+01 : f32
    %384 = vector.broadcast %cst_264 : f32 to vector<32x1xf32>
    %385 = arith.divf %383, %384 : vector<32x1xf32>
    %386 = vector.broadcast %385 : vector<32x1xf32> to vector<32x64xf32>
    %387 = arith.subf %381, %386 : vector<32x64xf32>
    %388 = arith.mulf %387, %387 : vector<32x64xf32>
    %cst_265 = arith.constant dense<0.000000e+00> : vector<32xf32>
    %389 = vector.multi_reduction <add>, %388, %cst_265 [1] : vector<32x64xf32> to vector<32xf32>
    %390 = vector.shape_cast %389 : vector<32xf32> to vector<32x1xf32>
    %cst_266 = arith.constant 6.400000e+01 : f32
    %391 = vector.broadcast %cst_266 : f32 to vector<32x1xf32>
    %392 = arith.divf %390, %391 : vector<32x1xf32>
    %393 = vector.broadcast %385 : vector<32x1xf32> to vector<32x64xf32>
    %394 = arith.subf %381, %393 : vector<32x64xf32>
    %cst_267 = arith.constant 9.99999997E-7 : f32
    %395 = vector.broadcast %cst_267 : f32 to vector<32x1xf32>
    %396 = arith.addf %392, %395 : vector<32x1xf32>
    %397 = math.rsqrt %396 : vector<32x1xf32>
    %398 = vector.broadcast %397 : vector<32x1xf32> to vector<32x64xf32>
    %399 = arith.mulf %394, %398 : vector<32x64xf32>
    %cst_268 = arith.constant 1.000000e+00 : f32
    %400 = vector.broadcast %cst_268 : f32 to vector<32x64xf32>
    %401 = arith.addf %400, %267 : vector<32x64xf32>
    %402 = arith.mulf %399, %401 : vector<32x64xf32>
    %403 = arith.addf %402, %260 : vector<32x64xf32>
    %c1_269 = arith.constant 1 : index
    %c0_270 = arith.constant 0 : index
    %c0_271 = arith.constant 0 : index
    %404 = vector.load %arg22[%c1_269, %c0_270, %c0_271] : memref<2x64x256xf32, #tpu.memory_space<vmem>>, vector<1x64x256xf32>
    %405 = vector.shape_cast %404 : vector<1x64x256xf32> to vector<64x256xf32>
    %cst_272 = arith.constant dense<0.000000e+00> : vector<32x256xf32>
    %406 = tpu.matmul %403, %405, %cst_272 {dimension_numbers = #tpu.dot_dimension_numbers<[1], [0], [0], [1], [0, 0, 1, 1], [], []>} : vector<32x64xf32>, vector<64x256xf32>, vector<32x256xf32> -> vector<32x256xf32>
    %c1_273 = arith.constant 1 : index
    %c0_274 = arith.constant 0 : index
    %c0_275 = arith.constant 0 : index
    %407 = vector.load %arg23[%c1_273, %c0_274, %c0_275] : memref<2x1x256xf32, #tpu.memory_space<vmem>>, vector<1x1x256xf32>
    %408 = vector.shape_cast %407 : vector<1x1x256xf32> to vector<1x256xf32>
    %409 = vector.broadcast %408 : vector<1x256xf32> to vector<32x256xf32>
    %410 = arith.addf %406, %409 : vector<32x256xf32>
    %cst_276 = arith.constant 5.000000e-01 : f32
    %411 = vector.broadcast %cst_276 : f32 to vector<32x256xf32>
    %412 = arith.mulf %411, %410 : vector<32x256xf32>
    %cst_277 = arith.constant 4.471500e-02 : f32
    %413 = vector.broadcast %cst_277 : f32 to vector<32x256xf32>
    %414 = arith.mulf %413, %410 : vector<32x256xf32>
    %415 = arith.mulf %414, %410 : vector<32x256xf32>
    %416 = arith.mulf %415, %410 : vector<32x256xf32>
    %417 = arith.addf %410, %416 : vector<32x256xf32>
    %cst_278 = arith.constant 0.797884583 : f32
    %418 = vector.broadcast %cst_278 : f32 to vector<32x256xf32>
    %419 = arith.mulf %418, %417 : vector<32x256xf32>
    %420 = math.tanh %419 : vector<32x256xf32>
    %cst_279 = arith.constant 1.000000e+00 : f32
    %421 = vector.broadcast %cst_279 : f32 to vector<32x256xf32>
    %422 = arith.addf %421, %420 : vector<32x256xf32>
    %423 = arith.mulf %412, %422 : vector<32x256xf32>
    %c1_280 = arith.constant 1 : index
    %c0_281 = arith.constant 0 : index
    %c0_282 = arith.constant 0 : index
    %424 = vector.load %arg24[%c1_280, %c0_281, %c0_282] : memref<2x256x64xf32, #tpu.memory_space<vmem>>, vector<1x256x64xf32>
    %425 = vector.shape_cast %424 : vector<1x256x64xf32> to vector<256x64xf32>
    %cst_283 = arith.constant dense<0.000000e+00> : vector<32x64xf32>
    %426 = tpu.matmul %423, %425, %cst_283 {dimension_numbers = #tpu.dot_dimension_numbers<[1], [0], [0], [1], [0, 0, 1, 1], [], []>} : vector<32x256xf32>, vector<256x64xf32>, vector<32x64xf32> -> vector<32x64xf32>
    %c1_284 = arith.constant 1 : index
    %c0_285 = arith.constant 0 : index
    %c0_286 = arith.constant 0 : index
    %427 = vector.load %arg25[%c1_284, %c0_285, %c0_286] : memref<2x1x64xf32, #tpu.memory_space<vmem>>, vector<1x1x64xf32>
    %428 = vector.shape_cast %427 : vector<1x1x64xf32> to vector<1x64xf32>
    %429 = vector.broadcast %428 : vector<1x64xf32> to vector<32x64xf32>
    %430 = arith.addf %426, %429 : vector<32x64xf32>
    %431 = arith.mulf %274, %430 : vector<32x64xf32>
    %432 = arith.addf %381, %431 : vector<32x64xf32>
    %c0_287 = arith.constant 0 : index
    %c0_288 = arith.constant 0 : index
    %c0_289 = arith.constant 0 : index
    %433 = vector.load %arg26[%c0_287, %c0_288, %c0_289] : memref<2x64x64xf32, #tpu.memory_space<vmem>>, vector<1x64x64xf32>
    %434 = vector.shape_cast %433 : vector<1x64x64xf32> to vector<64x64xf32>
    %cst_290 = arith.constant dense<0.000000e+00> : vector<32x64xf32>
    %435 = tpu.matmul %31, %434, %cst_290 {dimension_numbers = #tpu.dot_dimension_numbers<[1], [0], [0], [1], [0, 0, 1, 1], [], []>} : vector<32x64xf32>, vector<64x64xf32>, vector<32x64xf32> -> vector<32x64xf32>
    %c0_291 = arith.constant 0 : index
    %c0_292 = arith.constant 0 : index
    %c0_293 = arith.constant 0 : index
    %436 = vector.load %arg27[%c0_291, %c0_292, %c0_293] : memref<2x1x64xf32, #tpu.memory_space<vmem>>, vector<1x1x64xf32>
    %437 = vector.shape_cast %436 : vector<1x1x64xf32> to vector<1x64xf32>
    %438 = vector.broadcast %437 : vector<1x64xf32> to vector<32x64xf32>
    %439 = arith.addf %435, %438 : vector<32x64xf32>
    %c1_294 = arith.constant 1 : index
    %c0_295 = arith.constant 0 : index
    %c0_296 = arith.constant 0 : index
    %440 = vector.load %arg26[%c1_294, %c0_295, %c0_296] : memref<2x64x64xf32, #tpu.memory_space<vmem>>, vector<1x64x64xf32>
    %441 = vector.shape_cast %440 : vector<1x64x64xf32> to vector<64x64xf32>
    %cst_297 = arith.constant dense<0.000000e+00> : vector<32x64xf32>
    %442 = tpu.matmul %31, %441, %cst_297 {dimension_numbers = #tpu.dot_dimension_numbers<[1], [0], [0], [1], [0, 0, 1, 1], [], []>} : vector<32x64xf32>, vector<64x64xf32>, vector<32x64xf32> -> vector<32x64xf32>
    %c1_298 = arith.constant 1 : index
    %c0_299 = arith.constant 0 : index
    %c0_300 = arith.constant 0 : index
    %443 = vector.load %arg27[%c1_298, %c0_299, %c0_300] : memref<2x1x64xf32, #tpu.memory_space<vmem>>, vector<1x1x64xf32>
    %444 = vector.shape_cast %443 : vector<1x1x64xf32> to vector<1x64xf32>
    %445 = vector.broadcast %444 : vector<1x64xf32> to vector<32x64xf32>
    %446 = arith.addf %442, %445 : vector<32x64xf32>
    %cst_301 = arith.constant dense<0.000000e+00> : vector<32xf32>
    %447 = vector.multi_reduction <add>, %432, %cst_301 [1] : vector<32x64xf32> to vector<32xf32>
    %448 = vector.shape_cast %447 : vector<32xf32> to vector<32x1xf32>
    %cst_302 = arith.constant 6.400000e+01 : f32
    %449 = vector.broadcast %cst_302 : f32 to vector<32x1xf32>
    %450 = arith.divf %448, %449 : vector<32x1xf32>
    %451 = vector.broadcast %450 : vector<32x1xf32> to vector<32x64xf32>
    %452 = arith.subf %432, %451 : vector<32x64xf32>
    %453 = arith.mulf %452, %452 : vector<32x64xf32>
    %cst_303 = arith.constant dense<0.000000e+00> : vector<32xf32>
    %454 = vector.multi_reduction <add>, %453, %cst_303 [1] : vector<32x64xf32> to vector<32xf32>
    %455 = vector.shape_cast %454 : vector<32xf32> to vector<32x1xf32>
    %cst_304 = arith.constant 6.400000e+01 : f32
    %456 = vector.broadcast %cst_304 : f32 to vector<32x1xf32>
    %457 = arith.divf %455, %456 : vector<32x1xf32>
    %458 = vector.broadcast %450 : vector<32x1xf32> to vector<32x64xf32>
    %459 = arith.subf %432, %458 : vector<32x64xf32>
    %cst_305 = arith.constant 9.99999997E-7 : f32
    %460 = vector.broadcast %cst_305 : f32 to vector<32x1xf32>
    %461 = arith.addf %457, %460 : vector<32x1xf32>
    %462 = math.rsqrt %461 : vector<32x1xf32>
    %463 = vector.broadcast %462 : vector<32x1xf32> to vector<32x64xf32>
    %464 = arith.mulf %459, %463 : vector<32x64xf32>
    %cst_306 = arith.constant 1.000000e+00 : f32
    %465 = vector.broadcast %cst_306 : f32 to vector<32x64xf32>
    %466 = arith.addf %465, %446 : vector<32x64xf32>
    %467 = arith.mulf %464, %466 : vector<32x64xf32>
    %468 = arith.addf %467, %439 : vector<32x64xf32>
    %c0_307 = arith.constant 0 : index
    %c0_308 = arith.constant 0 : index
    %469 = vector.load %arg28[%c0_307, %c0_308] : memref<64x128xf32, #tpu.memory_space<vmem>>, vector<64x128xf32>
    %cst_309 = arith.constant dense<0.000000e+00> : vector<32x128xf32>
    %470 = tpu.matmul %468, %469, %cst_309 {dimension_numbers = #tpu.dot_dimension_numbers<[1], [0], [0], [1], [0, 0, 1, 1], [], []>} : vector<32x64xf32>, vector<64x128xf32>, vector<32x128xf32> -> vector<32x128xf32>
    %c0_310 = arith.constant 0 : index
    %c0_311 = arith.constant 0 : index
    %471 = vector.load %arg29[%c0_310, %c0_311] : memref<1x128xf32, #tpu.memory_space<vmem>>, vector<1x128xf32>
    %472 = vector.broadcast %471 : vector<1x128xf32> to vector<32x128xf32>
    %473 = arith.addf %470, %472 : vector<32x128xf32>
    %c0_312 = arith.constant 0 : index
    %c0_313 = arith.constant 0 : index
    %474 = vector.load %arg30[%c0_312, %c0_313] : memref<32x128xf32, #tpu.memory_space<vmem>>, vector<32x128xf32>
    tpu.vector_store %arg30[%c0_312, %c0_313], %473 {strides = array<i32>} : memref<32x128xf32, #tpu.memory_space<vmem>>, vector<32x128xf32>,
    return
  }
}

</mosaic_0001>

<llo_original>
// kernel: diffusion_forward.1
$region0: #{diffusion_forward.1}
  #allocation0 [shape = 'u32[]', space=smem, size = 0x4, offset = 0x4, fixed_abs, tag = 'smem constant byte address 0x4 - core index']
  #allocation1 [shape = 'u32[144,128]{1,0:T(1,128)}', space=vmem, size = 0x12000, scoped, tag = 'internal scratch']
  %s0 = inlined_call_operand.smem [shape: u32[31], index: -1, kind: input, shape index: {}]
  %s1 = sld [smem:[%s0]]
  %s2 = scalar_lea.smem %s0, 1
  %s3 = sld [smem:[%s2]]
  %s4 = scalar_lea.smem %s0, 2
  %s5 = sld [smem:[%s4]]
  %s6 = scalar_lea.smem %s0, 3
  %s7 = sld [smem:[%s6]]
  %s8 = scalar_lea.smem %s0, 4
  %s9 = sld [smem:[%s8]]
  %s10 = scalar_lea.smem %s0, 5
  %s11 = sld [smem:[%s10]]
  %s12 = scalar_lea.smem %s0, 6
  %s13 = sld [smem:[%s12]]
  %s14 = scalar_lea.smem %s0, 7
  %s15 = sld [smem:[%s14]]
  %s16 = scalar_lea.smem %s0, 8
  %s17 = sld [smem:[%s16]]
  %s18 = scalar_lea.smem %s0, 9
  %s19 = sld [smem:[%s18]]
  %s20 = scalar_lea.smem %s0, 10
  %s21 = sld [smem:[%s20]]
  %s22 = scalar_lea.smem %s0, 11
  %s23 = sld [smem:[%s22]]
  %s24 = scalar_lea.smem %s0, 12
  %s25 = sld [smem:[%s24]]
  %s26 = scalar_lea.smem %s0, 13
  %s27 = sld [smem:[%s26]]
  %s28 = scalar_lea.smem %s0, 14
  %s29 = sld [smem:[%s28]]
  %s30 = scalar_lea.smem %s0, 15
  %s31 = sld [smem:[%s30]]
  %s32 = scalar_lea.smem %s0, 16
  %s33 = sld [smem:[%s32]]
  %s34 = scalar_lea.smem %s0, 17
  %s35 = sld [smem:[%s34]]
  %s36 = scalar_lea.smem %s0, 18
  %s37 = sld [smem:[%s36]]
  %s38 = scalar_lea.smem %s0, 19
  %s39 = sld [smem:[%s38]]
  %s40 = scalar_lea.smem %s0, 20
  %s41 = sld [smem:[%s40]]
  %s42 = scalar_lea.smem %s0, 21
  %s43 = sld [smem:[%s42]]
  %s44 = scalar_lea.smem %s0, 22
  %s45 = sld [smem:[%s44]]
  %s46 = scalar_lea.smem %s0, 23
  %s47 = sld [smem:[%s46]]
  %s48 = scalar_lea.smem %s0, 24
  %s49 = sld [smem:[%s48]]
  %s50 = scalar_lea.smem %s0, 25
  %s51 = sld [smem:[%s50]]
  %s52 = scalar_lea.smem %s0, 26
  %s53 = sld [smem:[%s52]]
  %s54 = scalar_lea.smem %s0, 27
  %s55 = sld [smem:[%s54]]
  %s56 = scalar_lea.smem %s0, 28
  %s57 = sld [smem:[%s56]]
  %s58 = scalar_lea.smem %s0, 29
  %s59 = sld [smem:[%s58]]
  %s60 = scalar_lea.smem %s0, 30
  %s61 = sld [smem:[%s60]]
  %s62 = sld [smem:[#allocation0]]
  $region158: #{diffusion_forward.1} parent=0
    _
  %s64 = ssub.s32 1, %s62
  %s65 = scalar_select 0, %s64, %s62
  $region1: #{diffusion_forward.1} parent=0
    #allocation2 [shape = 'u8[512]{0}', space=vmem, size = 0x400, scoped, tag = 'input window, operand 7, single buffered']
    #allocation3 [shape = 's32[1]{0}', space=sflag, size = 0x4, scoped, tag = 'scoped memory for diffusion_forward.1']
    #allocation4 [shape = 'u8[512]{0}', space=vmem, size = 0x400, scoped, tag = 'input window, operand 9, single buffered']
    #allocation5 [shape = 's32[1]{0}', space=sflag, size = 0x4, scoped, tag = 'scoped memory for diffusion_forward.1']
    #allocation6 [shape = 'u8[512]{0}', space=vmem, size = 0x400, scoped, tag = 'input window, operand 11, single buffered']
    #allocation7 [shape = 'u8[2048]{0}', space=vmem, size = 0x800, scoped, tag = 'input window, operand 23, single buffered']
    #allocation8 [shape = 's32[1]{0}', space=sflag, size = 0x4, scoped, tag = 'scoped memory for diffusion_forward.1']
    #allocation9 [shape = 'u8[1024]{0}', space=vmem, size = 0x400, scoped, tag = 'input window, operand 25, single buffered']
    #allocation10 [shape = 'u8[1024]{0}', space=vmem, size = 0x400, scoped, tag = 'input window, operand 27, single buffered']
    #allocation11 [shape = 's32[1]{0}', space=sflag, size = 0x4, scoped, tag = 'scoped memory for diffusion_forward.1']
    #allocation12 [shape = 'u8[512]{0}', space=vmem, size = 0x400, scoped, tag = 'input window, operand 29, single buffered']
    %66 = vsyncpa [#allocation3], 0
    %67 = vsyncpa [#allocation5], 0
    %68 = vsyncpa [#allocation8], 0
    %69 = vsyncpa [#allocation11], 0
    // Predicated region
    $region2: #{diffusion_forward.1} parent=1 // pred_check
      _
    $region3: #{diffusion_forward.1} parent=1 // pred_check_branch
      %71 = sbr.rel (0) target = $region5
    $region4: #{diffusion_forward.1} parent=1 // pred_region
      _
    $region5: #{diffusion_forward.1} parent=1 // pred_fallthru
      _
    // Predicated region
    $region6: #{diffusion_forward.1} parent=1 // pred_check
      _
    $region7: #{diffusion_forward.1} parent=1 // pred_check_branch
      %73 = sbr.rel (0) target = $region9
    $region8: #{diffusion_forward.1} parent=1 // pred_region
      _
    $region9: #{diffusion_forward.1} parent=1 // pred_fallthru
      _
    // Predicated region
    $region10: #{diffusion_forward.1} parent=1 // pred_check
      _
    $region11: #{diffusion_forward.1} parent=1 // pred_check_branch
      %75 = sbr.rel (0) target = $region13
    $region12: #{diffusion_forward.1} parent=1 // pred_region
      _
    $region13: #{diffusion_forward.1} parent=1 // pred_fallthru
      _
    // Predicated region
    $region14: #{diffusion_forward.1} parent=1 // pred_check
      _
    $region15: #{diffusion_forward.1} parent=1 // pred_check_branch
      %77 = sbr.rel (0) target = $region17
    $region16: #{diffusion_forward.1} parent=1 // pred_region
      _
    $region17: #{diffusion_forward.1} parent=1 // pred_fallthru
      _
    // Predicated region
    $region18: #{diffusion_forward.1} parent=1 // pred_check
      _
    $region19: #{diffusion_forward.1} parent=1 // pred_check_branch
      %79 = sbr.rel (0) target = $region21
    $region20: #{diffusion_forward.1} parent=1 // pred_region
      _
    $region21: #{diffusion_forward.1} parent=1 // pred_fallthru
      _
    // Predicated region
    $region22: #{diffusion_forward.1} parent=1 // pred_check
      _
    $region23: #{diffusion_forward.1} parent=1 // pred_check_branch
      %81 = sbr.rel (0) target = $region25
    $region24: #{diffusion_forward.1} parent=1 // pred_region
      _
    $region25: #{diffusion_forward.1} parent=1 // pred_fallthru
      _
    // Predicated region
    $region26: #{diffusion_forward.1} parent=1 // pred_check
      _
    $region27: #{diffusion_forward.1} parent=1 // pred_check_branch
      %83 = sbr.rel (0) target = $region29
    $region28: #{diffusion_forward.1} parent=1 // pred_region
      _
    $region29: #{diffusion_forward.1} parent=1 // pred_fallthru
      _
    // Predicated region
    $region30: #{diffusion_forward.1} parent=1 // pred_check
      _
    $region31: #{diffusion_forward.1} parent=1 // pred_check_branch
      %85 = sbr.rel (0) target = $region33
    $region32: #{diffusion_forward.1} parent=1 // pred_region
      %s87 = ssub.s32 16, 16
      %88 = vsyncadd [#allocation3], %s87
      %s90 = sshll.u32 [#allocation2], 4
      %s91 = int_to_ptr.vmem [resolvable:$true] %s90
      %93 = dma.hbm_to_vmem [thread:$0]  %s15, 16, %s91, [#allocation3]
    $region33: #{diffusion_forward.1} parent=1 // pred_fallthru
      _
    // Predicated region
    $region34: #{diffusion_forward.1} parent=1 // pred_check
      _
    $region35: #{diffusion_forward.1} parent=1 // pred_check_branch
      %95 = sbr.rel (0) target = $region37
    $region36: #{diffusion_forward.1} parent=1 // pred_region
      _
    $region37: #{diffusion_forward.1} parent=1 // pred_fallthru
      _
    // Predicated region
    $region38: #{diffusion_forward.1} parent=1 // pred_check
      _
    $region39: #{diffusion_forward.1} parent=1 // pred_check_branch
      %97 = sbr.rel (0) target = $region41
    $region40: #{diffusion_forward.1} parent=1 // pred_region
      %s99 = ssub.s32 16, 16
      %100 = vsyncadd [#allocation5], %s99
      %s102 = sshll.u32 [#allocation4], 4
      %s103 = int_to_ptr.vmem [resolvable:$true] %s102
      %105 = dma.hbm_to_vmem [thread:$0]  %s19, 16, %s103, [#allocation5]
    $region41: #{diffusion_forward.1} parent=1 // pred_fallthru
      _
    // Predicated region
    $region42: #{diffusion_forward.1} parent=1 // pred_check
      _
    $region43: #{diffusion_forward.1} parent=1 // pred_check_branch
      %107 = sbr.rel (0) target = $region45
    $region44: #{diffusion_forward.1} parent=1 // pred_region
      _
    $region45: #{diffusion_forward.1} parent=1 // pred_fallthru
      _
    // Predicated region
    $region46: #{diffusion_forward.1} parent=1 // pred_check
      _
    $region47: #{diffusion_forward.1} parent=1 // pred_check_branch
      %109 = sbr.rel (0) target = $region49
    $region48: #{diffusion_forward.1} parent=1 // pred_region
      %s111 = ssub.s32 16, 16
      %112 = vsyncadd [#allocation5], %s111
      %s114 = sshll.u32 [#allocation6], 4
      %s115 = int_to_ptr.vmem [resolvable:$true] %s114
      %117 = dma.hbm_to_vmem [thread:$0]  %s23, 16, %s115, [#allocation5]
    $region49: #{diffusion_forward.1} parent=1 // pred_fallthru
      _
    // Predicated region
    $region50: #{diffusion_forward.1} parent=1 // pred_check
      _
    $region51: #{diffusion_forward.1} parent=1 // pred_check_branch
      %119 = sbr.rel (0) target = $region53
    $region52: #{diffusion_forward.1} parent=1 // pred_region
      _
    $region53: #{diffusion_forward.1} parent=1 // pred_fallthru
      _
    // Predicated region
    $region54: #{diffusion_forward.1} parent=1 // pred_check
      _
    $region55: #{diffusion_forward.1} parent=1 // pred_check_branch
      %121 = sbr.rel (0) target = $region57
    $region56: #{diffusion_forward.1} parent=1 // pred_region
      _
    $region57: #{diffusion_forward.1} parent=1 // pred_fallthru
      _
    // Predicated region
    $region58: #{diffusion_forward.1} parent=1 // pred_check
      _
    $region59: #{diffusion_forward.1} parent=1 // pred_check_branch
      %123 = sbr.rel (0) target = $region61
    $region60: #{diffusion_forward.1} parent=1 // pred_region
      _
    $region61: #{diffusion_forward.1} parent=1 // pred_fallthru
      _
    // Predicated region
    $region62: #{diffusion_forward.1} parent=1 // pred_check
      _
    $region63: #{diffusion_forward.1} parent=1 // pred_check_branch
      %125 = sbr.rel (0) target = $region65
    $region64: #{diffusion_forward.1} parent=1 // pred_region
      _
    $region65: #{diffusion_forward.1} parent=1 // pred_fallthru
      _
    // Predicated region
    $region66: #{diffusion_forward.1} parent=1 // pred_check
      _
    $region67: #{diffusion_forward.1} parent=1 // pred_check_branch
      %127 = sbr.rel (0) target = $region69
    $region68: #{diffusion_forward.1} parent=1 // pred_region
      _
    $region69: #{diffusion_forward.1} parent=1 // pred_fallthru
      _
    // Predicated region
    $region70: #{diffusion_forward.1} parent=1 // pred_check
      _
    $region71: #{diffusion_forward.1} parent=1 // pred_check_branch
      %129 = sbr.rel (0) target = $region73
    $region72: #{diffusion_forward.1} parent=1 // pred_region
      _
    $region73: #{diffusion_forward.1} parent=1 // pred_fallthru
      _
    // Predicated region
    $region74: #{diffusion_forward.1} parent=1 // pred_check
      _
    $region75: #{diffusion_forward.1} parent=1 // pred_check_branch
      %131 = sbr.rel (0) target = $region77
    $region76: #{diffusion_forward.1} parent=1 // pred_region
      _
    $region77: #{diffusion_forward.1} parent=1 // pred_fallthru
      _
    // Predicated region
    $region78: #{diffusion_forward.1} parent=1 // pred_check
      _
    $region79: #{diffusion_forward.1} parent=1 // pred_check_branch
      %133 = sbr.rel (0) target = $region81
    $region80: #{diffusion_forward.1} parent=1 // pred_region
      _
    $region81: #{diffusion_forward.1} parent=1 // pred_fallthru
      _
    // Predicated region
    $region82: #{diffusion_forward.1} parent=1 // pred_check
      _
    $region83: #{diffusion_forward.1} parent=1 // pred_check_branch
      %135 = sbr.rel (0) target = $region85
    $region84: #{diffusion_forward.1} parent=1 // pred_region
      _
    $region85: #{diffusion_forward.1} parent=1 // pred_fallthru
      _
    // Predicated region
    $region86: #{diffusion_forward.1} parent=1 // pred_check
      _
    $region87: #{diffusion_forward.1} parent=1 // pred_check_branch
      %137 = sbr.rel (0) target = $region89
    $region88: #{diffusion_forward.1} parent=1 // pred_region
      _
    $region89: #{diffusion_forward.1} parent=1 // pred_fallthru
      _
    // Predicated region
    $region90: #{diffusion_forward.1} parent=1 // pred_check
      _
    $region91: #{diffusion_forward.1} parent=1 // pred_check_branch
      %139 = sbr.rel (0) target = $region93
    $region92: #{diffusion_forward.1} parent=1 // pred_region
      _
    $region93: #{diffusion_forward.1} parent=1 // pred_fallthru
      _
    // Predicated region
    $region94: #{diffusion_forward.1} parent=1 // pred_check
      _
    $region95: #{diffusion_forward.1} parent=1 // pred_check_branch
      %141 = sbr.rel (0) target = $region97
    $region96: #{diffusion_forward.1} parent=1 // pred_region
      %s143 = ssub.s32 64, 64
      %144 = vsyncadd [#allocation8], %s143
      %s145 = sshll.u32 [#allocation7], 4
      %s146 = int_to_ptr.vmem [resolvable:$true] %s145
      %151 = dma.hbm_to_vmem [thread:$0]  %s47, 64, %s146, [#allocation8], 32, 32, 2
    $region97: #{diffusion_forward.1} parent=1 // pred_fallthru
      _
    // Predicated region
    $region98: #{diffusion_forward.1} parent=1 // pred_check
      _
    $region99: #{diffusion_forward.1} parent=1 // pred_check_branch
      %153 = sbr.rel (0) target = $region101
    $region100: #{diffusion_forward.1} parent=1 // pred_region
      _
    $region101: #{diffusion_forward.1} parent=1 // pred_fallthru
      _
    // Predicated region
    $region102: #{diffusion_forward.1} parent=1 // pred_check
      _
    $region103: #{diffusion_forward.1} parent=1 // pred_check_branch
      %155 = sbr.rel (0) target = $region105
    $region104: #{diffusion_forward.1} parent=1 // pred_region
      %s157 = ssub.s32 32, 32
      %158 = vsyncadd [#allocation8], %s157
      %s159 = sshll.u32 [#allocation9], 4
      %s160 = int_to_ptr.vmem [resolvable:$true] %s159
      %165 = dma.hbm_to_vmem [thread:$0]  %s51, 32, %s160, [#allocation8], 16, 16, 1
    $region105: #{diffusion_forward.1} parent=1 // pred_fallthru
      _
    // Predicated region
    $region106: #{diffusion_forward.1} parent=1 // pred_check
      _
    $region107: #{diffusion_forward.1} parent=1 // pred_check_branch
      %167 = sbr.rel (0) target = $region109
    $region108: #{diffusion_forward.1} parent=1 // pred_region
      _
    $region109: #{diffusion_forward.1} parent=1 // pred_fallthru
      _
    // Predicated region
    $region110: #{diffusion_forward.1} parent=1 // pred_check
      _
    $region111: #{diffusion_forward.1} parent=1 // pred_check_branch
      %169 = sbr.rel (0) target = $region113
    $region112: #{diffusion_forward.1} parent=1 // pred_region
      %s171 = ssub.s32 32, 32
      %172 = vsyncadd [#allocation11], %s171
      %s173 = sshll.u32 [#allocation10], 4
      %s174 = int_to_ptr.vmem [resolvable:$true] %s173
      %179 = dma.hbm_to_vmem [thread:$0]  %s55, 32, %s174, [#allocation11], 16, 16, 1
    $region113: #{diffusion_forward.1} parent=1 // pred_fallthru
      _
    // Predicated region
    $region114: #{diffusion_forward.1} parent=1 // pred_check
      _
    $region115: #{diffusion_forward.1} parent=1 // pred_check_branch
      %181 = sbr.rel (0) target = $region117
    $region116: #{diffusion_forward.1} parent=1 // pred_region
      _
    $region117: #{diffusion_forward.1} parent=1 // pred_fallthru
      _
    // Predicated region
    $region118: #{diffusion_forward.1} parent=1 // pred_check
      _
    $region119: #{diffusion_forward.1} parent=1 // pred_check_branch
      %183 = sbr.rel (0) target = $region121
    $region120: #{diffusion_forward.1} parent=1 // pred_region
      %s185 = ssub.s32 16, 16
      %186 = vsyncadd [#allocation11], %s185
      %s188 = sshll.u32 [#allocation12], 4
      %s189 = int_to_ptr.vmem [resolvable:$true] %s188
      %191 = dma.hbm_to_vmem [thread:$0]  %s59, 16, %s189, [#allocation11]
    $region121: #{diffusion_forward.1} parent=1 // pred_fallthru
      _
    // Predicated region
    $region122: #{diffusion_forward.1} parent=1 // pred_check
      _
    $region123: #{diffusion_forward.1} parent=1 // pred_check_branch
      %193 = sbr.rel (0) target = $region125
    $region124: #{diffusion_forward.1} parent=1 // pred_region
      %194 = dma.done [#allocation3], 16
    $region125: #{diffusion_forward.1} parent=1 // pred_fallthru
      _
    // Predicated region
    $region126: #{diffusion_forward.1} parent=1 // pred_check
      _
    $region127: #{diffusion_forward.1} parent=1 // pred_check_branch
      %196 = sbr.rel (0) target = $region129
    $region128: #{diffusion_forward.1} parent=1 // pred_region
      %197 = dma.done [#allocation5], 16
    $region129: #{diffusion_forward.1} parent=1 // pred_fallthru
      _
    // Predicated region
    $region130: #{diffusion_forward.1} parent=1 // pred_check
      _
    $region131: #{diffusion_forward.1} parent=1 // pred_check_branch
      %199 = sbr.rel (0) target = $region133
    $region132: #{diffusion_forward.1} parent=1 // pred_region
      %200 = dma.done [#allocation5], 16
    $region133: #{diffusion_forward.1} parent=1 // pred_fallthru
      _
    // Predicated region
    $region134: #{diffusion_forward.1} parent=1 // pred_check
      _
    $region135: #{diffusion_forward.1} parent=1 // pred_check_branch
      %202 = sbr.rel (0) target = $region137
    $region136: #{diffusion_forward.1} parent=1 // pred_region
      %203 = dma.done [#allocation8], 64
    $region137: #{diffusion_forward.1} parent=1 // pred_fallthru
      _
    // Predicated region
    $region138: #{diffusion_forward.1} parent=1 // pred_check
      _
    $region139: #{diffusion_forward.1} parent=1 // pred_check_branch
      %205 = sbr.rel (0) target = $region141
    $region140: #{diffusion_forward.1} parent=1 // pred_region
      %206 = dma.done [#allocation8], 32
    $region141: #{diffusion_forward.1} parent=1 // pred_fallthru
      _
    // Predicated region
    $region142: #{diffusion_forward.1} parent=1 // pred_check
      _
    $region143: #{diffusion_forward.1} parent=1 // pred_check_branch
      %208 = sbr.rel (0) target = $region145
    $region144: #{diffusion_forward.1} parent=1 // pred_region
      %209 = dma.done [#allocation11], 32
    $region145: #{diffusion_forward.1} parent=1 // pred_fallthru
      _
    // Predicated region
    $region146: #{diffusion_forward.1} parent=1 // pred_check
      _
    $region147: #{diffusion_forward.1} parent=1 // pred_check_branch
      %211 = sbr.rel (0) target = $region149
    $region148: #{diffusion_forward.1} parent=1 // pred_region
      %212 = dma.done [#allocation11], 16
    $region149: #{diffusion_forward.1} parent=1 // pred_fallthru
      _
    %v213 = vld [vmem:[%s1] sm:$0xff]
    %v214 = vld [vmem:[%s1 + $0x8] sm:$0xff]
    %v215 = vld [vmem:[%s1 + $0x10] sm:$0xff]
    %v216 = vld [vmem:[%s1 + $0x18] sm:$0xff]
    %v217 = vld [vmem:[%s13] sm:$0xff]
    %v218 = vld [vmem:[#allocation2] sm:$0x1]
    %v220 = vlaneseq
    %v221 = vshrl.u32 %v220, 7
    %v222 = vsub.s32 0, %v221
    %v223 = vrot.slane %v218, %v222
    %vm225 = vcmask 64512
    %v227 = vsel %vm225, %v213, 0
    %v230 = vsel %vm225, %v214, 0
    %v233 = vsel %vm225, %v215, 0
    %v236 = vsel %vm225, %v216, 0
    %238 = vmatprep.subr.mxu0 0.0
    %239 = vmatpush1.msra.mxu0 %v217
    %240 = vmatprep.subr.mxu0 0.0
    %241 = vmatpush1.msra.mxu0 0.0
    %242 = vmatprep.subr.mxu0 0.0
    %243 = vmatpush1.msra.mxu0 0.0
    %244 = vmatprep.subr.mxu0 0.0
    %245 = vmatpush1.msra.mxu0 0.0
    %246 = vmatprep.subr.mxu0 0.0
    %247 = vmatpush1.msra.mxu0 0.0
    %248 = vmatprep.subr.mxu0 0.0
    %249 = vmatpush1.msra.mxu0 0.0
    %250 = vmatprep.subr.mxu0 0.0
    %251 = vmatpush1.msra.mxu0 0.0
    %252 = vmatprep.subr.mxu0 0.0
    %253 = vmatpush1.msra.mxu0 0.0
    %254 = vmatprep.subr.mxu0 0.0
    %255 = vmatpush1.msra.mxu0 0.0
    %256 = vmatprep.subr.mxu0 0.0
    %257 = vmatpush1.msra.mxu0 0.0
    %258 = vmatprep.subr.mxu0 0.0
    %259 = vmatpush1.msra.mxu0 0.0
    %260 = vmatprep.subr.mxu0 0.0
    %261 = vmatpush1.msra.mxu0 0.0
    %262 = vmatprep.subr.mxu0 0.0
    %263 = vmatpush1.msra.mxu0 0.0
    %264 = vmatprep.subr.mxu0 0.0
    %265 = vmatpush1.msra.mxu0 0.0
    %266 = vmatprep.subr.mxu0 0.0
    %267 = vmatpush1.msra.mxu0 0.0
    %268 = vmatprep.subr.mxu0 0.0
    %269 = vmatpush1.msra.mxu0 0.0
    %270 = vmatprep.subr.mxu0 0.0
    %271 = vmatpush1.msra.mxu0 0.0
    %272 = vmatprep.subr.mxu0 0.0
    %273 = vmatpush1.msra.mxu0 0.0
    %274 = vmatprep.subr.mxu0 0.0
    %275 = vmatpush1.msra.mxu0 0.0
    %276 = vmatprep.subr.mxu0 0.0
    %277 = vmatpush1.msra.mxu0 0.0
    %278 = vmatprep.subr.mxu0 0.0
    %279 = vmatpush1.msra.mxu0 0.0
    %280 = vmatprep.subr.mxu0 0.0
    %281 = vmatpush1.msra.mxu0 0.0
    %282 = vmatprep.subr.mxu0 0.0
    %283 = vmatpush1.msra.mxu0 0.0
    %284 = vmatprep.subr.mxu0 0.0
    %285 = vmatpush1.msra.mxu0 0.0
    %286 = vmatprep.subr.mxu0 0.0
    %287 = vmatpush1.msra.mxu0 0.0
    %288 = vmatprep.subr.mxu0 0.0
    %289 = vmatpush1.msra.mxu0 0.0
    %290 = vmatprep.subr.mxu0 0.0
    %291 = vmatpush1.msra.mxu0 0.0
    %292 = vmatprep.subr.mxu0 0.0
    %293 = vmatpush1.msra.mxu0 0.0
    %294 = vmatprep.subr.mxu0 0.0
    %295 = vmatpush1.msra.mxu0 0.0
    %296 = vmatprep.subr.mxu0 0.0
    %297 = vmatpush1.msra.mxu0 0.0
    %298 = vmatprep.subr.mxu0 0.0
    %299 = vmatpush1.msra.mxu0 0.0
    %300 = vmatprep.subr.mxu0 0.0
    %301 = vmatpush1.msra.mxu0 0.0
    %302 = vmatprep.mubr.f32.mxu0 0.0
    %303 = vmatmul.mubr.f32.gmra.mrb[0].mxu0 %v227
    %v304 = vpop.f32.mrb[0].mxu0
    %v305 = vadd.f32 %v223, %v304
    %v306 = vpop.f32.mrb[0].mxu0
    %307 = vmatprep.mubr.f32.mxu0 0.0
    %308 = vmatmul.mubr.f32.gmra.mrb[0].mxu0 %v230
    %v309 = vpop.f32.mrb[0].mxu0
    %v310 = vadd.f32 %v223, %v309
    %v311 = vpop.f32.mrb[0].mxu0
    %312 = vmatprep.mubr.f32.mxu0 0.0
    %313 = vmatmul.mubr.f32.gmra.mrb[0].mxu0 %v233
    %v314 = vpop.f32.mrb[0].mxu0
    %v315 = vadd.f32 %v223, %v314
    %v316 = vpop.f32.mrb[0].mxu0
    %317 = vmatprep.mubr.f32.mxu0 0.0
    %318 = vmatmul.mubr.f32.gmra.mrb[0].mxu0 %v236
    %v319 = vpop.f32.mrb[0].mxu0
    %v320 = vadd.f32 %v223, %v319
    %v321 = vpop.f32.mrb[0].mxu0
    %322 = vdwg.mxu0
    %v323 = vld [vmem:[%s17] sm:$0xff]
    %v324 = vld [vmem:[#allocation4] sm:$0x1]
    %v326 = vlaneseq
    %v327 = vshrl.u32 %v326, 7
    %v328 = vsub.s32 0, %v327
    %v329 = vrot.slane %v324, %v328
    %331 = vmatprep.subr.mxu0 0.0
    %332 = vmatpush1.msra.mxu0 %v323
    %333 = vmatprep.subr.mxu0 0.0
    %334 = vmatpush1.msra.mxu0 0.0
    %335 = vmatprep.subr.mxu0 0.0
    %336 = vmatpush1.msra.mxu0 0.0
    %337 = vmatprep.subr.mxu0 0.0
    %338 = vmatpush1.msra.mxu0 0.0
    %339 = vmatprep.subr.mxu0 0.0
    %340 = vmatpush1.msra.mxu0 0.0
    %341 = vmatprep.subr.mxu0 0.0
    %342 = vmatpush1.msra.mxu0 0.0
    %343 = vmatprep.subr.mxu0 0.0
    %344 = vmatpush1.msra.mxu0 0.0
    %345 = vmatprep.subr.mxu0 0.0
    %346 = vmatpush1.msra.mxu0 0.0
    %347 = vmatprep.subr.mxu0 0.0
    %348 = vmatpush1.msra.mxu0 0.0
    %349 = vmatprep.subr.mxu0 0.0
    %350 = vmatpush1.msra.mxu0 0.0
    %351 = vmatprep.subr.mxu0 0.0
    %352 = vmatpush1.msra.mxu0 0.0
    %353 = vmatprep.subr.mxu0 0.0
    %354 = vmatpush1.msra.mxu0 0.0
    %355 = vmatprep.subr.mxu0 0.0
    %356 = vmatpush1.msra.mxu0 0.0
    %357 = vmatprep.subr.mxu0 0.0
    %358 = vmatpush1.msra.mxu0 0.0
    %359 = vmatprep.subr.mxu0 0.0
    %360 = vmatpush1.msra.mxu0 0.0
    %361 = vmatprep.subr.mxu0 0.0
    %362 = vmatpush1.msra.mxu0 0.0
    %363 = vmatprep.subr.mxu0 0.0
    %364 = vmatpush1.msra.mxu0 0.0
    %365 = vmatprep.subr.mxu0 0.0
    %366 = vmatpush1.msra.mxu0 0.0
    %367 = vmatprep.subr.mxu0 0.0
    %368 = vmatpush1.msra.mxu0 0.0
    %369 = vmatprep.subr.mxu0 0.0
    %370 = vmatpush1.msra.mxu0 0.0
    %371 = vmatprep.subr.mxu0 0.0
    %372 = vmatpush1.msra.mxu0 0.0
    %373 = vmatprep.subr.mxu0 0.0
    %374 = vmatpush1.msra.mxu0 0.0
    %375 = vmatprep.subr.mxu0 0.0
    %376 = vmatpush1.msra.mxu0 0.0
    %377 = vmatprep.subr.mxu0 0.0
    %378 = vmatpush1.msra.mxu0 0.0
    %379 = vmatprep.subr.mxu0 0.0
    %380 = vmatpush1.msra.mxu0 0.0
    %381 = vmatprep.subr.mxu0 0.0
    %382 = vmatpush1.msra.mxu0 0.0
    %383 = vmatprep.subr.mxu0 0.0
    %384 = vmatpush1.msra.mxu0 0.0
    %385 = vmatprep.subr.mxu0 0.0
    %386 = vmatpush1.msra.mxu0 0.0
    %387 = vmatprep.subr.mxu0 0.0
    %388 = vmatpush1.msra.mxu0 0.0
    %389 = vmatprep.subr.mxu0 0.0
    %390 = vmatpush1.msra.mxu0 0.0
    %391 = vmatprep.subr.mxu0 0.0
    %392 = vmatpush1.msra.mxu0 0.0
    %393 = vmatprep.subr.mxu0 0.0
    %394 = vmatpush1.msra.mxu0 0.0
    %395 = vmatprep.mubr.f32.mxu0 0.0
    %396 = vmatmul.mubr.f32.gmra.mrb[0].mxu0 %v227
    %v397 = vpop.f32.mrb[0].mxu0
    %v398 = vadd.f32 %v329, %v397
    %v399 = vpop.f32.mrb[0].mxu0
    %400 = vmatprep.mubr.f32.mxu0 0.0
    %401 = vmatmul.mubr.f32.gmra.mrb[0].mxu0 %v230
    %v402 = vpop.f32.mrb[0].mxu0
    %v403 = vadd.f32 %v329, %v402
    %v404 = vpop.f32.mrb[0].mxu0
    %405 = vmatprep.mubr.f32.mxu0 0.0
    %406 = vmatmul.mubr.f32.gmra.mrb[0].mxu0 %v233
    %v407 = vpop.f32.mrb[0].mxu0
    %v408 = vadd.f32 %v329, %v407
    %v409 = vpop.f32.mrb[0].mxu0
    %410 = vmatprep.mubr.f32.mxu0 0.0
    %411 = vmatmul.mubr.f32.gmra.mrb[0].mxu0 %v236
    %v412 = vpop.f32.mrb[0].mxu0
    %v413 = vadd.f32 %v329, %v412
    %v414 = vpop.f32.mrb[0].mxu0
    %415 = vdwg.mxu0
    %v416 = vld [vmem:[%s7] sm:$0xff]
    %v417 = vld [vmem:[%s7 + $0x8] sm:$0xff]
    %v418 = vld [vmem:[%s7 + $0x10] sm:$0xff]
    %v419 = vld [vmem:[%s7 + $0x18] sm:$0xff]
    %v420 = vmul.f32 %v305, %v416
    %v421 = vmul.f32 %v310, %v417
    %v422 = vmul.f32 %v315, %v418
    %v423 = vmul.f32 %v320, %v419
    %v424 = vld [vmem:[%s9] sm:$0xff]
    %v425 = vld [vmem:[%s9 + $0x8] sm:$0xff]
    %v426 = vld [vmem:[%s9 + $0x10] sm:$0xff]
    %v427 = vld [vmem:[%s9 + $0x18] sm:$0xff]
    %v428 = vmul.f32 %v398, %v424
    %v429 = vmul.f32 %v403, %v425
    %v430 = vmul.f32 %v408, %v426
    %v431 = vmul.f32 %v413, %v427
    %v432 = vadd.f32 %v420, %v428
    %v433 = vadd.f32 %v421, %v429
    %v434 = vadd.f32 %v422, %v430
    %v435 = vadd.f32 %v423, %v431
    %v436 = vld [vmem:[%s3] sm:$0xff]
    %v437 = vld [vmem:[%s3 + $0x8] sm:$0xff]
    %v438 = vld [vmem:[%s3 + $0x10] sm:$0xff]
    %v439 = vld [vmem:[%s3 + $0x18] sm:$0xff]
    %v440 = vld [vmem:[%s21] sm:$0xf]
    %v441 = vld [vmem:[#allocation6] sm:$0x1]
    %v443 = vlaneseq
    %v444 = vshrl.u32 %v443, 7
    %v445 = vsub.s32 0, %v444
    %v446 = vrot.slane %v441, %v445
    %vm448 = vcmask 31744
    %v450 = vsel %vm448, %v436, 0
    %v453 = vsel %vm448, %v437, 0
    %v456 = vsel %vm448, %v438, 0
    %v459 = vsel %vm448, %v439, 0
    %vm461 = vcmask 1043456
    %v463 = vsel %vm461, %v440, 0
    %465 = vmatprep.subr.mxu0 0.0
    %466 = vmatpush1.msra.mxu0 %v463
    %467 = vmatprep.subr.mxu0 0.0
    %468 = vmatpush1.msra.mxu0 0.0
    %469 = vmatprep.subr.mxu0 0.0
    %470 = vmatpush1.msra.mxu0 0.0
    %471 = vmatprep.subr.mxu0 0.0
    %472 = vmatpush1.msra.mxu0 0.0
    %473 = vmatprep.subr.mxu0 0.0
    %474 = vmatpush1.msra.mxu0 0.0
    %475 = vmatprep.subr.mxu0 0.0
    %476 = vmatpush1.msra.mxu0 0.0
    %477 = vmatprep.subr.mxu0 0.0
    %478 = vmatpush1.msra.mxu0 0.0
    %479 = vmatprep.subr.mxu0 0.0
    %480 = vmatpush1.msra.mxu0 0.0
    %481 = vmatprep.subr.mxu0 0.0
    %482 = vmatpush1.msra.mxu0 0.0
    %483 = vmatprep.subr.mxu0 0.0
    %484 = vmatpush1.msra.mxu0 0.0
    %485 = vmatprep.subr.mxu0 0.0
    %486 = vmatpush1.msra.mxu0 0.0
    %487 = vmatprep.subr.mxu0 0.0
    %488 = vmatpush1.msra.mxu0 0.0
    %489 = vmatprep.subr.mxu0 0.0
    %490 = vmatpush1.msra.mxu0 0.0
    %491 = vmatprep.subr.mxu0 0.0
    %492 = vmatpush1.msra.mxu0 0.0
    %493 = vmatprep.subr.mxu0 0.0
    %494 = vmatpush1.msra.mxu0 0.0
    %495 = vmatprep.subr.mxu0 0.0
    %496 = vmatpush1.msra.mxu0 0.0
    %497 = vmatprep.subr.mxu0 0.0
    %498 = vmatpush1.msra.mxu0 0.0
    %499 = vmatprep.subr.mxu0 0.0
    %500 = vmatpush1.msra.mxu0 0.0
    %501 = vmatprep.subr.mxu0 0.0
    %502 = vmatpush1.msra.mxu0 0.0
    %503 = vmatprep.subr.mxu0 0.0
    %504 = vmatpush1.msra.mxu0 0.0
    %505 = vmatprep.subr.mxu0 0.0
    %506 = vmatpush1.msra.mxu0 0.0
    %507 = vmatprep.subr.mxu0 0.0
    %508 = vmatpush1.msra.mxu0 0.0
    %509 = vmatprep.subr.mxu0 0.0
    %510 = vmatpush1.msra.mxu0 0.0
    %511 = vmatprep.subr.mxu0 0.0
    %512 = vmatpush1.msra.mxu0 0.0
    %513 = vmatprep.subr.mxu0 0.0
    %514 = vmatpush1.msra.mxu0 0.0
    %515 = vmatprep.subr.mxu0 0.0
    %516 = vmatpush1.msra.mxu0 0.0
    %517 = vmatprep.subr.mxu0 0.0
    %518 = vmatpush1.msra.mxu0 0.0
    %519 = vmatprep.subr.mxu0 0.0
    %520 = vmatpush1.msra.mxu0 0.0
    %521 = vmatprep.subr.mxu0 0.0
    %522 = vmatpush1.msra.mxu0 0.0
    %523 = vmatprep.subr.mxu0 0.0
    %524 = vmatpush1.msra.mxu0 0.0
    %525 = vmatprep.subr.mxu0 0.0
    %526 = vmatpush1.msra.mxu0 0.0
    %527 = vmatprep.subr.mxu0 0.0
    %528 = vmatpush1.msra.mxu0 0.0
    %529 = vmatprep.mubr.f32.mxu0 0.0
    %530 = vmatmul.mubr.f32.gmra.mrb[0].mxu0 %v450
    %v531 = vpop.f32.mrb[0].mxu0
    %v532 = vadd.f32 %v446, %v531
    %v533 = vpop.f32.mrb[0].mxu0
    %534 = vmatprep.mubr.f32.mxu0 0.0
    %535 = vmatmul.mubr.f32.gmra.mrb[0].mxu0 %v453
    %v536 = vpop.f32.mrb[0].mxu0
    %v537 = vadd.f32 %v446, %v536
    %v538 = vpop.f32.mrb[0].mxu0
    %539 = vmatprep.mubr.f32.mxu0 0.0
    %540 = vmatmul.mubr.f32.gmra.mrb[0].mxu0 %v456
    %v541 = vpop.f32.mrb[0].mxu0
    %v542 = vadd.f32 %v446, %v541
    %v543 = vpop.f32.mrb[0].mxu0
    %544 = vmatprep.mubr.f32.mxu0 0.0
    %545 = vmatmul.mubr.f32.gmra.mrb[0].mxu0 %v459
    %v546 = vpop.f32.mrb[0].mxu0
    %v547 = vadd.f32 %v446, %v546
    %v548 = vpop.f32.mrb[0].mxu0
    %549 = vdwg.mxu0
    %v550 = vld [vmem:[%s5] sm:$0xff]
    %v551 = vld [vmem:[%s5 + $0x8] sm:$0xff]
    %v552 = vld [vmem:[%s5 + $0x10] sm:$0xff]
    %v553 = vld [vmem:[%s5 + $0x18] sm:$0xff]
    %v554 = vadd.f32 %v532, %v550
    %v555 = vadd.f32 %v537, %v551
    %v556 = vadd.f32 %v542, %v552
    %v557 = vadd.f32 %v547, %v553
    %v558 = vsub.f32 0.0, %v554
    %v559 = vsub.f32 0.0, %v555
    %v560 = vsub.f32 0.0, %v556
    %v561 = vsub.f32 0.0, %v557
    %v562 = vmul.f32 %v558, 1.442695
    %v563 = vpow.pop %v562
    %v564 = vmul.f32 %v559, 1.442695
    %v565 = vpow.pop %v564
    %v566 = vmul.f32 %v560, 1.442695
    %v567 = vpow.pop %v566
    %v568 = vmul.f32 %v561, 1.442695
    %v569 = vpow.pop %v568
    %v570 = vadd.f32 %v563, 1.0
    %v571 = vadd.f32 %v565, 1.0
    %v572 = vadd.f32 %v567, 1.0
    %v573 = vadd.f32 %v569, 1.0
    %v574 = vrcp.pop %v570
    %v575 = vmul.f32 1.0, %v574
    %v576 = vrcp.pop %v571
    %v577 = vmul.f32 1.0, %v576
    %v578 = vrcp.pop %v572
    %v579 = vmul.f32 1.0, %v578
    %v580 = vrcp.pop %v573
    %v581 = vmul.f32 1.0, %v580
    %v582 = vmul.f32 %v554, %v575
    %v583 = vmul.f32 %v555, %v577
    %v584 = vmul.f32 %v556, %v579
    %v585 = vmul.f32 %v557, %v581
    %v586 = vld [vmem:[%s11] sm:$0xff]
    %v587 = vld [vmem:[%s11 + $0x8] sm:$0xff]
    %v588 = vld [vmem:[%s11 + $0x10] sm:$0xff]
    %v589 = vld [vmem:[%s11 + $0x18] sm:$0xff]
    %v590 = vld [vmem:[%s25] sm:$0xff]
    %v591 = vld [vmem:[%s25 + $0x8] sm:$0xff]
    %v592 = vld [vmem:[%s25 + $0x10] sm:$0xff]
    %v593 = vld [vmem:[%s25 + $0x18] sm:$0xff]
    %v594 = vld [vmem:[%s25 + $0x20] sm:$0xff]
    %v595 = vld [vmem:[%s25 + $0x28] sm:$0xff]
    %v596 = vld [vmem:[%s25 + $0x30] sm:$0xff]
    %v597 = vld [vmem:[%s25 + $0x38] sm:$0xff]
    %v598 = vld [vmem:[%s27] sm:$0x1]
    %v600 = vlaneseq
    %v601 = vshrl.u32 %v600, 7
    %v602 = vsub.s32 0, %v601
    %v603 = vrot.slane %v598, %v602
    %vm605 = vcmask 523264
    %v607 = vsel %vm605, %v582, 0
    %v610 = vsel %vm605, %v583, 0
    %v613 = vsel %vm605, %v584, 0
    %v616 = vsel %vm605, %v585, 0
    %618 = vmatprep.subr.mxu0 0.0
    %619 = vmatpush1.msra.mxu0 %v590
    %620 = vmatprep.subr.mxu0 0.0
    %621 = vmatpush1.msra.mxu0 %v591
    %622 = vmatprep.subr.mxu0 0.0
    %623 = vmatpush1.msra.mxu0 %v592
    %624 = vmatprep.subr.mxu0 0.0
    %625 = vmatpush1.msra.mxu0 %v593
    %626 = vmatprep.subr.mxu0 0.0
    %627 = vmatpush1.msra.mxu0 %v594
    %628 = vmatprep.subr.mxu0 0.0
    %629 = vmatpush1.msra.mxu0 %v595
    %630 = vmatprep.subr.mxu0 0.0
    %631 = vmatpush1.msra.mxu0 %v596
    %632 = vmatprep.subr.mxu0 0.0
    %633 = vmatpush1.msra.mxu0 %v597
    %634 = vmatprep.subr.mxu0 0.0
    %635 = vmatpush1.msra.mxu0 0.0
    %636 = vmatprep.subr.mxu0 0.0
    %637 = vmatpush1.msra.mxu0 0.0
    %638 = vmatprep.subr.mxu0 0.0
    %639 = vmatpush1.msra.mxu0 0.0
    %640 = vmatprep.subr.mxu0 0.0
    %641 = vmatpush1.msra.mxu0 0.0
    %642 = vmatprep.subr.mxu0 0.0
    %643 = vmatpush1.msra.mxu0 0.0
    %644 = vmatprep.subr.mxu0 0.0
    %645 = vmatpush1.msra.mxu0 0.0
    %646 = vmatprep.subr.mxu0 0.0
    %647 = vmatpush1.msra.mxu0 0.0
    %648 = vmatprep.subr.mxu0 0.0
    %649 = vmatpush1.msra.mxu0 0.0
    %650 = vmatprep.subr.mxu0 0.0
    %651 = vmatpush1.msra.mxu0 0.0
    %652 = vmatprep.subr.mxu0 0.0
    %653 = vmatpush1.msra.mxu0 0.0
    %654 = vmatprep.subr.mxu0 0.0
    %655 = vmatpush1.msra.mxu0 0.0
    %656 = vmatprep.subr.mxu0 0.0
    %657 = vmatpush1.msra.mxu0 0.0
    %658 = vmatprep.subr.mxu0 0.0
    %659 = vmatpush1.msra.mxu0 0.0
    %660 = vmatprep.subr.mxu0 0.0
    %661 = vmatpush1.msra.mxu0 0.0
    %662 = vmatprep.subr.mxu0 0.0
    %663 = vmatpush1.msra.mxu0 0.0
    %664 = vmatprep.subr.mxu0 0.0
    %665 = vmatpush1.msra.mxu0 0.0
    %666 = vmatprep.subr.mxu0 0.0
    %667 = vmatpush1.msra.mxu0 0.0
    %668 = vmatprep.subr.mxu0 0.0
    %669 = vmatpush1.msra.mxu0 0.0
    %670 = vmatprep.subr.mxu0 0.0
    %671 = vmatpush1.msra.mxu0 0.0
    %672 = vmatprep.subr.mxu0 0.0
    %673 = vmatpush1.msra.mxu0 0.0
    %674 = vmatprep.subr.mxu0 0.0
    %675 = vmatpush1.msra.mxu0 0.0
    %676 = vmatprep.subr.mxu0 0.0
    %677 = vmatpush1.msra.mxu0 0.0
    %678 = vmatprep.subr.mxu0 0.0
    %679 = vmatpush1.msra.mxu0 0.0
    %680 = vmatprep.subr.mxu0 0.0
    %681 = vmatpush1.msra.mxu0 0.0
    %682 = vmatprep.mubr.f32.mxu0 0.0
    %683 = vmatmul.mubr.f32.gmra.mrb[0].mxu0 %v607
    %v684 = vpop.f32.mrb[0].mxu0
    %v685 = vadd.f32 %v603, %v684
    %v686 = vpop.f32.mrb[0].mxu0
    %687 = vmatprep.mubr.f32.mxu0 0.0
    %688 = vmatmul.mubr.f32.gmra.mrb[0].mxu0 %v610
    %v689 = vpop.f32.mrb[0].mxu0
    %v690 = vadd.f32 %v603, %v689
    %v691 = vpop.f32.mrb[0].mxu0
    %692 = vmatprep.mubr.f32.mxu0 0.0
    %693 = vmatmul.mubr.f32.gmra.mrb[0].mxu0 %v613
    %v694 = vpop.f32.mrb[0].mxu0
    %v695 = vadd.f32 %v603, %v694
    %v696 = vpop.f32.mrb[0].mxu0
    %697 = vmatprep.mubr.f32.mxu0 0.0
    %698 = vmatmul.mubr.f32.gmra.mrb[0].mxu0 %v616
    %v699 = vpop.f32.mrb[0].mxu0
    %v700 = vadd.f32 %v603, %v699
    %v701 = vpop.f32.mrb[0].mxu0
    %702 = vdwg.mxu0
    %s703 = scalar_lea.vmem %s25, 64
    %v704 = vld [vmem:[%s703] sm:$0xff]
    %v705 = vld [vmem:[%s703 + $0x8] sm:$0xff]
    %v706 = vld [vmem:[%s703 + $0x10] sm:$0xff]
    %v707 = vld [vmem:[%s703 + $0x18] sm:$0xff]
    %v708 = vld [vmem:[%s703 + $0x20] sm:$0xff]
    %v709 = vld [vmem:[%s703 + $0x28] sm:$0xff]
    %v710 = vld [vmem:[%s703 + $0x30] sm:$0xff]
    %v711 = vld [vmem:[%s703 + $0x38] sm:$0xff]
    %s712 = scalar_lea.vmem %s27, 1
    %v713 = vld [vmem:[%s712] sm:$0x1]
    %v715 = vlaneseq
    %v716 = vshrl.u32 %v715, 7
    %v717 = vsub.s32 0, %v716
    %v718 = vrot.slane %v713, %v717
    %720 = vmatprep.subr.mxu0 0.0
    %721 = vmatpush1.msra.mxu0 %v704
    %722 = vmatprep.subr.mxu0 0.0
    %723 = vmatpush1.msra.mxu0 %v705
    %724 = vmatprep.subr.mxu0 0.0
    %725 = vmatpush1.msra.mxu0 %v706
    %726 = vmatprep.subr.mxu0 0.0
    %727 = vmatpush1.msra.mxu0 %v707
    %728 = vmatprep.subr.mxu0 0.0
    %729 = vmatpush1.msra.mxu0 %v708
    %730 = vmatprep.subr.mxu0 0.0
    %731 = vmatpush1.msra.mxu0 %v709
    %732 = vmatprep.subr.mxu0 0.0
    %733 = vmatpush1.msra.mxu0 %v710
    %734 = vmatprep.subr.mxu0 0.0
    %735 = vmatpush1.msra.mxu0 %v711
    %736 = vmatprep.subr.mxu0 0.0
    %737 = vmatpush1.msra.mxu0 0.0
    %738 = vmatprep.subr.mxu0 0.0
    %739 = vmatpush1.msra.mxu0 0.0
    %740 = vmatprep.subr.mxu0 0.0
    %741 = vmatpush1.msra.mxu0 0.0
    %742 = vmatprep.subr.mxu0 0.0
    %743 = vmatpush1.msra.mxu0 0.0
    %744 = vmatprep.subr.mxu0 0.0
    %745 = vmatpush1.msra.mxu0 0.0
    %746 = vmatprep.subr.mxu0 0.0
    %747 = vmatpush1.msra.mxu0 0.0
    %748 = vmatprep.subr.mxu0 0.0
    %749 = vmatpush1.msra.mxu0 0.0
    %750 = vmatprep.subr.mxu0 0.0
    %751 = vmatpush1.msra.mxu0 0.0
    %752 = vmatprep.subr.mxu0 0.0
    %753 = vmatpush1.msra.mxu0 0.0
    %754 = vmatprep.subr.mxu0 0.0
    %755 = vmatpush1.msra.mxu0 0.0
    %756 = vmatprep.subr.mxu0 0.0
    %757 = vmatpush1.msra.mxu0 0.0
    %758 = vmatprep.subr.mxu0 0.0
    %759 = vmatpush1.msra.mxu0 0.0
    %760 = vmatprep.subr.mxu0 0.0
    %761 = vmatpush1.msra.mxu0 0.0
    %762 = vmatprep.subr.mxu0 0.0
    %763 = vmatpush1.msra.mxu0 0.0
    %764 = vmatprep.subr.mxu0 0.0
    %765 = vmatpush1.msra.mxu0 0.0
    %766 = vmatprep.subr.mxu0 0.0
    %767 = vmatpush1.msra.mxu0 0.0
    %768 = vmatprep.subr.mxu0 0.0
    %769 = vmatpush1.msra.mxu0 0.0
    %770 = vmatprep.subr.mxu0 0.0
    %771 = vmatpush1.msra.mxu0 0.0
    %772 = vmatprep.subr.mxu0 0.0
    %773 = vmatpush1.msra.mxu0 0.0
    %774 = vmatprep.subr.mxu0 0.0
    %775 = vmatpush1.msra.mxu0 0.0
    %776 = vmatprep.subr.mxu0 0.0
    %777 = vmatpush1.msra.mxu0 0.0
    %778 = vmatprep.subr.mxu0 0.0
    %779 = vmatpush1.msra.mxu0 0.0
    %780 = vmatprep.subr.mxu0 0.0
    %781 = vmatpush1.msra.mxu0 0.0
    %782 = vmatprep.subr.mxu0 0.0
    %783 = vmatpush1.msra.mxu0 0.0
    %784 = vmatprep.mubr.f32.mxu0 0.0
    %785 = vmatmul.mubr.f32.gmra.mrb[0].mxu0 %v607
    %v786 = vpop.f32.mrb[0].mxu0
    %v787 = vadd.f32 %v718, %v786
    %v788 = vpop.f32.mrb[0].mxu0
    %789 = vmatprep.mubr.f32.mxu0 0.0
    %790 = vmatmul.mubr.f32.gmra.mrb[0].mxu0 %v610
    %v791 = vpop.f32.mrb[0].mxu0
    %v792 = vadd.f32 %v718, %v791
    %v793 = vpop.f32.mrb[0].mxu0
    %794 = vmatprep.mubr.f32.mxu0 0.0
    %795 = vmatmul.mubr.f32.gmra.mrb[0].mxu0 %v613
    %v796 = vpop.f32.mrb[0].mxu0
    %v797 = vadd.f32 %v718, %v796
    %v798 = vpop.f32.mrb[0].mxu0
    %799 = vmatprep.mubr.f32.mxu0 0.0
    %800 = vmatmul.mubr.f32.gmra.mrb[0].mxu0 %v616
    %v801 = vpop.f32.mrb[0].mxu0
    %v802 = vadd.f32 %v718, %v801
    %v803 = vpop.f32.mrb[0].mxu0
    %804 = vdwg.mxu0
    %s805 = scalar_lea.vmem %s25, 128
    %v806 = vld [vmem:[%s805] sm:$0xff]
    %v807 = vld [vmem:[%s805 + $0x8] sm:$0xff]
    %v808 = vld [vmem:[%s805 + $0x10] sm:$0xff]
    %v809 = vld [vmem:[%s805 + $0x18] sm:$0xff]
    %v810 = vld [vmem:[%s805 + $0x20] sm:$0xff]
    %v811 = vld [vmem:[%s805 + $0x28] sm:$0xff]
    %v812 = vld [vmem:[%s805 + $0x30] sm:$0xff]
    %v813 = vld [vmem:[%s805 + $0x38] sm:$0xff]
    %s814 = scalar_lea.vmem %s27, 2
    %v815 = vld [vmem:[%s814] sm:$0x1]
    %v817 = vlaneseq
    %v818 = vshrl.u32 %v817, 7
    %v819 = vsub.s32 0, %v818
    %v820 = vrot.slane %v815, %v819
    %822 = vmatprep.subr.mxu0 0.0
    %823 = vmatpush1.msra.mxu0 %v806
    %824 = vmatprep.subr.mxu0 0.0
    %825 = vmatpush1.msra.mxu0 %v807
    %826 = vmatprep.subr.mxu0 0.0
    %827 = vmatpush1.msra.mxu0 %v808
    %828 = vmatprep.subr.mxu0 0.0
    %829 = vmatpush1.msra.mxu0 %v809
    %830 = vmatprep.subr.mxu0 0.0
    %831 = vmatpush1.msra.mxu0 %v810
    %832 = vmatprep.subr.mxu0 0.0
    %833 = vmatpush1.msra.mxu0 %v811
    %834 = vmatprep.subr.mxu0 0.0
    %835 = vmatpush1.msra.mxu0 %v812
    %836 = vmatprep.subr.mxu0 0.0
    %837 = vmatpush1.msra.mxu0 %v813
    %838 = vmatprep.subr.mxu0 0.0
    %839 = vmatpush1.msra.mxu0 0.0
    %840 = vmatprep.subr.mxu0 0.0
    %841 = vmatpush1.msra.mxu0 0.0
    %842 = vmatprep.subr.mxu0 0.0
    %843 = vmatpush1.msra.mxu0 0.0
    %844 = vmatprep.subr.mxu0 0.0
    %845 = vmatpush1.msra.mxu0 0.0
    %846 = vmatprep.subr.mxu0 0.0
    %847 = vmatpush1.msra.mxu0 0.0
    %848 = vmatprep.subr.mxu0 0.0
    %849 = vmatpush1.msra.mxu0 0.0
    %850 = vmatprep.subr.mxu0 0.0
    %851 = vmatpush1.msra.mxu0 0.0
    %852 = vmatprep.subr.mxu0 0.0
    %853 = vmatpush1.msra.mxu0 0.0
    %854 = vmatprep.subr.mxu0 0.0
    %855 = vmatpush1.msra.mxu0 0.0
    %856 = vmatprep.subr.mxu0 0.0
    %857 = vmatpush1.msra.mxu0 0.0
    %858 = vmatprep.subr.mxu0 0.0
    %859 = vmatpush1.msra.mxu0 0.0
    %860 = vmatprep.subr.mxu0 0.0
    %861 = vmatpush1.msra.mxu0 0.0
    %862 = vmatprep.subr.mxu0 0.0
    %863 = vmatpush1.msra.mxu0 0.0
    %864 = vmatprep.subr.mxu0 0.0
    %865 = vmatpush1.msra.mxu0 0.0
    %866 = vmatprep.subr.mxu0 0.0
    %867 = vmatpush1.msra.mxu0 0.0
    %868 = vmatprep.subr.mxu0 0.0
    %869 = vmatpush1.msra.mxu0 0.0
    %870 = vmatprep.subr.mxu0 0.0
    %871 = vmatpush1.msra.mxu0 0.0
    %872 = vmatprep.subr.mxu0 0.0
    %873 = vmatpush1.msra.mxu0 0.0
    %874 = vmatprep.subr.mxu0 0.0
    %875 = vmatpush1.msra.mxu0 0.0
    %876 = vmatprep.subr.mxu0 0.0
    %877 = vmatpush1.msra.mxu0 0.0
    %878 = vmatprep.subr.mxu0 0.0
    %879 = vmatpush1.msra.mxu0 0.0
    %880 = vmatprep.subr.mxu0 0.0
    %881 = vmatpush1.msra.mxu0 0.0
    %882 = vmatprep.subr.mxu0 0.0
    %883 = vmatpush1.msra.mxu0 0.0
    %884 = vmatprep.subr.mxu0 0.0
    %885 = vmatpush1.msra.mxu0 0.0
    %886 = vmatprep.mubr.f32.mxu0 0.0
    %887 = vmatmul.mubr.f32.gmra.mrb[0].mxu0 %v607
    %v888 = vpop.f32.mrb[0].mxu0
    %v889 = vadd.f32 %v820, %v888
    %v890 = vpop.f32.mrb[0].mxu0
    %891 = vmatprep.mubr.f32.mxu0 0.0
    %892 = vmatmul.mubr.f32.gmra.mrb[0].mxu0 %v610
    %v893 = vpop.f32.mrb[0].mxu0
    %v894 = vadd.f32 %v820, %v893
    %v895 = vpop.f32.mrb[0].mxu0
    %896 = vmatprep.mubr.f32.mxu0 0.0
    %897 = vmatmul.mubr.f32.gmra.mrb[0].mxu0 %v613
    %v898 = vpop.f32.mrb[0].mxu0
    %v899 = vadd.f32 %v820, %v898
    %v900 = vpop.f32.mrb[0].mxu0
    %901 = vmatprep.mubr.f32.mxu0 0.0
    %902 = vmatmul.mubr.f32.gmra.mrb[0].mxu0 %v616
    %v903 = vpop.f32.mrb[0].mxu0
    %v904 = vadd.f32 %v820, %v903
    %v905 = vpop.f32.mrb[0].mxu0
    %906 = vdwg.mxu0
    %s907 = scalar_lea.vmem %s25, 192
    %v908 = vld [vmem:[%s907] sm:$0xff]
    %v909 = vld [vmem:[%s907 + $0x8] sm:$0xff]
    %v910 = vld [vmem:[%s907 + $0x10] sm:$0xff]
    %v911 = vld [vmem:[%s907 + $0x18] sm:$0xff]
    %v912 = vld [vmem:[%s907 + $0x20] sm:$0xff]
    %v913 = vld [vmem:[%s907 + $0x28] sm:$0xff]
    %v914 = vld [vmem:[%s907 + $0x30] sm:$0xff]
    %v915 = vld [vmem:[%s907 + $0x38] sm:$0xff]
    %s916 = scalar_lea.vmem %s27, 3
    %v917 = vld [vmem:[%s916] sm:$0x1]
    %v919 = vlaneseq
    %v920 = vshrl.u32 %v919, 7
    %v921 = vsub.s32 0, %v920
    %v922 = vrot.slane %v917, %v921
    %924 = vmatprep.subr.mxu0 0.0
    %925 = vmatpush1.msra.mxu0 %v908
    %926 = vmatprep.subr.mxu0 0.0
    %927 = vmatpush1.msra.mxu0 %v909
    %928 = vmatprep.subr.mxu0 0.0
    %929 = vmatpush1.msra.mxu0 %v910
    %930 = vmatprep.subr.mxu0 0.0
    %931 = vmatpush1.msra.mxu0 %v911
    %932 = vmatprep.subr.mxu0 0.0
    %933 = vmatpush1.msra.mxu0 %v912
    %934 = vmatprep.subr.mxu0 0.0
    %935 = vmatpush1.msra.mxu0 %v913
    %936 = vmatprep.subr.mxu0 0.0
    %937 = vmatpush1.msra.mxu0 %v914
    %938 = vmatprep.subr.mxu0 0.0
    %939 = vmatpush1.msra.mxu0 %v915
    %940 = vmatprep.subr.mxu0 0.0
    %941 = vmatpush1.msra.mxu0 0.0
    %942 = vmatprep.subr.mxu0 0.0
    %943 = vmatpush1.msra.mxu0 0.0
    %944 = vmatprep.subr.mxu0 0.0
    %945 = vmatpush1.msra.mxu0 0.0
    %946 = vmatprep.subr.mxu0 0.0
    %947 = vmatpush1.msra.mxu0 0.0
    %948 = vmatprep.subr.mxu0 0.0
    %949 = vmatpush1.msra.mxu0 0.0
    %950 = vmatprep.subr.mxu0 0.0
    %951 = vmatpush1.msra.mxu0 0.0
    %952 = vmatprep.subr.mxu0 0.0
    %953 = vmatpush1.msra.mxu0 0.0
    %954 = vmatprep.subr.mxu0 0.0
    %955 = vmatpush1.msra.mxu0 0.0
    %956 = vmatprep.subr.mxu0 0.0
    %957 = vmatpush1.msra.mxu0 0.0
    %958 = vmatprep.subr.mxu0 0.0
    %959 = vmatpush1.msra.mxu0 0.0
    %960 = vmatprep.subr.mxu0 0.0
    %961 = vmatpush1.msra.mxu0 0.0
    %962 = vmatprep.subr.mxu0 0.0
    %963 = vmatpush1.msra.mxu0 0.0
    %964 = vmatprep.subr.mxu0 0.0
    %965 = vmatpush1.msra.mxu0 0.0
    %966 = vmatprep.subr.mxu0 0.0
    %967 = vmatpush1.msra.mxu0 0.0
    %968 = vmatprep.subr.mxu0 0.0
    %969 = vmatpush1.msra.mxu0 0.0
    %970 = vmatprep.subr.mxu0 0.0
    %971 = vmatpush1.msra.mxu0 0.0
    %972 = vmatprep.subr.mxu0 0.0
    %973 = vmatpush1.msra.mxu0 0.0
    %974 = vmatprep.subr.mxu0 0.0
    %975 = vmatpush1.msra.mxu0 0.0
    %976 = vmatprep.subr.mxu0 0.0
    %977 = vmatpush1.msra.mxu0 0.0
    %978 = vmatprep.subr.mxu0 0.0
    %979 = vmatpush1.msra.mxu0 0.0
    %980 = vmatprep.subr.mxu0 0.0
    %981 = vmatpush1.msra.mxu0 0.0
    %982 = vmatprep.subr.mxu0 0.0
    %983 = vmatpush1.msra.mxu0 0.0
    %984 = vmatprep.subr.mxu0 0.0
    %985 = vmatpush1.msra.mxu0 0.0
    %986 = vmatprep.subr.mxu0 0.0
    %987 = vmatpush1.msra.mxu0 0.0
    %988 = vmatprep.mubr.f32.mxu0 0.0
    %989 = vmatmul.mubr.f32.gmra.mrb[0].mxu0 %v607
    %v990 = vpop.f32.mrb[0].mxu0
    %v991 = vadd.f32 %v922, %v990
    %v992 = vpop.f32.mrb[0].mxu0
    %993 = vmatprep.mubr.f32.mxu0 0.0
    %994 = vmatmul.mubr.f32.gmra.mrb[0].mxu0 %v610
    %v995 = vpop.f32.mrb[0].mxu0
    %v996 = vadd.f32 %v922, %v995
    %v997 = vpop.f32.mrb[0].mxu0
    %998 = vmatprep.mubr.f32.mxu0 0.0
    %999 = vmatmul.mubr.f32.gmra.mrb[0].mxu0 %v613
    %v1000 = vpop.f32.mrb[0].mxu0
    %v1001 = vadd.f32 %v922, %v1000
    %v1002 = vpop.f32.mrb[0].mxu0
    %1003 = vmatprep.mubr.f32.mxu0 0.0
    %1004 = vmatmul.mubr.f32.gmra.mrb[0].mxu0 %v616
    %v1005 = vpop.f32.mrb[0].mxu0
    %v1006 = vadd.f32 %v922, %v1005
    %v1007 = vpop.f32.mrb[0].mxu0
    %1008 = vdwg.mxu0
    %s1009 = scalar_lea.vmem %s25, 256
    %v1010 = vld [vmem:[%s1009] sm:$0xff]
    %v1011 = vld [vmem:[%s1009 + $0x8] sm:$0xff]
    %v1012 = vld [vmem:[%s1009 + $0x10] sm:$0xff]
    %v1013 = vld [vmem:[%s1009 + $0x18] sm:$0xff]
    %v1014 = vld [vmem:[%s1009 + $0x20] sm:$0xff]
    %v1015 = vld [vmem:[%s1009 + $0x28] sm:$0xff]
    %v1016 = vld [vmem:[%s1009 + $0x30] sm:$0xff]
    %v1017 = vld [vmem:[%s1009 + $0x38] sm:$0xff]
    %s1018 = scalar_lea.vmem %s27, 4
    %v1019 = vld [vmem:[%s1018] sm:$0x1]
    %v1021 = vlaneseq
    %v1022 = vshrl.u32 %v1021, 7
    %v1023 = vsub.s32 0, %v1022
    %v1024 = vrot.slane %v1019, %v1023
    %1026 = vmatprep.subr.mxu0 0.0
    %1027 = vmatpush1.msra.mxu0 %v1010
    %1028 = vmatprep.subr.mxu0 0.0
    %1029 = vmatpush1.msra.mxu0 %v1011
    %1030 = vmatprep.subr.mxu0 0.0
    %1031 = vmatpush1.msra.mxu0 %v1012
    %1032 = vmatprep.subr.mxu0 0.0
    %1033 = vmatpush1.msra.mxu0 %v1013
    %1034 = vmatprep.subr.mxu0 0.0
    %1035 = vmatpush1.msra.mxu0 %v1014
    %1036 = vmatprep.subr.mxu0 0.0
    %1037 = vmatpush1.msra.mxu0 %v1015
    %1038 = vmatprep.subr.mxu0 0.0
    %1039 = vmatpush1.msra.mxu0 %v1016
    %1040 = vmatprep.subr.mxu0 0.0
    %1041 = vmatpush1.msra.mxu0 %v1017
    %1042 = vmatprep.subr.mxu0 0.0
    %1043 = vmatpush1.msra.mxu0 0.0
    %1044 = vmatprep.subr.mxu0 0.0
    %1045 = vmatpush1.msra.mxu0 0.0
    %1046 = vmatprep.subr.mxu0 0.0
    %1047 = vmatpush1.msra.mxu0 0.0
    %1048 = vmatprep.subr.mxu0 0.0
    %1049 = vmatpush1.msra.mxu0 0.0
    %1050 = vmatprep.subr.mxu0 0.0
    %1051 = vmatpush1.msra.mxu0 0.0
    %1052 = vmatprep.subr.mxu0 0.0
    %1053 = vmatpush1.msra.mxu0 0.0
    %1054 = vmatprep.subr.mxu0 0.0
    %1055 = vmatpush1.msra.mxu0 0.0
    %1056 = vmatprep.subr.mxu0 0.0
    %1057 = vmatpush1.msra.mxu0 0.0
    %1058 = vmatprep.subr.mxu0 0.0
    %1059 = vmatpush1.msra.mxu0 0.0
    %1060 = vmatprep.subr.mxu0 0.0
    %1061 = vmatpush1.msra.mxu0 0.0
    %1062 = vmatprep.subr.mxu0 0.0
    %1063 = vmatpush1.msra.mxu0 0.0
    %1064 = vmatprep.subr.mxu0 0.0
    %1065 = vmatpush1.msra.mxu0 0.0
    %1066 = vmatprep.subr.mxu0 0.0
    %1067 = vmatpush1.msra.mxu0 0.0
    %1068 = vmatprep.subr.mxu0 0.0
    %1069 = vmatpush1.msra.mxu0 0.0
    %1070 = vmatprep.subr.mxu0 0.0
    %1071 = vmatpush1.msra.mxu0 0.0
    %1072 = vmatprep.subr.mxu0 0.0
    %1073 = vmatpush1.msra.mxu0 0.0
    %1074 = vmatprep.subr.mxu0 0.0
    %1075 = vmatpush1.msra.mxu0 0.0
    %1076 = vmatprep.subr.mxu0 0.0
    %1077 = vmatpush1.msra.mxu0 0.0
    %1078 = vmatprep.subr.mxu0 0.0
    %1079 = vmatpush1.msra.mxu0 0.0
    %1080 = vmatprep.subr.mxu0 0.0
    %1081 = vmatpush1.msra.mxu0 0.0
    %1082 = vmatprep.subr.mxu0 0.0
    %1083 = vmatpush1.msra.mxu0 0.0
    %1084 = vmatprep.subr.mxu0 0.0
    %1085 = vmatpush1.msra.mxu0 0.0
    %1086 = vmatprep.subr.mxu0 0.0
    %1087 = vmatpush1.msra.mxu0 0.0
    %1088 = vmatprep.subr.mxu0 0.0
    %1089 = vmatpush1.msra.mxu0 0.0
    %1090 = vmatprep.mubr.f32.mxu0 0.0
    %1091 = vmatmul.mubr.f32.gmra.mrb[0].mxu0 %v607
    %v1092 = vpop.f32.mrb[0].mxu0
    %v1093 = vadd.f32 %v1024, %v1092
    %v1094 = vpop.f32.mrb[0].mxu0
    %1095 = vmatprep.mubr.f32.mxu0 0.0
    %1096 = vmatmul.mubr.f32.gmra.mrb[0].mxu0 %v610
    %v1097 = vpop.f32.mrb[0].mxu0
    %v1098 = vadd.f32 %v1024, %v1097
    %v1099 = vpop.f32.mrb[0].mxu0
    %1100 = vmatprep.mubr.f32.mxu0 0.0
    %1101 = vmatmul.mubr.f32.gmra.mrb[0].mxu0 %v613
    %v1102 = vpop.f32.mrb[0].mxu0
    %v1103 = vadd.f32 %v1024, %v1102
    %v1104 = vpop.f32.mrb[0].mxu0
    %1105 = vmatprep.mubr.f32.mxu0 0.0
    %1106 = vmatmul.mubr.f32.gmra.mrb[0].mxu0 %v616
    %v1107 = vpop.f32.mrb[0].mxu0
    %v1108 = vadd.f32 %v1024, %v1107
    %v1109 = vpop.f32.mrb[0].mxu0
    %1110 = vdwg.mxu0
    %s1111 = scalar_lea.vmem %s25, 320
    %v1112 = vld [vmem:[%s1111] sm:$0xff]
    %v1113 = vld [vmem:[%s1111 + $0x8] sm:$0xff]
    %v1114 = vld [vmem:[%s1111 + $0x10] sm:$0xff]
    %v1115 = vld [vmem:[%s1111 + $0x18] sm:$0xff]
    %v1116 = vld [vmem:[%s1111 + $0x20] sm:$0xff]
    %v1117 = vld [vmem:[%s1111 + $0x28] sm:$0xff]
    %v1118 = vld [vmem:[%s1111 + $0x30] sm:$0xff]
    %v1119 = vld [vmem:[%s1111 + $0x38] sm:$0xff]
    %s1120 = scalar_lea.vmem %s27, 5
    %v1121 = vld [vmem:[%s1120] sm:$0x1]
    %v1123 = vlaneseq
    %v1124 = vshrl.u32 %v1123, 7
    %v1125 = vsub.s32 0, %v1124
    %v1126 = vrot.slane %v1121, %v1125
    %1128 = vmatprep.subr.mxu0 0.0
    %1129 = vmatpush1.msra.mxu0 %v1112
    %1130 = vmatprep.subr.mxu0 0.0
    %1131 = vmatpush1.msra.mxu0 %v1113
    %1132 = vmatprep.subr.mxu0 0.0
    %1133 = vmatpush1.msra.mxu0 %v1114
    %1134 = vmatprep.subr.mxu0 0.0
    %1135 = vmatpush1.msra.mxu0 %v1115
    %1136 = vmatprep.subr.mxu0 0.0
    %1137 = vmatpush1.msra.mxu0 %v1116
    %1138 = vmatprep.subr.mxu0 0.0
    %1139 = vmatpush1.msra.mxu0 %v1117
    %1140 = vmatprep.subr.mxu0 0.0
    %1141 = vmatpush1.msra.mxu0 %v1118
    %1142 = vmatprep.subr.mxu0 0.0
    %1143 = vmatpush1.msra.mxu0 %v1119
    %1144 = vmatprep.subr.mxu0 0.0
    %1145 = vmatpush1.msra.mxu0 0.0
    %1146 = vmatprep.subr.mxu0 0.0
    %1147 = vmatpush1.msra.mxu0 0.0
    %1148 = vmatprep.subr.mxu0 0.0
    %1149 = vmatpush1.msra.mxu0 0.0
    %1150 = vmatprep.subr.mxu0 0.0
    %1151 = vmatpush1.msra.mxu0 0.0
    %1152 = vmatprep.subr.mxu0 0.0
    %1153 = vmatpush1.msra.mxu0 0.0
    %1154 = vmatprep.subr.mxu0 0.0
    %1155 = vmatpush1.msra.mxu0 0.0
    %1156 = vmatprep.subr.mxu0 0.0
    %1157 = vmatpush1.msra.mxu0 0.0
    %1158 = vmatprep.subr.mxu0 0.0
    %1159 = vmatpush1.msra.mxu0 0.0
    %1160 = vmatprep.subr.mxu0 0.0
    %1161 = vmatpush1.msra.mxu0 0.0
    %1162 = vmatprep.subr.mxu0 0.0
    %1163 = vmatpush1.msra.mxu0 0.0
    %1164 = vmatprep.subr.mxu0 0.0
    %1165 = vmatpush1.msra.mxu0 0.0
    %1166 = vmatprep.subr.mxu0 0.0
    %1167 = vmatpush1.msra.mxu0 0.0
    %1168 = vmatprep.subr.mxu0 0.0
    %1169 = vmatpush1.msra.mxu0 0.0
    %1170 = vmatprep.subr.mxu0 0.0
    %1171 = vmatpush1.msra.mxu0 0.0
    %1172 = vmatprep.subr.mxu0 0.0
    %1173 = vmatpush1.msra.mxu0 0.0
    %1174 = vmatprep.subr.mxu0 0.0
    %1175 = vmatpush1.msra.mxu0 0.0
    %1176 = vmatprep.subr.mxu0 0.0
    %1177 = vmatpush1.msra.mxu0 0.0
    %1178 = vmatprep.subr.mxu0 0.0
    %1179 = vmatpush1.msra.mxu0 0.0
    %1180 = vmatprep.subr.mxu0 0.0
    %1181 = vmatpush1.msra.mxu0 0.0
    %1182 = vmatprep.subr.mxu0 0.0
    %1183 = vmatpush1.msra.mxu0 0.0
    %1184 = vmatprep.subr.mxu0 0.0
    %1185 = vmatpush1.msra.mxu0 0.0
    %1186 = vmatprep.subr.mxu0 0.0
    %1187 = vmatpush1.msra.mxu0 0.0
    %1188 = vmatprep.subr.mxu0 0.0
    %1189 = vmatpush1.msra.mxu0 0.0
    %1190 = vmatprep.subr.mxu0 0.0
    %1191 = vmatpush1.msra.mxu0 0.0
    %1192 = vmatprep.mubr.f32.mxu0 0.0
    %1193 = vmatmul.mubr.f32.gmra.mrb[0].mxu0 %v607
    %v1194 = vpop.f32.mrb[0].mxu0
    %v1195 = vadd.f32 %v1126, %v1194
    %v1196 = vpop.f32.mrb[0].mxu0
    %1197 = vmatprep.mubr.f32.mxu0 0.0
    %1198 = vmatmul.mubr.f32.gmra.mrb[0].mxu0 %v610
    %v1199 = vpop.f32.mrb[0].mxu0
    %v1200 = vadd.f32 %v1126, %v1199
    %v1201 = vpop.f32.mrb[0].mxu0
    %1202 = vmatprep.mubr.f32.mxu0 0.0
    %1203 = vmatmul.mubr.f32.gmra.mrb[0].mxu0 %v613
    %v1204 = vpop.f32.mrb[0].mxu0
    %v1205 = vadd.f32 %v1126, %v1204
    %v1206 = vpop.f32.mrb[0].mxu0
    %1207 = vmatprep.mubr.f32.mxu0 0.0
    %1208 = vmatmul.mubr.f32.gmra.mrb[0].mxu0 %v616
    %v1209 = vpop.f32.mrb[0].mxu0
    %v1210 = vadd.f32 %v1126, %v1209
    %v1211 = vpop.f32.mrb[0].mxu0
    %1212 = vdwg.mxu0
    %v1213 = vsel %vm605, %v432, 0.0
    %1214 = vadd.xlane.f32.xlu0 %v1213
    %v1215 = vpop.xlane.xlu0 %1214
    %v1216 = vsel %vm605, %v433, 0.0
    %1217 = vadd.xlane.f32.xlu0 %v1216
    %v1218 = vpop.xlane.xlu0 %1217
    %v1219 = vsel %vm605, %v434, 0.0
    %1220 = vadd.xlane.f32.xlu0 %v1219
    %v1221 = vpop.xlane.xlu0 %1220
    %v1222 = vsel %vm605, %v435, 0.0
    %1223 = vadd.xlane.f32.xlu0 %v1222
    %v1224 = vpop.xlane.xlu0 %1223
    %v1225 = vrcp.pop 64.0
    %v1226 = vmul.f32 %v1215, %v1225
    %v1227 = vmul.f32 %v1218, %v1225
    %v1228 = vmul.f32 %v1221, %v1225
    %v1229 = vmul.f32 %v1224, %v1225
    %v1230 = vsub.f32 %v432, %v1226
    %v1231 = vsub.f32 %v433, %v1227
    %v1232 = vsub.f32 %v434, %v1228
    %v1233 = vsub.f32 %v435, %v1229
    %v1234 = vmul.f32 %v1230, %v1230
    %v1235 = vmul.f32 %v1231, %v1231
    %v1236 = vmul.f32 %v1232, %v1232
    %v1237 = vmul.f32 %v1233, %v1233
    %v1238 = vsel %vm605, %v1234, 0.0
    %1239 = vadd.xlane.f32.xlu0 %v1238
    %v1240 = vpop.xlane.xlu0 %1239
    %v1241 = vsel %vm605, %v1235, 0.0
    %1242 = vadd.xlane.f32.xlu0 %v1241
    %v1243 = vpop.xlane.xlu0 %1242
    %v1244 = vsel %vm605, %v1236, 0.0
    %1245 = vadd.xlane.f32.xlu0 %v1244
    %v1246 = vpop.xlane.xlu0 %1245
    %v1247 = vsel %vm605, %v1237, 0.0
    %1248 = vadd.xlane.f32.xlu0 %v1247
    %v1249 = vpop.xlane.xlu0 %1248
    %v1250 = vmul.f32 %v1240, %v1225
    %v1251 = vmul.f32 %v1243, %v1225
    %v1252 = vmul.f32 %v1246, %v1225
    %v1253 = vmul.f32 %v1249, %v1225
    %v1254 = vadd.f32 %v1250, 1e-06
    %v1255 = vadd.f32 %v1251, 1e-06
    %v1256 = vadd.f32 %v1252, 1e-06
    %v1257 = vadd.f32 %v1253, 1e-06
    %v1258 = vrsqrt.pop %v1254
    %v1259 = vrsqrt.pop %v1255
    %v1260 = vrsqrt.pop %v1256
    %v1261 = vrsqrt.pop %v1257
    %v1262 = vmul.f32 %v1230, %v1258
    %v1263 = vmul.f32 %v1231, %v1259
    %v1264 = vmul.f32 %v1232, %v1260
    %v1265 = vmul.f32 %v1233, %v1261
    %v1266 = vadd.f32 %v787, 1.0
    %v1267 = vadd.f32 %v792, 1.0
    %v1268 = vadd.f32 %v797, 1.0
    %v1269 = vadd.f32 %v802, 1.0
    %v1270 = vmul.f32 %v1262, %v1266
    %v1271 = vmul.f32 %v1263, %v1267
    %v1272 = vmul.f32 %v1264, %v1268
    %v1273 = vmul.f32 %v1265, %v1269
    %v1274 = vadd.f32 %v1270, %v685
    %v1275 = vadd.f32 %v1271, %v690
    %v1276 = vadd.f32 %v1272, %v695
    %v1277 = vadd.f32 %v1273, %v700
    %v1278 = vld [vmem:[%s29] sm:$0xff]
    %v1279 = vld [vmem:[%s29 + $0x8] sm:$0xff]
    %v1280 = vld [vmem:[%s29 + $0x10] sm:$0xff]
    %v1281 = vld [vmem:[%s29 + $0x18] sm:$0xff]
    %v1282 = vld [vmem:[%s29 + $0x20] sm:$0xff]
    %v1283 = vld [vmem:[%s29 + $0x28] sm:$0xff]
    %v1284 = vld [vmem:[%s29 + $0x30] sm:$0xff]
    %v1285 = vld [vmem:[%s29 + $0x38] sm:$0xff]
    %v1286 = vld [vmem:[%s31] sm:$0x1]
    %v1288 = vlaneseq
    %v1289 = vshrl.u32 %v1288, 7
    %v1290 = vsub.s32 0, %v1289
    %v1291 = vrot.slane %v1286, %v1290
    %v1294 = vsel %vm605, %v1274, 0
    %v1297 = vsel %vm605, %v1275, 0
    %v1300 = vsel %vm605, %v1276, 0
    %v1303 = vsel %vm605, %v1277, 0
    %1305 = vmatprep.subr.mxu0 0.0
    %1306 = vmatpush1.msra.mxu0 %v1278
    %1307 = vmatprep.subr.mxu0 0.0
    %1308 = vmatpush1.msra.mxu0 %v1279
    %1309 = vmatprep.subr.mxu0 0.0
    %1310 = vmatpush1.msra.mxu0 %v1280
    %1311 = vmatprep.subr.mxu0 0.0
    %1312 = vmatpush1.msra.mxu0 %v1281
    %1313 = vmatprep.subr.mxu0 0.0
    %1314 = vmatpush1.msra.mxu0 %v1282
    %1315 = vmatprep.subr.mxu0 0.0
    %1316 = vmatpush1.msra.mxu0 %v1283
    %1317 = vmatprep.subr.mxu0 0.0
    %1318 = vmatpush1.msra.mxu0 %v1284
    %1319 = vmatprep.subr.mxu0 0.0
    %1320 = vmatpush1.msra.mxu0 %v1285
    %1321 = vmatprep.subr.mxu0 0.0
    %1322 = vmatpush1.msra.mxu0 0.0
    %1323 = vmatprep.subr.mxu0 0.0
    %1324 = vmatpush1.msra.mxu0 0.0
    %1325 = vmatprep.subr.mxu0 0.0
    %1326 = vmatpush1.msra.mxu0 0.0
    %1327 = vmatprep.subr.mxu0 0.0
    %1328 = vmatpush1.msra.mxu0 0.0
    %1329 = vmatprep.subr.mxu0 0.0
    %1330 = vmatpush1.msra.mxu0 0.0
    %1331 = vmatprep.subr.mxu0 0.0
    %1332 = vmatpush1.msra.mxu0 0.0
    %1333 = vmatprep.subr.mxu0 0.0
    %1334 = vmatpush1.msra.mxu0 0.0
    %1335 = vmatprep.subr.mxu0 0.0
    %1336 = vmatpush1.msra.mxu0 0.0
    %1337 = vmatprep.subr.mxu0 0.0
    %1338 = vmatpush1.msra.mxu0 0.0
    %1339 = vmatprep.subr.mxu0 0.0
    %1340 = vmatpush1.msra.mxu0 0.0
    %1341 = vmatprep.subr.mxu0 0.0
    %1342 = vmatpush1.msra.mxu0 0.0
    %1343 = vmatprep.subr.mxu0 0.0
    %1344 = vmatpush1.msra.mxu0 0.0
    %1345 = vmatprep.subr.mxu0 0.0
    %1346 = vmatpush1.msra.mxu0 0.0
    %1347 = vmatprep.subr.mxu0 0.0
    %1348 = vmatpush1.msra.mxu0 0.0
    %1349 = vmatprep.subr.mxu0 0.0
    %1350 = vmatpush1.msra.mxu0 0.0
    %1351 = vmatprep.subr.mxu0 0.0
    %1352 = vmatpush1.msra.mxu0 0.0
    %1353 = vmatprep.subr.mxu0 0.0
    %1354 = vmatpush1.msra.mxu0 0.0
    %1355 = vmatprep.subr.mxu0 0.0
    %1356 = vmatpush1.msra.mxu0 0.0
    %1357 = vmatprep.subr.mxu0 0.0
    %1358 = vmatpush1.msra.mxu0 0.0
    %1359 = vmatprep.subr.mxu0 0.0
    %1360 = vmatpush1.msra.mxu0 0.0
    %1361 = vmatprep.subr.mxu0 0.0
    %1362 = vmatpush1.msra.mxu0 0.0
    %1363 = vmatprep.subr.mxu0 0.0
    %1364 = vmatpush1.msra.mxu0 0.0
    %1365 = vmatprep.subr.mxu0 0.0
    %1366 = vmatpush1.msra.mxu0 0.0
    %1367 = vmatprep.subr.mxu0 0.0
    %1368 = vmatpush1.msra.mxu0 0.0
    %1369 = vmatprep.mubr.f32.mxu0 0.0
    %1370 = vmatmul.mubr.f32.gmra.mrb[0].mxu0 %v1294
    %v1371 = vpop.f32.mrb[0].mxu0
    %v1372 = vadd.f32 %v1291, %v1371
    %v1373 = vpop.f32.mrb[0].mxu0
    %1374 = vmatprep.mubr.f32.mxu0 0.0
    %1375 = vmatmul.mubr.f32.gmra.mrb[0].mxu0 %v1297
    %v1376 = vpop.f32.mrb[0].mxu0
    %v1377 = vadd.f32 %v1291, %v1376
    %v1378 = vpop.f32.mrb[0].mxu0
    %1379 = vmatprep.mubr.f32.mxu0 0.0
    %1380 = vmatmul.mubr.f32.gmra.mrb[0].mxu0 %v1300
    %v1381 = vpop.f32.mrb[0].mxu0
    %v1382 = vadd.f32 %v1291, %v1381
    %v1383 = vpop.f32.mrb[0].mxu0
    %1384 = vmatprep.mubr.f32.mxu0 0.0
    %1385 = vmatmul.mubr.f32.gmra.mrb[0].mxu0 %v1303
    %v1386 = vpop.f32.mrb[0].mxu0
    %v1387 = vadd.f32 %v1291, %v1386
    %v1388 = vpop.f32.mrb[0].mxu0
    %1389 = vdwg.mxu0
    %v1390 = vld [vmem:[%s33] sm:$0xff]
    %v1391 = vld [vmem:[%s33 + $0x8] sm:$0xff]
    %v1392 = vld [vmem:[%s33 + $0x10] sm:$0xff]
    %v1393 = vld [vmem:[%s33 + $0x18] sm:$0xff]
    %v1394 = vld [vmem:[%s33 + $0x20] sm:$0xff]
    %v1395 = vld [vmem:[%s33 + $0x28] sm:$0xff]
    %v1396 = vld [vmem:[%s33 + $0x30] sm:$0xff]
    %v1397 = vld [vmem:[%s33 + $0x38] sm:$0xff]
    %v1398 = vld [vmem:[%s35] sm:$0x1]
    %v1400 = vlaneseq
    %v1401 = vshrl.u32 %v1400, 7
    %v1402 = vsub.s32 0, %v1401
    %v1403 = vrot.slane %v1398, %v1402
    %1405 = vmatprep.subr.mxu0 0.0
    %1406 = vmatpush1.msra.mxu0 %v1390
    %1407 = vmatprep.subr.mxu0 0.0
    %1408 = vmatpush1.msra.mxu0 %v1391
    %1409 = vmatprep.subr.mxu0 0.0
    %1410 = vmatpush1.msra.mxu0 %v1392
    %1411 = vmatprep.subr.mxu0 0.0
    %1412 = vmatpush1.msra.mxu0 %v1393
    %1413 = vmatprep.subr.mxu0 0.0
    %1414 = vmatpush1.msra.mxu0 %v1394
    %1415 = vmatprep.subr.mxu0 0.0
    %1416 = vmatpush1.msra.mxu0 %v1395
    %1417 = vmatprep.subr.mxu0 0.0
    %1418 = vmatpush1.msra.mxu0 %v1396
    %1419 = vmatprep.subr.mxu0 0.0
    %1420 = vmatpush1.msra.mxu0 %v1397
    %1421 = vmatprep.subr.mxu0 0.0
    %1422 = vmatpush1.msra.mxu0 0.0
    %1423 = vmatprep.subr.mxu0 0.0
    %1424 = vmatpush1.msra.mxu0 0.0
    %1425 = vmatprep.subr.mxu0 0.0
    %1426 = vmatpush1.msra.mxu0 0.0
    %1427 = vmatprep.subr.mxu0 0.0
    %1428 = vmatpush1.msra.mxu0 0.0
    %1429 = vmatprep.subr.mxu0 0.0
    %1430 = vmatpush1.msra.mxu0 0.0
    %1431 = vmatprep.subr.mxu0 0.0
    %1432 = vmatpush1.msra.mxu0 0.0
    %1433 = vmatprep.subr.mxu0 0.0
    %1434 = vmatpush1.msra.mxu0 0.0
    %1435 = vmatprep.subr.mxu0 0.0
    %1436 = vmatpush1.msra.mxu0 0.0
    %1437 = vmatprep.subr.mxu0 0.0
    %1438 = vmatpush1.msra.mxu0 0.0
    %1439 = vmatprep.subr.mxu0 0.0
    %1440 = vmatpush1.msra.mxu0 0.0
    %1441 = vmatprep.subr.mxu0 0.0
    %1442 = vmatpush1.msra.mxu0 0.0
    %1443 = vmatprep.subr.mxu0 0.0
    %1444 = vmatpush1.msra.mxu0 0.0
    %1445 = vmatprep.subr.mxu0 0.0
    %1446 = vmatpush1.msra.mxu0 0.0
    %1447 = vmatprep.subr.mxu0 0.0
    %1448 = vmatpush1.msra.mxu0 0.0
    %1449 = vmatprep.subr.mxu0 0.0
    %1450 = vmatpush1.msra.mxu0 0.0
    %1451 = vmatprep.subr.mxu0 0.0
    %1452 = vmatpush1.msra.mxu0 0.0
    %1453 = vmatprep.subr.mxu0 0.0
    %1454 = vmatpush1.msra.mxu0 0.0
    %1455 = vmatprep.subr.mxu0 0.0
    %1456 = vmatpush1.msra.mxu0 0.0
    %1457 = vmatprep.subr.mxu0 0.0
    %1458 = vmatpush1.msra.mxu0 0.0
    %1459 = vmatprep.subr.mxu0 0.0
    %1460 = vmatpush1.msra.mxu0 0.0
    %1461 = vmatprep.subr.mxu0 0.0
    %1462 = vmatpush1.msra.mxu0 0.0
    %1463 = vmatprep.subr.mxu0 0.0
    %1464 = vmatpush1.msra.mxu0 0.0
    %1465 = vmatprep.subr.mxu0 0.0
    %1466 = vmatpush1.msra.mxu0 0.0
    %1467 = vmatprep.subr.mxu0 0.0
    %1468 = vmatpush1.msra.mxu0 0.0
    %1469 = vmatprep.mubr.f32.mxu0 0.0
    %1470 = vmatmul.mubr.f32.gmra.mrb[0].mxu0 %v1294
    %v1471 = vpop.f32.mrb[0].mxu0
    %v1472 = vadd.f32 %v1403, %v1471
    %v1473 = vpop.f32.mrb[0].mxu0
    %1474 = vmatprep.mubr.f32.mxu0 0.0
    %1475 = vmatmul.mubr.f32.gmra.mrb[0].mxu0 %v1297
    %v1476 = vpop.f32.mrb[0].mxu0
    %v1477 = vadd.f32 %v1403, %v1476
    %v1478 = vpop.f32.mrb[0].mxu0
    %1479 = vmatprep.mubr.f32.mxu0 0.0
    %1480 = vmatmul.mubr.f32.gmra.mrb[0].mxu0 %v1300
    %v1481 = vpop.f32.mrb[0].mxu0
    %v1482 = vadd.f32 %v1403, %v1481
    %v1483 = vpop.f32.mrb[0].mxu0
    %1484 = vmatprep.mubr.f32.mxu0 0.0
    %1485 = vmatmul.mubr.f32.gmra.mrb[0].mxu0 %v1303
    %v1486 = vpop.f32.mrb[0].mxu0
    %v1487 = vadd.f32 %v1403, %v1486
    %v1488 = vpop.f32.mrb[0].mxu0
    %1489 = vdwg.mxu0
    %v1490 = vld [vmem:[%s37] sm:$0xff]
    %v1491 = vld [vmem:[%s37 + $0x8] sm:$0xff]
    %v1492 = vld [vmem:[%s37 + $0x10] sm:$0xff]
    %v1493 = vld [vmem:[%s37 + $0x18] sm:$0xff]
    %v1494 = vld [vmem:[%s37 + $0x20] sm:$0xff]
    %v1495 = vld [vmem:[%s37 + $0x28] sm:$0xff]
    %v1496 = vld [vmem:[%s37 + $0x30] sm:$0xff]
    %v1497 = vld [vmem:[%s37 + $0x38] sm:$0xff]
    %v1498 = vld [vmem:[%s39] sm:$0x1]
    %v1500 = vlaneseq
    %v1501 = vshrl.u32 %v1500, 7
    %v1502 = vsub.s32 0, %v1501
    %v1503 = vrot.slane %v1498, %v1502
    %1505 = vmatprep.subr.mxu0 0.0
    %1506 = vmatpush1.msra.mxu0 %v1490
    %1507 = vmatprep.subr.mxu0 0.0
    %1508 = vmatpush1.msra.mxu0 %v1491
    %1509 = vmatprep.subr.mxu0 0.0
    %1510 = vmatpush1.msra.mxu0 %v1492
    %1511 = vmatprep.subr.mxu0 0.0
    %1512 = vmatpush1.msra.mxu0 %v1493
    %1513 = vmatprep.subr.mxu0 0.0
    %1514 = vmatpush1.msra.mxu0 %v1494
    %1515 = vmatprep.subr.mxu0 0.0
    %1516 = vmatpush1.msra.mxu0 %v1495
    %1517 = vmatprep.subr.mxu0 0.0
    %1518 = vmatpush1.msra.mxu0 %v1496
    %1519 = vmatprep.subr.mxu0 0.0
    %1520 = vmatpush1.msra.mxu0 %v1497
    %1521 = vmatprep.subr.mxu0 0.0
    %1522 = vmatpush1.msra.mxu0 0.0
    %1523 = vmatprep.subr.mxu0 0.0
    %1524 = vmatpush1.msra.mxu0 0.0
    %1525 = vmatprep.subr.mxu0 0.0
    %1526 = vmatpush1.msra.mxu0 0.0
    %1527 = vmatprep.subr.mxu0 0.0
    %1528 = vmatpush1.msra.mxu0 0.0
    %1529 = vmatprep.subr.mxu0 0.0
    %1530 = vmatpush1.msra.mxu0 0.0
    %1531 = vmatprep.subr.mxu0 0.0
    %1532 = vmatpush1.msra.mxu0 0.0
    %1533 = vmatprep.subr.mxu0 0.0
    %1534 = vmatpush1.msra.mxu0 0.0
    %1535 = vmatprep.subr.mxu0 0.0
    %1536 = vmatpush1.msra.mxu0 0.0
    %1537 = vmatprep.subr.mxu0 0.0
    %1538 = vmatpush1.msra.mxu0 0.0
    %1539 = vmatprep.subr.mxu0 0.0
    %1540 = vmatpush1.msra.mxu0 0.0
    %1541 = vmatprep.subr.mxu0 0.0
    %1542 = vmatpush1.msra.mxu0 0.0
    %1543 = vmatprep.subr.mxu0 0.0
    %1544 = vmatpush1.msra.mxu0 0.0
    %1545 = vmatprep.subr.mxu0 0.0
    %1546 = vmatpush1.msra.mxu0 0.0
    %1547 = vmatprep.subr.mxu0 0.0
    %1548 = vmatpush1.msra.mxu0 0.0
    %1549 = vmatprep.subr.mxu0 0.0
    %1550 = vmatpush1.msra.mxu0 0.0
    %1551 = vmatprep.subr.mxu0 0.0
    %1552 = vmatpush1.msra.mxu0 0.0
    %1553 = vmatprep.subr.mxu0 0.0
    %1554 = vmatpush1.msra.mxu0 0.0
    %1555 = vmatprep.subr.mxu0 0.0
    %1556 = vmatpush1.msra.mxu0 0.0
    %1557 = vmatprep.subr.mxu0 0.0
    %1558 = vmatpush1.msra.mxu0 0.0
    %1559 = vmatprep.subr.mxu0 0.0
    %1560 = vmatpush1.msra.mxu0 0.0
    %1561 = vmatprep.subr.mxu0 0.0
    %1562 = vmatpush1.msra.mxu0 0.0
    %1563 = vmatprep.subr.mxu0 0.0
    %1564 = vmatpush1.msra.mxu0 0.0
    %1565 = vmatprep.subr.mxu0 0.0
    %1566 = vmatpush1.msra.mxu0 0.0
    %1567 = vmatprep.subr.mxu0 0.0
    %1568 = vmatpush1.msra.mxu0 0.0
    %1569 = vmatprep.mubr.f32.mxu0 0.0
    %1570 = vmatmul.mubr.f32.gmra.mrb[0].mxu0 %v1294
    %v1571 = vpop.f32.mrb[0].mxu0
    %v1572 = vadd.f32 %v1503, %v1571
    %v1573 = vpop.f32.mrb[0].mxu0
    %1574 = vmatprep.mubr.f32.mxu0 0.0
    %1575 = vmatmul.mubr.f32.gmra.mrb[0].mxu0 %v1297
    %v1576 = vpop.f32.mrb[0].mxu0
    %v1577 = vadd.f32 %v1503, %v1576
    %v1578 = vpop.f32.mrb[0].mxu0
    %1579 = vmatprep.mubr.f32.mxu0 0.0
    %1580 = vmatmul.mubr.f32.gmra.mrb[0].mxu0 %v1300
    %v1581 = vpop.f32.mrb[0].mxu0
    %v1582 = vadd.f32 %v1503, %v1581
    %v1583 = vpop.f32.mrb[0].mxu0
    %1584 = vmatprep.mubr.f32.mxu0 0.0
    %1585 = vmatmul.mubr.f32.gmra.mrb[0].mxu0 %v1303
    %v1586 = vpop.f32.mrb[0].mxu0
    %v1587 = vadd.f32 %v1503, %v1586
    %v1588 = vpop.f32.mrb[0].mxu0
    %1589 = vdwg.mxu0
    %v1590 = vmul.f32 %v1372, 0.17677669
    %v1591 = vmul.f32 %v1377, 0.17677669
    %v1592 = vmul.f32 %v1382, 0.17677669
    %v1593 = vmul.f32 %v1387, 0.17677669
    %vm1594 = vcmask 261120
    %v1596 = vsel %vm1594, %v1590, 0
    %v1599 = vsel %vm1594, %v1591, 0
    %v1602 = vsel %vm1594, %v1592, 0
    %v1605 = vsel %vm1594, %v1593, 0
    %v1608 = vsel %vm1594, %v1472, 0
    %v1611 = vsel %vm1594, %v1477, 0
    %v1614 = vsel %vm1594, %v1482, 0
    %v1617 = vsel %vm1594, %v1487, 0
    %1619 = vmatprep.subr.mxu0 0.0
    %1620 = vmatpush1.xpose.msra.mxu0 %v1608
    %1621 = vmatprep.subr.mxu0 0.0
    %1622 = vmatpush1.xpose.msra.mxu0 %v1611
    %1623 = vmatprep.subr.mxu0 0.0
    %1624 = vmatpush1.xpose.msra.mxu0 %v1614
    %1625 = vmatprep.subr.mxu0 0.0
    %1626 = vmatpush1.xpose.msra.mxu0 %v1617
    %1627 = vmatprep.subr.mxu0 0.0
    %1628 = vmatpush1.xpose.msra.mxu0 0.0
    %1629 = vmatprep.subr.mxu0 0.0
    %1630 = vmatpush1.xpose.msra.mxu0 0.0
    %1631 = vmatprep.subr.mxu0 0.0
    %1632 = vmatpush1.xpose.msra.mxu0 0.0
    %1633 = vmatprep.subr.mxu0 0.0
    %1634 = vmatpush1.xpose.msra.mxu0 0.0
    %1635 = vmatprep.subr.mxu0 0.0
    %1636 = vmatpush1.xpose.msra.mxu0 0.0
    %1637 = vmatprep.subr.mxu0 0.0
    %1638 = vmatpush1.xpose.msra.mxu0 0.0
    %1639 = vmatprep.subr.mxu0 0.0
    %1640 = vmatpush1.xpose.msra.mxu0 0.0
    %1641 = vmatprep.subr.mxu0 0.0
    %1642 = vmatpush1.xpose.msra.mxu0 0.0
    %1643 = vmatprep.subr.mxu0 0.0
    %1644 = vmatpush1.xpose.msra.mxu0 0.0
    %1645 = vmatprep.subr.mxu0 0.0
    %1646 = vmatpush1.xpose.msra.mxu0 0.0
    %1647 = vmatprep.subr.mxu0 0.0
    %1648 = vmatpush1.xpose.msra.mxu0 0.0
    %1649 = vmatprep.subr.mxu0 0.0
    %1650 = vmatpush1.xpose.msra.mxu0 0.0
    %1651 = vmatprep.subr.mxu0 0.0
    %1652 = vmatpush1.xpose.msra.mxu0 0.0
    %1653 = vmatprep.subr.mxu0 0.0
    %1654 = vmatpush1.xpose.msra.mxu0 0.0
    %1655 = vmatprep.subr.mxu0 0.0
    %1656 = vmatpush1.xpose.msra.mxu0 0.0
    %1657 = vmatprep.subr.mxu0 0.0
    %1658 = vmatpush1.xpose.msra.mxu0 0.0
    %1659 = vmatprep.subr.mxu0 0.0
    %1660 = vmatpush1.xpose.msra.mxu0 0.0
    %1661 = vmatprep.subr.mxu0 0.0
    %1662 = vmatpush1.xpose.msra.mxu0 0.0
    %1663 = vmatprep.subr.mxu0 0.0
    %1664 = vmatpush1.xpose.msra.mxu0 0.0
    %1665 = vmatprep.subr.mxu0 0.0
    %1666 = vmatpush1.xpose.msra.mxu0 0.0
    %1667 = vmatprep.subr.mxu0 0.0
    %1668 = vmatpush1.xpose.msra.mxu0 0.0
    %1669 = vmatprep.subr.mxu0 0.0
    %1670 = vmatpush1.xpose.msra.mxu0 0.0
    %1671 = vmatprep.subr.mxu0 0.0
    %1672 = vmatpush1.xpose.msra.mxu0 0.0
    %1673 = vmatprep.subr.mxu0 0.0
    %1674 = vmatpush1.xpose.msra.mxu0 0.0
    %1675 = vmatprep.subr.mxu0 0.0
    %1676 = vmatpush1.xpose.msra.mxu0 0.0
    %1677 = vmatprep.subr.mxu0 0.0
    %1678 = vmatpush1.xpose.msra.mxu0 0.0
    %1679 = vmatprep.subr.mxu0 0.0
    %1680 = vmatpush1.xpose.msra.mxu0 0.0
    %1681 = vmatprep.subr.mxu0 0.0
    %1682 = vmatpush1.xpose.msra.mxu0 0.0
    %1683 = vmatprep.mubr.f32.mxu0 0.0
    %1684 = vmatmul.mubr.f32.gmra.mrb[0].mxu0 %v1596
    %v1685 = vpop.f32.mrb[0].mxu0
    %v1686 = vadd.f32 0.0, %v1685
    %v1687 = vpop.f32.mrb[0].mxu0
    %1688 = vmatprep.mubr.f32.mxu0 0.0
    %1689 = vmatmul.mubr.f32.gmra.mrb[0].mxu0 %v1599
    %v1690 = vpop.f32.mrb[0].mxu0
    %v1691 = vadd.f32 0.0, %v1690
    %v1692 = vpop.f32.mrb[0].mxu0
    %1693 = vmatprep.mubr.f32.mxu0 0.0
    %1694 = vmatmul.mubr.f32.gmra.mrb[0].mxu0 %v1602
    %v1695 = vpop.f32.mrb[0].mxu0
    %v1696 = vadd.f32 0.0, %v1695
    %v1697 = vpop.f32.mrb[0].mxu0
    %1698 = vmatprep.mubr.f32.mxu0 0.0
    %1699 = vmatmul.mubr.f32.gmra.mrb[0].mxu0 %v1605
    %v1700 = vpop.f32.mrb[0].mxu0
    %v1701 = vadd.f32 0.0, %v1700
    %v1702 = vpop.f32.mrb[0].mxu0
    %1703 = vdwg.mxu0
    %v1704 = vsel %vm1594, %v1686, -inf
    %1705 = vmax.xlane.f32.xlu0 %v1704
    %v1706 = vpop.xlane.xlu0 %1705
    %v1707 = vsel %vm1594, %v1691, -inf
    %1708 = vmax.xlane.f32.xlu0 %v1707
    %v1709 = vpop.xlane.xlu0 %1708
    %v1710 = vsel %vm1594, %v1696, -inf
    %1711 = vmax.xlane.f32.xlu0 %v1710
    %v1712 = vpop.xlane.xlu0 %1711
    %v1713 = vsel %vm1594, %v1701, -inf
    %1714 = vmax.xlane.f32.xlu0 %v1713
    %v1715 = vpop.xlane.xlu0 %1714
    %v1716 = vsub.f32 %v1686, %v1706
    %v1717 = vsub.f32 %v1691, %v1709
    %v1718 = vsub.f32 %v1696, %v1712
    %v1719 = vsub.f32 %v1701, %v1715
    %v1720 = vmul.f32 %v1716, 1.442695
    %v1721 = vpow.pop %v1720
    %v1722 = vmul.f32 %v1717, 1.442695
    %v1723 = vpow.pop %v1722
    %v1724 = vmul.f32 %v1718, 1.442695
    %v1725 = vpow.pop %v1724
    %v1726 = vmul.f32 %v1719, 1.442695
    %v1727 = vpow.pop %v1726
    %v1728 = vmul.f32 %v1721, %v586
    %v1729 = vmul.f32 %v1723, %v587
    %v1730 = vmul.f32 %v1725, %v588
    %v1731 = vmul.f32 %v1727, %v589
    %v1732 = vsel %vm1594, %v1728, 0.0
    %1733 = vadd.xlane.f32.xlu0 %v1732
    %v1734 = vpop.xlane.xlu0 %1733
    %v1735 = vsel %vm1594, %v1729, 0.0
    %1736 = vadd.xlane.f32.xlu0 %v1735
    %v1737 = vpop.xlane.xlu0 %1736
    %v1738 = vsel %vm1594, %v1730, 0.0
    %1739 = vadd.xlane.f32.xlu0 %v1738
    %v1740 = vpop.xlane.xlu0 %1739
    %v1741 = vsel %vm1594, %v1731, 0.0
    %1742 = vadd.xlane.f32.xlu0 %v1741
    %v1743 = vpop.xlane.xlu0 %1742
    %v1744 = vrcp.pop %v1734
    %v1745 = vrcp.pop %v1737
    %v1746 = vrcp.pop %v1740
    %v1747 = vrcp.pop %v1743
    %v1748 = vmul.f32 %v1728, %v1744
    %v1749 = vmul.f32 %v1729, %v1745
    %v1750 = vmul.f32 %v1730, %v1746
    %v1751 = vmul.f32 %v1731, %v1747
    %v1753 = vsel %vm1594, %v1748, 0
    %v1756 = vsel %vm1594, %v1749, 0
    %v1759 = vsel %vm1594, %v1750, 0
    %v1762 = vsel %vm1594, %v1751, 0
    %1764 = vmatprep.subr.mxu0 0.0
    %1765 = vmatpush1.msra.mxu0 %v1572
    %1766 = vmatprep.subr.mxu0 0.0
    %1767 = vmatpush1.msra.mxu0 %v1577
    %1768 = vmatprep.subr.mxu0 0.0
    %1769 = vmatpush1.msra.mxu0 %v1582
    %1770 = vmatprep.subr.mxu0 0.0
    %1771 = vmatpush1.msra.mxu0 %v1587
    %1772 = vmatprep.subr.mxu0 0.0
    %1773 = vmatpush1.msra.mxu0 0.0
    %1774 = vmatprep.subr.mxu0 0.0
    %1775 = vmatpush1.msra.mxu0 0.0
    %1776 = vmatprep.subr.mxu0 0.0
    %1777 = vmatpush1.msra.mxu0 0.0
    %1778 = vmatprep.subr.mxu0 0.0
    %1779 = vmatpush1.msra.mxu0 0.0
    %1780 = vmatprep.subr.mxu0 0.0
    %1781 = vmatpush1.msra.mxu0 0.0
    %1782 = vmatprep.subr.mxu0 0.0
    %1783 = vmatpush1.msra.mxu0 0.0
    %1784 = vmatprep.subr.mxu0 0.0
    %1785 = vmatpush1.msra.mxu0 0.0
    %1786 = vmatprep.subr.mxu0 0.0
    %1787 = vmatpush1.msra.mxu0 0.0
    %1788 = vmatprep.subr.mxu0 0.0
    %1789 = vmatpush1.msra.mxu0 0.0
    %1790 = vmatprep.subr.mxu0 0.0
    %1791 = vmatpush1.msra.mxu0 0.0
    %1792 = vmatprep.subr.mxu0 0.0
    %1793 = vmatpush1.msra.mxu0 0.0
    %1794 = vmatprep.subr.mxu0 0.0
    %1795 = vmatpush1.msra.mxu0 0.0
    %1796 = vmatprep.subr.mxu0 0.0
    %1797 = vmatpush1.msra.mxu0 0.0
    %1798 = vmatprep.subr.mxu0 0.0
    %1799 = vmatpush1.msra.mxu0 0.0
    %1800 = vmatprep.subr.mxu0 0.0
    %1801 = vmatpush1.msra.mxu0 0.0
    %1802 = vmatprep.subr.mxu0 0.0
    %1803 = vmatpush1.msra.mxu0 0.0
    %1804 = vmatprep.subr.mxu0 0.0
    %1805 = vmatpush1.msra.mxu0 0.0
    %1806 = vmatprep.subr.mxu0 0.0
    %1807 = vmatpush1.msra.mxu0 0.0
    %1808 = vmatprep.subr.mxu0 0.0
    %1809 = vmatpush1.msra.mxu0 0.0
    %1810 = vmatprep.subr.mxu0 0.0
    %1811 = vmatpush1.msra.mxu0 0.0
    %1812 = vmatprep.subr.mxu0 0.0
    %1813 = vmatpush1.msra.mxu0 0.0
    %1814 = vmatprep.subr.mxu0 0.0
    %1815 = vmatpush1.msra.mxu0 0.0
    %1816 = vmatprep.subr.mxu0 0.0
    %1817 = vmatpush1.msra.mxu0 0.0
    %1818 = vmatprep.subr.mxu0 0.0
    %1819 = vmatpush1.msra.mxu0 0.0
    %1820 = vmatprep.subr.mxu0 0.0
    %1821 = vmatpush1.msra.mxu0 0.0
    %1822 = vmatprep.subr.mxu0 0.0
    %1823 = vmatpush1.msra.mxu0 0.0
    %1824 = vmatprep.subr.mxu0 0.0
    %1825 = vmatpush1.msra.mxu0 0.0
    %1826 = vmatprep.subr.mxu0 0.0
    %1827 = vmatpush1.msra.mxu0 0.0
    %1828 = vmatprep.mubr.f32.mxu0 0.0
    %1829 = vmatmul.mubr.f32.gmra.mrb[0].mxu0 %v1753
    %v1830 = vpop.f32.mrb[0].mxu0
    %v1831 = vadd.f32 0.0, %v1830
    %v1832 = vpop.f32.mrb[0].mxu0
    %1833 = vmatprep.mubr.f32.mxu0 0.0
    %1834 = vmatmul.mubr.f32.gmra.mrb[0].mxu0 %v1756
    %v1835 = vpop.f32.mrb[0].mxu0
    %v1836 = vadd.f32 0.0, %v1835
    %v1837 = vpop.f32.mrb[0].mxu0
    %1838 = vmatprep.mubr.f32.mxu0 0.0
    %1839 = vmatmul.mubr.f32.gmra.mrb[0].mxu0 %v1759
    %v1840 = vpop.f32.mrb[0].mxu0
    %v1841 = vadd.f32 0.0, %v1840
    %v1842 = vpop.f32.mrb[0].mxu0
    %1843 = vmatprep.mubr.f32.mxu0 0.0
    %1844 = vmatmul.mubr.f32.gmra.mrb[0].mxu0 %v1762
    %v1845 = vpop.f32.mrb[0].mxu0
    %v1846 = vadd.f32 0.0, %v1845
    %v1847 = vpop.f32.mrb[0].mxu0
    %1848 = vdwg.mxu0
    %v1849 = vld [vmem:[%s41] sm:$0xff]
    %v1850 = vld [vmem:[%s41 + $0x8] sm:$0xff]
    %v1851 = vld [vmem:[%s41 + $0x10] sm:$0xff]
    %v1852 = vld [vmem:[%s41 + $0x18] sm:$0xff]
    %s1853 = scalar_lea.vmem %s29, 64
    %v1854 = vld [vmem:[%s1853] sm:$0xff]
    %v1855 = vld [vmem:[%s1853 + $0x8] sm:$0xff]
    %v1856 = vld [vmem:[%s1853 + $0x10] sm:$0xff]
    %v1857 = vld [vmem:[%s1853 + $0x18] sm:$0xff]
    %v1858 = vld [vmem:[%s1853 + $0x20] sm:$0xff]
    %v1859 = vld [vmem:[%s1853 + $0x28] sm:$0xff]
    %v1860 = vld [vmem:[%s1853 + $0x30] sm:$0xff]
    %v1861 = vld [vmem:[%s1853 + $0x38] sm:$0xff]
    %s1862 = scalar_lea.vmem %s31, 1
    %v1863 = vld [vmem:[%s1862] sm:$0x1]
    %v1865 = vlaneseq
    %v1866 = vshrl.u32 %v1865, 7
    %v1867 = vsub.s32 0, %v1866
    %v1868 = vrot.slane %v1863, %v1867
    %1870 = vmatprep.subr.mxu0 0.0
    %1871 = vmatpush1.msra.mxu0 %v1854
    %1872 = vmatprep.subr.mxu0 0.0
    %1873 = vmatpush1.msra.mxu0 %v1855
    %1874 = vmatprep.subr.mxu0 0.0
    %1875 = vmatpush1.msra.mxu0 %v1856
    %1876 = vmatprep.subr.mxu0 0.0
    %1877 = vmatpush1.msra.mxu0 %v1857
    %1878 = vmatprep.subr.mxu0 0.0
    %1879 = vmatpush1.msra.mxu0 %v1858
    %1880 = vmatprep.subr.mxu0 0.0
    %1881 = vmatpush1.msra.mxu0 %v1859
    %1882 = vmatprep.subr.mxu0 0.0
    %1883 = vmatpush1.msra.mxu0 %v1860
    %1884 = vmatprep.subr.mxu0 0.0
    %1885 = vmatpush1.msra.mxu0 %v1861
    %1886 = vmatprep.subr.mxu0 0.0
    %1887 = vmatpush1.msra.mxu0 0.0
    %1888 = vmatprep.subr.mxu0 0.0
    %1889 = vmatpush1.msra.mxu0 0.0
    %1890 = vmatprep.subr.mxu0 0.0
    %1891 = vmatpush1.msra.mxu0 0.0
    %1892 = vmatprep.subr.mxu0 0.0
    %1893 = vmatpush1.msra.mxu0 0.0
    %1894 = vmatprep.subr.mxu0 0.0
    %1895 = vmatpush1.msra.mxu0 0.0
    %1896 = vmatprep.subr.mxu0 0.0
    %1897 = vmatpush1.msra.mxu0 0.0
    %1898 = vmatprep.subr.mxu0 0.0
    %1899 = vmatpush1.msra.mxu0 0.0
    %1900 = vmatprep.subr.mxu0 0.0
    %1901 = vmatpush1.msra.mxu0 0.0
    %1902 = vmatprep.subr.mxu0 0.0
    %1903 = vmatpush1.msra.mxu0 0.0
    %1904 = vmatprep.subr.mxu0 0.0
    %1905 = vmatpush1.msra.mxu0 0.0
    %1906 = vmatprep.subr.mxu0 0.0
    %1907 = vmatpush1.msra.mxu0 0.0
    %1908 = vmatprep.subr.mxu0 0.0
    %1909 = vmatpush1.msra.mxu0 0.0
    %1910 = vmatprep.subr.mxu0 0.0
    %1911 = vmatpush1.msra.mxu0 0.0
    %1912 = vmatprep.subr.mxu0 0.0
    %1913 = vmatpush1.msra.mxu0 0.0
    %1914 = vmatprep.subr.mxu0 0.0
    %1915 = vmatpush1.msra.mxu0 0.0
    %1916 = vmatprep.subr.mxu0 0.0
    %1917 = vmatpush1.msra.mxu0 0.0
    %1918 = vmatprep.subr.mxu0 0.0
    %1919 = vmatpush1.msra.mxu0 0.0
    %1920 = vmatprep.subr.mxu0 0.0
    %1921 = vmatpush1.msra.mxu0 0.0
    %1922 = vmatprep.subr.mxu0 0.0
    %1923 = vmatpush1.msra.mxu0 0.0
    %1924 = vmatprep.subr.mxu0 0.0
    %1925 = vmatpush1.msra.mxu0 0.0
    %1926 = vmatprep.subr.mxu0 0.0
    %1927 = vmatpush1.msra.mxu0 0.0
    %1928 = vmatprep.subr.mxu0 0.0
    %1929 = vmatpush1.msra.mxu0 0.0
    %1930 = vmatprep.subr.mxu0 0.0
    %1931 = vmatpush1.msra.mxu0 0.0
    %1932 = vmatprep.subr.mxu0 0.0
    %1933 = vmatpush1.msra.mxu0 0.0
    %1934 = vmatprep.mubr.f32.mxu0 0.0
    %1935 = vmatmul.mubr.f32.gmra.mrb[0].mxu0 %v1294
    %v1936 = vpop.f32.mrb[0].mxu0
    %v1937 = vadd.f32 %v1868, %v1936
    %v1938 = vpop.f32.mrb[0].mxu0
    %1939 = vmatprep.mubr.f32.mxu0 0.0
    %1940 = vmatmul.mubr.f32.gmra.mrb[0].mxu0 %v1297
    %v1941 = vpop.f32.mrb[0].mxu0
    %v1942 = vadd.f32 %v1868, %v1941
    %v1943 = vpop.f32.mrb[0].mxu0
    %1944 = vmatprep.mubr.f32.mxu0 0.0
    %1945 = vmatmul.mubr.f32.gmra.mrb[0].mxu0 %v1300
    %v1946 = vpop.f32.mrb[0].mxu0
    %v1947 = vadd.f32 %v1868, %v1946
    %v1948 = vpop.f32.mrb[0].mxu0
    %1949 = vmatprep.mubr.f32.mxu0 0.0
    %1950 = vmatmul.mubr.f32.gmra.mrb[0].mxu0 %v1303
    %v1951 = vpop.f32.mrb[0].mxu0
    %v1952 = vadd.f32 %v1868, %v1951
    %v1953 = vpop.f32.mrb[0].mxu0
    %1954 = vdwg.mxu0
    %s1955 = scalar_lea.vmem %s33, 64
    %v1956 = vld [vmem:[%s1955] sm:$0xff]
    %v1957 = vld [vmem:[%s1955 + $0x8] sm:$0xff]
    %v1958 = vld [vmem:[%s1955 + $0x10] sm:$0xff]
    %v1959 = vld [vmem:[%s1955 + $0x18] sm:$0xff]
    %v1960 = vld [vmem:[%s1955 + $0x20] sm:$0xff]
    %v1961 = vld [vmem:[%s1955 + $0x28] sm:$0xff]
    %v1962 = vld [vmem:[%s1955 + $0x30] sm:$0xff]
    %v1963 = vld [vmem:[%s1955 + $0x38] sm:$0xff]
    %s1964 = scalar_lea.vmem %s35, 1
    %v1965 = vld [vmem:[%s1964] sm:$0x1]
    %v1967 = vlaneseq
    %v1968 = vshrl.u32 %v1967, 7
    %v1969 = vsub.s32 0, %v1968
    %v1970 = vrot.slane %v1965, %v1969
    %1972 = vmatprep.subr.mxu0 0.0
    %1973 = vmatpush1.msra.mxu0 %v1956
    %1974 = vmatprep.subr.mxu0 0.0
    %1975 = vmatpush1.msra.mxu0 %v1957
    %1976 = vmatprep.subr.mxu0 0.0
    %1977 = vmatpush1.msra.mxu0 %v1958
    %1978 = vmatprep.subr.mxu0 0.0
    %1979 = vmatpush1.msra.mxu0 %v1959
    %1980 = vmatprep.subr.mxu0 0.0
    %1981 = vmatpush1.msra.mxu0 %v1960
    %1982 = vmatprep.subr.mxu0 0.0
    %1983 = vmatpush1.msra.mxu0 %v1961
    %1984 = vmatprep.subr.mxu0 0.0
    %1985 = vmatpush1.msra.mxu0 %v1962
    %1986 = vmatprep.subr.mxu0 0.0
    %1987 = vmatpush1.msra.mxu0 %v1963
    %1988 = vmatprep.subr.mxu0 0.0
    %1989 = vmatpush1.msra.mxu0 0.0
    %1990 = vmatprep.subr.mxu0 0.0
    %1991 = vmatpush1.msra.mxu0 0.0
    %1992 = vmatprep.subr.mxu0 0.0
    %1993 = vmatpush1.msra.mxu0 0.0
    %1994 = vmatprep.subr.mxu0 0.0
    %1995 = vmatpush1.msra.mxu0 0.0
    %1996 = vmatprep.subr.mxu0 0.0
    %1997 = vmatpush1.msra.mxu0 0.0
    %1998 = vmatprep.subr.mxu0 0.0
    %1999 = vmatpush1.msra.mxu0 0.0
    %2000 = vmatprep.subr.mxu0 0.0
    %2001 = vmatpush1.msra.mxu0 0.0
    %2002 = vmatprep.subr.mxu0 0.0
    %2003 = vmatpush1.msra.mxu0 0.0
    %2004 = vmatprep.subr.mxu0 0.0
    %2005 = vmatpush1.msra.mxu0 0.0
    %2006 = vmatprep.subr.mxu0 0.0
    %2007 = vmatpush1.msra.mxu0 0.0
    %2008 = vmatprep.subr.mxu0 0.0
    %2009 = vmatpush1.msra.mxu0 0.0
    %2010 = vmatprep.subr.mxu0 0.0
    %2011 = vmatpush1.msra.mxu0 0.0
    %2012 = vmatprep.subr.mxu0 0.0
    %2013 = vmatpush1.msra.mxu0 0.0
    %2014 = vmatprep.subr.mxu0 0.0
    %2015 = vmatpush1.msra.mxu0 0.0
    %2016 = vmatprep.subr.mxu0 0.0
    %2017 = vmatpush1.msra.mxu0 0.0
    %2018 = vmatprep.subr.mxu0 0.0
    %2019 = vmatpush1.msra.mxu0 0.0
    %2020 = vmatprep.subr.mxu0 0.0
    %2021 = vmatpush1.msra.mxu0 0.0
    %2022 = vmatprep.subr.mxu0 0.0
    %2023 = vmatpush1.msra.mxu0 0.0
    %2024 = vmatprep.subr.mxu0 0.0
    %2025 = vmatpush1.msra.mxu0 0.0
    %2026 = vmatprep.subr.mxu0 0.0
    %2027 = vmatpush1.msra.mxu0 0.0
    %2028 = vmatprep.subr.mxu0 0.0
    %2029 = vmatpush1.msra.mxu0 0.0
    %2030 = vmatprep.subr.mxu0 0.0
    %2031 = vmatpush1.msra.mxu0 0.0
    %2032 = vmatprep.subr.mxu0 0.0
    %2033 = vmatpush1.msra.mxu0 0.0
    %2034 = vmatprep.subr.mxu0 0.0
    %2035 = vmatpush1.msra.mxu0 0.0
    %2036 = vmatprep.mubr.f32.mxu0 0.0
    %2037 = vmatmul.mubr.f32.gmra.mrb[0].mxu0 %v1294
    %v2038 = vpop.f32.mrb[0].mxu0
    %v2039 = vadd.f32 %v1970, %v2038
    %v2040 = vpop.f32.mrb[0].mxu0
    %2041 = vmatprep.mubr.f32.mxu0 0.0
    %2042 = vmatmul.mubr.f32.gmra.mrb[0].mxu0 %v1297
    %v2043 = vpop.f32.mrb[0].mxu0
    %v2044 = vadd.f32 %v1970, %v2043
    %v2045 = vpop.f32.mrb[0].mxu0
    %2046 = vmatprep.mubr.f32.mxu0 0.0
    %2047 = vmatmul.mubr.f32.gmra.mrb[0].mxu0 %v1300
    %v2048 = vpop.f32.mrb[0].mxu0
    %v2049 = vadd.f32 %v1970, %v2048
    %v2050 = vpop.f32.mrb[0].mxu0
    %2051 = vmatprep.mubr.f32.mxu0 0.0
    %2052 = vmatmul.mubr.f32.gmra.mrb[0].mxu0 %v1303
    %v2053 = vpop.f32.mrb[0].mxu0
    %v2054 = vadd.f32 %v1970, %v2053
    %v2055 = vpop.f32.mrb[0].mxu0
    %2056 = vdwg.mxu0
    %s2057 = scalar_lea.vmem %s37, 64
    %v2058 = vld [vmem:[%s2057] sm:$0xff]
    %v2059 = vld [vmem:[%s2057 + $0x8] sm:$0xff]
    %v2060 = vld [vmem:[%s2057 + $0x10] sm:$0xff]
    %v2061 = vld [vmem:[%s2057 + $0x18] sm:$0xff]
    %v2062 = vld [vmem:[%s2057 + $0x20] sm:$0xff]
    %v2063 = vld [vmem:[%s2057 + $0x28] sm:$0xff]
    %v2064 = vld [vmem:[%s2057 + $0x30] sm:$0xff]
    %v2065 = vld [vmem:[%s2057 + $0x38] sm:$0xff]
    %s2066 = scalar_lea.vmem %s39, 1
    %v2067 = vld [vmem:[%s2066] sm:$0x1]
    %v2069 = vlaneseq
    %v2070 = vshrl.u32 %v2069, 7
    %v2071 = vsub.s32 0, %v2070
    %v2072 = vrot.slane %v2067, %v2071
    %2074 = vmatprep.subr.mxu0 0.0
    %2075 = vmatpush1.msra.mxu0 %v2058
    %2076 = vmatprep.subr.mxu0 0.0
    %2077 = vmatpush1.msra.mxu0 %v2059
    %2078 = vmatprep.subr.mxu0 0.0
    %2079 = vmatpush1.msra.mxu0 %v2060
    %2080 = vmatprep.subr.mxu0 0.0
    %2081 = vmatpush1.msra.mxu0 %v2061
    %2082 = vmatprep.subr.mxu0 0.0
    %2083 = vmatpush1.msra.mxu0 %v2062
    %2084 = vmatprep.subr.mxu0 0.0
    %2085 = vmatpush1.msra.mxu0 %v2063
    %2086 = vmatprep.subr.mxu0 0.0
    %2087 = vmatpush1.msra.mxu0 %v2064
    %2088 = vmatprep.subr.mxu0 0.0
    %2089 = vmatpush1.msra.mxu0 %v2065
    %2090 = vmatprep.subr.mxu0 0.0
    %2091 = vmatpush1.msra.mxu0 0.0
    %2092 = vmatprep.subr.mxu0 0.0
    %2093 = vmatpush1.msra.mxu0 0.0
    %2094 = vmatprep.subr.mxu0 0.0
    %2095 = vmatpush1.msra.mxu0 0.0
    %2096 = vmatprep.subr.mxu0 0.0
    %2097 = vmatpush1.msra.mxu0 0.0
    %2098 = vmatprep.subr.mxu0 0.0
    %2099 = vmatpush1.msra.mxu0 0.0
    %2100 = vmatprep.subr.mxu0 0.0
    %2101 = vmatpush1.msra.mxu0 0.0
    %2102 = vmatprep.subr.mxu0 0.0
    %2103 = vmatpush1.msra.mxu0 0.0
    %2104 = vmatprep.subr.mxu0 0.0
    %2105 = vmatpush1.msra.mxu0 0.0
    %2106 = vmatprep.subr.mxu0 0.0
    %2107 = vmatpush1.msra.mxu0 0.0
    %2108 = vmatprep.subr.mxu0 0.0
    %2109 = vmatpush1.msra.mxu0 0.0
    %2110 = vmatprep.subr.mxu0 0.0
    %2111 = vmatpush1.msra.mxu0 0.0
    %2112 = vmatprep.subr.mxu0 0.0
    %2113 = vmatpush1.msra.mxu0 0.0
    %2114 = vmatprep.subr.mxu0 0.0
    %2115 = vmatpush1.msra.mxu0 0.0
    %2116 = vmatprep.subr.mxu0 0.0
    %2117 = vmatpush1.msra.mxu0 0.0
    %2118 = vmatprep.subr.mxu0 0.0
    %2119 = vmatpush1.msra.mxu0 0.0
    %2120 = vmatprep.subr.mxu0 0.0
    %2121 = vmatpush1.msra.mxu0 0.0
    %2122 = vmatprep.subr.mxu0 0.0
    %2123 = vmatpush1.msra.mxu0 0.0
    %2124 = vmatprep.subr.mxu0 0.0
    %2125 = vmatpush1.msra.mxu0 0.0
    %2126 = vmatprep.subr.mxu0 0.0
    %2127 = vmatpush1.msra.mxu0 0.0
    %2128 = vmatprep.subr.mxu0 0.0
    %2129 = vmatpush1.msra.mxu0 0.0
    %2130 = vmatprep.subr.mxu0 0.0
    %2131 = vmatpush1.msra.mxu0 0.0
    %2132 = vmatprep.subr.mxu0 0.0
    %2133 = vmatpush1.msra.mxu0 0.0
    %2134 = vmatprep.subr.mxu0 0.0
    %2135 = vmatpush1.msra.mxu0 0.0
    %2136 = vmatprep.subr.mxu0 0.0
    %2137 = vmatpush1.msra.mxu0 0.0
    %2138 = vmatprep.mubr.f32.mxu0 0.0
    %2139 = vmatmul.mubr.f32.gmra.mrb[0].mxu0 %v1294
    %v2140 = vpop.f32.mrb[0].mxu0
    %v2141 = vadd.f32 %v2072, %v2140
    %v2142 = vpop.f32.mrb[0].mxu0
    %2143 = vmatprep.mubr.f32.mxu0 0.0
    %2144 = vmatmul.mubr.f32.gmra.mrb[0].mxu0 %v1297
    %v2145 = vpop.f32.mrb[0].mxu0
    %v2146 = vadd.f32 %v2072, %v2145
    %v2147 = vpop.f32.mrb[0].mxu0
    %2148 = vmatprep.mubr.f32.mxu0 0.0
    %2149 = vmatmul.mubr.f32.gmra.mrb[0].mxu0 %v1300
    %v2150 = vpop.f32.mrb[0].mxu0
    %v2151 = vadd.f32 %v2072, %v2150
    %v2152 = vpop.f32.mrb[0].mxu0
    %2153 = vmatprep.mubr.f32.mxu0 0.0
    %2154 = vmatmul.mubr.f32.gmra.mrb[0].mxu0 %v1303
    %v2155 = vpop.f32.mrb[0].mxu0
    %v2156 = vadd.f32 %v2072, %v2155
    %v2157 = vpop.f32.mrb[0].mxu0
    %2158 = vdwg.mxu0
    %v2159 = vmul.f32 %v1937, 0.17677669
    %v2160 = vmul.f32 %v1942, 0.17677669
    %v2161 = vmul.f32 %v1947, 0.17677669
    %v2162 = vmul.f32 %v1952, 0.17677669
    %v2164 = vsel %vm1594, %v2159, 0
    %v2167 = vsel %vm1594, %v2160, 0
    %v2170 = vsel %vm1594, %v2161, 0
    %v2173 = vsel %vm1594, %v2162, 0
    %v2176 = vsel %vm1594, %v2039, 0
    %v2179 = vsel %vm1594, %v2044, 0
    %v2182 = vsel %vm1594, %v2049, 0
    %v2185 = vsel %vm1594, %v2054, 0
    %2187 = vmatprep.subr.mxu0 0.0
    %2188 = vmatpush1.xpose.msra.mxu0 %v2176
    %2189 = vmatprep.subr.mxu0 0.0
    %2190 = vmatpush1.xpose.msra.mxu0 %v2179
    %2191 = vmatprep.subr.mxu0 0.0
    %2192 = vmatpush1.xpose.msra.mxu0 %v2182
    %2193 = vmatprep.subr.mxu0 0.0
    %2194 = vmatpush1.xpose.msra.mxu0 %v2185
    %2195 = vmatprep.subr.mxu0 0.0
    %2196 = vmatpush1.xpose.msra.mxu0 0.0
    %2197 = vmatprep.subr.mxu0 0.0
    %2198 = vmatpush1.xpose.msra.mxu0 0.0
    %2199 = vmatprep.subr.mxu0 0.0
    %2200 = vmatpush1.xpose.msra.mxu0 0.0
    %2201 = vmatprep.subr.mxu0 0.0
    %2202 = vmatpush1.xpose.msra.mxu0 0.0
    %2203 = vmatprep.subr.mxu0 0.0
    %2204 = vmatpush1.xpose.msra.mxu0 0.0
    %2205 = vmatprep.subr.mxu0 0.0
    %2206 = vmatpush1.xpose.msra.mxu0 0.0
    %2207 = vmatprep.subr.mxu0 0.0
    %2208 = vmatpush1.xpose.msra.mxu0 0.0
    %2209 = vmatprep.subr.mxu0 0.0
    %2210 = vmatpush1.xpose.msra.mxu0 0.0
    %2211 = vmatprep.subr.mxu0 0.0
    %2212 = vmatpush1.xpose.msra.mxu0 0.0
    %2213 = vmatprep.subr.mxu0 0.0
    %2214 = vmatpush1.xpose.msra.mxu0 0.0
    %2215 = vmatprep.subr.mxu0 0.0
    %2216 = vmatpush1.xpose.msra.mxu0 0.0
    %2217 = vmatprep.subr.mxu0 0.0
    %2218 = vmatpush1.xpose.msra.mxu0 0.0
    %2219 = vmatprep.subr.mxu0 0.0
    %2220 = vmatpush1.xpose.msra.mxu0 0.0
    %2221 = vmatprep.subr.mxu0 0.0
    %2222 = vmatpush1.xpose.msra.mxu0 0.0
    %2223 = vmatprep.subr.mxu0 0.0
    %2224 = vmatpush1.xpose.msra.mxu0 0.0
    %2225 = vmatprep.subr.mxu0 0.0
    %2226 = vmatpush1.xpose.msra.mxu0 0.0
    %2227 = vmatprep.subr.mxu0 0.0
    %2228 = vmatpush1.xpose.msra.mxu0 0.0
    %2229 = vmatprep.subr.mxu0 0.0
    %2230 = vmatpush1.xpose.msra.mxu0 0.0
    %2231 = vmatprep.subr.mxu0 0.0
    %2232 = vmatpush1.xpose.msra.mxu0 0.0
    %2233 = vmatprep.subr.mxu0 0.0
    %2234 = vmatpush1.xpose.msra.mxu0 0.0
    %2235 = vmatprep.subr.mxu0 0.0
    %2236 = vmatpush1.xpose.msra.mxu0 0.0
    %2237 = vmatprep.subr.mxu0 0.0
    %2238 = vmatpush1.xpose.msra.mxu0 0.0
    %2239 = vmatprep.subr.mxu0 0.0
    %2240 = vmatpush1.xpose.msra.mxu0 0.0
    %2241 = vmatprep.subr.mxu0 0.0
    %2242 = vmatpush1.xpose.msra.mxu0 0.0
    %2243 = vmatprep.subr.mxu0 0.0
    %2244 = vmatpush1.xpose.msra.mxu0 0.0
    %2245 = vmatprep.subr.mxu0 0.0
    %2246 = vmatpush1.xpose.msra.mxu0 0.0
    %2247 = vmatprep.subr.mxu0 0.0
    %2248 = vmatpush1.xpose.msra.mxu0 0.0
    %2249 = vmatprep.subr.mxu0 0.0
    %2250 = vmatpush1.xpose.msra.mxu0 0.0
    %2251 = vmatprep.mubr.f32.mxu0 0.0
    %2252 = vmatmul.mubr.f32.gmra.mrb[0].mxu0 %v2164
    %v2253 = vpop.f32.mrb[0].mxu0
    %v2254 = vadd.f32 0.0, %v2253
    %v2255 = vpop.f32.mrb[0].mxu0
    %2256 = vmatprep.mubr.f32.mxu0 0.0
    %2257 = vmatmul.mubr.f32.gmra.mrb[0].mxu0 %v2167
    %v2258 = vpop.f32.mrb[0].mxu0
    %v2259 = vadd.f32 0.0, %v2258
    %v2260 = vpop.f32.mrb[0].mxu0
    %2261 = vmatprep.mubr.f32.mxu0 0.0
    %2262 = vmatmul.mubr.f32.gmra.mrb[0].mxu0 %v2170
    %v2263 = vpop.f32.mrb[0].mxu0
    %v2264 = vadd.f32 0.0, %v2263
    %v2265 = vpop.f32.mrb[0].mxu0
    %2266 = vmatprep.mubr.f32.mxu0 0.0
    %2267 = vmatmul.mubr.f32.gmra.mrb[0].mxu0 %v2173
    %v2268 = vpop.f32.mrb[0].mxu0
    %v2269 = vadd.f32 0.0, %v2268
    %v2270 = vpop.f32.mrb[0].mxu0
    %2271 = vdwg.mxu0
    %v2272 = vsel %vm1594, %v2254, -inf
    %2273 = vmax.xlane.f32.xlu0 %v2272
    %v2274 = vpop.xlane.xlu0 %2273
    %v2275 = vsel %vm1594, %v2259, -inf
    %2276 = vmax.xlane.f32.xlu0 %v2275
    %v2277 = vpop.xlane.xlu0 %2276
    %v2278 = vsel %vm1594, %v2264, -inf
    %2279 = vmax.xlane.f32.xlu0 %v2278
    %v2280 = vpop.xlane.xlu0 %2279
    %v2281 = vsel %vm1594, %v2269, -inf
    %2282 = vmax.xlane.f32.xlu0 %v2281
    %v2283 = vpop.xlane.xlu0 %2282
    %v2284 = vsub.f32 %v2254, %v2274
    %v2285 = vsub.f32 %v2259, %v2277
    %v2286 = vsub.f32 %v2264, %v2280
    %v2287 = vsub.f32 %v2269, %v2283
    %v2288 = vmul.f32 %v2284, 1.442695
    %v2289 = vpow.pop %v2288
    %v2290 = vmul.f32 %v2285, 1.442695
    %v2291 = vpow.pop %v2290
    %v2292 = vmul.f32 %v2286, 1.442695
    %v2293 = vpow.pop %v2292
    %v2294 = vmul.f32 %v2287, 1.442695
    %v2295 = vpow.pop %v2294
    %v2296 = vmul.f32 %v2289, %v586
    %v2297 = vmul.f32 %v2291, %v587
    %v2298 = vmul.f32 %v2293, %v588
    %v2299 = vmul.f32 %v2295, %v589
    %v2300 = vsel %vm1594, %v2296, 0.0
    %2301 = vadd.xlane.f32.xlu0 %v2300
    %v2302 = vpop.xlane.xlu0 %2301
    %v2303 = vsel %vm1594, %v2297, 0.0
    %2304 = vadd.xlane.f32.xlu0 %v2303
    %v2305 = vpop.xlane.xlu0 %2304
    %v2306 = vsel %vm1594, %v2298, 0.0
    %2307 = vadd.xlane.f32.xlu0 %v2306
    %v2308 = vpop.xlane.xlu0 %2307
    %v2309 = vsel %vm1594, %v2299, 0.0
    %2310 = vadd.xlane.f32.xlu0 %v2309
    %v2311 = vpop.xlane.xlu0 %2310
    %v2312 = vrcp.pop %v2302
    %v2313 = vrcp.pop %v2305
    %v2314 = vrcp.pop %v2308
    %v2315 = vrcp.pop %v2311
    %v2316 = vmul.f32 %v2296, %v2312
    %v2317 = vmul.f32 %v2297, %v2313
    %v2318 = vmul.f32 %v2298, %v2314
    %v2319 = vmul.f32 %v2299, %v2315
    %v2321 = vsel %vm1594, %v2316, 0
    %v2324 = vsel %vm1594, %v2317, 0
    %v2327 = vsel %vm1594, %v2318, 0
    %v2330 = vsel %vm1594, %v2319, 0
    %2332 = vmatprep.subr.mxu0 0.0
    %2333 = vmatpush1.msra.mxu0 %v2141
    %2334 = vmatprep.subr.mxu0 0.0
    %2335 = vmatpush1.msra.mxu0 %v2146
    %2336 = vmatprep.subr.mxu0 0.0
    %2337 = vmatpush1.msra.mxu0 %v2151
    %2338 = vmatprep.subr.mxu0 0.0
    %2339 = vmatpush1.msra.mxu0 %v2156
    %2340 = vmatprep.subr.mxu0 0.0
    %2341 = vmatpush1.msra.mxu0 0.0
    %2342 = vmatprep.subr.mxu0 0.0
    %2343 = vmatpush1.msra.mxu0 0.0
    %2344 = vmatprep.subr.mxu0 0.0
    %2345 = vmatpush1.msra.mxu0 0.0
    %2346 = vmatprep.subr.mxu0 0.0
    %2347 = vmatpush1.msra.mxu0 0.0
    %2348 = vmatprep.subr.mxu0 0.0
    %2349 = vmatpush1.msra.mxu0 0.0
    %2350 = vmatprep.subr.mxu0 0.0
    %2351 = vmatpush1.msra.mxu0 0.0
    %2352 = vmatprep.subr.mxu0 0.0
    %2353 = vmatpush1.msra.mxu0 0.0
    %2354 = vmatprep.subr.mxu0 0.0
    %2355 = vmatpush1.msra.mxu0 0.0
    %2356 = vmatprep.subr.mxu0 0.0
    %2357 = vmatpush1.msra.mxu0 0.0
    %2358 = vmatprep.subr.mxu0 0.0
    %2359 = vmatpush1.msra.mxu0 0.0
    %2360 = vmatprep.subr.mxu0 0.0
    %2361 = vmatpush1.msra.mxu0 0.0
    %2362 = vmatprep.subr.mxu0 0.0
    %2363 = vmatpush1.msra.mxu0 0.0
    %2364 = vmatprep.subr.mxu0 0.0
    %2365 = vmatpush1.msra.mxu0 0.0
    %2366 = vmatprep.subr.mxu0 0.0
    %2367 = vmatpush1.msra.mxu0 0.0
    %2368 = vmatprep.subr.mxu0 0.0
    %2369 = vmatpush1.msra.mxu0 0.0
    %2370 = vmatprep.subr.mxu0 0.0
    %2371 = vmatpush1.msra.mxu0 0.0
    %2372 = vmatprep.subr.mxu0 0.0
    %2373 = vmatpush1.msra.mxu0 0.0
    %2374 = vmatprep.subr.mxu0 0.0
    %2375 = vmatpush1.msra.mxu0 0.0
    %2376 = vmatprep.subr.mxu0 0.0
    %2377 = vmatpush1.msra.mxu0 0.0
    %2378 = vmatprep.subr.mxu0 0.0
    %2379 = vmatpush1.msra.mxu0 0.0
    %2380 = vmatprep.subr.mxu0 0.0
    %2381 = vmatpush1.msra.mxu0 0.0
    %2382 = vmatprep.subr.mxu0 0.0
    %2383 = vmatpush1.msra.mxu0 0.0
    %2384 = vmatprep.subr.mxu0 0.0
    %2385 = vmatpush1.msra.mxu0 0.0
    %2386 = vmatprep.subr.mxu0 0.0
    %2387 = vmatpush1.msra.mxu0 0.0
    %2388 = vmatprep.subr.mxu0 0.0
    %2389 = vmatpush1.msra.mxu0 0.0
    %2390 = vmatprep.subr.mxu0 0.0
    %2391 = vmatpush1.msra.mxu0 0.0
    %2392 = vmatprep.subr.mxu0 0.0
    %2393 = vmatpush1.msra.mxu0 0.0
    %2394 = vmatprep.subr.mxu0 0.0
    %2395 = vmatpush1.msra.mxu0 0.0
    %2396 = vmatprep.mubr.f32.mxu0 0.0
    %2397 = vmatmul.mubr.f32.gmra.mrb[0].mxu0 %v2321
    %v2398 = vpop.f32.mrb[0].mxu0
    %v2399 = vadd.f32 0.0, %v2398
    %v2400 = vpop.f32.mrb[0].mxu0
    %2401 = vmatprep.mubr.f32.mxu0 0.0
    %2402 = vmatmul.mubr.f32.gmra.mrb[0].mxu0 %v2324
    %v2403 = vpop.f32.mrb[0].mxu0
    %v2404 = vadd.f32 0.0, %v2403
    %v2405 = vpop.f32.mrb[0].mxu0
    %2406 = vmatprep.mubr.f32.mxu0 0.0
    %2407 = vmatmul.mubr.f32.gmra.mrb[0].mxu0 %v2327
    %v2408 = vpop.f32.mrb[0].mxu0
    %v2409 = vadd.f32 0.0, %v2408
    %v2410 = vpop.f32.mrb[0].mxu0
    %2411 = vmatprep.mubr.f32.mxu0 0.0
    %2412 = vmatmul.mubr.f32.gmra.mrb[0].mxu0 %v2330
    %v2413 = vpop.f32.mrb[0].mxu0
    %v2414 = vadd.f32 0.0, %v2413
    %v2415 = vpop.f32.mrb[0].mxu0
    %2416 = vdwg.mxu0
    %s2417 = scalar_lea.vmem %s41, 32
    %v2418 = vld [vmem:[%s2417] sm:$0xff]
    %v2419 = vld [vmem:[%s2417 + $0x8] sm:$0xff]
    %v2420 = vld [vmem:[%s2417 + $0x10] sm:$0xff]
    %v2421 = vld [vmem:[%s2417 + $0x18] sm:$0xff]
    %v2423 = vsel %vm1594, %v2399, 0
    %v2426 = vsel %vm1594, %v2404, 0
    %v2429 = vsel %vm1594, %v2409, 0
    %v2432 = vsel %vm1594, %v2414, 0
    %2434 = vmatprep.subr.mxu0 0.0
    %2435 = vmatpush1.msra.mxu0 %v2418
    %2436 = vmatprep.subr.mxu0 0.0
    %2437 = vmatpush1.msra.mxu0 %v2419
    %2438 = vmatprep.subr.mxu0 0.0
    %2439 = vmatpush1.msra.mxu0 %v2420
    %2440 = vmatprep.subr.mxu0 0.0
    %2441 = vmatpush1.msra.mxu0 %v2421
    %2442 = vmatprep.subr.mxu0 0.0
    %2443 = vmatpush1.msra.mxu0 0.0
    %2444 = vmatprep.subr.mxu0 0.0
    %2445 = vmatpush1.msra.mxu0 0.0
    %2446 = vmatprep.subr.mxu0 0.0
    %2447 = vmatpush1.msra.mxu0 0.0
    %2448 = vmatprep.subr.mxu0 0.0
    %2449 = vmatpush1.msra.mxu0 0.0
    %2450 = vmatprep.subr.mxu0 0.0
    %2451 = vmatpush1.msra.mxu0 0.0
    %2452 = vmatprep.subr.mxu0 0.0
    %2453 = vmatpush1.msra.mxu0 0.0
    %2454 = vmatprep.subr.mxu0 0.0
    %2455 = vmatpush1.msra.mxu0 0.0
    %2456 = vmatprep.subr.mxu0 0.0
    %2457 = vmatpush1.msra.mxu0 0.0
    %2458 = vmatprep.subr.mxu0 0.0
    %2459 = vmatpush1.msra.mxu0 0.0
    %2460 = vmatprep.subr.mxu0 0.0
    %2461 = vmatpush1.msra.mxu0 0.0
    %2462 = vmatprep.subr.mxu0 0.0
    %2463 = vmatpush1.msra.mxu0 0.0
    %2464 = vmatprep.subr.mxu0 0.0
    %2465 = vmatpush1.msra.mxu0 0.0
    %2466 = vmatprep.subr.mxu0 0.0
    %2467 = vmatpush1.msra.mxu0 0.0
    %2468 = vmatprep.subr.mxu0 0.0
    %2469 = vmatpush1.msra.mxu0 0.0
    %2470 = vmatprep.subr.mxu0 0.0
    %2471 = vmatpush1.msra.mxu0 0.0
    %2472 = vmatprep.subr.mxu0 0.0
    %2473 = vmatpush1.msra.mxu0 0.0
    %2474 = vmatprep.subr.mxu0 0.0
    %2475 = vmatpush1.msra.mxu0 0.0
    %2476 = vmatprep.subr.mxu0 0.0
    %2477 = vmatpush1.msra.mxu0 0.0
    %2478 = vmatprep.subr.mxu0 0.0
    %2479 = vmatpush1.msra.mxu0 0.0
    %2480 = vmatprep.subr.mxu0 0.0
    %2481 = vmatpush1.msra.mxu0 0.0
    %2482 = vmatprep.subr.mxu0 0.0
    %2483 = vmatpush1.msra.mxu0 0.0
    %2484 = vmatprep.subr.mxu0 0.0
    %2485 = vmatpush1.msra.mxu0 0.0
    %2486 = vmatprep.subr.mxu0 0.0
    %2487 = vmatpush1.msra.mxu0 0.0
    %2488 = vmatprep.subr.mxu0 0.0
    %2489 = vmatpush1.msra.mxu0 0.0
    %2490 = vmatprep.subr.mxu0 0.0
    %2491 = vmatpush1.msra.mxu0 0.0
    %2492 = vmatprep.subr.mxu0 0.0
    %2493 = vmatpush1.msra.mxu0 0.0
    %2494 = vmatprep.subr.mxu0 0.0
    %2495 = vmatpush1.msra.mxu0 0.0
    %2496 = vmatprep.subr.mxu0 0.0
    %2497 = vmatpush1.msra.mxu0 0.0
    %2498 = vmatprep.mubr.f32.mxu0 0.0
    %2499 = vmatmul.mubr.f32.gmra.mrb[0].mxu0 %v2423
    %v2500 = vpop.f32.mrb[0].mxu0
    %v2501 = vadd.f32 0.0, %v2500
    %v2502 = vpop.f32.mrb[0].mxu0
    %2503 = vmatprep.mubr.f32.mxu0 0.0
    %2504 = vmatmul.mubr.f32.gmra.mrb[0].mxu0 %v2426
    %v2505 = vpop.f32.mrb[0].mxu0
    %v2506 = vadd.f32 0.0, %v2505
    %v2507 = vpop.f32.mrb[0].mxu0
    %2508 = vmatprep.mubr.f32.mxu0 0.0
    %2509 = vmatmul.mubr.f32.gmra.mrb[0].mxu0 %v2429
    %v2510 = vpop.f32.mrb[0].mxu0
    %v2511 = vadd.f32 0.0, %v2510
    %v2512 = vpop.f32.mrb[0].mxu0
    %2513 = vmatprep.mubr.f32.mxu0 0.0
    %2514 = vmatmul.mubr.f32.gmra.mrb[0].mxu0 %v2432
    %v2515 = vpop.f32.mrb[0].mxu0
    %v2516 = vadd.f32 0.0, %v2515
    %v2517 = vpop.f32.mrb[0].mxu0
    %2518 = vdwg.mxu0
    %v2520 = vsel %vm1594, %v1831, 0
    %v2523 = vsel %vm1594, %v1836, 0
    %v2526 = vsel %vm1594, %v1841, 0
    %v2529 = vsel %vm1594, %v1846, 0
    %2531 = vmatprep.subr.mxu0 0.0
    %2532 = vmatpush1.msra.mxu0 %v1849
    %2533 = vmatprep.subr.mxu0 0.0
    %2534 = vmatpush1.msra.mxu0 %v1850
    %2535 = vmatprep.subr.mxu0 0.0
    %2536 = vmatpush1.msra.mxu0 %v1851
    %2537 = vmatprep.subr.mxu0 0.0
    %2538 = vmatpush1.msra.mxu0 %v1852
    %2539 = vmatprep.subr.mxu0 0.0
    %2540 = vmatpush1.msra.mxu0 0.0
    %2541 = vmatprep.subr.mxu0 0.0
    %2542 = vmatpush1.msra.mxu0 0.0
    %2543 = vmatprep.subr.mxu0 0.0
    %2544 = vmatpush1.msra.mxu0 0.0
    %2545 = vmatprep.subr.mxu0 0.0
    %2546 = vmatpush1.msra.mxu0 0.0
    %2547 = vmatprep.subr.mxu0 0.0
    %2548 = vmatpush1.msra.mxu0 0.0
    %2549 = vmatprep.subr.mxu0 0.0
    %2550 = vmatpush1.msra.mxu0 0.0
    %2551 = vmatprep.subr.mxu0 0.0
    %2552 = vmatpush1.msra.mxu0 0.0
    %2553 = vmatprep.subr.mxu0 0.0
    %2554 = vmatpush1.msra.mxu0 0.0
    %2555 = vmatprep.subr.mxu0 0.0
    %2556 = vmatpush1.msra.mxu0 0.0
    %2557 = vmatprep.subr.mxu0 0.0
    %2558 = vmatpush1.msra.mxu0 0.0
    %2559 = vmatprep.subr.mxu0 0.0
    %2560 = vmatpush1.msra.mxu0 0.0
    %2561 = vmatprep.subr.mxu0 0.0
    %2562 = vmatpush1.msra.mxu0 0.0
    %2563 = vmatprep.subr.mxu0 0.0
    %2564 = vmatpush1.msra.mxu0 0.0
    %2565 = vmatprep.subr.mxu0 0.0
    %2566 = vmatpush1.msra.mxu0 0.0
    %2567 = vmatprep.subr.mxu0 0.0
    %2568 = vmatpush1.msra.mxu0 0.0
    %2569 = vmatprep.subr.mxu0 0.0
    %2570 = vmatpush1.msra.mxu0 0.0
    %2571 = vmatprep.subr.mxu0 0.0
    %2572 = vmatpush1.msra.mxu0 0.0
    %2573 = vmatprep.subr.mxu0 0.0
    %2574 = vmatpush1.msra.mxu0 0.0
    %2575 = vmatprep.subr.mxu0 0.0
    %2576 = vmatpush1.msra.mxu0 0.0
    %2577 = vmatprep.subr.mxu0 0.0
    %2578 = vmatpush1.msra.mxu0 0.0
    %2579 = vmatprep.subr.mxu0 0.0
    %2580 = vmatpush1.msra.mxu0 0.0
    %2581 = vmatprep.subr.mxu0 0.0
    %2582 = vmatpush1.msra.mxu0 0.0
    %2583 = vmatprep.subr.mxu0 0.0
    %2584 = vmatpush1.msra.mxu0 0.0
    %2585 = vmatprep.subr.mxu0 0.0
    %2586 = vmatpush1.msra.mxu0 0.0
    %2587 = vmatprep.subr.mxu0 0.0
    %2588 = vmatpush1.msra.mxu0 0.0
    %2589 = vmatprep.subr.mxu0 0.0
    %2590 = vmatpush1.msra.mxu0 0.0
    %2591 = vmatprep.subr.mxu0 0.0
    %2592 = vmatpush1.msra.mxu0 0.0
    %2593 = vmatprep.subr.mxu0 0.0
    %2594 = vmatpush1.msra.mxu0 0.0
    %2595 = vmatprep.mubr.f32.mxu0 0.0
    %2596 = vmatmul.mubr.f32.gmra.mrb[0].mxu0 %v2520
    %v2597 = vpop.f32.mrb[0].mxu0
    %v2598 = vadd.f32 %v2501, %v2597
    %v2599 = vpop.f32.mrb[0].mxu0
    %2600 = vmatprep.mubr.f32.mxu0 0.0
    %2601 = vmatmul.mubr.f32.gmra.mrb[0].mxu0 %v2523
    %v2602 = vpop.f32.mrb[0].mxu0
    %v2603 = vadd.f32 %v2506, %v2602
    %v2604 = vpop.f32.mrb[0].mxu0
    %2605 = vmatprep.mubr.f32.mxu0 0.0
    %2606 = vmatmul.mubr.f32.gmra.mrb[0].mxu0 %v2526
    %v2607 = vpop.f32.mrb[0].mxu0
    %v2608 = vadd.f32 %v2511, %v2607
    %v2609 = vpop.f32.mrb[0].mxu0
    %2610 = vmatprep.mubr.f32.mxu0 0.0
    %2611 = vmatmul.mubr.f32.gmra.mrb[0].mxu0 %v2529
    %v2612 = vpop.f32.mrb[0].mxu0
    %v2613 = vadd.f32 %v2516, %v2612
    %v2614 = vpop.f32.mrb[0].mxu0
    %2615 = vdwg.mxu0
    %v2616 = vld [vmem:[%s43] sm:$0x1]
    %v2618 = vlaneseq
    %v2619 = vshrl.u32 %v2618, 7
    %v2620 = vsub.s32 0, %v2619
    %v2621 = vrot.slane %v2616, %v2620
    %v2623 = vadd.f32 %v2598, %v2621
    %v2624 = vadd.f32 %v2603, %v2621
    %v2625 = vadd.f32 %v2608, %v2621
    %v2626 = vadd.f32 %v2613, %v2621
    %v2627 = vmul.f32 %v889, %v2623
    %v2628 = vmul.f32 %v894, %v2624
    %v2629 = vmul.f32 %v899, %v2625
    %v2630 = vmul.f32 %v904, %v2626
    %v2631 = vadd.f32 %v432, %v2627
    %v2632 = vadd.f32 %v433, %v2628
    %v2633 = vadd.f32 %v434, %v2629
    %v2634 = vadd.f32 %v435, %v2630
    %v2635 = vsel %vm605, %v2631, 0.0
    %2636 = vadd.xlane.f32.xlu0 %v2635
    %v2637 = vpop.xlane.xlu0 %2636
    %v2638 = vsel %vm605, %v2632, 0.0
    %2639 = vadd.xlane.f32.xlu0 %v2638
    %v2640 = vpop.xlane.xlu0 %2639
    %v2641 = vsel %vm605, %v2633, 0.0
    %2642 = vadd.xlane.f32.xlu0 %v2641
    %v2643 = vpop.xlane.xlu0 %2642
    %v2644 = vsel %vm605, %v2634, 0.0
    %2645 = vadd.xlane.f32.xlu0 %v2644
    %v2646 = vpop.xlane.xlu0 %2645
    %v2647 = vmul.f32 %v2637, %v1225
    %v2648 = vmul.f32 %v2640, %v1225
    %v2649 = vmul.f32 %v2643, %v1225
    %v2650 = vmul.f32 %v2646, %v1225
    %v2651 = vsub.f32 %v2631, %v2647
    %v2652 = vsub.f32 %v2632, %v2648
    %v2653 = vsub.f32 %v2633, %v2649
    %v2654 = vsub.f32 %v2634, %v2650
    %v2655 = vmul.f32 %v2651, %v2651
    %v2656 = vmul.f32 %v2652, %v2652
    %v2657 = vmul.f32 %v2653, %v2653
    %v2658 = vmul.f32 %v2654, %v2654
    %v2659 = vsel %vm605, %v2655, 0.0
    %2660 = vadd.xlane.f32.xlu0 %v2659
    %v2661 = vpop.xlane.xlu0 %2660
    %v2662 = vsel %vm605, %v2656, 0.0
    %2663 = vadd.xlane.f32.xlu0 %v2662
    %v2664 = vpop.xlane.xlu0 %2663
    %v2665 = vsel %vm605, %v2657, 0.0
    %2666 = vadd.xlane.f32.xlu0 %v2665
    %v2667 = vpop.xlane.xlu0 %2666
    %v2668 = vsel %vm605, %v2658, 0.0
    %2669 = vadd.xlane.f32.xlu0 %v2668
    %v2670 = vpop.xlane.xlu0 %2669
    %v2671 = vmul.f32 %v2661, %v1225
    %v2672 = vmul.f32 %v2664, %v1225
    %v2673 = vmul.f32 %v2667, %v1225
    %v2674 = vmul.f32 %v2670, %v1225
    %v2675 = vadd.f32 %v2671, 1e-06
    %v2676 = vadd.f32 %v2672, 1e-06
    %v2677 = vadd.f32 %v2673, 1e-06
    %v2678 = vadd.f32 %v2674, 1e-06
    %v2679 = vrsqrt.pop %v2675
    %v2680 = vrsqrt.pop %v2676
    %v2681 = vrsqrt.pop %v2677
    %v2682 = vrsqrt.pop %v2678
    %v2683 = vmul.f32 %v2651, %v2679
    %v2684 = vmul.f32 %v2652, %v2680
    %v2685 = vmul.f32 %v2653, %v2681
    %v2686 = vmul.f32 %v2654, %v2682
    %v2687 = vadd.f32 %v1093, 1.0
    %v2688 = vadd.f32 %v1098, 1.0
    %v2689 = vadd.f32 %v1103, 1.0
    %v2690 = vadd.f32 %v1108, 1.0
    %v2691 = vmul.f32 %v2683, %v2687
    %v2692 = vmul.f32 %v2684, %v2688
    %v2693 = vmul.f32 %v2685, %v2689
    %v2694 = vmul.f32 %v2686, %v2690
    %v2695 = vadd.f32 %v2691, %v991
    %v2696 = vadd.f32 %v2692, %v996
    %v2697 = vadd.f32 %v2693, %v1001
    %v2698 = vadd.f32 %v2694, %v1006
    %v2699 = vld [vmem:[%s45] sm:$0xff]
    %v2700 = vld [vmem:[%s45 + $0x8] sm:$0xff]
    %v2701 = vld [vmem:[%s45 + $0x10] sm:$0xff]
    %v2702 = vld [vmem:[%s45 + $0x18] sm:$0xff]
    %v2703 = vld [vmem:[%s45 + $0x20] sm:$0xff]
    %v2704 = vld [vmem:[%s45 + $0x28] sm:$0xff]
    %v2705 = vld [vmem:[%s45 + $0x30] sm:$0xff]
    %v2706 = vld [vmem:[%s45 + $0x38] sm:$0xff]
    %v2707 = vld [vmem:[%s45 + $0x40] sm:$0xff]
    %v2708 = vld [vmem:[%s45 + $0x48] sm:$0xff]
    %v2709 = vld [vmem:[%s45 + $0x50] sm:$0xff]
    %v2710 = vld [vmem:[%s45 + $0x58] sm:$0xff]
    %v2711 = vld [vmem:[%s45 + $0x60] sm:$0xff]
    %v2712 = vld [vmem:[%s45 + $0x68] sm:$0xff]
    %v2713 = vld [vmem:[%s45 + $0x70] sm:$0xff]
    %v2714 = vld [vmem:[%s45 + $0x78] sm:$0xff]
    %v2715 = vld [vmem:[#allocation7] sm:$0x3]
    %v2717 = vlaneseq
    %v2718 = vshrl.u32 %v2717, 7
    %v2719 = vsub.s32 0, %v2718
    %v2720 = vrot.slane %v2715, %v2719
    %v2721 = vlaneseq
    %v2722 = vshrl.u32 %v2721, 7
    %v2723 = vsub.s32 1, %v2722
    %v2724 = vrot.slane %v2715, %v2723
    %v2728 = vsel %vm605, %v2695, 0
    %v2731 = vsel %vm605, %v2696, 0
    %v2734 = vsel %vm605, %v2697, 0
    %v2737 = vsel %vm605, %v2698, 0
    %2739 = vmatprep.subr.mxu0 %v2700
    %2740 = vmatpush1.msra.mxu0 %v2699
    %2741 = vmatprep.subr.mxu0 %v2702
    %2742 = vmatpush1.msra.mxu0 %v2701
    %2743 = vmatprep.subr.mxu0 %v2704
    %2744 = vmatpush1.msra.mxu0 %v2703
    %2745 = vmatprep.subr.mxu0 %v2706
    %2746 = vmatpush1.msra.mxu0 %v2705
    %2747 = vmatprep.subr.mxu0 %v2708
    %2748 = vmatpush1.msra.mxu0 %v2707
    %2749 = vmatprep.subr.mxu0 %v2710
    %2750 = vmatpush1.msra.mxu0 %v2709
    %2751 = vmatprep.subr.mxu0 %v2712
    %2752 = vmatpush1.msra.mxu0 %v2711
    %2753 = vmatprep.subr.mxu0 %v2714
    %2754 = vmatpush1.msra.mxu0 %v2713
    %2755 = vmatprep.subr.mxu0 0.0
    %2756 = vmatpush1.msra.mxu0 0.0
    %2757 = vmatprep.subr.mxu0 0.0
    %2758 = vmatpush1.msra.mxu0 0.0
    %2759 = vmatprep.subr.mxu0 0.0
    %2760 = vmatpush1.msra.mxu0 0.0
    %2761 = vmatprep.subr.mxu0 0.0
    %2762 = vmatpush1.msra.mxu0 0.0
    %2763 = vmatprep.subr.mxu0 0.0
    %2764 = vmatpush1.msra.mxu0 0.0
    %2765 = vmatprep.subr.mxu0 0.0
    %2766 = vmatpush1.msra.mxu0 0.0
    %2767 = vmatprep.subr.mxu0 0.0
    %2768 = vmatpush1.msra.mxu0 0.0
    %2769 = vmatprep.subr.mxu0 0.0
    %2770 = vmatpush1.msra.mxu0 0.0
    %2771 = vmatprep.subr.mxu0 0.0
    %2772 = vmatpush1.msra.mxu0 0.0
    %2773 = vmatprep.subr.mxu0 0.0
    %2774 = vmatpush1.msra.mxu0 0.0
    %2775 = vmatprep.subr.mxu0 0.0
    %2776 = vmatpush1.msra.mxu0 0.0
    %2777 = vmatprep.subr.mxu0 0.0
    %2778 = vmatpush1.msra.mxu0 0.0
    %2779 = vmatprep.subr.mxu0 0.0
    %2780 = vmatpush1.msra.mxu0 0.0
    %2781 = vmatprep.subr.mxu0 0.0
    %2782 = vmatpush1.msra.mxu0 0.0
    %2783 = vmatprep.subr.mxu0 0.0
    %2784 = vmatpush1.msra.mxu0 0.0
    %2785 = vmatprep.subr.mxu0 0.0
    %2786 = vmatpush1.msra.mxu0 0.0
    %2787 = vmatprep.subr.mxu0 0.0
    %2788 = vmatpush1.msra.mxu0 0.0
    %2789 = vmatprep.subr.mxu0 0.0
    %2790 = vmatpush1.msra.mxu0 0.0
    %2791 = vmatprep.subr.mxu0 0.0
    %2792 = vmatpush1.msra.mxu0 0.0
    %2793 = vmatprep.subr.mxu0 0.0
    %2794 = vmatpush1.msra.mxu0 0.0
    %2795 = vmatprep.subr.mxu0 0.0
    %2796 = vmatpush1.msra.mxu0 0.0
    %2797 = vmatprep.subr.mxu0 0.0
    %2798 = vmatpush1.msra.mxu0 0.0
    %2799 = vmatprep.subr.mxu0 0.0
    %2800 = vmatpush1.msra.mxu0 0.0
    %2801 = vmatprep.subr.mxu0 0.0
    %2802 = vmatpush1.msra.mxu0 0.0
    %2803 = vmatprep.mubr.f32.mxu0 0.0
    %2804 = vmatmul.mubr.f32.gmra.mrb[0].mxu0 %v2728
    %v2805 = vpop.f32.mrb[0].mxu0
    %v2806 = vadd.f32 %v2720, %v2805
    %v2807 = vpop.f32.mrb[0].mxu0
    %v2808 = vadd.f32 %v2724, %v2807
    %2809 = vmatprep.mubr.f32.mxu0 0.0
    %2810 = vmatmul.mubr.f32.gmra.mrb[0].mxu0 %v2731
    %v2811 = vpop.f32.mrb[0].mxu0
    %v2812 = vadd.f32 %v2720, %v2811
    %v2813 = vpop.f32.mrb[0].mxu0
    %v2814 = vadd.f32 %v2724, %v2813
    %2815 = vmatprep.mubr.f32.mxu0 0.0
    %2816 = vmatmul.mubr.f32.gmra.mrb[0].mxu0 %v2734
    %v2817 = vpop.f32.mrb[0].mxu0
    %v2818 = vadd.f32 %v2720, %v2817
    %v2819 = vpop.f32.mrb[0].mxu0
    %v2820 = vadd.f32 %v2724, %v2819
    %2821 = vmatprep.mubr.f32.mxu0 0.0
    %2822 = vmatmul.mubr.f32.gmra.mrb[0].mxu0 %v2737
    %v2823 = vpop.f32.mrb[0].mxu0
    %v2824 = vadd.f32 %v2720, %v2823
    %v2825 = vpop.f32.mrb[0].mxu0
    %v2826 = vadd.f32 %v2724, %v2825
    %2827 = vdwg.mxu0
    %v2828 = vmul.f32 %v2806, 0.5
    %v2829 = vmul.f32 %v2808, 0.5
    %v2830 = vmul.f32 %v2812, 0.5
    %v2831 = vmul.f32 %v2814, 0.5
    %v2832 = vmul.f32 %v2818, 0.5
    %v2833 = vmul.f32 %v2820, 0.5
    %v2834 = vmul.f32 %v2824, 0.5
    %v2835 = vmul.f32 %v2826, 0.5
    %v2836 = vmul.f32 %v2806, 0.044715
    %v2837 = vmul.f32 %v2808, 0.044715
    %v2838 = vmul.f32 %v2812, 0.044715
    %v2839 = vmul.f32 %v2814, 0.044715
    %v2840 = vmul.f32 %v2818, 0.044715
    %v2841 = vmul.f32 %v2820, 0.044715
    %v2842 = vmul.f32 %v2824, 0.044715
    %v2843 = vmul.f32 %v2826, 0.044715
    %v2844 = vmul.f32 %v2836, %v2806
    %v2845 = vmul.f32 %v2837, %v2808
    %v2846 = vmul.f32 %v2838, %v2812
    %v2847 = vmul.f32 %v2839, %v2814
    %v2848 = vmul.f32 %v2840, %v2818
    %v2849 = vmul.f32 %v2841, %v2820
    %v2850 = vmul.f32 %v2842, %v2824
    %v2851 = vmul.f32 %v2843, %v2826
    %v2852 = vmul.f32 %v2844, %v2806
    %v2853 = vmul.f32 %v2845, %v2808
    %v2854 = vmul.f32 %v2846, %v2812
    %v2855 = vmul.f32 %v2847, %v2814
    %v2856 = vmul.f32 %v2848, %v2818
    %v2857 = vmul.f32 %v2849, %v2820
    %v2858 = vmul.f32 %v2850, %v2824
    %v2859 = vmul.f32 %v2851, %v2826
    %v2860 = vadd.f32 %v2806, %v2852
    %v2861 = vadd.f32 %v2808, %v2853
    %v2862 = vadd.f32 %v2812, %v2854
    %v2863 = vadd.f32 %v2814, %v2855
    %v2864 = vadd.f32 %v2818, %v2856
    %v2865 = vadd.f32 %v2820, %v2857
    %v2866 = vadd.f32 %v2824, %v2858
    %v2867 = vadd.f32 %v2826, %v2859
    %v2868 = vmul.f32 %v2860, 0.7978846
    %v2869 = vmul.f32 %v2861, 0.7978846
    %v2870 = vmul.f32 %v2862, 0.7978846
    %v2871 = vmul.f32 %v2863, 0.7978846
    %v2872 = vmul.f32 %v2864, 0.7978846
    %v2873 = vmul.f32 %v2865, 0.7978846
    %v2874 = vmul.f32 %v2866, 0.7978846
    %v2875 = vmul.f32 %v2867, 0.7978846
    %v2876 = vtanh.pop %v2868
    %v2877 = vtanh.pop %v2869
    %v2878 = vtanh.pop %v2870
    %v2879 = vtanh.pop %v2871
    %v2880 = vtanh.pop %v2872
    %v2881 = vtanh.pop %v2873
    %v2882 = vtanh.pop %v2874
    %v2883 = vtanh.pop %v2875
    %v2884 = vadd.f32 %v2876, 1.0
    %v2885 = vadd.f32 %v2877, 1.0
    %v2886 = vadd.f32 %v2878, 1.0
    %v2887 = vadd.f32 %v2879, 1.0
    %v2888 = vadd.f32 %v2880, 1.0
    %v2889 = vadd.f32 %v2881, 1.0
    %v2890 = vadd.f32 %v2882, 1.0
    %v2891 = vadd.f32 %v2883, 1.0
    %v2892 = vmul.f32 %v2828, %v2884
    %v2893 = vmul.f32 %v2829, %v2885
    %v2894 = vmul.f32 %v2830, %v2886
    %v2895 = vmul.f32 %v2831, %v2887
    %v2896 = vmul.f32 %v2832, %v2888
    %v2897 = vmul.f32 %v2833, %v2889
    %v2898 = vmul.f32 %v2834, %v2890
    %v2899 = vmul.f32 %v2835, %v2891
    %v2900 = vld [vmem:[%s49] sm:$0xff]
    %v2901 = vld [vmem:[%s49 + $0x8] sm:$0xff]
    %v2902 = vld [vmem:[%s49 + $0x10] sm:$0xff]
    %v2903 = vld [vmem:[%s49 + $0x18] sm:$0xff]
    %v2904 = vld [vmem:[%s49 + $0x20] sm:$0xff]
    %v2905 = vld [vmem:[%s49 + $0x28] sm:$0xff]
    %v2906 = vld [vmem:[%s49 + $0x30] sm:$0xff]
    %v2907 = vld [vmem:[%s49 + $0x38] sm:$0xff]
    %v2908 = vld [vmem:[%s49 + $0x40] sm:$0xff]
    %v2909 = vld [vmem:[%s49 + $0x48] sm:$0xff]
    %v2910 = vld [vmem:[%s49 + $0x50] sm:$0xff]
    %v2911 = vld [vmem:[%s49 + $0x58] sm:$0xff]
    %v2912 = vld [vmem:[%s49 + $0x60] sm:$0xff]
    %v2913 = vld [vmem:[%s49 + $0x68] sm:$0xff]
    %v2914 = vld [vmem:[%s49 + $0x70] sm:$0xff]
    %v2915 = vld [vmem:[%s49 + $0x78] sm:$0xff]
    %v2916 = vld [vmem:[%s49 + $0x80] sm:$0xff]
    %v2917 = vld [vmem:[%s49 + $0x88] sm:$0xff]
    %v2918 = vld [vmem:[%s49 + $0x90] sm:$0xff]
    %v2919 = vld [vmem:[%s49 + $0x98] sm:$0xff]
    %v2920 = vld [vmem:[%s49 + $0xa0] sm:$0xff]
    %v2921 = vld [vmem:[%s49 + $0xa8] sm:$0xff]
    %v2922 = vld [vmem:[%s49 + $0xb0] sm:$0xff]
    %v2923 = vld [vmem:[%s49 + $0xb8] sm:$0xff]
    %v2924 = vld [vmem:[%s49 + $0xc0] sm:$0xff]
    %v2925 = vld [vmem:[%s49 + $0xc8] sm:$0xff]
    %v2926 = vld [vmem:[%s49 + $0xd0] sm:$0xff]
    %v2927 = vld [vmem:[%s49 + $0xd8] sm:$0xff]
    %v2928 = vld [vmem:[%s49 + $0xe0] sm:$0xff]
    %v2929 = vld [vmem:[%s49 + $0xe8] sm:$0xff]
    %v2930 = vld [vmem:[%s49 + $0xf0] sm:$0xff]
    %v2931 = vld [vmem:[%s49 + $0xf8] sm:$0xff]
    %v2932 = vld [vmem:[#allocation9] sm:$0x1]
    %v2934 = vlaneseq
    %v2935 = vshrl.u32 %v2934, 7
    %v2936 = vsub.s32 0, %v2935
    %v2937 = vrot.slane %v2932, %v2936
    %2939 = vmatprep.subr.mxu0 0.0
    %2940 = vmatpush1.msra.mxu0 %v2900
    %2941 = vmatprep.subr.mxu0 0.0
    %2942 = vmatpush1.msra.mxu0 %v2901
    %2943 = vmatprep.subr.mxu0 0.0
    %2944 = vmatpush1.msra.mxu0 %v2902
    %2945 = vmatprep.subr.mxu0 0.0
    %2946 = vmatpush1.msra.mxu0 %v2903
    %2947 = vmatprep.subr.mxu0 0.0
    %2948 = vmatpush1.msra.mxu0 %v2904
    %2949 = vmatprep.subr.mxu0 0.0
    %2950 = vmatpush1.msra.mxu0 %v2905
    %2951 = vmatprep.subr.mxu0 0.0
    %2952 = vmatpush1.msra.mxu0 %v2906
    %2953 = vmatprep.subr.mxu0 0.0
    %2954 = vmatpush1.msra.mxu0 %v2907
    %2955 = vmatprep.subr.mxu0 0.0
    %2956 = vmatpush1.msra.mxu0 %v2908
    %2957 = vmatprep.subr.mxu0 0.0
    %2958 = vmatpush1.msra.mxu0 %v2909
    %2959 = vmatprep.subr.mxu0 0.0
    %2960 = vmatpush1.msra.mxu0 %v2910
    %2961 = vmatprep.subr.mxu0 0.0
    %2962 = vmatpush1.msra.mxu0 %v2911
    %2963 = vmatprep.subr.mxu0 0.0
    %2964 = vmatpush1.msra.mxu0 %v2912
    %2965 = vmatprep.subr.mxu0 0.0
    %2966 = vmatpush1.msra.mxu0 %v2913
    %2967 = vmatprep.subr.mxu0 0.0
    %2968 = vmatpush1.msra.mxu0 %v2914
    %2969 = vmatprep.subr.mxu0 0.0
    %2970 = vmatpush1.msra.mxu0 %v2915
    %2971 = vmatprep.subr.mxu0 0.0
    %2972 = vmatpush1.msra.mxu0 %v2916
    %2973 = vmatprep.subr.mxu0 0.0
    %2974 = vmatpush1.msra.mxu0 %v2917
    %2975 = vmatprep.subr.mxu0 0.0
    %2976 = vmatpush1.msra.mxu0 %v2918
    %2977 = vmatprep.subr.mxu0 0.0
    %2978 = vmatpush1.msra.mxu0 %v2919
    %2979 = vmatprep.subr.mxu0 0.0
    %2980 = vmatpush1.msra.mxu0 %v2920
    %2981 = vmatprep.subr.mxu0 0.0
    %2982 = vmatpush1.msra.mxu0 %v2921
    %2983 = vmatprep.subr.mxu0 0.0
    %2984 = vmatpush1.msra.mxu0 %v2922
    %2985 = vmatprep.subr.mxu0 0.0
    %2986 = vmatpush1.msra.mxu0 %v2923
    %2987 = vmatprep.subr.mxu0 0.0
    %2988 = vmatpush1.msra.mxu0 %v2924
    %2989 = vmatprep.subr.mxu0 0.0
    %2990 = vmatpush1.msra.mxu0 %v2925
    %2991 = vmatprep.subr.mxu0 0.0
    %2992 = vmatpush1.msra.mxu0 %v2926
    %2993 = vmatprep.subr.mxu0 0.0
    %2994 = vmatpush1.msra.mxu0 %v2927
    %2995 = vmatprep.subr.mxu0 0.0
    %2996 = vmatpush1.msra.mxu0 %v2928
    %2997 = vmatprep.subr.mxu0 0.0
    %2998 = vmatpush1.msra.mxu0 %v2929
    %2999 = vmatprep.subr.mxu0 0.0
    %3000 = vmatpush1.msra.mxu0 %v2930
    %3001 = vmatprep.subr.mxu0 0.0
    %3002 = vmatpush1.msra.mxu0 %v2931
    %3003 = vmatprep.mubr.f32.mxu0 %v2893
    %3004 = vmatmul.mubr.f32.gmra.mrb[0].mxu0 %v2892
    %v3005 = vpop.f32.mrb[0].mxu0
    %v3006 = vadd.f32 %v2937, %v3005
    %v3007 = vpop.f32.mrb[0].mxu0
    %3008 = vmatprep.mubr.f32.mxu0 %v2895
    %3009 = vmatmul.mubr.f32.gmra.mrb[0].mxu0 %v2894
    %v3010 = vpop.f32.mrb[0].mxu0
    %v3011 = vadd.f32 %v2937, %v3010
    %v3012 = vpop.f32.mrb[0].mxu0
    %3013 = vmatprep.mubr.f32.mxu0 %v2897
    %3014 = vmatmul.mubr.f32.gmra.mrb[0].mxu0 %v2896
    %v3015 = vpop.f32.mrb[0].mxu0
    %v3016 = vadd.f32 %v2937, %v3015
    %v3017 = vpop.f32.mrb[0].mxu0
    %3018 = vmatprep.mubr.f32.mxu0 %v2899
    %3019 = vmatmul.mubr.f32.gmra.mrb[0].mxu0 %v2898
    %v3020 = vpop.f32.mrb[0].mxu0
    %v3021 = vadd.f32 %v2937, %v3020
    %v3022 = vpop.f32.mrb[0].mxu0
    %3023 = vdwg.mxu0
    %v3024 = vmul.f32 %v1195, %v3006
    %v3025 = vmul.f32 %v1200, %v3011
    %v3026 = vmul.f32 %v1205, %v3016
    %v3027 = vmul.f32 %v1210, %v3021
    %v3028 = vadd.f32 %v2631, %v3024
    %v3029 = vadd.f32 %v2632, %v3025
    %v3030 = vadd.f32 %v2633, %v3026
    %v3031 = vadd.f32 %v2634, %v3027
    %s3032 = scalar_lea.vmem %s25, 384
    %v3033 = vld [vmem:[%s3032] sm:$0xff]
    %v3034 = vld [vmem:[%s3032 + $0x8] sm:$0xff]
    %v3035 = vld [vmem:[%s3032 + $0x10] sm:$0xff]
    %v3036 = vld [vmem:[%s3032 + $0x18] sm:$0xff]
    %v3037 = vld [vmem:[%s3032 + $0x20] sm:$0xff]
    %v3038 = vld [vmem:[%s3032 + $0x28] sm:$0xff]
    %v3039 = vld [vmem:[%s3032 + $0x30] sm:$0xff]
    %v3040 = vld [vmem:[%s3032 + $0x38] sm:$0xff]
    %s3041 = scalar_lea.vmem %s27, 6
    %v3042 = vld [vmem:[%s3041] sm:$0x1]
    %v3044 = vlaneseq
    %v3045 = vshrl.u32 %v3044, 7
    %v3046 = vsub.s32 0, %v3045
    %v3047 = vrot.slane %v3042, %v3046
    %3049 = vmatprep.subr.mxu0 0.0
    %3050 = vmatpush1.msra.mxu0 %v3033
    %3051 = vmatprep.subr.mxu0 0.0
    %3052 = vmatpush1.msra.mxu0 %v3034
    %3053 = vmatprep.subr.mxu0 0.0
    %3054 = vmatpush1.msra.mxu0 %v3035
    %3055 = vmatprep.subr.mxu0 0.0
    %3056 = vmatpush1.msra.mxu0 %v3036
    %3057 = vmatprep.subr.mxu0 0.0
    %3058 = vmatpush1.msra.mxu0 %v3037
    %3059 = vmatprep.subr.mxu0 0.0
    %3060 = vmatpush1.msra.mxu0 %v3038
    %3061 = vmatprep.subr.mxu0 0.0
    %3062 = vmatpush1.msra.mxu0 %v3039
    %3063 = vmatprep.subr.mxu0 0.0
    %3064 = vmatpush1.msra.mxu0 %v3040
    %3065 = vmatprep.subr.mxu0 0.0
    %3066 = vmatpush1.msra.mxu0 0.0
    %3067 = vmatprep.subr.mxu0 0.0
    %3068 = vmatpush1.msra.mxu0 0.0
    %3069 = vmatprep.subr.mxu0 0.0
    %3070 = vmatpush1.msra.mxu0 0.0
    %3071 = vmatprep.subr.mxu0 0.0
    %3072 = vmatpush1.msra.mxu0 0.0
    %3073 = vmatprep.subr.mxu0 0.0
    %3074 = vmatpush1.msra.mxu0 0.0
    %3075 = vmatprep.subr.mxu0 0.0
    %3076 = vmatpush1.msra.mxu0 0.0
    %3077 = vmatprep.subr.mxu0 0.0
    %3078 = vmatpush1.msra.mxu0 0.0
    %3079 = vmatprep.subr.mxu0 0.0
    %3080 = vmatpush1.msra.mxu0 0.0
    %3081 = vmatprep.subr.mxu0 0.0
    %3082 = vmatpush1.msra.mxu0 0.0
    %3083 = vmatprep.subr.mxu0 0.0
    %3084 = vmatpush1.msra.mxu0 0.0
    %3085 = vmatprep.subr.mxu0 0.0
    %3086 = vmatpush1.msra.mxu0 0.0
    %3087 = vmatprep.subr.mxu0 0.0
    %3088 = vmatpush1.msra.mxu0 0.0
    %3089 = vmatprep.subr.mxu0 0.0
    %3090 = vmatpush1.msra.mxu0 0.0
    %3091 = vmatprep.subr.mxu0 0.0
    %3092 = vmatpush1.msra.mxu0 0.0
    %3093 = vmatprep.subr.mxu0 0.0
    %3094 = vmatpush1.msra.mxu0 0.0
    %3095 = vmatprep.subr.mxu0 0.0
    %3096 = vmatpush1.msra.mxu0 0.0
    %3097 = vmatprep.subr.mxu0 0.0
    %3098 = vmatpush1.msra.mxu0 0.0
    %3099 = vmatprep.subr.mxu0 0.0
    %3100 = vmatpush1.msra.mxu0 0.0
    %3101 = vmatprep.subr.mxu0 0.0
    %3102 = vmatpush1.msra.mxu0 0.0
    %3103 = vmatprep.subr.mxu0 0.0
    %3104 = vmatpush1.msra.mxu0 0.0
    %3105 = vmatprep.subr.mxu0 0.0
    %3106 = vmatpush1.msra.mxu0 0.0
    %3107 = vmatprep.subr.mxu0 0.0
    %3108 = vmatpush1.msra.mxu0 0.0
    %3109 = vmatprep.subr.mxu0 0.0
    %3110 = vmatpush1.msra.mxu0 0.0
    %3111 = vmatprep.subr.mxu0 0.0
    %3112 = vmatpush1.msra.mxu0 0.0
    %3113 = vmatprep.mubr.f32.mxu0 0.0
    %3114 = vmatmul.mubr.f32.gmra.mrb[0].mxu0 %v607
    %v3115 = vpop.f32.mrb[0].mxu0
    %v3116 = vadd.f32 %v3047, %v3115
    %v3117 = vpop.f32.mrb[0].mxu0
    %3118 = vmatprep.mubr.f32.mxu0 0.0
    %3119 = vmatmul.mubr.f32.gmra.mrb[0].mxu0 %v610
    %v3120 = vpop.f32.mrb[0].mxu0
    %v3121 = vadd.f32 %v3047, %v3120
    %v3122 = vpop.f32.mrb[0].mxu0
    %3123 = vmatprep.mubr.f32.mxu0 0.0
    %3124 = vmatmul.mubr.f32.gmra.mrb[0].mxu0 %v613
    %v3125 = vpop.f32.mrb[0].mxu0
    %v3126 = vadd.f32 %v3047, %v3125
    %v3127 = vpop.f32.mrb[0].mxu0
    %3128 = vmatprep.mubr.f32.mxu0 0.0
    %3129 = vmatmul.mubr.f32.gmra.mrb[0].mxu0 %v616
    %v3130 = vpop.f32.mrb[0].mxu0
    %v3131 = vadd.f32 %v3047, %v3130
    %v3132 = vpop.f32.mrb[0].mxu0
    %3133 = vdwg.mxu0
    %s3134 = scalar_lea.vmem %s25, 448
    %v3135 = vld [vmem:[%s3134] sm:$0xff]
    %v3136 = vld [vmem:[%s3134 + $0x8] sm:$0xff]
    %v3137 = vld [vmem:[%s3134 + $0x10] sm:$0xff]
    %v3138 = vld [vmem:[%s3134 + $0x18] sm:$0xff]
    %v3139 = vld [vmem:[%s3134 + $0x20] sm:$0xff]
    %v3140 = vld [vmem:[%s3134 + $0x28] sm:$0xff]
    %v3141 = vld [vmem:[%s3134 + $0x30] sm:$0xff]
    %v3142 = vld [vmem:[%s3134 + $0x38] sm:$0xff]
    %s3143 = scalar_lea.vmem %s27, 7
    %v3144 = vld [vmem:[%s3143] sm:$0x1]
    %v3146 = vlaneseq
    %v3147 = vshrl.u32 %v3146, 7
    %v3148 = vsub.s32 0, %v3147
    %v3149 = vrot.slane %v3144, %v3148
    %3151 = vmatprep.subr.mxu0 0.0
    %3152 = vmatpush1.msra.mxu0 %v3135
    %3153 = vmatprep.subr.mxu0 0.0
    %3154 = vmatpush1.msra.mxu0 %v3136
    %3155 = vmatprep.subr.mxu0 0.0
    %3156 = vmatpush1.msra.mxu0 %v3137
    %3157 = vmatprep.subr.mxu0 0.0
    %3158 = vmatpush1.msra.mxu0 %v3138
    %3159 = vmatprep.subr.mxu0 0.0
    %3160 = vmatpush1.msra.mxu0 %v3139
    %3161 = vmatprep.subr.mxu0 0.0
    %3162 = vmatpush1.msra.mxu0 %v3140
    %3163 = vmatprep.subr.mxu0 0.0
    %3164 = vmatpush1.msra.mxu0 %v3141
    %3165 = vmatprep.subr.mxu0 0.0
    %3166 = vmatpush1.msra.mxu0 %v3142
    %3167 = vmatprep.subr.mxu0 0.0
    %3168 = vmatpush1.msra.mxu0 0.0
    %3169 = vmatprep.subr.mxu0 0.0
    %3170 = vmatpush1.msra.mxu0 0.0
    %3171 = vmatprep.subr.mxu0 0.0
    %3172 = vmatpush1.msra.mxu0 0.0
    %3173 = vmatprep.subr.mxu0 0.0
    %3174 = vmatpush1.msra.mxu0 0.0
    %3175 = vmatprep.subr.mxu0 0.0
    %3176 = vmatpush1.msra.mxu0 0.0
    %3177 = vmatprep.subr.mxu0 0.0
    %3178 = vmatpush1.msra.mxu0 0.0
    %3179 = vmatprep.subr.mxu0 0.0
    %3180 = vmatpush1.msra.mxu0 0.0
    %3181 = vmatprep.subr.mxu0 0.0
    %3182 = vmatpush1.msra.mxu0 0.0
    %3183 = vmatprep.subr.mxu0 0.0
    %3184 = vmatpush1.msra.mxu0 0.0
    %3185 = vmatprep.subr.mxu0 0.0
    %3186 = vmatpush1.msra.mxu0 0.0
    %3187 = vmatprep.subr.mxu0 0.0
    %3188 = vmatpush1.msra.mxu0 0.0
    %3189 = vmatprep.subr.mxu0 0.0
    %3190 = vmatpush1.msra.mxu0 0.0
    %3191 = vmatprep.subr.mxu0 0.0
    %3192 = vmatpush1.msra.mxu0 0.0
    %3193 = vmatprep.subr.mxu0 0.0
    %3194 = vmatpush1.msra.mxu0 0.0
    %3195 = vmatprep.subr.mxu0 0.0
    %3196 = vmatpush1.msra.mxu0 0.0
    %3197 = vmatprep.subr.mxu0 0.0
    %3198 = vmatpush1.msra.mxu0 0.0
    %3199 = vmatprep.subr.mxu0 0.0
    %3200 = vmatpush1.msra.mxu0 0.0
    %3201 = vmatprep.subr.mxu0 0.0
    %3202 = vmatpush1.msra.mxu0 0.0
    %3203 = vmatprep.subr.mxu0 0.0
    %3204 = vmatpush1.msra.mxu0 0.0
    %3205 = vmatprep.subr.mxu0 0.0
    %3206 = vmatpush1.msra.mxu0 0.0
    %3207 = vmatprep.subr.mxu0 0.0
    %3208 = vmatpush1.msra.mxu0 0.0
    %3209 = vmatprep.subr.mxu0 0.0
    %3210 = vmatpush1.msra.mxu0 0.0
    %3211 = vmatprep.subr.mxu0 0.0
    %3212 = vmatpush1.msra.mxu0 0.0
    %3213 = vmatprep.subr.mxu0 0.0
    %3214 = vmatpush1.msra.mxu0 0.0
    %3215 = vmatprep.mubr.f32.mxu0 0.0
    %3216 = vmatmul.mubr.f32.gmra.mrb[0].mxu0 %v607
    %v3217 = vpop.f32.mrb[0].mxu0
    %v3218 = vadd.f32 %v3149, %v3217
    %v3219 = vpop.f32.mrb[0].mxu0
    %3220 = vmatprep.mubr.f32.mxu0 0.0
    %3221 = vmatmul.mubr.f32.gmra.mrb[0].mxu0 %v610
    %v3222 = vpop.f32.mrb[0].mxu0
    %v3223 = vadd.f32 %v3149, %v3222
    %v3224 = vpop.f32.mrb[0].mxu0
    %3225 = vmatprep.mubr.f32.mxu0 0.0
    %3226 = vmatmul.mubr.f32.gmra.mrb[0].mxu0 %v613
    %v3227 = vpop.f32.mrb[0].mxu0
    %v3228 = vadd.f32 %v3149, %v3227
    %v3229 = vpop.f32.mrb[0].mxu0
    %3230 = vmatprep.mubr.f32.mxu0 0.0
    %3231 = vmatmul.mubr.f32.gmra.mrb[0].mxu0 %v616
    %v3232 = vpop.f32.mrb[0].mxu0
    %v3233 = vadd.f32 %v3149, %v3232
    %v3234 = vpop.f32.mrb[0].mxu0
    %3235 = vdwg.mxu0
    %s3236 = scalar_lea.vmem %s25, 512
    %v3237 = vld [vmem:[%s3236] sm:$0xff]
    %v3238 = vld [vmem:[%s3236 + $0x8] sm:$0xff]
    %v3239 = vld [vmem:[%s3236 + $0x10] sm:$0xff]
    %v3240 = vld [vmem:[%s3236 + $0x18] sm:$0xff]
    %v3241 = vld [vmem:[%s3236 + $0x20] sm:$0xff]
    %v3242 = vld [vmem:[%s3236 + $0x28] sm:$0xff]
    %v3243 = vld [vmem:[%s3236 + $0x30] sm:$0xff]
    %v3244 = vld [vmem:[%s3236 + $0x38] sm:$0xff]
    %s3245 = scalar_lea.vmem %s27, 8
    %v3246 = vld [vmem:[%s3245] sm:$0x1]
    %v3248 = vlaneseq
    %v3249 = vshrl.u32 %v3248, 7
    %v3250 = vsub.s32 0, %v3249
    %v3251 = vrot.slane %v3246, %v3250
    %3253 = vmatprep.subr.mxu0 0.0
    %3254 = vmatpush1.msra.mxu0 %v3237
    %3255 = vmatprep.subr.mxu0 0.0
    %3256 = vmatpush1.msra.mxu0 %v3238
    %3257 = vmatprep.subr.mxu0 0.0
    %3258 = vmatpush1.msra.mxu0 %v3239
    %3259 = vmatprep.subr.mxu0 0.0
    %3260 = vmatpush1.msra.mxu0 %v3240
    %3261 = vmatprep.subr.mxu0 0.0
    %3262 = vmatpush1.msra.mxu0 %v3241
    %3263 = vmatprep.subr.mxu0 0.0
    %3264 = vmatpush1.msra.mxu0 %v3242
    %3265 = vmatprep.subr.mxu0 0.0
    %3266 = vmatpush1.msra.mxu0 %v3243
    %3267 = vmatprep.subr.mxu0 0.0
    %3268 = vmatpush1.msra.mxu0 %v3244
    %3269 = vmatprep.subr.mxu0 0.0
    %3270 = vmatpush1.msra.mxu0 0.0
    %3271 = vmatprep.subr.mxu0 0.0
    %3272 = vmatpush1.msra.mxu0 0.0
    %3273 = vmatprep.subr.mxu0 0.0
    %3274 = vmatpush1.msra.mxu0 0.0
    %3275 = vmatprep.subr.mxu0 0.0
    %3276 = vmatpush1.msra.mxu0 0.0
    %3277 = vmatprep.subr.mxu0 0.0
    %3278 = vmatpush1.msra.mxu0 0.0
    %3279 = vmatprep.subr.mxu0 0.0
    %3280 = vmatpush1.msra.mxu0 0.0
    %3281 = vmatprep.subr.mxu0 0.0
    %3282 = vmatpush1.msra.mxu0 0.0
    %3283 = vmatprep.subr.mxu0 0.0
    %3284 = vmatpush1.msra.mxu0 0.0
    %3285 = vmatprep.subr.mxu0 0.0
    %3286 = vmatpush1.msra.mxu0 0.0
    %3287 = vmatprep.subr.mxu0 0.0
    %3288 = vmatpush1.msra.mxu0 0.0
    %3289 = vmatprep.subr.mxu0 0.0
    %3290 = vmatpush1.msra.mxu0 0.0
    %3291 = vmatprep.subr.mxu0 0.0
    %3292 = vmatpush1.msra.mxu0 0.0
    %3293 = vmatprep.subr.mxu0 0.0
    %3294 = vmatpush1.msra.mxu0 0.0
    %3295 = vmatprep.subr.mxu0 0.0
    %3296 = vmatpush1.msra.mxu0 0.0
    %3297 = vmatprep.subr.mxu0 0.0
    %3298 = vmatpush1.msra.mxu0 0.0
    %3299 = vmatprep.subr.mxu0 0.0
    %3300 = vmatpush1.msra.mxu0 0.0
    %3301 = vmatprep.subr.mxu0 0.0
    %3302 = vmatpush1.msra.mxu0 0.0
    %3303 = vmatprep.subr.mxu0 0.0
    %3304 = vmatpush1.msra.mxu0 0.0
    %3305 = vmatprep.subr.mxu0 0.0
    %3306 = vmatpush1.msra.mxu0 0.0
    %3307 = vmatprep.subr.mxu0 0.0
    %3308 = vmatpush1.msra.mxu0 0.0
    %3309 = vmatprep.subr.mxu0 0.0
    %3310 = vmatpush1.msra.mxu0 0.0
    %3311 = vmatprep.subr.mxu0 0.0
    %3312 = vmatpush1.msra.mxu0 0.0
    %3313 = vmatprep.subr.mxu0 0.0
    %3314 = vmatpush1.msra.mxu0 0.0
    %3315 = vmatprep.subr.mxu0 0.0
    %3316 = vmatpush1.msra.mxu0 0.0
    %3317 = vmatprep.mubr.f32.mxu0 0.0
    %3318 = vmatmul.mubr.f32.gmra.mrb[0].mxu0 %v607
    %v3319 = vpop.f32.mrb[0].mxu0
    %v3320 = vadd.f32 %v3251, %v3319
    %v3321 = vpop.f32.mrb[0].mxu0
    %3322 = vmatprep.mubr.f32.mxu0 0.0
    %3323 = vmatmul.mubr.f32.gmra.mrb[0].mxu0 %v610
    %v3324 = vpop.f32.mrb[0].mxu0
    %v3325 = vadd.f32 %v3251, %v3324
    %v3326 = vpop.f32.mrb[0].mxu0
    %3327 = vmatprep.mubr.f32.mxu0 0.0
    %3328 = vmatmul.mubr.f32.gmra.mrb[0].mxu0 %v613
    %v3329 = vpop.f32.mrb[0].mxu0
    %v3330 = vadd.f32 %v3251, %v3329
    %v3331 = vpop.f32.mrb[0].mxu0
    %3332 = vmatprep.mubr.f32.mxu0 0.0
    %3333 = vmatmul.mubr.f32.gmra.mrb[0].mxu0 %v616
    %v3334 = vpop.f32.mrb[0].mxu0
    %v3335 = vadd.f32 %v3251, %v3334
    %v3336 = vpop.f32.mrb[0].mxu0
    %3337 = vdwg.mxu0
    %s3338 = scalar_lea.vmem %s25, 576
    %v3339 = vld [vmem:[%s3338] sm:$0xff]
    %v3340 = vld [vmem:[%s3338 + $0x8] sm:$0xff]
    %v3341 = vld [vmem:[%s3338 + $0x10] sm:$0xff]
    %v3342 = vld [vmem:[%s3338 + $0x18] sm:$0xff]
    %v3343 = vld [vmem:[%s3338 + $0x20] sm:$0xff]
    %v3344 = vld [vmem:[%s3338 + $0x28] sm:$0xff]
    %v3345 = vld [vmem:[%s3338 + $0x30] sm:$0xff]
    %v3346 = vld [vmem:[%s3338 + $0x38] sm:$0xff]
    %s3347 = scalar_lea.vmem %s27, 9
    %v3348 = vld [vmem:[%s3347] sm:$0x1]
    %v3350 = vlaneseq
    %v3351 = vshrl.u32 %v3350, 7
    %v3352 = vsub.s32 0, %v3351
    %v3353 = vrot.slane %v3348, %v3352
    %3355 = vmatprep.subr.mxu0 0.0
    %3356 = vmatpush1.msra.mxu0 %v3339
    %3357 = vmatprep.subr.mxu0 0.0
    %3358 = vmatpush1.msra.mxu0 %v3340
    %3359 = vmatprep.subr.mxu0 0.0
    %3360 = vmatpush1.msra.mxu0 %v3341
    %3361 = vmatprep.subr.mxu0 0.0
    %3362 = vmatpush1.msra.mxu0 %v3342
    %3363 = vmatprep.subr.mxu0 0.0
    %3364 = vmatpush1.msra.mxu0 %v3343
    %3365 = vmatprep.subr.mxu0 0.0
    %3366 = vmatpush1.msra.mxu0 %v3344
    %3367 = vmatprep.subr.mxu0 0.0
    %3368 = vmatpush1.msra.mxu0 %v3345
    %3369 = vmatprep.subr.mxu0 0.0
    %3370 = vmatpush1.msra.mxu0 %v3346
    %3371 = vmatprep.subr.mxu0 0.0
    %3372 = vmatpush1.msra.mxu0 0.0
    %3373 = vmatprep.subr.mxu0 0.0
    %3374 = vmatpush1.msra.mxu0 0.0
    %3375 = vmatprep.subr.mxu0 0.0
    %3376 = vmatpush1.msra.mxu0 0.0
    %3377 = vmatprep.subr.mxu0 0.0
    %3378 = vmatpush1.msra.mxu0 0.0
    %3379 = vmatprep.subr.mxu0 0.0
    %3380 = vmatpush1.msra.mxu0 0.0
    %3381 = vmatprep.subr.mxu0 0.0
    %3382 = vmatpush1.msra.mxu0 0.0
    %3383 = vmatprep.subr.mxu0 0.0
    %3384 = vmatpush1.msra.mxu0 0.0
    %3385 = vmatprep.subr.mxu0 0.0
    %3386 = vmatpush1.msra.mxu0 0.0
    %3387 = vmatprep.subr.mxu0 0.0
    %3388 = vmatpush1.msra.mxu0 0.0
    %3389 = vmatprep.subr.mxu0 0.0
    %3390 = vmatpush1.msra.mxu0 0.0
    %3391 = vmatprep.subr.mxu0 0.0
    %3392 = vmatpush1.msra.mxu0 0.0
    %3393 = vmatprep.subr.mxu0 0.0
    %3394 = vmatpush1.msra.mxu0 0.0
    %3395 = vmatprep.subr.mxu0 0.0
    %3396 = vmatpush1.msra.mxu0 0.0
    %3397 = vmatprep.subr.mxu0 0.0
    %3398 = vmatpush1.msra.mxu0 0.0
    %3399 = vmatprep.subr.mxu0 0.0
    %3400 = vmatpush1.msra.mxu0 0.0
    %3401 = vmatprep.subr.mxu0 0.0
    %3402 = vmatpush1.msra.mxu0 0.0
    %3403 = vmatprep.subr.mxu0 0.0
    %3404 = vmatpush1.msra.mxu0 0.0
    %3405 = vmatprep.subr.mxu0 0.0
    %3406 = vmatpush1.msra.mxu0 0.0
    %3407 = vmatprep.subr.mxu0 0.0
    %3408 = vmatpush1.msra.mxu0 0.0
    %3409 = vmatprep.subr.mxu0 0.0
    %3410 = vmatpush1.msra.mxu0 0.0
    %3411 = vmatprep.subr.mxu0 0.0
    %3412 = vmatpush1.msra.mxu0 0.0
    %3413 = vmatprep.subr.mxu0 0.0
    %3414 = vmatpush1.msra.mxu0 0.0
    %3415 = vmatprep.subr.mxu0 0.0
    %3416 = vmatpush1.msra.mxu0 0.0
    %3417 = vmatprep.subr.mxu0 0.0
    %3418 = vmatpush1.msra.mxu0 0.0
    %3419 = vmatprep.mubr.f32.mxu0 0.0
    %3420 = vmatmul.mubr.f32.gmra.mrb[0].mxu0 %v607
    %v3421 = vpop.f32.mrb[0].mxu0
    %v3422 = vadd.f32 %v3353, %v3421
    %v3423 = vpop.f32.mrb[0].mxu0
    %3424 = vmatprep.mubr.f32.mxu0 0.0
    %3425 = vmatmul.mubr.f32.gmra.mrb[0].mxu0 %v610
    %v3426 = vpop.f32.mrb[0].mxu0
    %v3427 = vadd.f32 %v3353, %v3426
    %v3428 = vpop.f32.mrb[0].mxu0
    %3429 = vmatprep.mubr.f32.mxu0 0.0
    %3430 = vmatmul.mubr.f32.gmra.mrb[0].mxu0 %v613
    %v3431 = vpop.f32.mrb[0].mxu0
    %v3432 = vadd.f32 %v3353, %v3431
    %v3433 = vpop.f32.mrb[0].mxu0
    %3434 = vmatprep.mubr.f32.mxu0 0.0
    %3435 = vmatmul.mubr.f32.gmra.mrb[0].mxu0 %v616
    %v3436 = vpop.f32.mrb[0].mxu0
    %v3437 = vadd.f32 %v3353, %v3436
    %v3438 = vpop.f32.mrb[0].mxu0
    %3439 = vdwg.mxu0
    %s3440 = scalar_lea.vmem %s25, 640
    %v3441 = vld [vmem:[%s3440] sm:$0xff]
    %v3442 = vld [vmem:[%s3440 + $0x8] sm:$0xff]
    %v3443 = vld [vmem:[%s3440 + $0x10] sm:$0xff]
    %v3444 = vld [vmem:[%s3440 + $0x18] sm:$0xff]
    %v3445 = vld [vmem:[%s3440 + $0x20] sm:$0xff]
    %v3446 = vld [vmem:[%s3440 + $0x28] sm:$0xff]
    %v3447 = vld [vmem:[%s3440 + $0x30] sm:$0xff]
    %v3448 = vld [vmem:[%s3440 + $0x38] sm:$0xff]
    %s3449 = scalar_lea.vmem %s27, 10
    %v3450 = vld [vmem:[%s3449] sm:$0x1]
    %v3452 = vlaneseq
    %v3453 = vshrl.u32 %v3452, 7
    %v3454 = vsub.s32 0, %v3453
    %v3455 = vrot.slane %v3450, %v3454
    %3457 = vmatprep.subr.mxu0 0.0
    %3458 = vmatpush1.msra.mxu0 %v3441
    %3459 = vmatprep.subr.mxu0 0.0
    %3460 = vmatpush1.msra.mxu0 %v3442
    %3461 = vmatprep.subr.mxu0 0.0
    %3462 = vmatpush1.msra.mxu0 %v3443
    %3463 = vmatprep.subr.mxu0 0.0
    %3464 = vmatpush1.msra.mxu0 %v3444
    %3465 = vmatprep.subr.mxu0 0.0
    %3466 = vmatpush1.msra.mxu0 %v3445
    %3467 = vmatprep.subr.mxu0 0.0
    %3468 = vmatpush1.msra.mxu0 %v3446
    %3469 = vmatprep.subr.mxu0 0.0
    %3470 = vmatpush1.msra.mxu0 %v3447
    %3471 = vmatprep.subr.mxu0 0.0
    %3472 = vmatpush1.msra.mxu0 %v3448
    %3473 = vmatprep.subr.mxu0 0.0
    %3474 = vmatpush1.msra.mxu0 0.0
    %3475 = vmatprep.subr.mxu0 0.0
    %3476 = vmatpush1.msra.mxu0 0.0
    %3477 = vmatprep.subr.mxu0 0.0
    %3478 = vmatpush1.msra.mxu0 0.0
    %3479 = vmatprep.subr.mxu0 0.0
    %3480 = vmatpush1.msra.mxu0 0.0
    %3481 = vmatprep.subr.mxu0 0.0
    %3482 = vmatpush1.msra.mxu0 0.0
    %3483 = vmatprep.subr.mxu0 0.0
    %3484 = vmatpush1.msra.mxu0 0.0
    %3485 = vmatprep.subr.mxu0 0.0
    %3486 = vmatpush1.msra.mxu0 0.0
    %3487 = vmatprep.subr.mxu0 0.0
    %3488 = vmatpush1.msra.mxu0 0.0
    %3489 = vmatprep.subr.mxu0 0.0
    %3490 = vmatpush1.msra.mxu0 0.0
    %3491 = vmatprep.subr.mxu0 0.0
    %3492 = vmatpush1.msra.mxu0 0.0
    %3493 = vmatprep.subr.mxu0 0.0
    %3494 = vmatpush1.msra.mxu0 0.0
    %3495 = vmatprep.subr.mxu0 0.0
    %3496 = vmatpush1.msra.mxu0 0.0
    %3497 = vmatprep.subr.mxu0 0.0
    %3498 = vmatpush1.msra.mxu0 0.0
    %3499 = vmatprep.subr.mxu0 0.0
    %3500 = vmatpush1.msra.mxu0 0.0
    %3501 = vmatprep.subr.mxu0 0.0
    %3502 = vmatpush1.msra.mxu0 0.0
    %3503 = vmatprep.subr.mxu0 0.0
    %3504 = vmatpush1.msra.mxu0 0.0
    %3505 = vmatprep.subr.mxu0 0.0
    %3506 = vmatpush1.msra.mxu0 0.0
    %3507 = vmatprep.subr.mxu0 0.0
    %3508 = vmatpush1.msra.mxu0 0.0
    %3509 = vmatprep.subr.mxu0 0.0
    %3510 = vmatpush1.msra.mxu0 0.0
    %3511 = vmatprep.subr.mxu0 0.0
    %3512 = vmatpush1.msra.mxu0 0.0
    %3513 = vmatprep.subr.mxu0 0.0
    %3514 = vmatpush1.msra.mxu0 0.0
    %3515 = vmatprep.subr.mxu0 0.0
    %3516 = vmatpush1.msra.mxu0 0.0
    %3517 = vmatprep.subr.mxu0 0.0
    %3518 = vmatpush1.msra.mxu0 0.0
    %3519 = vmatprep.subr.mxu0 0.0
    %3520 = vmatpush1.msra.mxu0 0.0
    %3521 = vmatprep.mubr.f32.mxu0 0.0
    %3522 = vmatmul.mubr.f32.gmra.mrb[0].mxu0 %v607
    %v3523 = vpop.f32.mrb[0].mxu0
    %v3524 = vadd.f32 %v3455, %v3523
    %v3525 = vpop.f32.mrb[0].mxu0
    %3526 = vmatprep.mubr.f32.mxu0 0.0
    %3527 = vmatmul.mubr.f32.gmra.mrb[0].mxu0 %v610
    %v3528 = vpop.f32.mrb[0].mxu0
    %v3529 = vadd.f32 %v3455, %v3528
    %v3530 = vpop.f32.mrb[0].mxu0
    %3531 = vmatprep.mubr.f32.mxu0 0.0
    %3532 = vmatmul.mubr.f32.gmra.mrb[0].mxu0 %v613
    %v3533 = vpop.f32.mrb[0].mxu0
    %v3534 = vadd.f32 %v3455, %v3533
    %v3535 = vpop.f32.mrb[0].mxu0
    %3536 = vmatprep.mubr.f32.mxu0 0.0
    %3537 = vmatmul.mubr.f32.gmra.mrb[0].mxu0 %v616
    %v3538 = vpop.f32.mrb[0].mxu0
    %v3539 = vadd.f32 %v3455, %v3538
    %v3540 = vpop.f32.mrb[0].mxu0
    %3541 = vdwg.mxu0
    %s3542 = scalar_lea.vmem %s25, 704
    %v3543 = vld [vmem:[%s3542] sm:$0xff]
    %v3544 = vld [vmem:[%s3542 + $0x8] sm:$0xff]
    %v3545 = vld [vmem:[%s3542 + $0x10] sm:$0xff]
    %v3546 = vld [vmem:[%s3542 + $0x18] sm:$0xff]
    %v3547 = vld [vmem:[%s3542 + $0x20] sm:$0xff]
    %v3548 = vld [vmem:[%s3542 + $0x28] sm:$0xff]
    %v3549 = vld [vmem:[%s3542 + $0x30] sm:$0xff]
    %v3550 = vld [vmem:[%s3542 + $0x38] sm:$0xff]
    %s3551 = scalar_lea.vmem %s27, 11
    %v3552 = vld [vmem:[%s3551] sm:$0x1]
    %v3554 = vlaneseq
    %v3555 = vshrl.u32 %v3554, 7
    %v3556 = vsub.s32 0, %v3555
    %v3557 = vrot.slane %v3552, %v3556
    %3559 = vmatprep.subr.mxu0 0.0
    %3560 = vmatpush1.msra.mxu0 %v3543
    %3561 = vmatprep.subr.mxu0 0.0
    %3562 = vmatpush1.msra.mxu0 %v3544
    %3563 = vmatprep.subr.mxu0 0.0
    %3564 = vmatpush1.msra.mxu0 %v3545
    %3565 = vmatprep.subr.mxu0 0.0
    %3566 = vmatpush1.msra.mxu0 %v3546
    %3567 = vmatprep.subr.mxu0 0.0
    %3568 = vmatpush1.msra.mxu0 %v3547
    %3569 = vmatprep.subr.mxu0 0.0
    %3570 = vmatpush1.msra.mxu0 %v3548
    %3571 = vmatprep.subr.mxu0 0.0
    %3572 = vmatpush1.msra.mxu0 %v3549
    %3573 = vmatprep.subr.mxu0 0.0
    %3574 = vmatpush1.msra.mxu0 %v3550
    %3575 = vmatprep.subr.mxu0 0.0
    %3576 = vmatpush1.msra.mxu0 0.0
    %3577 = vmatprep.subr.mxu0 0.0
    %3578 = vmatpush1.msra.mxu0 0.0
    %3579 = vmatprep.subr.mxu0 0.0
    %3580 = vmatpush1.msra.mxu0 0.0
    %3581 = vmatprep.subr.mxu0 0.0
    %3582 = vmatpush1.msra.mxu0 0.0
    %3583 = vmatprep.subr.mxu0 0.0
    %3584 = vmatpush1.msra.mxu0 0.0
    %3585 = vmatprep.subr.mxu0 0.0
    %3586 = vmatpush1.msra.mxu0 0.0
    %3587 = vmatprep.subr.mxu0 0.0
    %3588 = vmatpush1.msra.mxu0 0.0
    %3589 = vmatprep.subr.mxu0 0.0
    %3590 = vmatpush1.msra.mxu0 0.0
    %3591 = vmatprep.subr.mxu0 0.0
    %3592 = vmatpush1.msra.mxu0 0.0
    %3593 = vmatprep.subr.mxu0 0.0
    %3594 = vmatpush1.msra.mxu0 0.0
    %3595 = vmatprep.subr.mxu0 0.0
    %3596 = vmatpush1.msra.mxu0 0.0
    %3597 = vmatprep.subr.mxu0 0.0
    %3598 = vmatpush1.msra.mxu0 0.0
    %3599 = vmatprep.subr.mxu0 0.0
    %3600 = vmatpush1.msra.mxu0 0.0
    %3601 = vmatprep.subr.mxu0 0.0
    %3602 = vmatpush1.msra.mxu0 0.0
    %3603 = vmatprep.subr.mxu0 0.0
    %3604 = vmatpush1.msra.mxu0 0.0
    %3605 = vmatprep.subr.mxu0 0.0
    %3606 = vmatpush1.msra.mxu0 0.0
    %3607 = vmatprep.subr.mxu0 0.0
    %3608 = vmatpush1.msra.mxu0 0.0
    %3609 = vmatprep.subr.mxu0 0.0
    %3610 = vmatpush1.msra.mxu0 0.0
    %3611 = vmatprep.subr.mxu0 0.0
    %3612 = vmatpush1.msra.mxu0 0.0
    %3613 = vmatprep.subr.mxu0 0.0
    %3614 = vmatpush1.msra.mxu0 0.0
    %3615 = vmatprep.subr.mxu0 0.0
    %3616 = vmatpush1.msra.mxu0 0.0
    %3617 = vmatprep.subr.mxu0 0.0
    %3618 = vmatpush1.msra.mxu0 0.0
    %3619 = vmatprep.subr.mxu0 0.0
    %3620 = vmatpush1.msra.mxu0 0.0
    %3621 = vmatprep.subr.mxu0 0.0
    %3622 = vmatpush1.msra.mxu0 0.0
    %3623 = vmatprep.mubr.f32.mxu0 0.0
    %3624 = vmatmul.mubr.f32.gmra.mrb[0].mxu0 %v607
    %v3625 = vpop.f32.mrb[0].mxu0
    %v3626 = vadd.f32 %v3557, %v3625
    %v3627 = vpop.f32.mrb[0].mxu0
    %3628 = vmatprep.mubr.f32.mxu0 0.0
    %3629 = vmatmul.mubr.f32.gmra.mrb[0].mxu0 %v610
    %v3630 = vpop.f32.mrb[0].mxu0
    %v3631 = vadd.f32 %v3557, %v3630
    %v3632 = vpop.f32.mrb[0].mxu0
    %3633 = vmatprep.mubr.f32.mxu0 0.0
    %3634 = vmatmul.mubr.f32.gmra.mrb[0].mxu0 %v613
    %v3635 = vpop.f32.mrb[0].mxu0
    %v3636 = vadd.f32 %v3557, %v3635
    %v3637 = vpop.f32.mrb[0].mxu0
    %3638 = vmatprep.mubr.f32.mxu0 0.0
    %3639 = vmatmul.mubr.f32.gmra.mrb[0].mxu0 %v616
    %v3640 = vpop.f32.mrb[0].mxu0
    %v3641 = vadd.f32 %v3557, %v3640
    %v3642 = vpop.f32.mrb[0].mxu0
    %3643 = vdwg.mxu0
    %v3644 = vsel %vm605, %v3028, 0.0
    %3645 = vadd.xlane.f32.xlu0 %v3644
    %v3646 = vpop.xlane.xlu0 %3645
    %v3647 = vsel %vm605, %v3029, 0.0
    %3648 = vadd.xlane.f32.xlu0 %v3647
    %v3649 = vpop.xlane.xlu0 %3648
    %v3650 = vsel %vm605, %v3030, 0.0
    %3651 = vadd.xlane.f32.xlu0 %v3650
    %v3652 = vpop.xlane.xlu0 %3651
    %v3653 = vsel %vm605, %v3031, 0.0
    %3654 = vadd.xlane.f32.xlu0 %v3653
    %v3655 = vpop.xlane.xlu0 %3654
    %v3656 = vmul.f32 %v3646, %v1225
    %v3657 = vmul.f32 %v3649, %v1225
    %v3658 = vmul.f32 %v3652, %v1225
    %v3659 = vmul.f32 %v3655, %v1225
    %v3660 = vsub.f32 %v3028, %v3656
    %v3661 = vsub.f32 %v3029, %v3657
    %v3662 = vsub.f32 %v3030, %v3658
    %v3663 = vsub.f32 %v3031, %v3659
    %v3664 = vmul.f32 %v3660, %v3660
    %v3665 = vmul.f32 %v3661, %v3661
    %v3666 = vmul.f32 %v3662, %v3662
    %v3667 = vmul.f32 %v3663, %v3663
    %v3668 = vsel %vm605, %v3664, 0.0
    %3669 = vadd.xlane.f32.xlu0 %v3668
    %v3670 = vpop.xlane.xlu0 %3669
    %v3671 = vsel %vm605, %v3665, 0.0
    %3672 = vadd.xlane.f32.xlu0 %v3671
    %v3673 = vpop.xlane.xlu0 %3672
    %v3674 = vsel %vm605, %v3666, 0.0
    %3675 = vadd.xlane.f32.xlu0 %v3674
    %v3676 = vpop.xlane.xlu0 %3675
    %v3677 = vsel %vm605, %v3667, 0.0
    %3678 = vadd.xlane.f32.xlu0 %v3677
    %v3679 = vpop.xlane.xlu0 %3678
    %v3680 = vmul.f32 %v3670, %v1225
    %v3681 = vmul.f32 %v3673, %v1225
    %v3682 = vmul.f32 %v3676, %v1225
    %v3683 = vmul.f32 %v3679, %v1225
    %v3684 = vadd.f32 %v3680, 1e-06
    %v3685 = vadd.f32 %v3681, 1e-06
    %v3686 = vadd.f32 %v3682, 1e-06
    %v3687 = vadd.f32 %v3683, 1e-06
    %v3688 = vrsqrt.pop %v3684
    %v3689 = vrsqrt.pop %v3685
    %v3690 = vrsqrt.pop %v3686
    %v3691 = vrsqrt.pop %v3687
    %v3692 = vmul.f32 %v3660, %v3688
    %v3693 = vmul.f32 %v3661, %v3689
    %v3694 = vmul.f32 %v3662, %v3690
    %v3695 = vmul.f32 %v3663, %v3691
    %v3696 = vadd.f32 %v3218, 1.0
    %v3697 = vadd.f32 %v3223, 1.0
    %v3698 = vadd.f32 %v3228, 1.0
    %v3699 = vadd.f32 %v3233, 1.0
    %v3700 = vmul.f32 %v3692, %v3696
    %v3701 = vmul.f32 %v3693, %v3697
    %v3702 = vmul.f32 %v3694, %v3698
    %v3703 = vmul.f32 %v3695, %v3699
    %v3704 = vadd.f32 %v3700, %v3116
    %v3705 = vadd.f32 %v3701, %v3121
    %v3706 = vadd.f32 %v3702, %v3126
    %v3707 = vadd.f32 %v3703, %v3131
    %s3708 = scalar_lea.vmem %s29, 128
    %v3709 = vld [vmem:[%s3708] sm:$0xff]
    %v3710 = vld [vmem:[%s3708 + $0x8] sm:$0xff]
    %v3711 = vld [vmem:[%s3708 + $0x10] sm:$0xff]
    %v3712 = vld [vmem:[%s3708 + $0x18] sm:$0xff]
    %v3713 = vld [vmem:[%s3708 + $0x20] sm:$0xff]
    %v3714 = vld [vmem:[%s3708 + $0x28] sm:$0xff]
    %v3715 = vld [vmem:[%s3708 + $0x30] sm:$0xff]
    %v3716 = vld [vmem:[%s3708 + $0x38] sm:$0xff]
    %s3717 = scalar_lea.vmem %s31, 2
    %v3718 = vld [vmem:[%s3717] sm:$0x1]
    %v3720 = vlaneseq
    %v3721 = vshrl.u32 %v3720, 7
    %v3722 = vsub.s32 0, %v3721
    %v3723 = vrot.slane %v3718, %v3722
    %v3726 = vsel %vm605, %v3704, 0
    %v3729 = vsel %vm605, %v3705, 0
    %v3732 = vsel %vm605, %v3706, 0
    %v3735 = vsel %vm605, %v3707, 0
    %3737 = vmatprep.subr.mxu0 0.0
    %3738 = vmatpush1.msra.mxu0 %v3709
    %3739 = vmatprep.subr.mxu0 0.0
    %3740 = vmatpush1.msra.mxu0 %v3710
    %3741 = vmatprep.subr.mxu0 0.0
    %3742 = vmatpush1.msra.mxu0 %v3711
    %3743 = vmatprep.subr.mxu0 0.0
    %3744 = vmatpush1.msra.mxu0 %v3712
    %3745 = vmatprep.subr.mxu0 0.0
    %3746 = vmatpush1.msra.mxu0 %v3713
    %3747 = vmatprep.subr.mxu0 0.0
    %3748 = vmatpush1.msra.mxu0 %v3714
    %3749 = vmatprep.subr.mxu0 0.0
    %3750 = vmatpush1.msra.mxu0 %v3715
    %3751 = vmatprep.subr.mxu0 0.0
    %3752 = vmatpush1.msra.mxu0 %v3716
    %3753 = vmatprep.subr.mxu0 0.0
    %3754 = vmatpush1.msra.mxu0 0.0
    %3755 = vmatprep.subr.mxu0 0.0
    %3756 = vmatpush1.msra.mxu0 0.0
    %3757 = vmatprep.subr.mxu0 0.0
    %3758 = vmatpush1.msra.mxu0 0.0
    %3759 = vmatprep.subr.mxu0 0.0
    %3760 = vmatpush1.msra.mxu0 0.0
    %3761 = vmatprep.subr.mxu0 0.0
    %3762 = vmatpush1.msra.mxu0 0.0
    %3763 = vmatprep.subr.mxu0 0.0
    %3764 = vmatpush1.msra.mxu0 0.0
    %3765 = vmatprep.subr.mxu0 0.0
    %3766 = vmatpush1.msra.mxu0 0.0
    %3767 = vmatprep.subr.mxu0 0.0
    %3768 = vmatpush1.msra.mxu0 0.0
    %3769 = vmatprep.subr.mxu0 0.0
    %3770 = vmatpush1.msra.mxu0 0.0
    %3771 = vmatprep.subr.mxu0 0.0
    %3772 = vmatpush1.msra.mxu0 0.0
    %3773 = vmatprep.subr.mxu0 0.0
    %3774 = vmatpush1.msra.mxu0 0.0
    %3775 = vmatprep.subr.mxu0 0.0
    %3776 = vmatpush1.msra.mxu0 0.0
    %3777 = vmatprep.subr.mxu0 0.0
    %3778 = vmatpush1.msra.mxu0 0.0
    %3779 = vmatprep.subr.mxu0 0.0
    %3780 = vmatpush1.msra.mxu0 0.0
    %3781 = vmatprep.subr.mxu0 0.0
    %3782 = vmatpush1.msra.mxu0 0.0
    %3783 = vmatprep.subr.mxu0 0.0
    %3784 = vmatpush1.msra.mxu0 0.0
    %3785 = vmatprep.subr.mxu0 0.0
    %3786 = vmatpush1.msra.mxu0 0.0
    %3787 = vmatprep.subr.mxu0 0.0
    %3788 = vmatpush1.msra.mxu0 0.0
    %3789 = vmatprep.subr.mxu0 0.0
    %3790 = vmatpush1.msra.mxu0 0.0
    %3791 = vmatprep.subr.mxu0 0.0
    %3792 = vmatpush1.msra.mxu0 0.0
    %3793 = vmatprep.subr.mxu0 0.0
    %3794 = vmatpush1.msra.mxu0 0.0
    %3795 = vmatprep.subr.mxu0 0.0
    %3796 = vmatpush1.msra.mxu0 0.0
    %3797 = vmatprep.subr.mxu0 0.0
    %3798 = vmatpush1.msra.mxu0 0.0
    %3799 = vmatprep.subr.mxu0 0.0
    %3800 = vmatpush1.msra.mxu0 0.0
    %3801 = vmatprep.mubr.f32.mxu0 0.0
    %3802 = vmatmul.mubr.f32.gmra.mrb[0].mxu0 %v3726
    %v3803 = vpop.f32.mrb[0].mxu0
    %v3804 = vadd.f32 %v3723, %v3803
    %v3805 = vpop.f32.mrb[0].mxu0
    %3806 = vmatprep.mubr.f32.mxu0 0.0
    %3807 = vmatmul.mubr.f32.gmra.mrb[0].mxu0 %v3729
    %v3808 = vpop.f32.mrb[0].mxu0
    %v3809 = vadd.f32 %v3723, %v3808
    %v3810 = vpop.f32.mrb[0].mxu0
    %3811 = vmatprep.mubr.f32.mxu0 0.0
    %3812 = vmatmul.mubr.f32.gmra.mrb[0].mxu0 %v3732
    %v3813 = vpop.f32.mrb[0].mxu0
    %v3814 = vadd.f32 %v3723, %v3813
    %v3815 = vpop.f32.mrb[0].mxu0
    %3816 = vmatprep.mubr.f32.mxu0 0.0
    %3817 = vmatmul.mubr.f32.gmra.mrb[0].mxu0 %v3735
    %v3818 = vpop.f32.mrb[0].mxu0
    %v3819 = vadd.f32 %v3723, %v3818
    %v3820 = vpop.f32.mrb[0].mxu0
    %3821 = vdwg.mxu0
    %s3822 = scalar_lea.vmem %s33, 128
    %v3823 = vld [vmem:[%s3822] sm:$0xff]
    %v3824 = vld [vmem:[%s3822 + $0x8] sm:$0xff]
    %v3825 = vld [vmem:[%s3822 + $0x10] sm:$0xff]
    %v3826 = vld [vmem:[%s3822 + $0x18] sm:$0xff]
    %v3827 = vld [vmem:[%s3822 + $0x20] sm:$0xff]
    %v3828 = vld [vmem:[%s3822 + $0x28] sm:$0xff]
    %v3829 = vld [vmem:[%s3822 + $0x30] sm:$0xff]
    %v3830 = vld [vmem:[%s3822 + $0x38] sm:$0xff]
    %s3831 = scalar_lea.vmem %s35, 2
    %v3832 = vld [vmem:[%s3831] sm:$0x1]
    %v3834 = vlaneseq
    %v3835 = vshrl.u32 %v3834, 7
    %v3836 = vsub.s32 0, %v3835
    %v3837 = vrot.slane %v3832, %v3836
    %3839 = vmatprep.subr.mxu0 0.0
    %3840 = vmatpush1.msra.mxu0 %v3823
    %3841 = vmatprep.subr.mxu0 0.0
    %3842 = vmatpush1.msra.mxu0 %v3824
    %3843 = vmatprep.subr.mxu0 0.0
    %3844 = vmatpush1.msra.mxu0 %v3825
    %3845 = vmatprep.subr.mxu0 0.0
    %3846 = vmatpush1.msra.mxu0 %v3826
    %3847 = vmatprep.subr.mxu0 0.0
    %3848 = vmatpush1.msra.mxu0 %v3827
    %3849 = vmatprep.subr.mxu0 0.0
    %3850 = vmatpush1.msra.mxu0 %v3828
    %3851 = vmatprep.subr.mxu0 0.0
    %3852 = vmatpush1.msra.mxu0 %v3829
    %3853 = vmatprep.subr.mxu0 0.0
    %3854 = vmatpush1.msra.mxu0 %v3830
    %3855 = vmatprep.subr.mxu0 0.0
    %3856 = vmatpush1.msra.mxu0 0.0
    %3857 = vmatprep.subr.mxu0 0.0
    %3858 = vmatpush1.msra.mxu0 0.0
    %3859 = vmatprep.subr.mxu0 0.0
    %3860 = vmatpush1.msra.mxu0 0.0
    %3861 = vmatprep.subr.mxu0 0.0
    %3862 = vmatpush1.msra.mxu0 0.0
    %3863 = vmatprep.subr.mxu0 0.0
    %3864 = vmatpush1.msra.mxu0 0.0
    %3865 = vmatprep.subr.mxu0 0.0
    %3866 = vmatpush1.msra.mxu0 0.0
    %3867 = vmatprep.subr.mxu0 0.0
    %3868 = vmatpush1.msra.mxu0 0.0
    %3869 = vmatprep.subr.mxu0 0.0
    %3870 = vmatpush1.msra.mxu0 0.0
    %3871 = vmatprep.subr.mxu0 0.0
    %3872 = vmatpush1.msra.mxu0 0.0
    %3873 = vmatprep.subr.mxu0 0.0
    %3874 = vmatpush1.msra.mxu0 0.0
    %3875 = vmatprep.subr.mxu0 0.0
    %3876 = vmatpush1.msra.mxu0 0.0
    %3877 = vmatprep.subr.mxu0 0.0
    %3878 = vmatpush1.msra.mxu0 0.0
    %3879 = vmatprep.subr.mxu0 0.0
    %3880 = vmatpush1.msra.mxu0 0.0
    %3881 = vmatprep.subr.mxu0 0.0
    %3882 = vmatpush1.msra.mxu0 0.0
    %3883 = vmatprep.subr.mxu0 0.0
    %3884 = vmatpush1.msra.mxu0 0.0
    %3885 = vmatprep.subr.mxu0 0.0
    %3886 = vmatpush1.msra.mxu0 0.0
    %3887 = vmatprep.subr.mxu0 0.0
    %3888 = vmatpush1.msra.mxu0 0.0
    %3889 = vmatprep.subr.mxu0 0.0
    %3890 = vmatpush1.msra.mxu0 0.0
    %3891 = vmatprep.subr.mxu0 0.0
    %3892 = vmatpush1.msra.mxu0 0.0
    %3893 = vmatprep.subr.mxu0 0.0
    %3894 = vmatpush1.msra.mxu0 0.0
    %3895 = vmatprep.subr.mxu0 0.0
    %3896 = vmatpush1.msra.mxu0 0.0
    %3897 = vmatprep.subr.mxu0 0.0
    %3898 = vmatpush1.msra.mxu0 0.0
    %3899 = vmatprep.subr.mxu0 0.0
    %3900 = vmatpush1.msra.mxu0 0.0
    %3901 = vmatprep.subr.mxu0 0.0
    %3902 = vmatpush1.msra.mxu0 0.0
    %3903 = vmatprep.mubr.f32.mxu0 0.0
    %3904 = vmatmul.mubr.f32.gmra.mrb[0].mxu0 %v3726
    %v3905 = vpop.f32.mrb[0].mxu0
    %v3906 = vadd.f32 %v3837, %v3905
    %v3907 = vpop.f32.mrb[0].mxu0
    %3908 = vmatprep.mubr.f32.mxu0 0.0
    %3909 = vmatmul.mubr.f32.gmra.mrb[0].mxu0 %v3729
    %v3910 = vpop.f32.mrb[0].mxu0
    %v3911 = vadd.f32 %v3837, %v3910
    %v3912 = vpop.f32.mrb[0].mxu0
    %3913 = vmatprep.mubr.f32.mxu0 0.0
    %3914 = vmatmul.mubr.f32.gmra.mrb[0].mxu0 %v3732
    %v3915 = vpop.f32.mrb[0].mxu0
    %v3916 = vadd.f32 %v3837, %v3915
    %v3917 = vpop.f32.mrb[0].mxu0
    %3918 = vmatprep.mubr.f32.mxu0 0.0
    %3919 = vmatmul.mubr.f32.gmra.mrb[0].mxu0 %v3735
    %v3920 = vpop.f32.mrb[0].mxu0
    %v3921 = vadd.f32 %v3837, %v3920
    %v3922 = vpop.f32.mrb[0].mxu0
    %3923 = vdwg.mxu0
    %s3924 = scalar_lea.vmem %s37, 128
    %v3925 = vld [vmem:[%s3924] sm:$0xff]
    %v3926 = vld [vmem:[%s3924 + $0x8] sm:$0xff]
    %v3927 = vld [vmem:[%s3924 + $0x10] sm:$0xff]
    %v3928 = vld [vmem:[%s3924 + $0x18] sm:$0xff]
    %v3929 = vld [vmem:[%s3924 + $0x20] sm:$0xff]
    %v3930 = vld [vmem:[%s3924 + $0x28] sm:$0xff]
    %v3931 = vld [vmem:[%s3924 + $0x30] sm:$0xff]
    %v3932 = vld [vmem:[%s3924 + $0x38] sm:$0xff]
    %s3933 = scalar_lea.vmem %s39, 2
    %v3934 = vld [vmem:[%s3933] sm:$0x1]
    %v3936 = vlaneseq
    %v3937 = vshrl.u32 %v3936, 7
    %v3938 = vsub.s32 0, %v3937
    %v3939 = vrot.slane %v3934, %v3938
    %3941 = vmatprep.subr.mxu0 0.0
    %3942 = vmatpush1.msra.mxu0 %v3925
    %3943 = vmatprep.subr.mxu0 0.0
    %3944 = vmatpush1.msra.mxu0 %v3926
    %3945 = vmatprep.subr.mxu0 0.0
    %3946 = vmatpush1.msra.mxu0 %v3927
    %3947 = vmatprep.subr.mxu0 0.0
    %3948 = vmatpush1.msra.mxu0 %v3928
    %3949 = vmatprep.subr.mxu0 0.0
    %3950 = vmatpush1.msra.mxu0 %v3929
    %3951 = vmatprep.subr.mxu0 0.0
    %3952 = vmatpush1.msra.mxu0 %v3930
    %3953 = vmatprep.subr.mxu0 0.0
    %3954 = vmatpush1.msra.mxu0 %v3931
    %3955 = vmatprep.subr.mxu0 0.0
    %3956 = vmatpush1.msra.mxu0 %v3932
    %3957 = vmatprep.subr.mxu0 0.0
    %3958 = vmatpush1.msra.mxu0 0.0
    %3959 = vmatprep.subr.mxu0 0.0
    %3960 = vmatpush1.msra.mxu0 0.0
    %3961 = vmatprep.subr.mxu0 0.0
    %3962 = vmatpush1.msra.mxu0 0.0
    %3963 = vmatprep.subr.mxu0 0.0
    %3964 = vmatpush1.msra.mxu0 0.0
    %3965 = vmatprep.subr.mxu0 0.0
    %3966 = vmatpush1.msra.mxu0 0.0
    %3967 = vmatprep.subr.mxu0 0.0
    %3968 = vmatpush1.msra.mxu0 0.0
    %3969 = vmatprep.subr.mxu0 0.0
    %3970 = vmatpush1.msra.mxu0 0.0
    %3971 = vmatprep.subr.mxu0 0.0
    %3972 = vmatpush1.msra.mxu0 0.0
    %3973 = vmatprep.subr.mxu0 0.0
    %3974 = vmatpush1.msra.mxu0 0.0
    %3975 = vmatprep.subr.mxu0 0.0
    %3976 = vmatpush1.msra.mxu0 0.0
    %3977 = vmatprep.subr.mxu0 0.0
    %3978 = vmatpush1.msra.mxu0 0.0
    %3979 = vmatprep.subr.mxu0 0.0
    %3980 = vmatpush1.msra.mxu0 0.0
    %3981 = vmatprep.subr.mxu0 0.0
    %3982 = vmatpush1.msra.mxu0 0.0
    %3983 = vmatprep.subr.mxu0 0.0
    %3984 = vmatpush1.msra.mxu0 0.0
    %3985 = vmatprep.subr.mxu0 0.0
    %3986 = vmatpush1.msra.mxu0 0.0
    %3987 = vmatprep.subr.mxu0 0.0
    %3988 = vmatpush1.msra.mxu0 0.0
    %3989 = vmatprep.subr.mxu0 0.0
    %3990 = vmatpush1.msra.mxu0 0.0
    %3991 = vmatprep.subr.mxu0 0.0
    %3992 = vmatpush1.msra.mxu0 0.0
    %3993 = vmatprep.subr.mxu0 0.0
    %3994 = vmatpush1.msra.mxu0 0.0
    %3995 = vmatprep.subr.mxu0 0.0
    %3996 = vmatpush1.msra.mxu0 0.0
    %3997 = vmatprep.subr.mxu0 0.0
    %3998 = vmatpush1.msra.mxu0 0.0
    %3999 = vmatprep.subr.mxu0 0.0
    %4000 = vmatpush1.msra.mxu0 0.0
    %4001 = vmatprep.subr.mxu0 0.0
    %4002 = vmatpush1.msra.mxu0 0.0
    %4003 = vmatprep.subr.mxu0 0.0
    %4004 = vmatpush1.msra.mxu0 0.0
    %4005 = vmatprep.mubr.f32.mxu0 0.0
    %4006 = vmatmul.mubr.f32.gmra.mrb[0].mxu0 %v3726
    %v4007 = vpop.f32.mrb[0].mxu0
    %v4008 = vadd.f32 %v3939, %v4007
    %v4009 = vpop.f32.mrb[0].mxu0
    %4010 = vmatprep.mubr.f32.mxu0 0.0
    %4011 = vmatmul.mubr.f32.gmra.mrb[0].mxu0 %v3729
    %v4012 = vpop.f32.mrb[0].mxu0
    %v4013 = vadd.f32 %v3939, %v4012
    %v4014 = vpop.f32.mrb[0].mxu0
    %4015 = vmatprep.mubr.f32.mxu0 0.0
    %4016 = vmatmul.mubr.f32.gmra.mrb[0].mxu0 %v3732
    %v4017 = vpop.f32.mrb[0].mxu0
    %v4018 = vadd.f32 %v3939, %v4017
    %v4019 = vpop.f32.mrb[0].mxu0
    %4020 = vmatprep.mubr.f32.mxu0 0.0
    %4021 = vmatmul.mubr.f32.gmra.mrb[0].mxu0 %v3735
    %v4022 = vpop.f32.mrb[0].mxu0
    %v4023 = vadd.f32 %v3939, %v4022
    %v4024 = vpop.f32.mrb[0].mxu0
    %4025 = vdwg.mxu0
    %v4026 = vmul.f32 %v3804, 0.17677669
    %v4027 = vmul.f32 %v3809, 0.17677669
    %v4028 = vmul.f32 %v3814, 0.17677669
    %v4029 = vmul.f32 %v3819, 0.17677669
    %v4031 = vsel %vm1594, %v4026, 0
    %v4034 = vsel %vm1594, %v4027, 0
    %v4037 = vsel %vm1594, %v4028, 0
    %v4040 = vsel %vm1594, %v4029, 0
    %v4043 = vsel %vm1594, %v3906, 0
    %v4046 = vsel %vm1594, %v3911, 0
    %v4049 = vsel %vm1594, %v3916, 0
    %v4052 = vsel %vm1594, %v3921, 0
    %4054 = vmatprep.subr.mxu0 0.0
    %4055 = vmatpush1.xpose.msra.mxu0 %v4043
    %4056 = vmatprep.subr.mxu0 0.0
    %4057 = vmatpush1.xpose.msra.mxu0 %v4046
    %4058 = vmatprep.subr.mxu0 0.0
    %4059 = vmatpush1.xpose.msra.mxu0 %v4049
    %4060 = vmatprep.subr.mxu0 0.0
    %4061 = vmatpush1.xpose.msra.mxu0 %v4052
    %4062 = vmatprep.subr.mxu0 0.0
    %4063 = vmatpush1.xpose.msra.mxu0 0.0
    %4064 = vmatprep.subr.mxu0 0.0
    %4065 = vmatpush1.xpose.msra.mxu0 0.0
    %4066 = vmatprep.subr.mxu0 0.0
    %4067 = vmatpush1.xpose.msra.mxu0 0.0
    %4068 = vmatprep.subr.mxu0 0.0
    %4069 = vmatpush1.xpose.msra.mxu0 0.0
    %4070 = vmatprep.subr.mxu0 0.0
    %4071 = vmatpush1.xpose.msra.mxu0 0.0
    %4072 = vmatprep.subr.mxu0 0.0
    %4073 = vmatpush1.xpose.msra.mxu0 0.0
    %4074 = vmatprep.subr.mxu0 0.0
    %4075 = vmatpush1.xpose.msra.mxu0 0.0
    %4076 = vmatprep.subr.mxu0 0.0
    %4077 = vmatpush1.xpose.msra.mxu0 0.0
    %4078 = vmatprep.subr.mxu0 0.0
    %4079 = vmatpush1.xpose.msra.mxu0 0.0
    %4080 = vmatprep.subr.mxu0 0.0
    %4081 = vmatpush1.xpose.msra.mxu0 0.0
    %4082 = vmatprep.subr.mxu0 0.0
    %4083 = vmatpush1.xpose.msra.mxu0 0.0
    %4084 = vmatprep.subr.mxu0 0.0
    %4085 = vmatpush1.xpose.msra.mxu0 0.0
    %4086 = vmatprep.subr.mxu0 0.0
    %4087 = vmatpush1.xpose.msra.mxu0 0.0
    %4088 = vmatprep.subr.mxu0 0.0
    %4089 = vmatpush1.xpose.msra.mxu0 0.0
    %4090 = vmatprep.subr.mxu0 0.0
    %4091 = vmatpush1.xpose.msra.mxu0 0.0
    %4092 = vmatprep.subr.mxu0 0.0
    %4093 = vmatpush1.xpose.msra.mxu0 0.0
    %4094 = vmatprep.subr.mxu0 0.0
    %4095 = vmatpush1.xpose.msra.mxu0 0.0
    %4096 = vmatprep.subr.mxu0 0.0
    %4097 = vmatpush1.xpose.msra.mxu0 0.0
    %4098 = vmatprep.subr.mxu0 0.0
    %4099 = vmatpush1.xpose.msra.mxu0 0.0
    %4100 = vmatprep.subr.mxu0 0.0
    %4101 = vmatpush1.xpose.msra.mxu0 0.0
    %4102 = vmatprep.subr.mxu0 0.0
    %4103 = vmatpush1.xpose.msra.mxu0 0.0
    %4104 = vmatprep.subr.mxu0 0.0
    %4105 = vmatpush1.xpose.msra.mxu0 0.0
    %4106 = vmatprep.subr.mxu0 0.0
    %4107 = vmatpush1.xpose.msra.mxu0 0.0
    %4108 = vmatprep.subr.mxu0 0.0
    %4109 = vmatpush1.xpose.msra.mxu0 0.0
    %4110 = vmatprep.subr.mxu0 0.0
    %4111 = vmatpush1.xpose.msra.mxu0 0.0
    %4112 = vmatprep.subr.mxu0 0.0
    %4113 = vmatpush1.xpose.msra.mxu0 0.0
    %4114 = vmatprep.subr.mxu0 0.0
    %4115 = vmatpush1.xpose.msra.mxu0 0.0
    %4116 = vmatprep.subr.mxu0 0.0
    %4117 = vmatpush1.xpose.msra.mxu0 0.0
    %4118 = vmatprep.mubr.f32.mxu0 0.0
    %4119 = vmatmul.mubr.f32.gmra.mrb[0].mxu0 %v4031
    %v4120 = vpop.f32.mrb[0].mxu0
    %v4121 = vadd.f32 0.0, %v4120
    %v4122 = vpop.f32.mrb[0].mxu0
    %4123 = vmatprep.mubr.f32.mxu0 0.0
    %4124 = vmatmul.mubr.f32.gmra.mrb[0].mxu0 %v4034
    %v4125 = vpop.f32.mrb[0].mxu0
    %v4126 = vadd.f32 0.0, %v4125
    %v4127 = vpop.f32.mrb[0].mxu0
    %4128 = vmatprep.mubr.f32.mxu0 0.0
    %4129 = vmatmul.mubr.f32.gmra.mrb[0].mxu0 %v4037
    %v4130 = vpop.f32.mrb[0].mxu0
    %v4131 = vadd.f32 0.0, %v4130
    %v4132 = vpop.f32.mrb[0].mxu0
    %4133 = vmatprep.mubr.f32.mxu0 0.0
    %4134 = vmatmul.mubr.f32.gmra.mrb[0].mxu0 %v4040
    %v4135 = vpop.f32.mrb[0].mxu0
    %v4136 = vadd.f32 0.0, %v4135
    %v4137 = vpop.f32.mrb[0].mxu0
    %4138 = vdwg.mxu0
    %v4139 = vsel %vm1594, %v4121, -inf
    %4140 = vmax.xlane.f32.xlu0 %v4139
    %v4141 = vpop.xlane.xlu0 %4140
    %v4142 = vsel %vm1594, %v4126, -inf
    %4143 = vmax.xlane.f32.xlu0 %v4142
    %v4144 = vpop.xlane.xlu0 %4143
    %v4145 = vsel %vm1594, %v4131, -inf
    %4146 = vmax.xlane.f32.xlu0 %v4145
    %v4147 = vpop.xlane.xlu0 %4146
    %v4148 = vsel %vm1594, %v4136, -inf
    %4149 = vmax.xlane.f32.xlu0 %v4148
    %v4150 = vpop.xlane.xlu0 %4149
    %v4151 = vsub.f32 %v4121, %v4141
    %v4152 = vsub.f32 %v4126, %v4144
    %v4153 = vsub.f32 %v4131, %v4147
    %v4154 = vsub.f32 %v4136, %v4150
    %v4155 = vmul.f32 %v4151, 1.442695
    %v4156 = vpow.pop %v4155
    %v4157 = vmul.f32 %v4152, 1.442695
    %v4158 = vpow.pop %v4157
    %v4159 = vmul.f32 %v4153, 1.442695
    %v4160 = vpow.pop %v4159
    %v4161 = vmul.f32 %v4154, 1.442695
    %v4162 = vpow.pop %v4161
    %v4163 = vmul.f32 %v4156, %v586
    %v4164 = vmul.f32 %v4158, %v587
    %v4165 = vmul.f32 %v4160, %v588
    %v4166 = vmul.f32 %v4162, %v589
    %v4167 = vsel %vm1594, %v4163, 0.0
    %4168 = vadd.xlane.f32.xlu0 %v4167
    %v4169 = vpop.xlane.xlu0 %4168
    %v4170 = vsel %vm1594, %v4164, 0.0
    %4171 = vadd.xlane.f32.xlu0 %v4170
    %v4172 = vpop.xlane.xlu0 %4171
    %v4173 = vsel %vm1594, %v4165, 0.0
    %4174 = vadd.xlane.f32.xlu0 %v4173
    %v4175 = vpop.xlane.xlu0 %4174
    %v4176 = vsel %vm1594, %v4166, 0.0
    %4177 = vadd.xlane.f32.xlu0 %v4176
    %v4178 = vpop.xlane.xlu0 %4177
    %v4179 = vrcp.pop %v4169
    %v4180 = vrcp.pop %v4172
    %v4181 = vrcp.pop %v4175
    %v4182 = vrcp.pop %v4178
    %v4183 = vmul.f32 %v4163, %v4179
    %v4184 = vmul.f32 %v4164, %v4180
    %v4185 = vmul.f32 %v4165, %v4181
    %v4186 = vmul.f32 %v4166, %v4182
    %v4188 = vsel %vm1594, %v4183, 0
    %v4191 = vsel %vm1594, %v4184, 0
    %v4194 = vsel %vm1594, %v4185, 0
    %v4197 = vsel %vm1594, %v4186, 0
    %4199 = vmatprep.subr.mxu0 0.0
    %4200 = vmatpush1.msra.mxu0 %v4008
    %4201 = vmatprep.subr.mxu0 0.0
    %4202 = vmatpush1.msra.mxu0 %v4013
    %4203 = vmatprep.subr.mxu0 0.0
    %4204 = vmatpush1.msra.mxu0 %v4018
    %4205 = vmatprep.subr.mxu0 0.0
    %4206 = vmatpush1.msra.mxu0 %v4023
    %4207 = vmatprep.subr.mxu0 0.0
    %4208 = vmatpush1.msra.mxu0 0.0
    %4209 = vmatprep.subr.mxu0 0.0
    %4210 = vmatpush1.msra.mxu0 0.0
    %4211 = vmatprep.subr.mxu0 0.0
    %4212 = vmatpush1.msra.mxu0 0.0
    %4213 = vmatprep.subr.mxu0 0.0
    %4214 = vmatpush1.msra.mxu0 0.0
    %4215 = vmatprep.subr.mxu0 0.0
    %4216 = vmatpush1.msra.mxu0 0.0
    %4217 = vmatprep.subr.mxu0 0.0
    %4218 = vmatpush1.msra.mxu0 0.0
    %4219 = vmatprep.subr.mxu0 0.0
    %4220 = vmatpush1.msra.mxu0 0.0
    %4221 = vmatprep.subr.mxu0 0.0
    %4222 = vmatpush1.msra.mxu0 0.0
    %4223 = vmatprep.subr.mxu0 0.0
    %4224 = vmatpush1.msra.mxu0 0.0
    %4225 = vmatprep.subr.mxu0 0.0
    %4226 = vmatpush1.msra.mxu0 0.0
    %4227 = vmatprep.subr.mxu0 0.0
    %4228 = vmatpush1.msra.mxu0 0.0
    %4229 = vmatprep.subr.mxu0 0.0
    %4230 = vmatpush1.msra.mxu0 0.0
    %4231 = vmatprep.subr.mxu0 0.0
    %4232 = vmatpush1.msra.mxu0 0.0
    %4233 = vmatprep.subr.mxu0 0.0
    %4234 = vmatpush1.msra.mxu0 0.0
    %4235 = vmatprep.subr.mxu0 0.0
    %4236 = vmatpush1.msra.mxu0 0.0
    %4237 = vmatprep.subr.mxu0 0.0
    %4238 = vmatpush1.msra.mxu0 0.0
    %4239 = vmatprep.subr.mxu0 0.0
    %4240 = vmatpush1.msra.mxu0 0.0
    %4241 = vmatprep.subr.mxu0 0.0
    %4242 = vmatpush1.msra.mxu0 0.0
    %4243 = vmatprep.subr.mxu0 0.0
    %4244 = vmatpush1.msra.mxu0 0.0
    %4245 = vmatprep.subr.mxu0 0.0
    %4246 = vmatpush1.msra.mxu0 0.0
    %4247 = vmatprep.subr.mxu0 0.0
    %4248 = vmatpush1.msra.mxu0 0.0
    %4249 = vmatprep.subr.mxu0 0.0
    %4250 = vmatpush1.msra.mxu0 0.0
    %4251 = vmatprep.subr.mxu0 0.0
    %4252 = vmatpush1.msra.mxu0 0.0
    %4253 = vmatprep.subr.mxu0 0.0
    %4254 = vmatpush1.msra.mxu0 0.0
    %4255 = vmatprep.subr.mxu0 0.0
    %4256 = vmatpush1.msra.mxu0 0.0
    %4257 = vmatprep.subr.mxu0 0.0
    %4258 = vmatpush1.msra.mxu0 0.0
    %4259 = vmatprep.subr.mxu0 0.0
    %4260 = vmatpush1.msra.mxu0 0.0
    %4261 = vmatprep.subr.mxu0 0.0
    %4262 = vmatpush1.msra.mxu0 0.0
    %4263 = vmatprep.mubr.f32.mxu0 0.0
    %4264 = vmatmul.mubr.f32.gmra.mrb[0].mxu0 %v4188
    %v4265 = vpop.f32.mrb[0].mxu0
    %v4266 = vadd.f32 0.0, %v4265
    %v4267 = vpop.f32.mrb[0].mxu0
    %4268 = vmatprep.mubr.f32.mxu0 0.0
    %4269 = vmatmul.mubr.f32.gmra.mrb[0].mxu0 %v4191
    %v4270 = vpop.f32.mrb[0].mxu0
    %v4271 = vadd.f32 0.0, %v4270
    %v4272 = vpop.f32.mrb[0].mxu0
    %4273 = vmatprep.mubr.f32.mxu0 0.0
    %4274 = vmatmul.mubr.f32.gmra.mrb[0].mxu0 %v4194
    %v4275 = vpop.f32.mrb[0].mxu0
    %v4276 = vadd.f32 0.0, %v4275
    %v4277 = vpop.f32.mrb[0].mxu0
    %4278 = vmatprep.mubr.f32.mxu0 0.0
    %4279 = vmatmul.mubr.f32.gmra.mrb[0].mxu0 %v4197
    %v4280 = vpop.f32.mrb[0].mxu0
    %v4281 = vadd.f32 0.0, %v4280
    %v4282 = vpop.f32.mrb[0].mxu0
    %4283 = vdwg.mxu0
    %s4284 = scalar_lea.vmem %s41, 64
    %v4285 = vld [vmem:[%s4284] sm:$0xff]
    %v4286 = vld [vmem:[%s4284 + $0x8] sm:$0xff]
    %v4287 = vld [vmem:[%s4284 + $0x10] sm:$0xff]
    %v4288 = vld [vmem:[%s4284 + $0x18] sm:$0xff]
    %s4289 = scalar_lea.vmem %s29, 192
    %v4290 = vld [vmem:[%s4289] sm:$0xff]
    %v4291 = vld [vmem:[%s4289 + $0x8] sm:$0xff]
    %v4292 = vld [vmem:[%s4289 + $0x10] sm:$0xff]
    %v4293 = vld [vmem:[%s4289 + $0x18] sm:$0xff]
    %v4294 = vld [vmem:[%s4289 + $0x20] sm:$0xff]
    %v4295 = vld [vmem:[%s4289 + $0x28] sm:$0xff]
    %v4296 = vld [vmem:[%s4289 + $0x30] sm:$0xff]
    %v4297 = vld [vmem:[%s4289 + $0x38] sm:$0xff]
    %s4298 = scalar_lea.vmem %s31, 3
    %v4299 = vld [vmem:[%s4298] sm:$0x1]
    %v4301 = vlaneseq
    %v4302 = vshrl.u32 %v4301, 7
    %v4303 = vsub.s32 0, %v4302
    %v4304 = vrot.slane %v4299, %v4303
    %4306 = vmatprep.subr.mxu0 0.0
    %4307 = vmatpush1.msra.mxu0 %v4290
    %4308 = vmatprep.subr.mxu0 0.0
    %4309 = vmatpush1.msra.mxu0 %v4291
    %4310 = vmatprep.subr.mxu0 0.0
    %4311 = vmatpush1.msra.mxu0 %v4292
    %4312 = vmatprep.subr.mxu0 0.0
    %4313 = vmatpush1.msra.mxu0 %v4293
    %4314 = vmatprep.subr.mxu0 0.0
    %4315 = vmatpush1.msra.mxu0 %v4294
    %4316 = vmatprep.subr.mxu0 0.0
    %4317 = vmatpush1.msra.mxu0 %v4295
    %4318 = vmatprep.subr.mxu0 0.0
    %4319 = vmatpush1.msra.mxu0 %v4296
    %4320 = vmatprep.subr.mxu0 0.0
    %4321 = vmatpush1.msra.mxu0 %v4297
    %4322 = vmatprep.subr.mxu0 0.0
    %4323 = vmatpush1.msra.mxu0 0.0
    %4324 = vmatprep.subr.mxu0 0.0
    %4325 = vmatpush1.msra.mxu0 0.0
    %4326 = vmatprep.subr.mxu0 0.0
    %4327 = vmatpush1.msra.mxu0 0.0
    %4328 = vmatprep.subr.mxu0 0.0
    %4329 = vmatpush1.msra.mxu0 0.0
    %4330 = vmatprep.subr.mxu0 0.0
    %4331 = vmatpush1.msra.mxu0 0.0
    %4332 = vmatprep.subr.mxu0 0.0
    %4333 = vmatpush1.msra.mxu0 0.0
    %4334 = vmatprep.subr.mxu0 0.0
    %4335 = vmatpush1.msra.mxu0 0.0
    %4336 = vmatprep.subr.mxu0 0.0
    %4337 = vmatpush1.msra.mxu0 0.0
    %4338 = vmatprep.subr.mxu0 0.0
    %4339 = vmatpush1.msra.mxu0 0.0
    %4340 = vmatprep.subr.mxu0 0.0
    %4341 = vmatpush1.msra.mxu0 0.0
    %4342 = vmatprep.subr.mxu0 0.0
    %4343 = vmatpush1.msra.mxu0 0.0
    %4344 = vmatprep.subr.mxu0 0.0
    %4345 = vmatpush1.msra.mxu0 0.0
    %4346 = vmatprep.subr.mxu0 0.0
    %4347 = vmatpush1.msra.mxu0 0.0
    %4348 = vmatprep.subr.mxu0 0.0
    %4349 = vmatpush1.msra.mxu0 0.0
    %4350 = vmatprep.subr.mxu0 0.0
    %4351 = vmatpush1.msra.mxu0 0.0
    %4352 = vmatprep.subr.mxu0 0.0
    %4353 = vmatpush1.msra.mxu0 0.0
    %4354 = vmatprep.subr.mxu0 0.0
    %4355 = vmatpush1.msra.mxu0 0.0
    %4356 = vmatprep.subr.mxu0 0.0
    %4357 = vmatpush1.msra.mxu0 0.0
    %4358 = vmatprep.subr.mxu0 0.0
    %4359 = vmatpush1.msra.mxu0 0.0
    %4360 = vmatprep.subr.mxu0 0.0
    %4361 = vmatpush1.msra.mxu0 0.0
    %4362 = vmatprep.subr.mxu0 0.0
    %4363 = vmatpush1.msra.mxu0 0.0
    %4364 = vmatprep.subr.mxu0 0.0
    %4365 = vmatpush1.msra.mxu0 0.0
    %4366 = vmatprep.subr.mxu0 0.0
    %4367 = vmatpush1.msra.mxu0 0.0
    %4368 = vmatprep.subr.mxu0 0.0
    %4369 = vmatpush1.msra.mxu0 0.0
    %4370 = vmatprep.mubr.f32.mxu0 0.0
    %4371 = vmatmul.mubr.f32.gmra.mrb[0].mxu0 %v3726
    %v4372 = vpop.f32.mrb[0].mxu0
    %v4373 = vadd.f32 %v4304, %v4372
    %v4374 = vpop.f32.mrb[0].mxu0
    %4375 = vmatprep.mubr.f32.mxu0 0.0
    %4376 = vmatmul.mubr.f32.gmra.mrb[0].mxu0 %v3729
    %v4377 = vpop.f32.mrb[0].mxu0
    %v4378 = vadd.f32 %v4304, %v4377
    %v4379 = vpop.f32.mrb[0].mxu0
    %4380 = vmatprep.mubr.f32.mxu0 0.0
    %4381 = vmatmul.mubr.f32.gmra.mrb[0].mxu0 %v3732
    %v4382 = vpop.f32.mrb[0].mxu0
    %v4383 = vadd.f32 %v4304, %v4382
    %v4384 = vpop.f32.mrb[0].mxu0
    %4385 = vmatprep.mubr.f32.mxu0 0.0
    %4386 = vmatmul.mubr.f32.gmra.mrb[0].mxu0 %v3735
    %v4387 = vpop.f32.mrb[0].mxu0
    %v4388 = vadd.f32 %v4304, %v4387
    %v4389 = vpop.f32.mrb[0].mxu0
    %4390 = vdwg.mxu0
    %s4391 = scalar_lea.vmem %s33, 192
    %v4392 = vld [vmem:[%s4391] sm:$0xff]
    %v4393 = vld [vmem:[%s4391 + $0x8] sm:$0xff]
    %v4394 = vld [vmem:[%s4391 + $0x10] sm:$0xff]
    %v4395 = vld [vmem:[%s4391 + $0x18] sm:$0xff]
    %v4396 = vld [vmem:[%s4391 + $0x20] sm:$0xff]
    %v4397 = vld [vmem:[%s4391 + $0x28] sm:$0xff]
    %v4398 = vld [vmem:[%s4391 + $0x30] sm:$0xff]
    %v4399 = vld [vmem:[%s4391 + $0x38] sm:$0xff]
    %s4400 = scalar_lea.vmem %s35, 3
    %v4401 = vld [vmem:[%s4400] sm:$0x1]
    %v4403 = vlaneseq
    %v4404 = vshrl.u32 %v4403, 7
    %v4405 = vsub.s32 0, %v4404
    %v4406 = vrot.slane %v4401, %v4405
    %4408 = vmatprep.subr.mxu0 0.0
    %4409 = vmatpush1.msra.mxu0 %v4392
    %4410 = vmatprep.subr.mxu0 0.0
    %4411 = vmatpush1.msra.mxu0 %v4393
    %4412 = vmatprep.subr.mxu0 0.0
    %4413 = vmatpush1.msra.mxu0 %v4394
    %4414 = vmatprep.subr.mxu0 0.0
    %4415 = vmatpush1.msra.mxu0 %v4395
    %4416 = vmatprep.subr.mxu0 0.0
    %4417 = vmatpush1.msra.mxu0 %v4396
    %4418 = vmatprep.subr.mxu0 0.0
    %4419 = vmatpush1.msra.mxu0 %v4397
    %4420 = vmatprep.subr.mxu0 0.0
    %4421 = vmatpush1.msra.mxu0 %v4398
    %4422 = vmatprep.subr.mxu0 0.0
    %4423 = vmatpush1.msra.mxu0 %v4399
    %4424 = vmatprep.subr.mxu0 0.0
    %4425 = vmatpush1.msra.mxu0 0.0
    %4426 = vmatprep.subr.mxu0 0.0
    %4427 = vmatpush1.msra.mxu0 0.0
    %4428 = vmatprep.subr.mxu0 0.0
    %4429 = vmatpush1.msra.mxu0 0.0
    %4430 = vmatprep.subr.mxu0 0.0
    %4431 = vmatpush1.msra.mxu0 0.0
    %4432 = vmatprep.subr.mxu0 0.0
    %4433 = vmatpush1.msra.mxu0 0.0
    %4434 = vmatprep.subr.mxu0 0.0
    %4435 = vmatpush1.msra.mxu0 0.0
    %4436 = vmatprep.subr.mxu0 0.0
    %4437 = vmatpush1.msra.mxu0 0.0
    %4438 = vmatprep.subr.mxu0 0.0
    %4439 = vmatpush1.msra.mxu0 0.0
    %4440 = vmatprep.subr.mxu0 0.0
    %4441 = vmatpush1.msra.mxu0 0.0
    %4442 = vmatprep.subr.mxu0 0.0
    %4443 = vmatpush1.msra.mxu0 0.0
    %4444 = vmatprep.subr.mxu0 0.0
    %4445 = vmatpush1.msra.mxu0 0.0
    %4446 = vmatprep.subr.mxu0 0.0
    %4447 = vmatpush1.msra.mxu0 0.0
    %4448 = vmatprep.subr.mxu0 0.0
    %4449 = vmatpush1.msra.mxu0 0.0
    %4450 = vmatprep.subr.mxu0 0.0
    %4451 = vmatpush1.msra.mxu0 0.0
    %4452 = vmatprep.subr.mxu0 0.0
    %4453 = vmatpush1.msra.mxu0 0.0
    %4454 = vmatprep.subr.mxu0 0.0
    %4455 = vmatpush1.msra.mxu0 0.0
    %4456 = vmatprep.subr.mxu0 0.0
    %4457 = vmatpush1.msra.mxu0 0.0
    %4458 = vmatprep.subr.mxu0 0.0
    %4459 = vmatpush1.msra.mxu0 0.0
    %4460 = vmatprep.subr.mxu0 0.0
    %4461 = vmatpush1.msra.mxu0 0.0
    %4462 = vmatprep.subr.mxu0 0.0
    %4463 = vmatpush1.msra.mxu0 0.0
    %4464 = vmatprep.subr.mxu0 0.0
    %4465 = vmatpush1.msra.mxu0 0.0
    %4466 = vmatprep.subr.mxu0 0.0
    %4467 = vmatpush1.msra.mxu0 0.0
    %4468 = vmatprep.subr.mxu0 0.0
    %4469 = vmatpush1.msra.mxu0 0.0
    %4470 = vmatprep.subr.mxu0 0.0
    %4471 = vmatpush1.msra.mxu0 0.0
    %4472 = vmatprep.mubr.f32.mxu0 0.0
    %4473 = vmatmul.mubr.f32.gmra.mrb[0].mxu0 %v3726
    %v4474 = vpop.f32.mrb[0].mxu0
    %v4475 = vadd.f32 %v4406, %v4474
    %v4476 = vpop.f32.mrb[0].mxu0
    %4477 = vmatprep.mubr.f32.mxu0 0.0
    %4478 = vmatmul.mubr.f32.gmra.mrb[0].mxu0 %v3729
    %v4479 = vpop.f32.mrb[0].mxu0
    %v4480 = vadd.f32 %v4406, %v4479
    %v4481 = vpop.f32.mrb[0].mxu0
    %4482 = vmatprep.mubr.f32.mxu0 0.0
    %4483 = vmatmul.mubr.f32.gmra.mrb[0].mxu0 %v3732
    %v4484 = vpop.f32.mrb[0].mxu0
    %v4485 = vadd.f32 %v4406, %v4484
    %v4486 = vpop.f32.mrb[0].mxu0
    %4487 = vmatprep.mubr.f32.mxu0 0.0
    %4488 = vmatmul.mubr.f32.gmra.mrb[0].mxu0 %v3735
    %v4489 = vpop.f32.mrb[0].mxu0
    %v4490 = vadd.f32 %v4406, %v4489
    %v4491 = vpop.f32.mrb[0].mxu0
    %4492 = vdwg.mxu0
    %s4493 = scalar_lea.vmem %s37, 192
    %v4494 = vld [vmem:[%s4493] sm:$0xff]
    %v4495 = vld [vmem:[%s4493 + $0x8] sm:$0xff]
    %v4496 = vld [vmem:[%s4493 + $0x10] sm:$0xff]
    %v4497 = vld [vmem:[%s4493 + $0x18] sm:$0xff]
    %v4498 = vld [vmem:[%s4493 + $0x20] sm:$0xff]
    %v4499 = vld [vmem:[%s4493 + $0x28] sm:$0xff]
    %v4500 = vld [vmem:[%s4493 + $0x30] sm:$0xff]
    %v4501 = vld [vmem:[%s4493 + $0x38] sm:$0xff]
    %s4502 = scalar_lea.vmem %s39, 3
    %v4503 = vld [vmem:[%s4502] sm:$0x1]
    %v4505 = vlaneseq
    %v4506 = vshrl.u32 %v4505, 7
    %v4507 = vsub.s32 0, %v4506
    %v4508 = vrot.slane %v4503, %v4507
    %4510 = vmatprep.subr.mxu0 0.0
    %4511 = vmatpush1.msra.mxu0 %v4494
    %4512 = vmatprep.subr.mxu0 0.0
    %4513 = vmatpush1.msra.mxu0 %v4495
    %4514 = vmatprep.subr.mxu0 0.0
    %4515 = vmatpush1.msra.mxu0 %v4496
    %4516 = vmatprep.subr.mxu0 0.0
    %4517 = vmatpush1.msra.mxu0 %v4497
    %4518 = vmatprep.subr.mxu0 0.0
    %4519 = vmatpush1.msra.mxu0 %v4498
    %4520 = vmatprep.subr.mxu0 0.0
    %4521 = vmatpush1.msra.mxu0 %v4499
    %4522 = vmatprep.subr.mxu0 0.0
    %4523 = vmatpush1.msra.mxu0 %v4500
    %4524 = vmatprep.subr.mxu0 0.0
    %4525 = vmatpush1.msra.mxu0 %v4501
    %4526 = vmatprep.subr.mxu0 0.0
    %4527 = vmatpush1.msra.mxu0 0.0
    %4528 = vmatprep.subr.mxu0 0.0
    %4529 = vmatpush1.msra.mxu0 0.0
    %4530 = vmatprep.subr.mxu0 0.0
    %4531 = vmatpush1.msra.mxu0 0.0
    %4532 = vmatprep.subr.mxu0 0.0
    %4533 = vmatpush1.msra.mxu0 0.0
    %4534 = vmatprep.subr.mxu0 0.0
    %4535 = vmatpush1.msra.mxu0 0.0
    %4536 = vmatprep.subr.mxu0 0.0
    %4537 = vmatpush1.msra.mxu0 0.0
    %4538 = vmatprep.subr.mxu0 0.0
    %4539 = vmatpush1.msra.mxu0 0.0
    %4540 = vmatprep.subr.mxu0 0.0
    %4541 = vmatpush1.msra.mxu0 0.0
    %4542 = vmatprep.subr.mxu0 0.0
    %4543 = vmatpush1.msra.mxu0 0.0
    %4544 = vmatprep.subr.mxu0 0.0
    %4545 = vmatpush1.msra.mxu0 0.0
    %4546 = vmatprep.subr.mxu0 0.0
    %4547 = vmatpush1.msra.mxu0 0.0
    %4548 = vmatprep.subr.mxu0 0.0
    %4549 = vmatpush1.msra.mxu0 0.0
    %4550 = vmatprep.subr.mxu0 0.0
    %4551 = vmatpush1.msra.mxu0 0.0
    %4552 = vmatprep.subr.mxu0 0.0
    %4553 = vmatpush1.msra.mxu0 0.0
    %4554 = vmatprep.subr.mxu0 0.0
    %4555 = vmatpush1.msra.mxu0 0.0
    %4556 = vmatprep.subr.mxu0 0.0
    %4557 = vmatpush1.msra.mxu0 0.0
    %4558 = vmatprep.subr.mxu0 0.0
    %4559 = vmatpush1.msra.mxu0 0.0
    %4560 = vmatprep.subr.mxu0 0.0
    %4561 = vmatpush1.msra.mxu0 0.0
    %4562 = vmatprep.subr.mxu0 0.0
    %4563 = vmatpush1.msra.mxu0 0.0
    %4564 = vmatprep.subr.mxu0 0.0
    %4565 = vmatpush1.msra.mxu0 0.0
    %4566 = vmatprep.subr.mxu0 0.0
    %4567 = vmatpush1.msra.mxu0 0.0
    %4568 = vmatprep.subr.mxu0 0.0
    %4569 = vmatpush1.msra.mxu0 0.0
    %4570 = vmatprep.subr.mxu0 0.0
    %4571 = vmatpush1.msra.mxu0 0.0
    %4572 = vmatprep.subr.mxu0 0.0
    %4573 = vmatpush1.msra.mxu0 0.0
    %4574 = vmatprep.mubr.f32.mxu0 0.0
    %4575 = vmatmul.mubr.f32.gmra.mrb[0].mxu0 %v3726
    %v4576 = vpop.f32.mrb[0].mxu0
    %v4577 = vadd.f32 %v4508, %v4576
    %v4578 = vpop.f32.mrb[0].mxu0
    %4579 = vmatprep.mubr.f32.mxu0 0.0
    %4580 = vmatmul.mubr.f32.gmra.mrb[0].mxu0 %v3729
    %v4581 = vpop.f32.mrb[0].mxu0
    %v4582 = vadd.f32 %v4508, %v4581
    %v4583 = vpop.f32.mrb[0].mxu0
    %4584 = vmatprep.mubr.f32.mxu0 0.0
    %4585 = vmatmul.mubr.f32.gmra.mrb[0].mxu0 %v3732
    %v4586 = vpop.f32.mrb[0].mxu0
    %v4587 = vadd.f32 %v4508, %v4586
    %v4588 = vpop.f32.mrb[0].mxu0
    %4589 = vmatprep.mubr.f32.mxu0 0.0
    %4590 = vmatmul.mubr.f32.gmra.mrb[0].mxu0 %v3735
    %v4591 = vpop.f32.mrb[0].mxu0
    %v4592 = vadd.f32 %v4508, %v4591
    %v4593 = vpop.f32.mrb[0].mxu0
    %4594 = vdwg.mxu0
    %v4595 = vmul.f32 %v4373, 0.17677669
    %v4596 = vmul.f32 %v4378, 0.17677669
    %v4597 = vmul.f32 %v4383, 0.17677669
    %v4598 = vmul.f32 %v4388, 0.17677669
    %v4600 = vsel %vm1594, %v4595, 0
    %v4603 = vsel %vm1594, %v4596, 0
    %v4606 = vsel %vm1594, %v4597, 0
    %v4609 = vsel %vm1594, %v4598, 0
    %v4612 = vsel %vm1594, %v4475, 0
    %v4615 = vsel %vm1594, %v4480, 0
    %v4618 = vsel %vm1594, %v4485, 0
    %v4621 = vsel %vm1594, %v4490, 0
    %4623 = vmatprep.subr.mxu0 0.0
    %4624 = vmatpush1.xpose.msra.mxu0 %v4612
    %4625 = vmatprep.subr.mxu0 0.0
    %4626 = vmatpush1.xpose.msra.mxu0 %v4615
    %4627 = vmatprep.subr.mxu0 0.0
    %4628 = vmatpush1.xpose.msra.mxu0 %v4618
    %4629 = vmatprep.subr.mxu0 0.0
    %4630 = vmatpush1.xpose.msra.mxu0 %v4621
    %4631 = vmatprep.subr.mxu0 0.0
    %4632 = vmatpush1.xpose.msra.mxu0 0.0
    %4633 = vmatprep.subr.mxu0 0.0
    %4634 = vmatpush1.xpose.msra.mxu0 0.0
    %4635 = vmatprep.subr.mxu0 0.0
    %4636 = vmatpush1.xpose.msra.mxu0 0.0
    %4637 = vmatprep.subr.mxu0 0.0
    %4638 = vmatpush1.xpose.msra.mxu0 0.0
    %4639 = vmatprep.subr.mxu0 0.0
    %4640 = vmatpush1.xpose.msra.mxu0 0.0
    %4641 = vmatprep.subr.mxu0 0.0
    %4642 = vmatpush1.xpose.msra.mxu0 0.0
    %4643 = vmatprep.subr.mxu0 0.0
    %4644 = vmatpush1.xpose.msra.mxu0 0.0
    %4645 = vmatprep.subr.mxu0 0.0
    %4646 = vmatpush1.xpose.msra.mxu0 0.0
    %4647 = vmatprep.subr.mxu0 0.0
    %4648 = vmatpush1.xpose.msra.mxu0 0.0
    %4649 = vmatprep.subr.mxu0 0.0
    %4650 = vmatpush1.xpose.msra.mxu0 0.0
    %4651 = vmatprep.subr.mxu0 0.0
    %4652 = vmatpush1.xpose.msra.mxu0 0.0
    %4653 = vmatprep.subr.mxu0 0.0
    %4654 = vmatpush1.xpose.msra.mxu0 0.0
    %4655 = vmatprep.subr.mxu0 0.0
    %4656 = vmatpush1.xpose.msra.mxu0 0.0
    %4657 = vmatprep.subr.mxu0 0.0
    %4658 = vmatpush1.xpose.msra.mxu0 0.0
    %4659 = vmatprep.subr.mxu0 0.0
    %4660 = vmatpush1.xpose.msra.mxu0 0.0
    %4661 = vmatprep.subr.mxu0 0.0
    %4662 = vmatpush1.xpose.msra.mxu0 0.0
    %4663 = vmatprep.subr.mxu0 0.0
    %4664 = vmatpush1.xpose.msra.mxu0 0.0
    %4665 = vmatprep.subr.mxu0 0.0
    %4666 = vmatpush1.xpose.msra.mxu0 0.0
    %4667 = vmatprep.subr.mxu0 0.0
    %4668 = vmatpush1.xpose.msra.mxu0 0.0
    %4669 = vmatprep.subr.mxu0 0.0
    %4670 = vmatpush1.xpose.msra.mxu0 0.0
    %4671 = vmatprep.subr.mxu0 0.0
    %4672 = vmatpush1.xpose.msra.mxu0 0.0
    %4673 = vmatprep.subr.mxu0 0.0
    %4674 = vmatpush1.xpose.msra.mxu0 0.0
    %4675 = vmatprep.subr.mxu0 0.0
    %4676 = vmatpush1.xpose.msra.mxu0 0.0
    %4677 = vmatprep.subr.mxu0 0.0
    %4678 = vmatpush1.xpose.msra.mxu0 0.0
    %4679 = vmatprep.subr.mxu0 0.0
    %4680 = vmatpush1.xpose.msra.mxu0 0.0
    %4681 = vmatprep.subr.mxu0 0.0
    %4682 = vmatpush1.xpose.msra.mxu0 0.0
    %4683 = vmatprep.subr.mxu0 0.0
    %4684 = vmatpush1.xpose.msra.mxu0 0.0
    %4685 = vmatprep.subr.mxu0 0.0
    %4686 = vmatpush1.xpose.msra.mxu0 0.0
    %4687 = vmatprep.mubr.f32.mxu0 0.0
    %4688 = vmatmul.mubr.f32.gmra.mrb[0].mxu0 %v4600
    %v4689 = vpop.f32.mrb[0].mxu0
    %v4690 = vadd.f32 0.0, %v4689
    %v4691 = vpop.f32.mrb[0].mxu0
    %4692 = vmatprep.mubr.f32.mxu0 0.0
    %4693 = vmatmul.mubr.f32.gmra.mrb[0].mxu0 %v4603
    %v4694 = vpop.f32.mrb[0].mxu0
    %v4695 = vadd.f32 0.0, %v4694
    %v4696 = vpop.f32.mrb[0].mxu0
    %4697 = vmatprep.mubr.f32.mxu0 0.0
    %4698 = vmatmul.mubr.f32.gmra.mrb[0].mxu0 %v4606
    %v4699 = vpop.f32.mrb[0].mxu0
    %v4700 = vadd.f32 0.0, %v4699
    %v4701 = vpop.f32.mrb[0].mxu0
    %4702 = vmatprep.mubr.f32.mxu0 0.0
    %4703 = vmatmul.mubr.f32.gmra.mrb[0].mxu0 %v4609
    %v4704 = vpop.f32.mrb[0].mxu0
    %v4705 = vadd.f32 0.0, %v4704
    %v4706 = vpop.f32.mrb[0].mxu0
    %4707 = vdwg.mxu0
    %v4708 = vsel %vm1594, %v4690, -inf
    %4709 = vmax.xlane.f32.xlu0 %v4708
    %v4710 = vpop.xlane.xlu0 %4709
    %v4711 = vsel %vm1594, %v4695, -inf
    %4712 = vmax.xlane.f32.xlu0 %v4711
    %v4713 = vpop.xlane.xlu0 %4712
    %v4714 = vsel %vm1594, %v4700, -inf
    %4715 = vmax.xlane.f32.xlu0 %v4714
    %v4716 = vpop.xlane.xlu0 %4715
    %v4717 = vsel %vm1594, %v4705, -inf
    %4718 = vmax.xlane.f32.xlu0 %v4717
    %v4719 = vpop.xlane.xlu0 %4718
    %v4720 = vsub.f32 %v4690, %v4710
    %v4721 = vsub.f32 %v4695, %v4713
    %v4722 = vsub.f32 %v4700, %v4716
    %v4723 = vsub.f32 %v4705, %v4719
    %v4724 = vmul.f32 %v4720, 1.442695
    %v4725 = vpow.pop %v4724
    %v4726 = vmul.f32 %v4721, 1.442695
    %v4727 = vpow.pop %v4726
    %v4728 = vmul.f32 %v4722, 1.442695
    %v4729 = vpow.pop %v4728
    %v4730 = vmul.f32 %v4723, 1.442695
    %v4731 = vpow.pop %v4730
    %v4732 = vmul.f32 %v4725, %v586
    %v4733 = vmul.f32 %v4727, %v587
    %v4734 = vmul.f32 %v4729, %v588
    %v4735 = vmul.f32 %v4731, %v589
    %v4736 = vsel %vm1594, %v4732, 0.0
    %4737 = vadd.xlane.f32.xlu0 %v4736
    %v4738 = vpop.xlane.xlu0 %4737
    %v4739 = vsel %vm1594, %v4733, 0.0
    %4740 = vadd.xlane.f32.xlu0 %v4739
    %v4741 = vpop.xlane.xlu0 %4740
    %v4742 = vsel %vm1594, %v4734, 0.0
    %4743 = vadd.xlane.f32.xlu0 %v4742
    %v4744 = vpop.xlane.xlu0 %4743
    %v4745 = vsel %vm1594, %v4735, 0.0
    %4746 = vadd.xlane.f32.xlu0 %v4745
    %v4747 = vpop.xlane.xlu0 %4746
    %v4748 = vrcp.pop %v4738
    %v4749 = vrcp.pop %v4741
    %v4750 = vrcp.pop %v4744
    %v4751 = vrcp.pop %v4747
    %v4752 = vmul.f32 %v4732, %v4748
    %v4753 = vmul.f32 %v4733, %v4749
    %v4754 = vmul.f32 %v4734, %v4750
    %v4755 = vmul.f32 %v4735, %v4751
    %v4757 = vsel %vm1594, %v4752, 0
    %v4760 = vsel %vm1594, %v4753, 0
    %v4763 = vsel %vm1594, %v4754, 0
    %v4766 = vsel %vm1594, %v4755, 0
    %4768 = vmatprep.subr.mxu0 0.0
    %4769 = vmatpush1.msra.mxu0 %v4577
    %4770 = vmatprep.subr.mxu0 0.0
    %4771 = vmatpush1.msra.mxu0 %v4582
    %4772 = vmatprep.subr.mxu0 0.0
    %4773 = vmatpush1.msra.mxu0 %v4587
    %4774 = vmatprep.subr.mxu0 0.0
    %4775 = vmatpush1.msra.mxu0 %v4592
    %4776 = vmatprep.subr.mxu0 0.0
    %4777 = vmatpush1.msra.mxu0 0.0
    %4778 = vmatprep.subr.mxu0 0.0
    %4779 = vmatpush1.msra.mxu0 0.0
    %4780 = vmatprep.subr.mxu0 0.0
    %4781 = vmatpush1.msra.mxu0 0.0
    %4782 = vmatprep.subr.mxu0 0.0
    %4783 = vmatpush1.msra.mxu0 0.0
    %4784 = vmatprep.subr.mxu0 0.0
    %4785 = vmatpush1.msra.mxu0 0.0
    %4786 = vmatprep.subr.mxu0 0.0
    %4787 = vmatpush1.msra.mxu0 0.0
    %4788 = vmatprep.subr.mxu0 0.0
    %4789 = vmatpush1.msra.mxu0 0.0
    %4790 = vmatprep.subr.mxu0 0.0
    %4791 = vmatpush1.msra.mxu0 0.0
    %4792 = vmatprep.subr.mxu0 0.0
    %4793 = vmatpush1.msra.mxu0 0.0
    %4794 = vmatprep.subr.mxu0 0.0
    %4795 = vmatpush1.msra.mxu0 0.0
    %4796 = vmatprep.subr.mxu0 0.0
    %4797 = vmatpush1.msra.mxu0 0.0
    %4798 = vmatprep.subr.mxu0 0.0
    %4799 = vmatpush1.msra.mxu0 0.0
    %4800 = vmatprep.subr.mxu0 0.0
    %4801 = vmatpush1.msra.mxu0 0.0
    %4802 = vmatprep.subr.mxu0 0.0
    %4803 = vmatpush1.msra.mxu0 0.0
    %4804 = vmatprep.subr.mxu0 0.0
    %4805 = vmatpush1.msra.mxu0 0.0
    %4806 = vmatprep.subr.mxu0 0.0
    %4807 = vmatpush1.msra.mxu0 0.0
    %4808 = vmatprep.subr.mxu0 0.0
    %4809 = vmatpush1.msra.mxu0 0.0
    %4810 = vmatprep.subr.mxu0 0.0
    %4811 = vmatpush1.msra.mxu0 0.0
    %4812 = vmatprep.subr.mxu0 0.0
    %4813 = vmatpush1.msra.mxu0 0.0
    %4814 = vmatprep.subr.mxu0 0.0
    %4815 = vmatpush1.msra.mxu0 0.0
    %4816 = vmatprep.subr.mxu0 0.0
    %4817 = vmatpush1.msra.mxu0 0.0
    %4818 = vmatprep.subr.mxu0 0.0
    %4819 = vmatpush1.msra.mxu0 0.0
    %4820 = vmatprep.subr.mxu0 0.0
    %4821 = vmatpush1.msra.mxu0 0.0
    %4822 = vmatprep.subr.mxu0 0.0
    %4823 = vmatpush1.msra.mxu0 0.0
    %4824 = vmatprep.subr.mxu0 0.0
    %4825 = vmatpush1.msra.mxu0 0.0
    %4826 = vmatprep.subr.mxu0 0.0
    %4827 = vmatpush1.msra.mxu0 0.0
    %4828 = vmatprep.subr.mxu0 0.0
    %4829 = vmatpush1.msra.mxu0 0.0
    %4830 = vmatprep.subr.mxu0 0.0
    %4831 = vmatpush1.msra.mxu0 0.0
    %4832 = vmatprep.mubr.f32.mxu0 0.0
    %4833 = vmatmul.mubr.f32.gmra.mrb[0].mxu0 %v4757
    %v4834 = vpop.f32.mrb[0].mxu0
    %v4835 = vadd.f32 0.0, %v4834
    %v4836 = vpop.f32.mrb[0].mxu0
    %4837 = vmatprep.mubr.f32.mxu0 0.0
    %4838 = vmatmul.mubr.f32.gmra.mrb[0].mxu0 %v4760
    %v4839 = vpop.f32.mrb[0].mxu0
    %v4840 = vadd.f32 0.0, %v4839
    %v4841 = vpop.f32.mrb[0].mxu0
    %4842 = vmatprep.mubr.f32.mxu0 0.0
    %4843 = vmatmul.mubr.f32.gmra.mrb[0].mxu0 %v4763
    %v4844 = vpop.f32.mrb[0].mxu0
    %v4845 = vadd.f32 0.0, %v4844
    %v4846 = vpop.f32.mrb[0].mxu0
    %4847 = vmatprep.mubr.f32.mxu0 0.0
    %4848 = vmatmul.mubr.f32.gmra.mrb[0].mxu0 %v4766
    %v4849 = vpop.f32.mrb[0].mxu0
    %v4850 = vadd.f32 0.0, %v4849
    %v4851 = vpop.f32.mrb[0].mxu0
    %4852 = vdwg.mxu0
    %s4853 = scalar_lea.vmem %s41, 96
    %v4854 = vld [vmem:[%s4853] sm:$0xff]
    %v4855 = vld [vmem:[%s4853 + $0x8] sm:$0xff]
    %v4856 = vld [vmem:[%s4853 + $0x10] sm:$0xff]
    %v4857 = vld [vmem:[%s4853 + $0x18] sm:$0xff]
    %v4859 = vsel %vm1594, %v4835, 0
    %v4862 = vsel %vm1594, %v4840, 0
    %v4865 = vsel %vm1594, %v4845, 0
    %v4868 = vsel %vm1594, %v4850, 0
    %4870 = vmatprep.subr.mxu0 0.0
    %4871 = vmatpush1.msra.mxu0 %v4854
    %4872 = vmatprep.subr.mxu0 0.0
    %4873 = vmatpush1.msra.mxu0 %v4855
    %4874 = vmatprep.subr.mxu0 0.0
    %4875 = vmatpush1.msra.mxu0 %v4856
    %4876 = vmatprep.subr.mxu0 0.0
    %4877 = vmatpush1.msra.mxu0 %v4857
    %4878 = vmatprep.subr.mxu0 0.0
    %4879 = vmatpush1.msra.mxu0 0.0
    %4880 = vmatprep.subr.mxu0 0.0
    %4881 = vmatpush1.msra.mxu0 0.0
    %4882 = vmatprep.subr.mxu0 0.0
    %4883 = vmatpush1.msra.mxu0 0.0
    %4884 = vmatprep.subr.mxu0 0.0
    %4885 = vmatpush1.msra.mxu0 0.0
    %4886 = vmatprep.subr.mxu0 0.0
    %4887 = vmatpush1.msra.mxu0 0.0
    %4888 = vmatprep.subr.mxu0 0.0
    %4889 = vmatpush1.msra.mxu0 0.0
    %4890 = vmatprep.subr.mxu0 0.0
    %4891 = vmatpush1.msra.mxu0 0.0
    %4892 = vmatprep.subr.mxu0 0.0
    %4893 = vmatpush1.msra.mxu0 0.0
    %4894 = vmatprep.subr.mxu0 0.0
    %4895 = vmatpush1.msra.mxu0 0.0
    %4896 = vmatprep.subr.mxu0 0.0
    %4897 = vmatpush1.msra.mxu0 0.0
    %4898 = vmatprep.subr.mxu0 0.0
    %4899 = vmatpush1.msra.mxu0 0.0
    %4900 = vmatprep.subr.mxu0 0.0
    %4901 = vmatpush1.msra.mxu0 0.0
    %4902 = vmatprep.subr.mxu0 0.0
    %4903 = vmatpush1.msra.mxu0 0.0
    %4904 = vmatprep.subr.mxu0 0.0
    %4905 = vmatpush1.msra.mxu0 0.0
    %4906 = vmatprep.subr.mxu0 0.0
    %4907 = vmatpush1.msra.mxu0 0.0
    %4908 = vmatprep.subr.mxu0 0.0
    %4909 = vmatpush1.msra.mxu0 0.0
    %4910 = vmatprep.subr.mxu0 0.0
    %4911 = vmatpush1.msra.mxu0 0.0
    %4912 = vmatprep.subr.mxu0 0.0
    %4913 = vmatpush1.msra.mxu0 0.0
    %4914 = vmatprep.subr.mxu0 0.0
    %4915 = vmatpush1.msra.mxu0 0.0
    %4916 = vmatprep.subr.mxu0 0.0
    %4917 = vmatpush1.msra.mxu0 0.0
    %4918 = vmatprep.subr.mxu0 0.0
    %4919 = vmatpush1.msra.mxu0 0.0
    %4920 = vmatprep.subr.mxu0 0.0
    %4921 = vmatpush1.msra.mxu0 0.0
    %4922 = vmatprep.subr.mxu0 0.0
    %4923 = vmatpush1.msra.mxu0 0.0
    %4924 = vmatprep.subr.mxu0 0.0
    %4925 = vmatpush1.msra.mxu0 0.0
    %4926 = vmatprep.subr.mxu0 0.0
    %4927 = vmatpush1.msra.mxu0 0.0
    %4928 = vmatprep.subr.mxu0 0.0
    %4929 = vmatpush1.msra.mxu0 0.0
    %4930 = vmatprep.subr.mxu0 0.0
    %4931 = vmatpush1.msra.mxu0 0.0
    %4932 = vmatprep.subr.mxu0 0.0
    %4933 = vmatpush1.msra.mxu0 0.0
    %4934 = vmatprep.mubr.f32.mxu0 0.0
    %4935 = vmatmul.mubr.f32.gmra.mrb[0].mxu0 %v4859
    %v4936 = vpop.f32.mrb[0].mxu0
    %v4937 = vadd.f32 0.0, %v4936
    %v4938 = vpop.f32.mrb[0].mxu0
    %4939 = vmatprep.mubr.f32.mxu0 0.0
    %4940 = vmatmul.mubr.f32.gmra.mrb[0].mxu0 %v4862
    %v4941 = vpop.f32.mrb[0].mxu0
    %v4942 = vadd.f32 0.0, %v4941
    %v4943 = vpop.f32.mrb[0].mxu0
    %4944 = vmatprep.mubr.f32.mxu0 0.0
    %4945 = vmatmul.mubr.f32.gmra.mrb[0].mxu0 %v4865
    %v4946 = vpop.f32.mrb[0].mxu0
    %v4947 = vadd.f32 0.0, %v4946
    %v4948 = vpop.f32.mrb[0].mxu0
    %4949 = vmatprep.mubr.f32.mxu0 0.0
    %4950 = vmatmul.mubr.f32.gmra.mrb[0].mxu0 %v4868
    %v4951 = vpop.f32.mrb[0].mxu0
    %v4952 = vadd.f32 0.0, %v4951
    %v4953 = vpop.f32.mrb[0].mxu0
    %4954 = vdwg.mxu0
    %v4956 = vsel %vm1594, %v4266, 0
    %v4959 = vsel %vm1594, %v4271, 0
    %v4962 = vsel %vm1594, %v4276, 0
    %v4965 = vsel %vm1594, %v4281, 0
    %4967 = vmatprep.subr.mxu0 0.0
    %4968 = vmatpush1.msra.mxu0 %v4285
    %4969 = vmatprep.subr.mxu0 0.0
    %4970 = vmatpush1.msra.mxu0 %v4286
    %4971 = vmatprep.subr.mxu0 0.0
    %4972 = vmatpush1.msra.mxu0 %v4287
    %4973 = vmatprep.subr.mxu0 0.0
    %4974 = vmatpush1.msra.mxu0 %v4288
    %4975 = vmatprep.subr.mxu0 0.0
    %4976 = vmatpush1.msra.mxu0 0.0
    %4977 = vmatprep.subr.mxu0 0.0
    %4978 = vmatpush1.msra.mxu0 0.0
    %4979 = vmatprep.subr.mxu0 0.0
    %4980 = vmatpush1.msra.mxu0 0.0
    %4981 = vmatprep.subr.mxu0 0.0
    %4982 = vmatpush1.msra.mxu0 0.0
    %4983 = vmatprep.subr.mxu0 0.0
    %4984 = vmatpush1.msra.mxu0 0.0
    %4985 = vmatprep.subr.mxu0 0.0
    %4986 = vmatpush1.msra.mxu0 0.0
    %4987 = vmatprep.subr.mxu0 0.0
    %4988 = vmatpush1.msra.mxu0 0.0
    %4989 = vmatprep.subr.mxu0 0.0
    %4990 = vmatpush1.msra.mxu0 0.0
    %4991 = vmatprep.subr.mxu0 0.0
    %4992 = vmatpush1.msra.mxu0 0.0
    %4993 = vmatprep.subr.mxu0 0.0
    %4994 = vmatpush1.msra.mxu0 0.0
    %4995 = vmatprep.subr.mxu0 0.0
    %4996 = vmatpush1.msra.mxu0 0.0
    %4997 = vmatprep.subr.mxu0 0.0
    %4998 = vmatpush1.msra.mxu0 0.0
    %4999 = vmatprep.subr.mxu0 0.0
    %5000 = vmatpush1.msra.mxu0 0.0
    %5001 = vmatprep.subr.mxu0 0.0
    %5002 = vmatpush1.msra.mxu0 0.0
    %5003 = vmatprep.subr.mxu0 0.0
    %5004 = vmatpush1.msra.mxu0 0.0
    %5005 = vmatprep.subr.mxu0 0.0
    %5006 = vmatpush1.msra.mxu0 0.0
    %5007 = vmatprep.subr.mxu0 0.0
    %5008 = vmatpush1.msra.mxu0 0.0
    %5009 = vmatprep.subr.mxu0 0.0
    %5010 = vmatpush1.msra.mxu0 0.0
    %5011 = vmatprep.subr.mxu0 0.0
    %5012 = vmatpush1.msra.mxu0 0.0
    %5013 = vmatprep.subr.mxu0 0.0
    %5014 = vmatpush1.msra.mxu0 0.0
    %5015 = vmatprep.subr.mxu0 0.0
    %5016 = vmatpush1.msra.mxu0 0.0
    %5017 = vmatprep.subr.mxu0 0.0
    %5018 = vmatpush1.msra.mxu0 0.0
    %5019 = vmatprep.subr.mxu0 0.0
    %5020 = vmatpush1.msra.mxu0 0.0
    %5021 = vmatprep.subr.mxu0 0.0
    %5022 = vmatpush1.msra.mxu0 0.0
    %5023 = vmatprep.subr.mxu0 0.0
    %5024 = vmatpush1.msra.mxu0 0.0
    %5025 = vmatprep.subr.mxu0 0.0
    %5026 = vmatpush1.msra.mxu0 0.0
    %5027 = vmatprep.subr.mxu0 0.0
    %5028 = vmatpush1.msra.mxu0 0.0
    %5029 = vmatprep.subr.mxu0 0.0
    %5030 = vmatpush1.msra.mxu0 0.0
    %5031 = vmatprep.mubr.f32.mxu0 0.0
    %5032 = vmatmul.mubr.f32.gmra.mrb[0].mxu0 %v4956
    %v5033 = vpop.f32.mrb[0].mxu0
    %v5034 = vadd.f32 %v4937, %v5033
    %v5035 = vpop.f32.mrb[0].mxu0
    %5036 = vmatprep.mubr.f32.mxu0 0.0
    %5037 = vmatmul.mubr.f32.gmra.mrb[0].mxu0 %v4959
    %v5038 = vpop.f32.mrb[0].mxu0
    %v5039 = vadd.f32 %v4942, %v5038
    %v5040 = vpop.f32.mrb[0].mxu0
    %5041 = vmatprep.mubr.f32.mxu0 0.0
    %5042 = vmatmul.mubr.f32.gmra.mrb[0].mxu0 %v4962
    %v5043 = vpop.f32.mrb[0].mxu0
    %v5044 = vadd.f32 %v4947, %v5043
    %v5045 = vpop.f32.mrb[0].mxu0
    %5046 = vmatprep.mubr.f32.mxu0 0.0
    %5047 = vmatmul.mubr.f32.gmra.mrb[0].mxu0 %v4965
    %v5048 = vpop.f32.mrb[0].mxu0
    %v5049 = vadd.f32 %v4952, %v5048
    %v5050 = vpop.f32.mrb[0].mxu0
    %5051 = vdwg.mxu0
    %s5052 = scalar_lea.vmem %s43, 1
    %v5053 = vld [vmem:[%s5052] sm:$0x1]
    %v5055 = vlaneseq
    %v5056 = vshrl.u32 %v5055, 7
    %v5057 = vsub.s32 0, %v5056
    %v5058 = vrot.slane %v5053, %v5057
    %v5060 = vadd.f32 %v5034, %v5058
    %v5061 = vadd.f32 %v5039, %v5058
    %v5062 = vadd.f32 %v5044, %v5058
    %v5063 = vadd.f32 %v5049, %v5058
    %v5064 = vmul.f32 %v3320, %v5060
    %v5065 = vmul.f32 %v3325, %v5061
    %v5066 = vmul.f32 %v3330, %v5062
    %v5067 = vmul.f32 %v3335, %v5063
    %v5068 = vadd.f32 %v3028, %v5064
    %v5069 = vadd.f32 %v3029, %v5065
    %v5070 = vadd.f32 %v3030, %v5066
    %v5071 = vadd.f32 %v3031, %v5067
    %v5072 = vsel %vm605, %v5068, 0.0
    %5073 = vadd.xlane.f32.xlu0 %v5072
    %v5074 = vpop.xlane.xlu0 %5073
    %v5075 = vsel %vm605, %v5069, 0.0
    %5076 = vadd.xlane.f32.xlu0 %v5075
    %v5077 = vpop.xlane.xlu0 %5076
    %v5078 = vsel %vm605, %v5070, 0.0
    %5079 = vadd.xlane.f32.xlu0 %v5078
    %v5080 = vpop.xlane.xlu0 %5079
    %v5081 = vsel %vm605, %v5071, 0.0
    %5082 = vadd.xlane.f32.xlu0 %v5081
    %v5083 = vpop.xlane.xlu0 %5082
    %v5084 = vmul.f32 %v5074, %v1225
    %v5085 = vmul.f32 %v5077, %v1225
    %v5086 = vmul.f32 %v5080, %v1225
    %v5087 = vmul.f32 %v5083, %v1225
    %v5088 = vsub.f32 %v5068, %v5084
    %v5089 = vsub.f32 %v5069, %v5085
    %v5090 = vsub.f32 %v5070, %v5086
    %v5091 = vsub.f32 %v5071, %v5087
    %v5092 = vmul.f32 %v5088, %v5088
    %v5093 = vmul.f32 %v5089, %v5089
    %v5094 = vmul.f32 %v5090, %v5090
    %v5095 = vmul.f32 %v5091, %v5091
    %v5096 = vsel %vm605, %v5092, 0.0
    %5097 = vadd.xlane.f32.xlu0 %v5096
    %v5098 = vpop.xlane.xlu0 %5097
    %v5099 = vsel %vm605, %v5093, 0.0
    %5100 = vadd.xlane.f32.xlu0 %v5099
    %v5101 = vpop.xlane.xlu0 %5100
    %v5102 = vsel %vm605, %v5094, 0.0
    %5103 = vadd.xlane.f32.xlu0 %v5102
    %v5104 = vpop.xlane.xlu0 %5103
    %v5105 = vsel %vm605, %v5095, 0.0
    %5106 = vadd.xlane.f32.xlu0 %v5105
    %v5107 = vpop.xlane.xlu0 %5106
    %v5108 = vmul.f32 %v5098, %v1225
    %v5109 = vmul.f32 %v5101, %v1225
    %v5110 = vmul.f32 %v5104, %v1225
    %v5111 = vmul.f32 %v5107, %v1225
    %v5112 = vadd.f32 %v5108, 1e-06
    %v5113 = vadd.f32 %v5109, 1e-06
    %v5114 = vadd.f32 %v5110, 1e-06
    %v5115 = vadd.f32 %v5111, 1e-06
    %v5116 = vrsqrt.pop %v5112
    %v5117 = vrsqrt.pop %v5113
    %v5118 = vrsqrt.pop %v5114
    %v5119 = vrsqrt.pop %v5115
    %v5120 = vmul.f32 %v5088, %v5116
    %v5121 = vmul.f32 %v5089, %v5117
    %v5122 = vmul.f32 %v5090, %v5118
    %v5123 = vmul.f32 %v5091, %v5119
    %v5124 = vadd.f32 %v3524, 1.0
    %v5125 = vadd.f32 %v3529, 1.0
    %v5126 = vadd.f32 %v3534, 1.0
    %v5127 = vadd.f32 %v3539, 1.0
    %v5128 = vmul.f32 %v5120, %v5124
    %v5129 = vmul.f32 %v5121, %v5125
    %v5130 = vmul.f32 %v5122, %v5126
    %v5131 = vmul.f32 %v5123, %v5127
    %v5132 = vadd.f32 %v5128, %v3422
    %v5133 = vadd.f32 %v5129, %v3427
    %v5134 = vadd.f32 %v5130, %v3432
    %v5135 = vadd.f32 %v5131, %v3437
    %s5136 = scalar_lea.vmem %s45, 128
    %v5137 = vld [vmem:[%s5136] sm:$0xff]
    %v5138 = vld [vmem:[%s5136 + $0x8] sm:$0xff]
    %v5139 = vld [vmem:[%s5136 + $0x10] sm:$0xff]
    %v5140 = vld [vmem:[%s5136 + $0x18] sm:$0xff]
    %v5141 = vld [vmem:[%s5136 + $0x20] sm:$0xff]
    %v5142 = vld [vmem:[%s5136 + $0x28] sm:$0xff]
    %v5143 = vld [vmem:[%s5136 + $0x30] sm:$0xff]
    %v5144 = vld [vmem:[%s5136 + $0x38] sm:$0xff]
    %v5145 = vld [vmem:[%s5136 + $0x40] sm:$0xff]
    %v5146 = vld [vmem:[%s5136 + $0x48] sm:$0xff]
    %v5147 = vld [vmem:[%s5136 + $0x50] sm:$0xff]
    %v5148 = vld [vmem:[%s5136 + $0x58] sm:$0xff]
    %v5149 = vld [vmem:[%s5136 + $0x60] sm:$0xff]
    %v5150 = vld [vmem:[%s5136 + $0x68] sm:$0xff]
    %v5151 = vld [vmem:[%s5136 + $0x70] sm:$0xff]
    %v5152 = vld [vmem:[%s5136 + $0x78] sm:$0xff]
    %s5153 = scalar_lea.vmem [#allocation7], 2
    %v5154 = vld [vmem:[%s5153] sm:$0x3]
    %v5156 = vlaneseq
    %v5157 = vshrl.u32 %v5156, 7
    %v5158 = vsub.s32 0, %v5157
    %v5159 = vrot.slane %v5154, %v5158
    %v5160 = vlaneseq
    %v5161 = vshrl.u32 %v5160, 7
    %v5162 = vsub.s32 1, %v5161
    %v5163 = vrot.slane %v5154, %v5162
    %v5167 = vsel %vm605, %v5132, 0
    %v5170 = vsel %vm605, %v5133, 0
    %v5173 = vsel %vm605, %v5134, 0
    %v5176 = vsel %vm605, %v5135, 0
    %5178 = vmatprep.subr.mxu0 %v5138
    %5179 = vmatpush1.msra.mxu0 %v5137
    %5180 = vmatprep.subr.mxu0 %v5140
    %5181 = vmatpush1.msra.mxu0 %v5139
    %5182 = vmatprep.subr.mxu0 %v5142
    %5183 = vmatpush1.msra.mxu0 %v5141
    %5184 = vmatprep.subr.mxu0 %v5144
    %5185 = vmatpush1.msra.mxu0 %v5143
    %5186 = vmatprep.subr.mxu0 %v5146
    %5187 = vmatpush1.msra.mxu0 %v5145
    %5188 = vmatprep.subr.mxu0 %v5148
    %5189 = vmatpush1.msra.mxu0 %v5147
    %5190 = vmatprep.subr.mxu0 %v5150
    %5191 = vmatpush1.msra.mxu0 %v5149
    %5192 = vmatprep.subr.mxu0 %v5152
    %5193 = vmatpush1.msra.mxu0 %v5151
    %5194 = vmatprep.subr.mxu0 0.0
    %5195 = vmatpush1.msra.mxu0 0.0
    %5196 = vmatprep.subr.mxu0 0.0
    %5197 = vmatpush1.msra.mxu0 0.0
    %5198 = vmatprep.subr.mxu0 0.0
    %5199 = vmatpush1.msra.mxu0 0.0
    %5200 = vmatprep.subr.mxu0 0.0
    %5201 = vmatpush1.msra.mxu0 0.0
    %5202 = vmatprep.subr.mxu0 0.0
    %5203 = vmatpush1.msra.mxu0 0.0
    %5204 = vmatprep.subr.mxu0 0.0
    %5205 = vmatpush1.msra.mxu0 0.0
    %5206 = vmatprep.subr.mxu0 0.0
    %5207 = vmatpush1.msra.mxu0 0.0
    %5208 = vmatprep.subr.mxu0 0.0
    %5209 = vmatpush1.msra.mxu0 0.0
    %5210 = vmatprep.subr.mxu0 0.0
    %5211 = vmatpush1.msra.mxu0 0.0
    %5212 = vmatprep.subr.mxu0 0.0
    %5213 = vmatpush1.msra.mxu0 0.0
    %5214 = vmatprep.subr.mxu0 0.0
    %5215 = vmatpush1.msra.mxu0 0.0
    %5216 = vmatprep.subr.mxu0 0.0
    %5217 = vmatpush1.msra.mxu0 0.0
    %5218 = vmatprep.subr.mxu0 0.0
    %5219 = vmatpush1.msra.mxu0 0.0
    %5220 = vmatprep.subr.mxu0 0.0
    %5221 = vmatpush1.msra.mxu0 0.0
    %5222 = vmatprep.subr.mxu0 0.0
    %5223 = vmatpush1.msra.mxu0 0.0
    %5224 = vmatprep.subr.mxu0 0.0
    %5225 = vmatpush1.msra.mxu0 0.0
    %5226 = vmatprep.subr.mxu0 0.0
    %5227 = vmatpush1.msra.mxu0 0.0
    %5228 = vmatprep.subr.mxu0 0.0
    %5229 = vmatpush1.msra.mxu0 0.0
    %5230 = vmatprep.subr.mxu0 0.0
    %5231 = vmatpush1.msra.mxu0 0.0
    %5232 = vmatprep.subr.mxu0 0.0
    %5233 = vmatpush1.msra.mxu0 0.0
    %5234 = vmatprep.subr.mxu0 0.0
    %5235 = vmatpush1.msra.mxu0 0.0
    %5236 = vmatprep.subr.mxu0 0.0
    %5237 = vmatpush1.msra.mxu0 0.0
    %5238 = vmatprep.subr.mxu0 0.0
    %5239 = vmatpush1.msra.mxu0 0.0
    %5240 = vmatprep.subr.mxu0 0.0
    %5241 = vmatpush1.msra.mxu0 0.0
    %5242 = vmatprep.mubr.f32.mxu0 0.0
    %5243 = vmatmul.mubr.f32.gmra.mrb[0].mxu0 %v5167
    %v5244 = vpop.f32.mrb[0].mxu0
    %v5245 = vadd.f32 %v5159, %v5244
    %v5246 = vpop.f32.mrb[0].mxu0
    %v5247 = vadd.f32 %v5163, %v5246
    %5248 = vmatprep.mubr.f32.mxu0 0.0
    %5249 = vmatmul.mubr.f32.gmra.mrb[0].mxu0 %v5170
    %v5250 = vpop.f32.mrb[0].mxu0
    %v5251 = vadd.f32 %v5159, %v5250
    %v5252 = vpop.f32.mrb[0].mxu0
    %v5253 = vadd.f32 %v5163, %v5252
    %5254 = vmatprep.mubr.f32.mxu0 0.0
    %5255 = vmatmul.mubr.f32.gmra.mrb[0].mxu0 %v5173
    %v5256 = vpop.f32.mrb[0].mxu0
    %v5257 = vadd.f32 %v5159, %v5256
    %v5258 = vpop.f32.mrb[0].mxu0
    %v5259 = vadd.f32 %v5163, %v5258
    %5260 = vmatprep.mubr.f32.mxu0 0.0
    %5261 = vmatmul.mubr.f32.gmra.mrb[0].mxu0 %v5176
    %v5262 = vpop.f32.mrb[0].mxu0
    %v5263 = vadd.f32 %v5159, %v5262
    %v5264 = vpop.f32.mrb[0].mxu0
    %v5265 = vadd.f32 %v5163, %v5264
    %5266 = vdwg.mxu0
    %v5267 = vmul.f32 %v5245, 0.5
    %v5268 = vmul.f32 %v5247, 0.5
    %v5269 = vmul.f32 %v5251, 0.5
    %v5270 = vmul.f32 %v5253, 0.5
    %v5271 = vmul.f32 %v5257, 0.5
    %v5272 = vmul.f32 %v5259, 0.5
    %v5273 = vmul.f32 %v5263, 0.5
    %v5274 = vmul.f32 %v5265, 0.5
    %v5275 = vmul.f32 %v5245, 0.044715
    %v5276 = vmul.f32 %v5247, 0.044715
    %v5277 = vmul.f32 %v5251, 0.044715
    %v5278 = vmul.f32 %v5253, 0.044715
    %v5279 = vmul.f32 %v5257, 0.044715
    %v5280 = vmul.f32 %v5259, 0.044715
    %v5281 = vmul.f32 %v5263, 0.044715
    %v5282 = vmul.f32 %v5265, 0.044715
    %v5283 = vmul.f32 %v5275, %v5245
    %v5284 = vmul.f32 %v5276, %v5247
    %v5285 = vmul.f32 %v5277, %v5251
    %v5286 = vmul.f32 %v5278, %v5253
    %v5287 = vmul.f32 %v5279, %v5257
    %v5288 = vmul.f32 %v5280, %v5259
    %v5289 = vmul.f32 %v5281, %v5263
    %v5290 = vmul.f32 %v5282, %v5265
    %v5291 = vmul.f32 %v5283, %v5245
    %v5292 = vmul.f32 %v5284, %v5247
    %v5293 = vmul.f32 %v5285, %v5251
    %v5294 = vmul.f32 %v5286, %v5253
    %v5295 = vmul.f32 %v5287, %v5257
    %v5296 = vmul.f32 %v5288, %v5259
    %v5297 = vmul.f32 %v5289, %v5263
    %v5298 = vmul.f32 %v5290, %v5265
    %v5299 = vadd.f32 %v5245, %v5291
    %v5300 = vadd.f32 %v5247, %v5292
    %v5301 = vadd.f32 %v5251, %v5293
    %v5302 = vadd.f32 %v5253, %v5294
    %v5303 = vadd.f32 %v5257, %v5295
    %v5304 = vadd.f32 %v5259, %v5296
    %v5305 = vadd.f32 %v5263, %v5297
    %v5306 = vadd.f32 %v5265, %v5298
    %v5307 = vmul.f32 %v5299, 0.7978846
    %v5308 = vmul.f32 %v5300, 0.7978846
    %v5309 = vmul.f32 %v5301, 0.7978846
    %v5310 = vmul.f32 %v5302, 0.7978846
    %v5311 = vmul.f32 %v5303, 0.7978846
    %v5312 = vmul.f32 %v5304, 0.7978846
    %v5313 = vmul.f32 %v5305, 0.7978846
    %v5314 = vmul.f32 %v5306, 0.7978846
    %v5315 = vtanh.pop %v5307
    %v5316 = vtanh.pop %v5308
    %v5317 = vtanh.pop %v5309
    %v5318 = vtanh.pop %v5310
    %v5319 = vtanh.pop %v5311
    %v5320 = vtanh.pop %v5312
    %v5321 = vtanh.pop %v5313
    %v5322 = vtanh.pop %v5314
    %v5323 = vadd.f32 %v5315, 1.0
    %v5324 = vadd.f32 %v5316, 1.0
    %v5325 = vadd.f32 %v5317, 1.0
    %v5326 = vadd.f32 %v5318, 1.0
    %v5327 = vadd.f32 %v5319, 1.0
    %v5328 = vadd.f32 %v5320, 1.0
    %v5329 = vadd.f32 %v5321, 1.0
    %v5330 = vadd.f32 %v5322, 1.0
    %v5331 = vmul.f32 %v5267, %v5323
    %v5332 = vmul.f32 %v5268, %v5324
    %v5333 = vmul.f32 %v5269, %v5325
    %v5334 = vmul.f32 %v5270, %v5326
    %v5335 = vmul.f32 %v5271, %v5327
    %v5336 = vmul.f32 %v5272, %v5328
    %v5337 = vmul.f32 %v5273, %v5329
    %v5338 = vmul.f32 %v5274, %v5330
    %s5339 = scalar_lea.vmem %s49, 256
    %v5340 = vld [vmem:[%s5339] sm:$0xff]
    %v5341 = vld [vmem:[%s5339 + $0x8] sm:$0xff]
    %v5342 = vld [vmem:[%s5339 + $0x10] sm:$0xff]
    %v5343 = vld [vmem:[%s5339 + $0x18] sm:$0xff]
    %v5344 = vld [vmem:[%s5339 + $0x20] sm:$0xff]
    %v5345 = vld [vmem:[%s5339 + $0x28] sm:$0xff]
    %v5346 = vld [vmem:[%s5339 + $0x30] sm:$0xff]
    %v5347 = vld [vmem:[%s5339 + $0x38] sm:$0xff]
    %v5348 = vld [vmem:[%s5339 + $0x40] sm:$0xff]
    %v5349 = vld [vmem:[%s5339 + $0x48] sm:$0xff]
    %v5350 = vld [vmem:[%s5339 + $0x50] sm:$0xff]
    %v5351 = vld [vmem:[%s5339 + $0x58] sm:$0xff]
    %v5352 = vld [vmem:[%s5339 + $0x60] sm:$0xff]
    %v5353 = vld [vmem:[%s5339 + $0x68] sm:$0xff]
    %v5354 = vld [vmem:[%s5339 + $0x70] sm:$0xff]
    %v5355 = vld [vmem:[%s5339 + $0x78] sm:$0xff]
    %v5356 = vld [vmem:[%s5339 + $0x80] sm:$0xff]
    %v5357 = vld [vmem:[%s5339 + $0x88] sm:$0xff]
    %v5358 = vld [vmem:[%s5339 + $0x90] sm:$0xff]
    %v5359 = vld [vmem:[%s5339 + $0x98] sm:$0xff]
    %v5360 = vld [vmem:[%s5339 + $0xa0] sm:$0xff]
    %v5361 = vld [vmem:[%s5339 + $0xa8] sm:$0xff]
    %v5362 = vld [vmem:[%s5339 + $0xb0] sm:$0xff]
    %v5363 = vld [vmem:[%s5339 + $0xb8] sm:$0xff]
    %v5364 = vld [vmem:[%s5339 + $0xc0] sm:$0xff]
    %v5365 = vld [vmem:[%s5339 + $0xc8] sm:$0xff]
    %v5366 = vld [vmem:[%s5339 + $0xd0] sm:$0xff]
    %v5367 = vld [vmem:[%s5339 + $0xd8] sm:$0xff]
    %v5368 = vld [vmem:[%s5339 + $0xe0] sm:$0xff]
    %v5369 = vld [vmem:[%s5339 + $0xe8] sm:$0xff]
    %v5370 = vld [vmem:[%s5339 + $0xf0] sm:$0xff]
    %v5371 = vld [vmem:[%s5339 + $0xf8] sm:$0xff]
    %s5372 = scalar_lea.vmem [#allocation9], 1
    %v5373 = vld [vmem:[%s5372] sm:$0x1]
    %v5375 = vlaneseq
    %v5376 = vshrl.u32 %v5375, 7
    %v5377 = vsub.s32 0, %v5376
    %v5378 = vrot.slane %v5373, %v5377
    %5380 = vmatprep.subr.mxu0 0.0
    %5381 = vmatpush1.msra.mxu0 %v5340
    %5382 = vmatprep.subr.mxu0 0.0
    %5383 = vmatpush1.msra.mxu0 %v5341
    %5384 = vmatprep.subr.mxu0 0.0
    %5385 = vmatpush1.msra.mxu0 %v5342
    %5386 = vmatprep.subr.mxu0 0.0
    %5387 = vmatpush1.msra.mxu0 %v5343
    %5388 = vmatprep.subr.mxu0 0.0
    %5389 = vmatpush1.msra.mxu0 %v5344
    %5390 = vmatprep.subr.mxu0 0.0
    %5391 = vmatpush1.msra.mxu0 %v5345
    %5392 = vmatprep.subr.mxu0 0.0
    %5393 = vmatpush1.msra.mxu0 %v5346
    %5394 = vmatprep.subr.mxu0 0.0
    %5395 = vmatpush1.msra.mxu0 %v5347
    %5396 = vmatprep.subr.mxu0 0.0
    %5397 = vmatpush1.msra.mxu0 %v5348
    %5398 = vmatprep.subr.mxu0 0.0
    %5399 = vmatpush1.msra.mxu0 %v5349
    %5400 = vmatprep.subr.mxu0 0.0
    %5401 = vmatpush1.msra.mxu0 %v5350
    %5402 = vmatprep.subr.mxu0 0.0
    %5403 = vmatpush1.msra.mxu0 %v5351
    %5404 = vmatprep.subr.mxu0 0.0
    %5405 = vmatpush1.msra.mxu0 %v5352
    %5406 = vmatprep.subr.mxu0 0.0
    %5407 = vmatpush1.msra.mxu0 %v5353
    %5408 = vmatprep.subr.mxu0 0.0
    %5409 = vmatpush1.msra.mxu0 %v5354
    %5410 = vmatprep.subr.mxu0 0.0
    %5411 = vmatpush1.msra.mxu0 %v5355
    %5412 = vmatprep.subr.mxu0 0.0
    %5413 = vmatpush1.msra.mxu0 %v5356
    %5414 = vmatprep.subr.mxu0 0.0
    %5415 = vmatpush1.msra.mxu0 %v5357
    %5416 = vmatprep.subr.mxu0 0.0
    %5417 = vmatpush1.msra.mxu0 %v5358
    %5418 = vmatprep.subr.mxu0 0.0
    %5419 = vmatpush1.msra.mxu0 %v5359
    %5420 = vmatprep.subr.mxu0 0.0
    %5421 = vmatpush1.msra.mxu0 %v5360
    %5422 = vmatprep.subr.mxu0 0.0
    %5423 = vmatpush1.msra.mxu0 %v5361
    %5424 = vmatprep.subr.mxu0 0.0
    %5425 = vmatpush1.msra.mxu0 %v5362
    %5426 = vmatprep.subr.mxu0 0.0
    %5427 = vmatpush1.msra.mxu0 %v5363
    %5428 = vmatprep.subr.mxu0 0.0
    %5429 = vmatpush1.msra.mxu0 %v5364
    %5430 = vmatprep.subr.mxu0 0.0
    %5431 = vmatpush1.msra.mxu0 %v5365
    %5432 = vmatprep.subr.mxu0 0.0
    %5433 = vmatpush1.msra.mxu0 %v5366
    %5434 = vmatprep.subr.mxu0 0.0
    %5435 = vmatpush1.msra.mxu0 %v5367
    %5436 = vmatprep.subr.mxu0 0.0
    %5437 = vmatpush1.msra.mxu0 %v5368
    %5438 = vmatprep.subr.mxu0 0.0
    %5439 = vmatpush1.msra.mxu0 %v5369
    %5440 = vmatprep.subr.mxu0 0.0
    %5441 = vmatpush1.msra.mxu0 %v5370
    %5442 = vmatprep.subr.mxu0 0.0
    %5443 = vmatpush1.msra.mxu0 %v5371
    %5444 = vmatprep.mubr.f32.mxu0 %v5332
    %5445 = vmatmul.mubr.f32.gmra.mrb[0].mxu0 %v5331
    %v5446 = vpop.f32.mrb[0].mxu0
    %v5447 = vadd.f32 %v5378, %v5446
    %v5448 = vpop.f32.mrb[0].mxu0
    %5449 = vmatprep.mubr.f32.mxu0 %v5334
    %5450 = vmatmul.mubr.f32.gmra.mrb[0].mxu0 %v5333
    %v5451 = vpop.f32.mrb[0].mxu0
    %v5452 = vadd.f32 %v5378, %v5451
    %v5453 = vpop.f32.mrb[0].mxu0
    %5454 = vmatprep.mubr.f32.mxu0 %v5336
    %5455 = vmatmul.mubr.f32.gmra.mrb[0].mxu0 %v5335
    %v5456 = vpop.f32.mrb[0].mxu0
    %v5457 = vadd.f32 %v5378, %v5456
    %v5458 = vpop.f32.mrb[0].mxu0
    %5459 = vmatprep.mubr.f32.mxu0 %v5338
    %5460 = vmatmul.mubr.f32.gmra.mrb[0].mxu0 %v5337
    %v5461 = vpop.f32.mrb[0].mxu0
    %v5462 = vadd.f32 %v5378, %v5461
    %v5463 = vpop.f32.mrb[0].mxu0
    %5464 = vdwg.mxu0
    %v5465 = vmul.f32 %v3626, %v5447
    %v5466 = vmul.f32 %v3631, %v5452
    %v5467 = vmul.f32 %v3636, %v5457
    %v5468 = vmul.f32 %v3641, %v5462
    %v5469 = vadd.f32 %v5068, %v5465
    %v5470 = vadd.f32 %v5069, %v5466
    %v5471 = vadd.f32 %v5070, %v5467
    %v5472 = vadd.f32 %v5071, %v5468
    %v5473 = vld [vmem:[%s53] sm:$0xff]
    %v5474 = vld [vmem:[%s53 + $0x8] sm:$0xff]
    %v5475 = vld [vmem:[%s53 + $0x10] sm:$0xff]
    %v5476 = vld [vmem:[%s53 + $0x18] sm:$0xff]
    %v5477 = vld [vmem:[%s53 + $0x20] sm:$0xff]
    %v5478 = vld [vmem:[%s53 + $0x28] sm:$0xff]
    %v5479 = vld [vmem:[%s53 + $0x30] sm:$0xff]
    %v5480 = vld [vmem:[%s53 + $0x38] sm:$0xff]
    %v5481 = vld [vmem:[#allocation10] sm:$0x1]
    %v5483 = vlaneseq
    %v5484 = vshrl.u32 %v5483, 7
    %v5485 = vsub.s32 0, %v5484
    %v5486 = vrot.slane %v5481, %v5485
    %5488 = vmatprep.subr.mxu0 0.0
    %5489 = vmatpush1.msra.mxu0 %v5473
    %5490 = vmatprep.subr.mxu0 0.0
    %5491 = vmatpush1.msra.mxu0 %v5474
    %5492 = vmatprep.subr.mxu0 0.0
    %5493 = vmatpush1.msra.mxu0 %v5475
    %5494 = vmatprep.subr.mxu0 0.0
    %5495 = vmatpush1.msra.mxu0 %v5476
    %5496 = vmatprep.subr.mxu0 0.0
    %5497 = vmatpush1.msra.mxu0 %v5477
    %5498 = vmatprep.subr.mxu0 0.0
    %5499 = vmatpush1.msra.mxu0 %v5478
    %5500 = vmatprep.subr.mxu0 0.0
    %5501 = vmatpush1.msra.mxu0 %v5479
    %5502 = vmatprep.subr.mxu0 0.0
    %5503 = vmatpush1.msra.mxu0 %v5480
    %5504 = vmatprep.subr.mxu0 0.0
    %5505 = vmatpush1.msra.mxu0 0.0
    %5506 = vmatprep.subr.mxu0 0.0
    %5507 = vmatpush1.msra.mxu0 0.0
    %5508 = vmatprep.subr.mxu0 0.0
    %5509 = vmatpush1.msra.mxu0 0.0
    %5510 = vmatprep.subr.mxu0 0.0
    %5511 = vmatpush1.msra.mxu0 0.0
    %5512 = vmatprep.subr.mxu0 0.0
    %5513 = vmatpush1.msra.mxu0 0.0
    %5514 = vmatprep.subr.mxu0 0.0
    %5515 = vmatpush1.msra.mxu0 0.0
    %5516 = vmatprep.subr.mxu0 0.0
    %5517 = vmatpush1.msra.mxu0 0.0
    %5518 = vmatprep.subr.mxu0 0.0
    %5519 = vmatpush1.msra.mxu0 0.0
    %5520 = vmatprep.subr.mxu0 0.0
    %5521 = vmatpush1.msra.mxu0 0.0
    %5522 = vmatprep.subr.mxu0 0.0
    %5523 = vmatpush1.msra.mxu0 0.0
    %5524 = vmatprep.subr.mxu0 0.0
    %5525 = vmatpush1.msra.mxu0 0.0
    %5526 = vmatprep.subr.mxu0 0.0
    %5527 = vmatpush1.msra.mxu0 0.0
    %5528 = vmatprep.subr.mxu0 0.0
    %5529 = vmatpush1.msra.mxu0 0.0
    %5530 = vmatprep.subr.mxu0 0.0
    %5531 = vmatpush1.msra.mxu0 0.0
    %5532 = vmatprep.subr.mxu0 0.0
    %5533 = vmatpush1.msra.mxu0 0.0
    %5534 = vmatprep.subr.mxu0 0.0
    %5535 = vmatpush1.msra.mxu0 0.0
    %5536 = vmatprep.subr.mxu0 0.0
    %5537 = vmatpush1.msra.mxu0 0.0
    %5538 = vmatprep.subr.mxu0 0.0
    %5539 = vmatpush1.msra.mxu0 0.0
    %5540 = vmatprep.subr.mxu0 0.0
    %5541 = vmatpush1.msra.mxu0 0.0
    %5542 = vmatprep.subr.mxu0 0.0
    %5543 = vmatpush1.msra.mxu0 0.0
    %5544 = vmatprep.subr.mxu0 0.0
    %5545 = vmatpush1.msra.mxu0 0.0
    %5546 = vmatprep.subr.mxu0 0.0
    %5547 = vmatpush1.msra.mxu0 0.0
    %5548 = vmatprep.subr.mxu0 0.0
    %5549 = vmatpush1.msra.mxu0 0.0
    %5550 = vmatprep.subr.mxu0 0.0
    %5551 = vmatpush1.msra.mxu0 0.0
    %5552 = vmatprep.mubr.f32.mxu0 0.0
    %5553 = vmatmul.mubr.f32.gmra.mrb[0].mxu0 %v607
    %v5554 = vpop.f32.mrb[0].mxu0
    %v5555 = vadd.f32 %v5486, %v5554
    %v5556 = vpop.f32.mrb[0].mxu0
    %5557 = vmatprep.mubr.f32.mxu0 0.0
    %5558 = vmatmul.mubr.f32.gmra.mrb[0].mxu0 %v610
    %v5559 = vpop.f32.mrb[0].mxu0
    %v5560 = vadd.f32 %v5486, %v5559
    %v5561 = vpop.f32.mrb[0].mxu0
    %5562 = vmatprep.mubr.f32.mxu0 0.0
    %5563 = vmatmul.mubr.f32.gmra.mrb[0].mxu0 %v613
    %v5564 = vpop.f32.mrb[0].mxu0
    %v5565 = vadd.f32 %v5486, %v5564
    %v5566 = vpop.f32.mrb[0].mxu0
    %5567 = vmatprep.mubr.f32.mxu0 0.0
    %5568 = vmatmul.mubr.f32.gmra.mrb[0].mxu0 %v616
    %v5569 = vpop.f32.mrb[0].mxu0
    %v5570 = vadd.f32 %v5486, %v5569
    %v5571 = vpop.f32.mrb[0].mxu0
    %5572 = vdwg.mxu0
    %s5573 = scalar_lea.vmem %s53, 64
    %v5574 = vld [vmem:[%s5573] sm:$0xff]
    %v5575 = vld [vmem:[%s5573 + $0x8] sm:$0xff]
    %v5576 = vld [vmem:[%s5573 + $0x10] sm:$0xff]
    %v5577 = vld [vmem:[%s5573 + $0x18] sm:$0xff]
    %v5578 = vld [vmem:[%s5573 + $0x20] sm:$0xff]
    %v5579 = vld [vmem:[%s5573 + $0x28] sm:$0xff]
    %v5580 = vld [vmem:[%s5573 + $0x30] sm:$0xff]
    %v5581 = vld [vmem:[%s5573 + $0x38] sm:$0xff]
    %s5582 = scalar_lea.vmem [#allocation10], 1
    %v5583 = vld [vmem:[%s5582] sm:$0x1]
    %v5585 = vlaneseq
    %v5586 = vshrl.u32 %v5585, 7
    %v5587 = vsub.s32 0, %v5586
    %v5588 = vrot.slane %v5583, %v5587
    %5590 = vmatprep.subr.mxu0 0.0
    %5591 = vmatpush1.msra.mxu0 %v5574
    %5592 = vmatprep.subr.mxu0 0.0
    %5593 = vmatpush1.msra.mxu0 %v5575
    %5594 = vmatprep.subr.mxu0 0.0
    %5595 = vmatpush1.msra.mxu0 %v5576
    %5596 = vmatprep.subr.mxu0 0.0
    %5597 = vmatpush1.msra.mxu0 %v5577
    %5598 = vmatprep.subr.mxu0 0.0
    %5599 = vmatpush1.msra.mxu0 %v5578
    %5600 = vmatprep.subr.mxu0 0.0
    %5601 = vmatpush1.msra.mxu0 %v5579
    %5602 = vmatprep.subr.mxu0 0.0
    %5603 = vmatpush1.msra.mxu0 %v5580
    %5604 = vmatprep.subr.mxu0 0.0
    %5605 = vmatpush1.msra.mxu0 %v5581
    %5606 = vmatprep.subr.mxu0 0.0
    %5607 = vmatpush1.msra.mxu0 0.0
    %5608 = vmatprep.subr.mxu0 0.0
    %5609 = vmatpush1.msra.mxu0 0.0
    %5610 = vmatprep.subr.mxu0 0.0
    %5611 = vmatpush1.msra.mxu0 0.0
    %5612 = vmatprep.subr.mxu0 0.0
    %5613 = vmatpush1.msra.mxu0 0.0
    %5614 = vmatprep.subr.mxu0 0.0
    %5615 = vmatpush1.msra.mxu0 0.0
    %5616 = vmatprep.subr.mxu0 0.0
    %5617 = vmatpush1.msra.mxu0 0.0
    %5618 = vmatprep.subr.mxu0 0.0
    %5619 = vmatpush1.msra.mxu0 0.0
    %5620 = vmatprep.subr.mxu0 0.0
    %5621 = vmatpush1.msra.mxu0 0.0
    %5622 = vmatprep.subr.mxu0 0.0
    %5623 = vmatpush1.msra.mxu0 0.0
    %5624 = vmatprep.subr.mxu0 0.0
    %5625 = vmatpush1.msra.mxu0 0.0
    %5626 = vmatprep.subr.mxu0 0.0
    %5627 = vmatpush1.msra.mxu0 0.0
    %5628 = vmatprep.subr.mxu0 0.0
    %5629 = vmatpush1.msra.mxu0 0.0
    %5630 = vmatprep.subr.mxu0 0.0
    %5631 = vmatpush1.msra.mxu0 0.0
    %5632 = vmatprep.subr.mxu0 0.0
    %5633 = vmatpush1.msra.mxu0 0.0
    %5634 = vmatprep.subr.mxu0 0.0
    %5635 = vmatpush1.msra.mxu0 0.0
    %5636 = vmatprep.subr.mxu0 0.0
    %5637 = vmatpush1.msra.mxu0 0.0
    %5638 = vmatprep.subr.mxu0 0.0
    %5639 = vmatpush1.msra.mxu0 0.0
    %5640 = vmatprep.subr.mxu0 0.0
    %5641 = vmatpush1.msra.mxu0 0.0
    %5642 = vmatprep.subr.mxu0 0.0
    %5643 = vmatpush1.msra.mxu0 0.0
    %5644 = vmatprep.subr.mxu0 0.0
    %5645 = vmatpush1.msra.mxu0 0.0
    %5646 = vmatprep.subr.mxu0 0.0
    %5647 = vmatpush1.msra.mxu0 0.0
    %5648 = vmatprep.subr.mxu0 0.0
    %5649 = vmatpush1.msra.mxu0 0.0
    %5650 = vmatprep.subr.mxu0 0.0
    %5651 = vmatpush1.msra.mxu0 0.0
    %5652 = vmatprep.subr.mxu0 0.0
    %5653 = vmatpush1.msra.mxu0 0.0
    %5654 = vmatprep.mubr.f32.mxu0 0.0
    %5655 = vmatmul.mubr.f32.gmra.mrb[0].mxu0 %v607
    %v5656 = vpop.f32.mrb[0].mxu0
    %v5657 = vadd.f32 %v5588, %v5656
    %v5658 = vpop.f32.mrb[0].mxu0
    %5659 = vmatprep.mubr.f32.mxu0 0.0
    %5660 = vmatmul.mubr.f32.gmra.mrb[0].mxu0 %v610
    %v5661 = vpop.f32.mrb[0].mxu0
    %v5662 = vadd.f32 %v5588, %v5661
    %v5663 = vpop.f32.mrb[0].mxu0
    %5664 = vmatprep.mubr.f32.mxu0 0.0
    %5665 = vmatmul.mubr.f32.gmra.mrb[0].mxu0 %v613
    %v5666 = vpop.f32.mrb[0].mxu0
    %v5667 = vadd.f32 %v5588, %v5666
    %v5668 = vpop.f32.mrb[0].mxu0
    %5669 = vmatprep.mubr.f32.mxu0 0.0
    %5670 = vmatmul.mubr.f32.gmra.mrb[0].mxu0 %v616
    %v5671 = vpop.f32.mrb[0].mxu0
    %v5672 = vadd.f32 %v5588, %v5671
    %v5673 = vpop.f32.mrb[0].mxu0
    %5674 = vdwg.mxu0
    %v5675 = vsel %vm605, %v5469, 0.0
    %5676 = vadd.xlane.f32.xlu0 %v5675
    %v5677 = vpop.xlane.xlu0 %5676
    %v5678 = vsel %vm605, %v5470, 0.0
    %5679 = vadd.xlane.f32.xlu0 %v5678
    %v5680 = vpop.xlane.xlu0 %5679
    %v5681 = vsel %vm605, %v5471, 0.0
    %5682 = vadd.xlane.f32.xlu0 %v5681
    %v5683 = vpop.xlane.xlu0 %5682
    %v5684 = vsel %vm605, %v5472, 0.0
    %5685 = vadd.xlane.f32.xlu0 %v5684
    %v5686 = vpop.xlane.xlu0 %5685
    %v5687 = vmul.f32 %v5677, %v1225
    %v5688 = vmul.f32 %v5680, %v1225
    %v5689 = vmul.f32 %v5683, %v1225
    %v5690 = vmul.f32 %v5686, %v1225
    %v5691 = vsub.f32 %v5469, %v5687
    %v5692 = vsub.f32 %v5470, %v5688
    %v5693 = vsub.f32 %v5471, %v5689
    %v5694 = vsub.f32 %v5472, %v5690
    %v5695 = vmul.f32 %v5691, %v5691
    %v5696 = vmul.f32 %v5692, %v5692
    %v5697 = vmul.f32 %v5693, %v5693
    %v5698 = vmul.f32 %v5694, %v5694
    %v5699 = vsel %vm605, %v5695, 0.0
    %5700 = vadd.xlane.f32.xlu0 %v5699
    %v5701 = vpop.xlane.xlu0 %5700
    %v5702 = vsel %vm605, %v5696, 0.0
    %5703 = vadd.xlane.f32.xlu0 %v5702
    %v5704 = vpop.xlane.xlu0 %5703
    %v5705 = vsel %vm605, %v5697, 0.0
    %5706 = vadd.xlane.f32.xlu0 %v5705
    %v5707 = vpop.xlane.xlu0 %5706
    %v5708 = vsel %vm605, %v5698, 0.0
    %5709 = vadd.xlane.f32.xlu0 %v5708
    %v5710 = vpop.xlane.xlu0 %5709
    %v5711 = vmul.f32 %v5701, %v1225
    %v5712 = vmul.f32 %v5704, %v1225
    %v5713 = vmul.f32 %v5707, %v1225
    %v5714 = vmul.f32 %v5710, %v1225
    %v5715 = vadd.f32 %v5711, 1e-06
    %v5716 = vadd.f32 %v5712, 1e-06
    %v5717 = vadd.f32 %v5713, 1e-06
    %v5718 = vadd.f32 %v5714, 1e-06
    %v5719 = vrsqrt.pop %v5715
    %v5720 = vrsqrt.pop %v5716
    %v5721 = vrsqrt.pop %v5717
    %v5722 = vrsqrt.pop %v5718
    %v5723 = vmul.f32 %v5691, %v5719
    %v5724 = vmul.f32 %v5692, %v5720
    %v5725 = vmul.f32 %v5693, %v5721
    %v5726 = vmul.f32 %v5694, %v5722
    %v5727 = vadd.f32 %v5657, 1.0
    %v5728 = vadd.f32 %v5662, 1.0
    %v5729 = vadd.f32 %v5667, 1.0
    %v5730 = vadd.f32 %v5672, 1.0
    %v5731 = vmul.f32 %v5723, %v5727
    %v5732 = vmul.f32 %v5724, %v5728
    %v5733 = vmul.f32 %v5725, %v5729
    %v5734 = vmul.f32 %v5726, %v5730
    %v5735 = vadd.f32 %v5731, %v5555
    %v5736 = vadd.f32 %v5732, %v5560
    %v5737 = vadd.f32 %v5733, %v5565
    %v5738 = vadd.f32 %v5734, %v5570
    %v5739 = vld [vmem:[%s57] sm:$0xff]
    %v5740 = vld [vmem:[%s57 + $0x8] sm:$0xff]
    %v5741 = vld [vmem:[%s57 + $0x10] sm:$0xff]
    %v5742 = vld [vmem:[%s57 + $0x18] sm:$0xff]
    %v5743 = vld [vmem:[%s57 + $0x20] sm:$0xff]
    %v5744 = vld [vmem:[%s57 + $0x28] sm:$0xff]
    %v5745 = vld [vmem:[%s57 + $0x30] sm:$0xff]
    %v5746 = vld [vmem:[%s57 + $0x38] sm:$0xff]
    %v5747 = vld [vmem:[#allocation12] sm:$0x1]
    %v5749 = vlaneseq
    %v5750 = vshrl.u32 %v5749, 7
    %v5751 = vsub.s32 0, %v5750
    %v5752 = vrot.slane %v5747, %v5751
    %v5755 = vsel %vm605, %v5735, 0
    %v5758 = vsel %vm605, %v5736, 0
    %v5761 = vsel %vm605, %v5737, 0
    %v5764 = vsel %vm605, %v5738, 0
    %5766 = vmatprep.subr.mxu0 0.0
    %5767 = vmatpush1.msra.mxu0 %v5739
    %5768 = vmatprep.subr.mxu0 0.0
    %5769 = vmatpush1.msra.mxu0 %v5740
    %5770 = vmatprep.subr.mxu0 0.0
    %5771 = vmatpush1.msra.mxu0 %v5741
    %5772 = vmatprep.subr.mxu0 0.0
    %5773 = vmatpush1.msra.mxu0 %v5742
    %5774 = vmatprep.subr.mxu0 0.0
    %5775 = vmatpush1.msra.mxu0 %v5743
    %5776 = vmatprep.subr.mxu0 0.0
    %5777 = vmatpush1.msra.mxu0 %v5744
    %5778 = vmatprep.subr.mxu0 0.0
    %5779 = vmatpush1.msra.mxu0 %v5745
    %5780 = vmatprep.subr.mxu0 0.0
    %5781 = vmatpush1.msra.mxu0 %v5746
    %5782 = vmatprep.subr.mxu0 0.0
    %5783 = vmatpush1.msra.mxu0 0.0
    %5784 = vmatprep.subr.mxu0 0.0
    %5785 = vmatpush1.msra.mxu0 0.0
    %5786 = vmatprep.subr.mxu0 0.0
    %5787 = vmatpush1.msra.mxu0 0.0
    %5788 = vmatprep.subr.mxu0 0.0
    %5789 = vmatpush1.msra.mxu0 0.0
    %5790 = vmatprep.subr.mxu0 0.0
    %5791 = vmatpush1.msra.mxu0 0.0
    %5792 = vmatprep.subr.mxu0 0.0
    %5793 = vmatpush1.msra.mxu0 0.0
    %5794 = vmatprep.subr.mxu0 0.0
    %5795 = vmatpush1.msra.mxu0 0.0
    %5796 = vmatprep.subr.mxu0 0.0
    %5797 = vmatpush1.msra.mxu0 0.0
    %5798 = vmatprep.subr.mxu0 0.0
    %5799 = vmatpush1.msra.mxu0 0.0
    %5800 = vmatprep.subr.mxu0 0.0
    %5801 = vmatpush1.msra.mxu0 0.0
    %5802 = vmatprep.subr.mxu0 0.0
    %5803 = vmatpush1.msra.mxu0 0.0
    %5804 = vmatprep.subr.mxu0 0.0
    %5805 = vmatpush1.msra.mxu0 0.0
    %5806 = vmatprep.subr.mxu0 0.0
    %5807 = vmatpush1.msra.mxu0 0.0
    %5808 = vmatprep.subr.mxu0 0.0
    %5809 = vmatpush1.msra.mxu0 0.0
    %5810 = vmatprep.subr.mxu0 0.0
    %5811 = vmatpush1.msra.mxu0 0.0
    %5812 = vmatprep.subr.mxu0 0.0
    %5813 = vmatpush1.msra.mxu0 0.0
    %5814 = vmatprep.subr.mxu0 0.0
    %5815 = vmatpush1.msra.mxu0 0.0
    %5816 = vmatprep.subr.mxu0 0.0
    %5817 = vmatpush1.msra.mxu0 0.0
    %5818 = vmatprep.subr.mxu0 0.0
    %5819 = vmatpush1.msra.mxu0 0.0
    %5820 = vmatprep.subr.mxu0 0.0
    %5821 = vmatpush1.msra.mxu0 0.0
    %5822 = vmatprep.subr.mxu0 0.0
    %5823 = vmatpush1.msra.mxu0 0.0
    %5824 = vmatprep.subr.mxu0 0.0
    %5825 = vmatpush1.msra.mxu0 0.0
    %5826 = vmatprep.subr.mxu0 0.0
    %5827 = vmatpush1.msra.mxu0 0.0
    %5828 = vmatprep.subr.mxu0 0.0
    %5829 = vmatpush1.msra.mxu0 0.0
    %5830 = vmatprep.mubr.f32.mxu0 0.0
    %5831 = vmatmul.mubr.f32.gmra.mrb[0].mxu0 %v5755
    %v5832 = vpop.f32.mrb[0].mxu0
    %v5833 = vadd.f32 %v5752, %v5832
    %v5834 = vpop.f32.mrb[0].mxu0
    %5835 = vmatprep.mubr.f32.mxu0 0.0
    %5836 = vmatmul.mubr.f32.gmra.mrb[0].mxu0 %v5758
    %v5837 = vpop.f32.mrb[0].mxu0
    %v5838 = vadd.f32 %v5752, %v5837
    %v5839 = vpop.f32.mrb[0].mxu0
    %5840 = vmatprep.mubr.f32.mxu0 0.0
    %5841 = vmatmul.mubr.f32.gmra.mrb[0].mxu0 %v5761
    %v5842 = vpop.f32.mrb[0].mxu0
    %v5843 = vadd.f32 %v5752, %v5842
    %v5844 = vpop.f32.mrb[0].mxu0
    %5845 = vmatprep.mubr.f32.mxu0 0.0
    %5846 = vmatmul.mubr.f32.gmra.mrb[0].mxu0 %v5764
    %v5847 = vpop.f32.mrb[0].mxu0
    %v5848 = vadd.f32 %v5752, %v5847
    %v5849 = vpop.f32.mrb[0].mxu0
    %5850 = vdwg.mxu0
    %5851 = vst [vmem:[%s61] sm:$0xff] %v5833
    %5852 = vst [vmem:[%s61 + $0x8] sm:$0xff] %v5838
    %5853 = vst [vmem:[%s61 + $0x10] sm:$0xff] %v5843
    %5854 = vst [vmem:[%s61 + $0x18] sm:$0xff] %v5848
    // Predicated region
    $region150: #{diffusion_forward.1} parent=1 // pred_check
      _
    $region151: #{diffusion_forward.1} parent=1 // pred_check_branch
      %5856 = sbr.rel (0) target = $region153
    $region152: #{diffusion_forward.1} parent=1 // pred_region
      _
    $region153: #{diffusion_forward.1} parent=1 // pred_fallthru
      _
    // Predicated region
    $region154: #{diffusion_forward.1} parent=1 // pred_check
      _
    $region155: #{diffusion_forward.1} parent=1 // pred_check_branch
      %5858 = sbr.rel (0) target = $region157
    $region156: #{diffusion_forward.1} parent=1 // pred_region
      _
    $region157: #{diffusion_forward.1} parent=1 // pred_fallthru
      _
    %5859 = vsyncpa [#allocation3], 1
    %5860 = vsyncpa [#allocation5], 1
    %5861 = vsyncpa [#allocation8], 1
    %5862 = vsyncpa [#allocation11], 1

</llo_original>
